<compile_context>
chip_gen: v6e
topology: v6e:2x2x1
jax: 0.10.0
libtpu: 0.0.40
codegen_flags: <defaults>
</compile_context>

<pallas_src>
import functools

import numpy as np

import jax
import jax.numpy as jnp
from jax.experimental import pallas as pl
from jax.experimental.pallas import tpu as pltpu

EPS = 1e-5
PAD = 4        # row halo: covers dil_conv_5x5 (pad 4) and everything smaller
SEP_PAD = 2    # row halo for the second depthwise conv inside sep_conv

PRIMITIVES = [
    "none",
    "max_pool_3x3",
    "avg_pool_3x3",
    "skip_connect",
    "sep_conv_3x3",
    "sep_conv_5x5",
    "dil_conv_3x3",
    "dil_conv_5x5",
]

# column offsets (in pixels) that ever need a roll + mask
DXS = (-4, -2, -1, 1, 2, 4)
DX_ROW = {dx: i for i, dx in enumerate(DXS)}

# first depthwise stage of the four conv branches: (name, K, dilation, pad)
STAGE1 = (("s3", 3, 1, 1), ("s5", 5, 1, 2), ("d3", 3, 2, 2), ("d5", 5, 2, 4))


def _stage1_taps_by_dx():
    by_dx = {}
    for name, K, dil, p in STAGE1:
        for ky in range(K):
            for kx in range(K):
                by_dx.setdefault(kx * dil - p, []).append(
                    (name, ky * dil - p, ky * K + kx))
    return by_dx


_BY_DX = _stage1_taps_by_dx()

VMEM_SPEC = pl.BlockSpec(memory_space=pltpu.MemorySpace.VMEM)
SMEM_SPEC = pl.BlockSpec(memory_space=pltpu.MemorySpace.SMEM)


# ------------------------------ fused kernel ------------------------------- #

def _mixed_op_kernel(w_ref, x_ref, cmask_ref, rowminf_ref, invc_ref, bnproj_ref,
                     s3a_ref, s3b_ref, s5a_ref, s5b_ref, d3_ref, d5_ref,
                     ksep1_ref, ksep2_ref, kdil_ref,
                     o_ref, xrp_scr, srp_scr, pair_scr, *, N, C, H, W):
    WC = W * C
    NH = N * H
    f32 = jnp.float32

    def roll_cols(a, dx):
        """Shift pixel columns by dx (a[..., w] <- a[..., w+dx]), with wrap."""
        n, hp, wc = a.shape
        sh = (-dx * C) % wc
        return pltpu.roll(a.reshape(n * hp, wc), sh, 1).reshape(n, hp, wc)

    def cmask(dx):
        return cmask_ref[DX_ROW[dx], :]            # (WC,) 0/1 column-valid mask

    def bn(y):
        """BatchNorm2d(affine=False), training batch stats; one matmul / stat."""
        y2 = y.reshape(NH, WC)
        mean = jnp.dot(jnp.sum(y2, axis=0, keepdims=True), bnproj_ref[...],
                       preferred_element_type=f32)                    # (1, WC)
        d = y2 - mean
        var = jnp.dot(jnp.sum(d * d, axis=0, keepdims=True), bnproj_ref[...],
                      preferred_element_type=f32)
        return (d * jax.lax.rsqrt(var + EPS)).reshape(N, H, WC)

    def pw_pair(ya, yb, kron_ref):
        """Two 1x1 convs as ONE 256-wide matmul (lane-concat via aligned stores)."""
        pair_scr[:, :WC] = ya.reshape(NH, WC)
        pair_scr[:, WC:] = yb.reshape(NH, WC)
        z = jnp.dot(pair_scr[...], kron_ref[...], preferred_element_type=f32)
        return z[:, :WC].reshape(N, H, WC), z[:, WC:].reshape(N, H, WC)

    # Zero the halo scratches once (centers are overwritten before every read).
    xrp_scr[...] = jnp.zeros_like(xrp_scr)
    srp_scr[...] = jnp.zeros_like(srp_scr)

    xin = x_ref[...]                                 # (N, H, WC)
    xrp_scr[:, PAD:PAD + H, :] = xin                 # lane-dense store, row halo
    x_rp = xrp_scr[...]                              # (N, H+2*PAD, WC)

    # ---- skip_connect (identity at stride=1), PRIMITIVES[3] ----------------- #
    acc = w_ref[3] * xin

    # Shared column-rolled slabs for dx = -1, +1 (pools + dx=+-1 conv taps).
    rolled_m1 = roll_cols(x_rp, -1)
    rolled_p1 = roll_cols(x_rp, +1)
    cm_m1, cm_p1 = cmask(-1), cmask(+1)
    masked_m1 = rolled_m1 * cm_m1                    # zero-padded column shift
    masked_p1 = rolled_p1 * cm_p1

    # ---- max_pool_3x3 + BN (separable, additive -1e30 halo) ----------------- #
    m1 = jnp.maximum(jnp.maximum(x_rp, rolled_m1 + (cm_m1 - 1.0) * 1e30),
                     rolled_p1 + (cm_p1 - 1.0) * 1e30)
    m1 = m1 + rowminf_ref[...]                       # halo rows can never win
    maxp = jnp.maximum(jnp.maximum(m1[:, PAD - 1:PAD - 1 + H, :],
                                   m1[:, PAD:PAD + H, :]),
                       m1[:, PAD + 1:PAD + 1 + H, :])
    acc = acc + w_ref[1] * bn(maxp)

    # ---- avg_pool_3x3 (count_include_pad=False) + BN ------------------------ #
    s1 = x_rp + masked_m1 + masked_p1
    avgp = (s1[:, PAD - 1:PAD - 1 + H, :] + s1[:, PAD:PAD + H, :]
            + s1[:, PAD + 1:PAD + 1 + H, :]) * invc_ref[...]
    acc = acc + w_ref[2] * bn(avgp)

    # ---- first depthwise stage of sep/dil: shared column-shifted ReLU slabs -- #
    dw_refs = {"s3": s3a_ref, "s5": s5a_ref, "d3": d3_ref, "d5": d5_ref}
    accs = {}
    order = [-1, 1, 0] + [d for d in sorted(_BY_DX) if d not in (-1, 0, 1)]
    for dx in order:
        if dx == 0:
            cslab = jnp.maximum(x_rp, 0.0)
        elif dx == -1:
            cslab = jnp.maximum(masked_m1, 0.0)      # roll shared with pools
        elif dx == 1:
            cslab = jnp.maximum(masked_p1, 0.0)
        else:
            cslab = jnp.maximum(roll_cols(x_rp, dx) * cmask(dx), 0.0)
        slice_cache = {}
        for name, dy, k in _BY_DX[dx]:
            if dy not in slice_cache:                # share coincident taps
                slice_cache[dy] = cslab[:, PAD + dy:PAD + dy + H, :]
            tap = slice_cache[dy] * dw_refs[name][k, :]
            accs[name] = tap if name not in accs else accs[name] + tap

    # ---- dil_conv_{3,5}: paired pointwise + BN ------------------------------- #
    zd3, zd5 = pw_pair(accs["d3"], accs["d5"], kdil_ref)
    acc = acc + w_ref[6] * bn(zd3) + w_ref[7] * bn(zd5)

    # ---- sep_conv_{3,5}: paired pw1 + BN + ReLU ------------------------------ #
    zs3, zs5 = pw_pair(accs["s3"], accs["s5"], ksep1_ref)
    y3 = jnp.maximum(bn(zs3), 0.0)
    y5 = jnp.maximum(bn(zs5), 0.0)

    # second depthwise stage: lane-aligned scratch (row halo only), roll columns
    def dw2(y, dwref, K, p):
        srp_scr[:, SEP_PAD:SEP_PAD + H, :] = y       # unmasked, lane-dense store
        s = srp_scr[...]
        out = None
        for kx in range(K):
            dxx = kx - p
            sl = s if dxx == 0 else roll_cols(s, dxx) * cmask(dxx)
            for ky in range(K):
                dyy = ky - p
                tap = sl[:, SEP_PAD + dyy:SEP_PAD + dyy + H, :] * dwref[ky * K + kx, :]
                out = tap if out is None else out + tap
        return out

    u3 = dw2(y3, s3b_ref, 3, 1)
    u5 = dw2(y5, s5b_ref, 5, 2)
    v3, v5 = pw_pair(u3, u5, ksep2_ref)
    acc = acc + w_ref[4] * bn(v3) + w_ref[5] * bn(v5)

    # 'none' (PRIMITIVES[0]) contributes exactly zero and is dropped.
    o_ref[...] = acc


# --------------------------- trace-time plumbing --------------------------- #

def _tile_dw_weights(w_dw, W):
    """(C, 1, K, K) depthwise weights -> (K*K, W*C) lane-tiled tap rows."""
    C, K = w_dw.shape[0], w_dw.shape[-1]
    taps = jnp.transpose(w_dw.reshape(C, K * K), (1, 0))        # (K*K, C)
    return jnp.tile(taps, (1, W))                               # (K*K, W*C)


def _kron_pw(w_pw, W):
    """(Cout, Cin, 1, 1) 1x1 conv weights -> block-diagonal (W*Cin, W*Cout)."""
    c_out, c_in = w_pw.shape[0], w_pw.shape[1]
    wt = jnp.transpose(w_pw.reshape(c_out, c_in), (1, 0))       # (Cin, Cout)
    return jnp.kron(jnp.eye(W, dtype=wt.dtype), wt)


def _kron_pair(w_a, w_b, W):
    """Two 1x1 convs -> one (2*W*C, 2*W*C) block-diag weight (256-wide MXU)."""
    ka, kb = _kron_pw(w_a, W), _kron_pw(w_b, W)
    top = jnp.concatenate([ka, jnp.zeros_like(ka)], axis=1)
    bot = jnp.concatenate([jnp.zeros_like(kb), kb], axis=1)
    return jnp.concatenate([top, bot], axis=0)


def _constants(N, C, H, W):
    """Compile-time constants: column masks, row -inf, avg 1/count, BN proj."""
    WC = W * C
    Hp = H + 2 * PAD

    cmask = np.ones((len(DXS), WC), np.float32)
    for i, dx in enumerate(DXS):
        if dx > 0:
            cmask[i, (W - dx) * C:] = 0.0
        else:
            cmask[i, :(-dx) * C] = 0.0

    rowminf = np.zeros((Hp, WC), np.float32)
    rowminf[:PAD, :] = -1e30
    rowminf[PAD + H:, :] = -1e30

    ones = np.pad(np.ones((H, W), np.float32), ((1, 1), (1, 1)))
    cnt = sum(ones[ky:ky + H, kx:kx + W] for ky in range(3) for kx in range(3))
    invc = np.repeat((1.0 / cnt).astype(np.float32)[:, :, None],
                     C, axis=2).reshape(H, WC)

    lanes = np.arange(WC)
    bnproj = ((lanes[:, None] % C == lanes[None, :] % C)
              .astype(np.float32) / float(N * H * W))            # (WC, WC)

    return (jnp.asarray(cmask), jnp.asarray(rowminf),
            jnp.asarray(invc), jnp.asarray(bnproj))


@jax.jit
def mixed_op_forward(x_nchw, weights, params):
    """MixedOp(C, stride=1).forward(x, weights).  x: NCHW, returns NCHW."""
    x_nchw = x_nchw.astype(jnp.float32)
    N, C, H, W = x_nchw.shape
    WC = W * C

    x = jnp.transpose(x_nchw, (0, 2, 3, 1)).reshape(N, H, WC)   # lane-merged NHWC

    cmask, rowminf, invc, bnproj = _constants(N, C, H, W)
    s3, s5 = params["sep_conv_3x3"], params["sep_conv_5x5"]
    d3, d5 = params["dil_conv_3x3"], params["dil_conv_5x5"]

    args = (
        weights.astype(jnp.float32), x, cmask, rowminf, invc, bnproj,
        _tile_dw_weights(s3["dw1"], W), _tile_dw_weights(s3["dw2"], W),
        _tile_dw_weights(s5["dw1"], W), _tile_dw_weights(s5["dw2"], W),
        _tile_dw_weights(d3["dw"], W), _tile_dw_weights(d5["dw"], W),
        _kron_pair(s3["pw1"], s5["pw1"], W),
        _kron_pair(s3["pw2"], s5["pw2"], W),
        _kron_pair(d3["pw"], d5["pw"], W),
    )

    out = pl.pallas_call(
        functools.partial(_mixed_op_kernel, N=N, C=C, H=H, W=W),
        out_shape=jax.ShapeDtypeStruct((N, H, WC), jnp.float32),
        in_specs=[SMEM_SPEC] + [VMEM_SPEC] * (len(args) - 1),
        out_specs=VMEM_SPEC,
        scratch_shapes=[
            pltpu.VMEM((N, H + 2 * PAD, WC), jnp.float32),       # row-padded input
            pltpu.VMEM((N, H + 2 * SEP_PAD, WC), jnp.float32),   # sep-conv re-pad
            pltpu.VMEM((N * H, 2 * WC), jnp.float32),            # paired pw LHS
        ],
    )(*args)

    return jnp.transpose(out.reshape(N, H, W, C), (0, 3, 1, 2))  # -> NCHW


# --------------------------- parameters / reference ------------------------ #

def init_params(key, C):
    def nrm(k, shape):
        return 0.1 * jax.random.normal(k, shape, jnp.float32)

    ks = jax.random.split(key, 12)
    return {
        "sep_conv_3x3": {"dw1": nrm(ks[0], (C, 1, 3, 3)),
                         "pw1": nrm(ks[1], (C, C, 1, 1)),
                         "dw2": nrm(ks[2], (C, 1, 3, 3)),
                         "pw2": nrm(ks[3], (C, C, 1, 1))},
        "sep_conv_5x5": {"dw1": nrm(ks[4], (C, 1, 5, 5)),
                         "pw1": nrm(ks[5], (C, C, 1, 1)),
                         "dw2": nrm(ks[6], (C, 1, 5, 5)),
                         "pw2": nrm(ks[7], (C, C, 1, 1))},
        "dil_conv_3x3": {"dw": nrm(ks[8], (C, 1, 3, 3)),
                         "pw": nrm(ks[9], (C, C, 1, 1))},
        "dil_conv_5x5": {"dw": nrm(ks[10], (C, 1, 5, 5)),
                         "pw": nrm(ks[11], (C, C, 1, 1))},
    }


def _reference_mixed_op(x_nchw, weights, params):
    """Plain-JAX reference of the PyTorch MixedOp (stride=1, training-mode BN)."""
    x = jnp.transpose(x_nchw.astype(jnp.float32), (0, 2, 3, 1))
    N, H, W, C = x.shape
    hi = jax.lax.Precision.HIGHEST

    def bn(y):
        m = jnp.mean(y, axis=(0, 1, 2), keepdims=True)
        v = jnp.mean((y - m) ** 2, axis=(0, 1, 2), keepdims=True)
        return (y - m) * jax.lax.rsqrt(v + EPS)

    def dw(y, w_dw, K, dil):
        p = dil * (K - 1) // 2
        yp = jnp.pad(y, ((0, 0), (p, p), (p, p), (0, 0)))
        w2 = jnp.transpose(w_dw.reshape(C, K * K), (1, 0))
        acc = jnp.zeros_like(y)
        for ky in range(K):
            for kx in range(K):
                acc = acc + (yp[:, ky * dil:ky * dil + H, kx * dil:kx * dil + W, :]
                             * w2[ky * K + kx])
        return acc

    def pw(y, w_pw):
        w2 = jnp.transpose(w_pw.reshape(w_pw.shape[0], C), (1, 0))
        return jnp.einsum("nhwc,cd->nhwd", y, w2, precision=hi)

    def sep(y, p, K):
        y = bn(pw(dw(jax.nn.relu(y), p["dw1"], K, 1), p["pw1"]))
        return bn(pw(dw(jax.nn.relu(y), p["dw2"], K, 1), p["pw2"]))

    def dil(y, p, K):
        return bn(pw(dw(jax.nn.relu(y), p["dw"], K, 2), p["pw"]))

    neg = jnp.finfo(jnp.float32).min
    xm = jnp.pad(x, ((0, 0), (1, 1), (1, 1), (0, 0)), constant_values=neg)
    mx = xm[:, 0:H, 0:W, :]
    for ky in range(3):
        for kx in range(3):
            mx = jnp.maximum(mx, xm[:, ky:ky + H, kx:kx + W, :])

    xa = jnp.pad(x, ((0, 0), (1, 1), (1, 1), (0, 0)))
    ones = jnp.pad(jnp.ones((1, H, W, 1), jnp.float32),
                   ((0, 0), (1, 1), (1, 1), (0, 0)))
    num = sum(xa[:, ky:ky + H, kx:kx + W, :] for ky in range(3) for kx in range(3))
    cnt = sum(ones[:, ky:ky + H, kx:kx + W, :] for ky in range(3) for kx in range(3))

    outs = [jnp.zeros_like(x), bn(mx), bn(num / cnt), x,
            sep(x, params["sep_conv_3x3"], 3), sep(x, params["sep_conv_5x5"], 5),
            dil(x, params["dil_conv_3x3"], 3), dil(x, params["dil_conv_5x5"], 5)]
    y = sum(w * o for w, o in zip(weights, outs))
    return jnp.transpose(y, (0, 3, 1, 2))


# ---------------------------------- demo ----------------------------------- #

if __name__ == "__main__":
    key = jax.random.PRNGKey(0)
    kx, ka, kp = jax.random.split(key, 3)

    N, C, H, W = 2, 8, 16, 16           # W * C == 128 -> fully lane-dense slabs
    x = jax.random.normal(kx, (N, C, H, W), jnp.float32)     # NCHW, like PyTorch
    alphas = jax.random.normal(ka, (len(PRIMITIVES),), jnp.float32)
    weights = jax.nn.softmax(alphas)                          # architecture weights
    params = init_params(kp, C)

    y = jax.block_until_ready(mixed_op_forward(x, weights, params))
    assert y.shape == (N, C, H, W)
    assert bool(jnp.all(jnp.isfinite(y)))

    y_ref = jax.block_until_ready(_reference_mixed_op(x, weights, params))
    max_err = float(jnp.max(jnp.abs(y - y_ref)))
    assert jnp.allclose(y, y_ref, rtol=1e-2, atol=1e-2), max_err

    print("KERNEL_OK")
</pallas_src>

<mosaic_0001>
module attributes {stable_mosaic.version = 11 : i64} {
  func.func @_mixed_op_kernel(%arg0: memref<8xf32, #tpu.memory_space<smem>>, %arg1: memref<2x16x128xf32, #tpu.memory_space<vmem>>, %arg2: memref<6x128xf32, #tpu.memory_space<vmem>>, %arg3: memref<24x128xf32, #tpu.memory_space<vmem>>, %arg4: memref<16x128xf32, #tpu.memory_space<vmem>>, %arg5: memref<128x128xf32, #tpu.memory_space<vmem>>, %arg6: memref<9x128xf32, #tpu.memory_space<vmem>>, %arg7: memref<9x128xf32, #tpu.memory_space<vmem>>, %arg8: memref<25x128xf32, #tpu.memory_space<vmem>>, %arg9: memref<25x128xf32, #tpu.memory_space<vmem>>, %arg10: memref<9x128xf32, #tpu.memory_space<vmem>>, %arg11: memref<25x128xf32, #tpu.memory_space<vmem>>, %arg12: memref<256x256xf32, #tpu.memory_space<vmem>>, %arg13: memref<256x256xf32, #tpu.memory_space<vmem>>, %arg14: memref<256x256xf32, #tpu.memory_space<vmem>>, %arg15: memref<2x16x128xf32, #tpu.memory_space<vmem>>, %arg16: memref<2x24x128xf32, #tpu.memory_space<vmem>>, %arg17: memref<2x20x128xf32, #tpu.memory_space<vmem>>, %arg18: memref<32x256xf32, #tpu.memory_space<vmem>>) attributes {dimension_semantics = [], scalar_prefetch = 0 : i64, scratch_operands = 3 : i64, tpu.core_type = #tpu.core_type<tc>} {
    %cst = arith.constant 0.000000e+00 : f32
    %0 = vector.broadcast %cst : f32 to vector<2x24x128xf32>
    %c0 = arith.constant 0 : index
    %c0_0 = arith.constant 0 : index
    %c0_1 = arith.constant 0 : index
    %1 = vector.load %arg16[%c0, %c0_0, %c0_1] : memref<2x24x128xf32, #tpu.memory_space<vmem>>, vector<2x24x128xf32>
    tpu.vector_store %arg16[%c0, %c0_0, %c0_1], %0 {strides = array<i32>} : memref<2x24x128xf32, #tpu.memory_space<vmem>>, vector<2x24x128xf32>,
    %cst_2 = arith.constant 0.000000e+00 : f32
    %2 = vector.broadcast %cst_2 : f32 to vector<2x20x128xf32>
    %c0_3 = arith.constant 0 : index
    %c0_4 = arith.constant 0 : index
    %c0_5 = arith.constant 0 : index
    %3 = vector.load %arg17[%c0_3, %c0_4, %c0_5] : memref<2x20x128xf32, #tpu.memory_space<vmem>>, vector<2x20x128xf32>
    tpu.vector_store %arg17[%c0_3, %c0_4, %c0_5], %2 {strides = array<i32>} : memref<2x20x128xf32, #tpu.memory_space<vmem>>, vector<2x20x128xf32>,
    %c0_6 = arith.constant 0 : index
    %c0_7 = arith.constant 0 : index
    %c0_8 = arith.constant 0 : index
    %4 = vector.load %arg1[%c0_6, %c0_7, %c0_8] : memref<2x16x128xf32, #tpu.memory_space<vmem>>, vector<2x16x128xf32>
    %c0_9 = arith.constant 0 : index
    %c4 = arith.constant 4 : index
    %c0_10 = arith.constant 0 : index
    %5 = vector.load %arg16[%c0_9, %c4, %c0_10] : memref<2x24x128xf32, #tpu.memory_space<vmem>>, vector<2x16x128xf32>
    tpu.vector_store %arg16[%c0_9, %c4, %c0_10], %4 {strides = array<i32>} : memref<2x24x128xf32, #tpu.memory_space<vmem>>, vector<2x16x128xf32>,
    %c0_11 = arith.constant 0 : index
    %c0_12 = arith.constant 0 : index
    %c0_13 = arith.constant 0 : index
    %6 = vector.load %arg16[%c0_11, %c0_12, %c0_13] : memref<2x24x128xf32, #tpu.memory_space<vmem>>, vector<2x24x128xf32>
    %c3 = arith.constant 3 : index
    %7 = memref.load %arg0[%c3] : memref<8xf32, #tpu.memory_space<smem>>
    %8 = vector.broadcast %7 : f32 to vector<2x16x128xf32>
    %9 = arith.mulf %8, %4 : vector<2x16x128xf32>
    %10 = vector.shape_cast %6 : vector<2x24x128xf32> to vector<48x128xf32>
    %c8_i32 = arith.constant 8 : i32
    %11 = tpu.dynamic_rotate %10 by %c8_i32 dim 1 : vector<48x128xf32>, i32 -> vector<48x128xf32>
    %12 = vector.shape_cast %11 : vector<48x128xf32> to vector<2x24x128xf32>
    %13 = vector.shape_cast %6 : vector<2x24x128xf32> to vector<48x128xf32>
    %c120_i32 = arith.constant 120 : i32
    %14 = tpu.dynamic_rotate %13 by %c120_i32 dim 1 : vector<48x128xf32>, i32 -> vector<48x128xf32>
    %15 = vector.shape_cast %14 : vector<48x128xf32> to vector<2x24x128xf32>
    %c2 = arith.constant 2 : index
    %c0_14 = arith.constant 0 : index
    %16 = vector.load %arg2[%c2, %c0_14] : memref<6x128xf32, #tpu.memory_space<vmem>>, vector<1x128xf32>
    %17 = vector.shape_cast %16 : vector<1x128xf32> to vector<128xf32>
    %c3_15 = arith.constant 3 : index
    %c0_16 = arith.constant 0 : index
    %18 = vector.load %arg2[%c3_15, %c0_16] : memref<6x128xf32, #tpu.memory_space<vmem>>, vector<1x128xf32>
    %19 = vector.shape_cast %18 : vector<1x128xf32> to vector<128xf32>
    %20 = vector.shape_cast %17 : vector<128xf32> to vector<1x1x128xf32>
    %21 = vector.broadcast %20 : vector<1x1x128xf32> to vector<2x24x128xf32>
    %22 = arith.mulf %12, %21 : vector<2x24x128xf32>
    %23 = vector.shape_cast %19 : vector<128xf32> to vector<1x1x128xf32>
    %24 = vector.broadcast %23 : vector<1x1x128xf32> to vector<2x24x128xf32>
    %25 = arith.mulf %15, %24 : vector<2x24x128xf32>
    %cst_17 = arith.constant 1.000000e+00 : f32
    %26 = vector.broadcast %cst_17 : f32 to vector<128xf32>
    %27 = arith.subf %17, %26 : vector<128xf32>
    %cst_18 = arith.constant 1.000000e+30 : f32
    %28 = vector.broadcast %cst_18 : f32 to vector<128xf32>
    %29 = arith.mulf %27, %28 : vector<128xf32>
    %30 = vector.shape_cast %29 : vector<128xf32> to vector<1x1x128xf32>
    %31 = vector.broadcast %30 : vector<1x1x128xf32> to vector<2x24x128xf32>
    %32 = arith.addf %12, %31 : vector<2x24x128xf32>
    %33 = arith.maximumf %6, %32 : vector<2x24x128xf32>
    %cst_19 = arith.constant 1.000000e+00 : f32
    %34 = vector.broadcast %cst_19 : f32 to vector<128xf32>
    %35 = arith.subf %19, %34 : vector<128xf32>
    %cst_20 = arith.constant 1.000000e+30 : f32
    %36 = vector.broadcast %cst_20 : f32 to vector<128xf32>
    %37 = arith.mulf %35, %36 : vector<128xf32>
    %38 = vector.shape_cast %37 : vector<128xf32> to vector<1x1x128xf32>
    %39 = vector.broadcast %38 : vector<1x1x128xf32> to vector<2x24x128xf32>
    %40 = arith.addf %15, %39 : vector<2x24x128xf32>
    %41 = arith.maximumf %33, %40 : vector<2x24x128xf32>
    %c0_21 = arith.constant 0 : index
    %c0_22 = arith.constant 0 : index
    %42 = vector.load %arg3[%c0_21, %c0_22] : memref<24x128xf32, #tpu.memory_space<vmem>>, vector<24x128xf32>
    %43 = vector.shape_cast %42 : vector<24x128xf32> to vector<1x24x128xf32>
    %44 = vector.broadcast %43 : vector<1x24x128xf32> to vector<2x24x128xf32>
    %45 = arith.addf %41, %44 : vector<2x24x128xf32>
    %46 = vector.extract_strided_slice %45 {offsets = [0, 3, 0], sizes = [2, 16, 128], strides = [1, 1, 1]} : vector<2x24x128xf32> to vector<2x16x128xf32>
    %47 = vector.extract_strided_slice %45 {offsets = [0, 4, 0], sizes = [2, 16, 128], strides = [1, 1, 1]} : vector<2x24x128xf32> to vector<2x16x128xf32>
    %48 = arith.maximumf %46, %47 : vector<2x16x128xf32>
    %49 = vector.extract_strided_slice %45 {offsets = [0, 5, 0], sizes = [2, 16, 128], strides = [1, 1, 1]} : vector<2x24x128xf32> to vector<2x16x128xf32>
    %50 = arith.maximumf %48, %49 : vector<2x16x128xf32>
    %c1 = arith.constant 1 : index
    %51 = memref.load %arg0[%c1] : memref<8xf32, #tpu.memory_space<smem>>
    %52 = vector.shape_cast %50 : vector<2x16x128xf32> to vector<32x128xf32>
    %cst_23 = arith.constant dense<0.000000e+00> : vector<128xf32>
    %53 = vector.multi_reduction <add>, %52, %cst_23 [0] : vector<32x128xf32> to vector<128xf32>
    %54 = vector.shape_cast %53 : vector<128xf32> to vector<1x128xf32>
    %c0_24 = arith.constant 0 : index
    %c0_25 = arith.constant 0 : index
    %55 = vector.load %arg5[%c0_24, %c0_25] : memref<128x128xf32, #tpu.memory_space<vmem>>, vector<128x128xf32>
    %cst_26 = arith.constant dense<0.000000e+00> : vector<1x128xf32>
    %56 = tpu.matmul %54, %55, %cst_26 {dimension_numbers = #tpu.dot_dimension_numbers<[1], [0], [0], [1], [0, 0, 1, 1], [], []>} : vector<1x128xf32>, vector<128x128xf32>, vector<1x128xf32> -> vector<1x128xf32>
    %57 = vector.broadcast %56 : vector<1x128xf32> to vector<32x128xf32>
    %58 = arith.subf %52, %57 : vector<32x128xf32>
    %59 = arith.mulf %58, %58 : vector<32x128xf32>
    %cst_27 = arith.constant dense<0.000000e+00> : vector<128xf32>
    %60 = vector.multi_reduction <add>, %59, %cst_27 [0] : vector<32x128xf32> to vector<128xf32>
    %61 = vector.shape_cast %60 : vector<128xf32> to vector<1x128xf32>
    %c0_28 = arith.constant 0 : index
    %c0_29 = arith.constant 0 : index
    %62 = vector.load %arg5[%c0_28, %c0_29] : memref<128x128xf32, #tpu.memory_space<vmem>>, vector<128x128xf32>
    %cst_30 = arith.constant dense<0.000000e+00> : vector<1x128xf32>
    %63 = tpu.matmul %61, %62, %cst_30 {dimension_numbers = #tpu.dot_dimension_numbers<[1], [0], [0], [1], [0, 0, 1, 1], [], []>} : vector<1x128xf32>, vector<128x128xf32>, vector<1x128xf32> -> vector<1x128xf32>
    %cst_31 = arith.constant 9.99999974E-6 : f32
    %64 = vector.broadcast %cst_31 : f32 to vector<1x128xf32>
    %65 = arith.addf %63, %64 : vector<1x128xf32>
    %66 = math.rsqrt %65 : vector<1x128xf32>
    %67 = vector.broadcast %66 : vector<1x128xf32> to vector<32x128xf32>
    %68 = arith.mulf %58, %67 : vector<32x128xf32>
    %69 = vector.shape_cast %68 : vector<32x128xf32> to vector<2x16x128xf32>
    %70 = vector.broadcast %51 : f32 to vector<2x16x128xf32>
    %71 = arith.mulf %70, %69 : vector<2x16x128xf32>
    %72 = arith.addf %9, %71 : vector<2x16x128xf32>
    %73 = arith.addf %6, %22 : vector<2x24x128xf32>
    %74 = arith.addf %73, %25 : vector<2x24x128xf32>
    %75 = vector.extract_strided_slice %74 {offsets = [0, 3, 0], sizes = [2, 16, 128], strides = [1, 1, 1]} : vector<2x24x128xf32> to vector<2x16x128xf32>
    %76 = vector.extract_strided_slice %74 {offsets = [0, 4, 0], sizes = [2, 16, 128], strides = [1, 1, 1]} : vector<2x24x128xf32> to vector<2x16x128xf32>
    %77 = arith.addf %75, %76 : vector<2x16x128xf32>
    %78 = vector.extract_strided_slice %74 {offsets = [0, 5, 0], sizes = [2, 16, 128], strides = [1, 1, 1]} : vector<2x24x128xf32> to vector<2x16x128xf32>
    %79 = arith.addf %77, %78 : vector<2x16x128xf32>
    %c0_32 = arith.constant 0 : index
    %c0_33 = arith.constant 0 : index
    %80 = vector.load %arg4[%c0_32, %c0_33] : memref<16x128xf32, #tpu.memory_space<vmem>>, vector<16x128xf32>
    %81 = vector.shape_cast %80 : vector<16x128xf32> to vector<1x16x128xf32>
    %82 = vector.broadcast %81 : vector<1x16x128xf32> to vector<2x16x128xf32>
    %83 = arith.mulf %79, %82 : vector<2x16x128xf32>
    %c2_34 = arith.constant 2 : index
    %84 = memref.load %arg0[%c2_34] : memref<8xf32, #tpu.memory_space<smem>>
    %85 = vector.shape_cast %83 : vector<2x16x128xf32> to vector<32x128xf32>
    %cst_35 = arith.constant dense<0.000000e+00> : vector<128xf32>
    %86 = vector.multi_reduction <add>, %85, %cst_35 [0] : vector<32x128xf32> to vector<128xf32>
    %87 = vector.shape_cast %86 : vector<128xf32> to vector<1x128xf32>
    %c0_36 = arith.constant 0 : index
    %c0_37 = arith.constant 0 : index
    %88 = vector.load %arg5[%c0_36, %c0_37] : memref<128x128xf32, #tpu.memory_space<vmem>>, vector<128x128xf32>
    %cst_38 = arith.constant dense<0.000000e+00> : vector<1x128xf32>
    %89 = tpu.matmul %87, %88, %cst_38 {dimension_numbers = #tpu.dot_dimension_numbers<[1], [0], [0], [1], [0, 0, 1, 1], [], []>} : vector<1x128xf32>, vector<128x128xf32>, vector<1x128xf32> -> vector<1x128xf32>
    %90 = vector.broadcast %89 : vector<1x128xf32> to vector<32x128xf32>
    %91 = arith.subf %85, %90 : vector<32x128xf32>
    %92 = arith.mulf %91, %91 : vector<32x128xf32>
    %cst_39 = arith.constant dense<0.000000e+00> : vector<128xf32>
    %93 = vector.multi_reduction <add>, %92, %cst_39 [0] : vector<32x128xf32> to vector<128xf32>
    %94 = vector.shape_cast %93 : vector<128xf32> to vector<1x128xf32>
    %c0_40 = arith.constant 0 : index
    %c0_41 = arith.constant 0 : index
    %95 = vector.load %arg5[%c0_40, %c0_41] : memref<128x128xf32, #tpu.memory_space<vmem>>, vector<128x128xf32>
    %cst_42 = arith.constant dense<0.000000e+00> : vector<1x128xf32>
    %96 = tpu.matmul %94, %95, %cst_42 {dimension_numbers = #tpu.dot_dimension_numbers<[1], [0], [0], [1], [0, 0, 1, 1], [], []>} : vector<1x128xf32>, vector<128x128xf32>, vector<1x128xf32> -> vector<1x128xf32>
    %cst_43 = arith.constant 9.99999974E-6 : f32
    %97 = vector.broadcast %cst_43 : f32 to vector<1x128xf32>
    %98 = arith.addf %96, %97 : vector<1x128xf32>
    %99 = math.rsqrt %98 : vector<1x128xf32>
    %100 = vector.broadcast %99 : vector<1x128xf32> to vector<32x128xf32>
    %101 = arith.mulf %91, %100 : vector<32x128xf32>
    %102 = vector.shape_cast %101 : vector<32x128xf32> to vector<2x16x128xf32>
    %103 = vector.broadcast %84 : f32 to vector<2x16x128xf32>
    %104 = arith.mulf %103, %102 : vector<2x16x128xf32>
    %105 = arith.addf %72, %104 : vector<2x16x128xf32>
    %cst_44 = arith.constant 0.000000e+00 : f32
    %106 = vector.broadcast %cst_44 : f32 to vector<2x24x128xf32>
    %107 = arith.maximumf %22, %106 : vector<2x24x128xf32>
    %108 = vector.extract_strided_slice %107 {offsets = [0, 3, 0], sizes = [2, 16, 128], strides = [1, 1, 1]} : vector<2x24x128xf32> to vector<2x16x128xf32>
    %c0_45 = arith.constant 0 : index
    %c0_46 = arith.constant 0 : index
    %109 = vector.load %arg6[%c0_45, %c0_46] : memref<9x128xf32, #tpu.memory_space<vmem>>, vector<1x128xf32>
    %110 = vector.shape_cast %109 : vector<1x128xf32> to vector<128xf32>
    %111 = vector.shape_cast %110 : vector<128xf32> to vector<1x1x128xf32>
    %112 = vector.broadcast %111 : vector<1x1x128xf32> to vector<2x16x128xf32>
    %113 = arith.mulf %108, %112 : vector<2x16x128xf32>
    %114 = vector.extract_strided_slice %107 {offsets = [0, 4, 0], sizes = [2, 16, 128], strides = [1, 1, 1]} : vector<2x24x128xf32> to vector<2x16x128xf32>
    %c3_47 = arith.constant 3 : index
    %c0_48 = arith.constant 0 : index
    %115 = vector.load %arg6[%c3_47, %c0_48] : memref<9x128xf32, #tpu.memory_space<vmem>>, vector<1x128xf32>
    %116 = vector.shape_cast %115 : vector<1x128xf32> to vector<128xf32>
    %117 = vector.shape_cast %116 : vector<128xf32> to vector<1x1x128xf32>
    %118 = vector.broadcast %117 : vector<1x1x128xf32> to vector<2x16x128xf32>
    %119 = arith.mulf %114, %118 : vector<2x16x128xf32>
    %120 = arith.addf %113, %119 : vector<2x16x128xf32>
    %121 = vector.extract_strided_slice %107 {offsets = [0, 5, 0], sizes = [2, 16, 128], strides = [1, 1, 1]} : vector<2x24x128xf32> to vector<2x16x128xf32>
    %c6 = arith.constant 6 : index
    %c0_49 = arith.constant 0 : index
    %122 = vector.load %arg6[%c6, %c0_49] : memref<9x128xf32, #tpu.memory_space<vmem>>, vector<1x128xf32>
    %123 = vector.shape_cast %122 : vector<1x128xf32> to vector<128xf32>
    %124 = vector.shape_cast %123 : vector<128xf32> to vector<1x1x128xf32>
    %125 = vector.broadcast %124 : vector<1x1x128xf32> to vector<2x16x128xf32>
    %126 = arith.mulf %121, %125 : vector<2x16x128xf32>
    %127 = arith.addf %120, %126 : vector<2x16x128xf32>
    %128 = vector.extract_strided_slice %107 {offsets = [0, 2, 0], sizes = [2, 16, 128], strides = [1, 1, 1]} : vector<2x24x128xf32> to vector<2x16x128xf32>
    %c1_50 = arith.constant 1 : index
    %c0_51 = arith.constant 0 : index
    %129 = vector.load %arg8[%c1_50, %c0_51] : memref<25x128xf32, #tpu.memory_space<vmem>>, vector<1x128xf32>
    %130 = vector.shape_cast %129 : vector<1x128xf32> to vector<128xf32>
    %131 = vector.shape_cast %130 : vector<128xf32> to vector<1x1x128xf32>
    %132 = vector.broadcast %131 : vector<1x1x128xf32> to vector<2x16x128xf32>
    %133 = arith.mulf %128, %132 : vector<2x16x128xf32>
    %c6_52 = arith.constant 6 : index
    %c0_53 = arith.constant 0 : index
    %134 = vector.load %arg8[%c6_52, %c0_53] : memref<25x128xf32, #tpu.memory_space<vmem>>, vector<1x128xf32>
    %135 = vector.shape_cast %134 : vector<1x128xf32> to vector<128xf32>
    %136 = vector.shape_cast %135 : vector<128xf32> to vector<1x1x128xf32>
    %137 = vector.broadcast %136 : vector<1x1x128xf32> to vector<2x16x128xf32>
    %138 = arith.mulf %108, %137 : vector<2x16x128xf32>
    %139 = arith.addf %133, %138 : vector<2x16x128xf32>
    %c11 = arith.constant 11 : index
    %c0_54 = arith.constant 0 : index
    %140 = vector.load %arg8[%c11, %c0_54] : memref<25x128xf32, #tpu.memory_space<vmem>>, vector<1x128xf32>
    %141 = vector.shape_cast %140 : vector<1x128xf32> to vector<128xf32>
    %142 = vector.shape_cast %141 : vector<128xf32> to vector<1x1x128xf32>
    %143 = vector.broadcast %142 : vector<1x1x128xf32> to vector<2x16x128xf32>
    %144 = arith.mulf %114, %143 : vector<2x16x128xf32>
    %145 = arith.addf %139, %144 : vector<2x16x128xf32>
    %c16 = arith.constant 16 : index
    %c0_55 = arith.constant 0 : index
    %146 = vector.load %arg8[%c16, %c0_55] : memref<25x128xf32, #tpu.memory_space<vmem>>, vector<1x128xf32>
    %147 = vector.shape_cast %146 : vector<1x128xf32> to vector<128xf32>
    %148 = vector.shape_cast %147 : vector<128xf32> to vector<1x1x128xf32>
    %149 = vector.broadcast %148 : vector<1x1x128xf32> to vector<2x16x128xf32>
    %150 = arith.mulf %121, %149 : vector<2x16x128xf32>
    %151 = arith.addf %145, %150 : vector<2x16x128xf32>
    %152 = vector.extract_strided_slice %107 {offsets = [0, 6, 0], sizes = [2, 16, 128], strides = [1, 1, 1]} : vector<2x24x128xf32> to vector<2x16x128xf32>
    %c21 = arith.constant 21 : index
    %c0_56 = arith.constant 0 : index
    %153 = vector.load %arg8[%c21, %c0_56] : memref<25x128xf32, #tpu.memory_space<vmem>>, vector<1x128xf32>
    %154 = vector.shape_cast %153 : vector<1x128xf32> to vector<128xf32>
    %155 = vector.shape_cast %154 : vector<128xf32> to vector<1x1x128xf32>
    %156 = vector.broadcast %155 : vector<1x1x128xf32> to vector<2x16x128xf32>
    %157 = arith.mulf %152, %156 : vector<2x16x128xf32>
    %158 = arith.addf %151, %157 : vector<2x16x128xf32>
    %cst_57 = arith.constant 0.000000e+00 : f32
    %159 = vector.broadcast %cst_57 : f32 to vector<2x24x128xf32>
    %160 = arith.maximumf %25, %159 : vector<2x24x128xf32>
    %161 = vector.extract_strided_slice %160 {offsets = [0, 3, 0], sizes = [2, 16, 128], strides = [1, 1, 1]} : vector<2x24x128xf32> to vector<2x16x128xf32>
    %c2_58 = arith.constant 2 : index
    %c0_59 = arith.constant 0 : index
    %162 = vector.load %arg6[%c2_58, %c0_59] : memref<9x128xf32, #tpu.memory_space<vmem>>, vector<1x128xf32>
    %163 = vector.shape_cast %162 : vector<1x128xf32> to vector<128xf32>
    %164 = vector.shape_cast %163 : vector<128xf32> to vector<1x1x128xf32>
    %165 = vector.broadcast %164 : vector<1x1x128xf32> to vector<2x16x128xf32>
    %166 = arith.mulf %161, %165 : vector<2x16x128xf32>
    %167 = arith.addf %127, %166 : vector<2x16x128xf32>
    %168 = vector.extract_strided_slice %160 {offsets = [0, 4, 0], sizes = [2, 16, 128], strides = [1, 1, 1]} : vector<2x24x128xf32> to vector<2x16x128xf32>
    %c5 = arith.constant 5 : index
    %c0_60 = arith.constant 0 : index
    %169 = vector.load %arg6[%c5, %c0_60] : memref<9x128xf32, #tpu.memory_space<vmem>>, vector<1x128xf32>
    %170 = vector.shape_cast %169 : vector<1x128xf32> to vector<128xf32>
    %171 = vector.shape_cast %170 : vector<128xf32> to vector<1x1x128xf32>
    %172 = vector.broadcast %171 : vector<1x1x128xf32> to vector<2x16x128xf32>
    %173 = arith.mulf %168, %172 : vector<2x16x128xf32>
    %174 = arith.addf %167, %173 : vector<2x16x128xf32>
    %175 = vector.extract_strided_slice %160 {offsets = [0, 5, 0], sizes = [2, 16, 128], strides = [1, 1, 1]} : vector<2x24x128xf32> to vector<2x16x128xf32>
    %c8 = arith.constant 8 : index
    %c0_61 = arith.constant 0 : index
    %176 = vector.load %arg6[%c8, %c0_61] : memref<9x128xf32, #tpu.memory_space<vmem>>, vector<1x128xf32>
    %177 = vector.shape_cast %176 : vector<1x128xf32> to vector<128xf32>
    %178 = vector.shape_cast %177 : vector<128xf32> to vector<1x1x128xf32>
    %179 = vector.broadcast %178 : vector<1x1x128xf32> to vector<2x16x128xf32>
    %180 = arith.mulf %175, %179 : vector<2x16x128xf32>
    %181 = arith.addf %174, %180 : vector<2x16x128xf32>
    %182 = vector.extract_strided_slice %160 {offsets = [0, 2, 0], sizes = [2, 16, 128], strides = [1, 1, 1]} : vector<2x24x128xf32> to vector<2x16x128xf32>
    %c3_62 = arith.constant 3 : index
    %c0_63 = arith.constant 0 : index
    %183 = vector.load %arg8[%c3_62, %c0_63] : memref<25x128xf32, #tpu.memory_space<vmem>>, vector<1x128xf32>
    %184 = vector.shape_cast %183 : vector<1x128xf32> to vector<128xf32>
    %185 = vector.shape_cast %184 : vector<128xf32> to vector<1x1x128xf32>
    %186 = vector.broadcast %185 : vector<1x1x128xf32> to vector<2x16x128xf32>
    %187 = arith.mulf %182, %186 : vector<2x16x128xf32>
    %188 = arith.addf %158, %187 : vector<2x16x128xf32>
    %c8_64 = arith.constant 8 : index
    %c0_65 = arith.constant 0 : index
    %189 = vector.load %arg8[%c8_64, %c0_65] : memref<25x128xf32, #tpu.memory_space<vmem>>, vector<1x128xf32>
    %190 = vector.shape_cast %189 : vector<1x128xf32> to vector<128xf32>
    %191 = vector.shape_cast %190 : vector<128xf32> to vector<1x1x128xf32>
    %192 = vector.broadcast %191 : vector<1x1x128xf32> to vector<2x16x128xf32>
    %193 = arith.mulf %161, %192 : vector<2x16x128xf32>
    %194 = arith.addf %188, %193 : vector<2x16x128xf32>
    %c13 = arith.constant 13 : index
    %c0_66 = arith.constant 0 : index
    %195 = vector.load %arg8[%c13, %c0_66] : memref<25x128xf32, #tpu.memory_space<vmem>>, vector<1x128xf32>
    %196 = vector.shape_cast %195 : vector<1x128xf32> to vector<128xf32>
    %197 = vector.shape_cast %196 : vector<128xf32> to vector<1x1x128xf32>
    %198 = vector.broadcast %197 : vector<1x1x128xf32> to vector<2x16x128xf32>
    %199 = arith.mulf %168, %198 : vector<2x16x128xf32>
    %200 = arith.addf %194, %199 : vector<2x16x128xf32>
    %c18 = arith.constant 18 : index
    %c0_67 = arith.constant 0 : index
    %201 = vector.load %arg8[%c18, %c0_67] : memref<25x128xf32, #tpu.memory_space<vmem>>, vector<1x128xf32>
    %202 = vector.shape_cast %201 : vector<1x128xf32> to vector<128xf32>
    %203 = vector.shape_cast %202 : vector<128xf32> to vector<1x1x128xf32>
    %204 = vector.broadcast %203 : vector<1x1x128xf32> to vector<2x16x128xf32>
    %205 = arith.mulf %175, %204 : vector<2x16x128xf32>
    %206 = arith.addf %200, %205 : vector<2x16x128xf32>
    %207 = vector.extract_strided_slice %160 {offsets = [0, 6, 0], sizes = [2, 16, 128], strides = [1, 1, 1]} : vector<2x24x128xf32> to vector<2x16x128xf32>
    %c23 = arith.constant 23 : index
    %c0_68 = arith.constant 0 : index
    %208 = vector.load %arg8[%c23, %c0_68] : memref<25x128xf32, #tpu.memory_space<vmem>>, vector<1x128xf32>
    %209 = vector.shape_cast %208 : vector<1x128xf32> to vector<128xf32>
    %210 = vector.shape_cast %209 : vector<128xf32> to vector<1x1x128xf32>
    %211 = vector.broadcast %210 : vector<1x1x128xf32> to vector<2x16x128xf32>
    %212 = arith.mulf %207, %211 : vector<2x16x128xf32>
    %213 = arith.addf %206, %212 : vector<2x16x128xf32>
    %cst_69 = arith.constant 0.000000e+00 : f32
    %214 = vector.broadcast %cst_69 : f32 to vector<2x24x128xf32>
    %215 = arith.maximumf %6, %214 : vector<2x24x128xf32>
    %216 = vector.extract_strided_slice %215 {offsets = [0, 3, 0], sizes = [2, 16, 128], strides = [1, 1, 1]} : vector<2x24x128xf32> to vector<2x16x128xf32>
    %c1_70 = arith.constant 1 : index
    %c0_71 = arith.constant 0 : index
    %217 = vector.load %arg6[%c1_70, %c0_71] : memref<9x128xf32, #tpu.memory_space<vmem>>, vector<1x128xf32>
    %218 = vector.shape_cast %217 : vector<1x128xf32> to vector<128xf32>
    %219 = vector.shape_cast %218 : vector<128xf32> to vector<1x1x128xf32>
    %220 = vector.broadcast %219 : vector<1x1x128xf32> to vector<2x16x128xf32>
    %221 = arith.mulf %216, %220 : vector<2x16x128xf32>
    %222 = arith.addf %181, %221 : vector<2x16x128xf32>
    %223 = vector.extract_strided_slice %215 {offsets = [0, 4, 0], sizes = [2, 16, 128], strides = [1, 1, 1]} : vector<2x24x128xf32> to vector<2x16x128xf32>
    %c4_72 = arith.constant 4 : index
    %c0_73 = arith.constant 0 : index
    %224 = vector.load %arg6[%c4_72, %c0_73] : memref<9x128xf32, #tpu.memory_space<vmem>>, vector<1x128xf32>
    %225 = vector.shape_cast %224 : vector<1x128xf32> to vector<128xf32>
    %226 = vector.shape_cast %225 : vector<128xf32> to vector<1x1x128xf32>
    %227 = vector.broadcast %226 : vector<1x1x128xf32> to vector<2x16x128xf32>
    %228 = arith.mulf %223, %227 : vector<2x16x128xf32>
    %229 = arith.addf %222, %228 : vector<2x16x128xf32>
    %230 = vector.extract_strided_slice %215 {offsets = [0, 5, 0], sizes = [2, 16, 128], strides = [1, 1, 1]} : vector<2x24x128xf32> to vector<2x16x128xf32>
    %c7 = arith.constant 7 : index
    %c0_74 = arith.constant 0 : index
    %231 = vector.load %arg6[%c7, %c0_74] : memref<9x128xf32, #tpu.memory_space<vmem>>, vector<1x128xf32>
    %232 = vector.shape_cast %231 : vector<1x128xf32> to vector<128xf32>
    %233 = vector.shape_cast %232 : vector<128xf32> to vector<1x1x128xf32>
    %234 = vector.broadcast %233 : vector<1x1x128xf32> to vector<2x16x128xf32>
    %235 = arith.mulf %230, %234 : vector<2x16x128xf32>
    %236 = arith.addf %229, %235 : vector<2x16x128xf32>
    %237 = vector.extract_strided_slice %215 {offsets = [0, 2, 0], sizes = [2, 16, 128], strides = [1, 1, 1]} : vector<2x24x128xf32> to vector<2x16x128xf32>
    %c2_75 = arith.constant 2 : index
    %c0_76 = arith.constant 0 : index
    %238 = vector.load %arg8[%c2_75, %c0_76] : memref<25x128xf32, #tpu.memory_space<vmem>>, vector<1x128xf32>
    %239 = vector.shape_cast %238 : vector<1x128xf32> to vector<128xf32>
    %240 = vector.shape_cast %239 : vector<128xf32> to vector<1x1x128xf32>
    %241 = vector.broadcast %240 : vector<1x1x128xf32> to vector<2x16x128xf32>
    %242 = arith.mulf %237, %241 : vector<2x16x128xf32>
    %243 = arith.addf %213, %242 : vector<2x16x128xf32>
    %c7_77 = arith.constant 7 : index
    %c0_78 = arith.constant 0 : index
    %244 = vector.load %arg8[%c7_77, %c0_78] : memref<25x128xf32, #tpu.memory_space<vmem>>, vector<1x128xf32>
    %245 = vector.shape_cast %244 : vector<1x128xf32> to vector<128xf32>
    %246 = vector.shape_cast %245 : vector<128xf32> to vector<1x1x128xf32>
    %247 = vector.broadcast %246 : vector<1x1x128xf32> to vector<2x16x128xf32>
    %248 = arith.mulf %216, %247 : vector<2x16x128xf32>
    %249 = arith.addf %243, %248 : vector<2x16x128xf32>
    %c12 = arith.constant 12 : index
    %c0_79 = arith.constant 0 : index
    %250 = vector.load %arg8[%c12, %c0_79] : memref<25x128xf32, #tpu.memory_space<vmem>>, vector<1x128xf32>
    %251 = vector.shape_cast %250 : vector<1x128xf32> to vector<128xf32>
    %252 = vector.shape_cast %251 : vector<128xf32> to vector<1x1x128xf32>
    %253 = vector.broadcast %252 : vector<1x1x128xf32> to vector<2x16x128xf32>
    %254 = arith.mulf %223, %253 : vector<2x16x128xf32>
    %255 = arith.addf %249, %254 : vector<2x16x128xf32>
    %c17 = arith.constant 17 : index
    %c0_80 = arith.constant 0 : index
    %256 = vector.load %arg8[%c17, %c0_80] : memref<25x128xf32, #tpu.memory_space<vmem>>, vector<1x128xf32>
    %257 = vector.shape_cast %256 : vector<1x128xf32> to vector<128xf32>
    %258 = vector.shape_cast %257 : vector<128xf32> to vector<1x1x128xf32>
    %259 = vector.broadcast %258 : vector<1x1x128xf32> to vector<2x16x128xf32>
    %260 = arith.mulf %230, %259 : vector<2x16x128xf32>
    %261 = arith.addf %255, %260 : vector<2x16x128xf32>
    %262 = vector.extract_strided_slice %215 {offsets = [0, 6, 0], sizes = [2, 16, 128], strides = [1, 1, 1]} : vector<2x24x128xf32> to vector<2x16x128xf32>
    %c22 = arith.constant 22 : index
    %c0_81 = arith.constant 0 : index
    %263 = vector.load %arg8[%c22, %c0_81] : memref<25x128xf32, #tpu.memory_space<vmem>>, vector<1x128xf32>
    %264 = vector.shape_cast %263 : vector<1x128xf32> to vector<128xf32>
    %265 = vector.shape_cast %264 : vector<128xf32> to vector<1x1x128xf32>
    %266 = vector.broadcast %265 : vector<1x1x128xf32> to vector<2x16x128xf32>
    %267 = arith.mulf %262, %266 : vector<2x16x128xf32>
    %268 = arith.addf %261, %267 : vector<2x16x128xf32>
    %c1_82 = arith.constant 1 : index
    %c0_83 = arith.constant 0 : index
    %269 = vector.load %arg10[%c1_82, %c0_83] : memref<9x128xf32, #tpu.memory_space<vmem>>, vector<1x128xf32>
    %270 = vector.shape_cast %269 : vector<1x128xf32> to vector<128xf32>
    %271 = vector.shape_cast %270 : vector<128xf32> to vector<1x1x128xf32>
    %272 = vector.broadcast %271 : vector<1x1x128xf32> to vector<2x16x128xf32>
    %273 = arith.mulf %237, %272 : vector<2x16x128xf32>
    %c4_84 = arith.constant 4 : index
    %c0_85 = arith.constant 0 : index
    %274 = vector.load %arg10[%c4_84, %c0_85] : memref<9x128xf32, #tpu.memory_space<vmem>>, vector<1x128xf32>
    %275 = vector.shape_cast %274 : vector<1x128xf32> to vector<128xf32>
    %276 = vector.shape_cast %275 : vector<128xf32> to vector<1x1x128xf32>
    %277 = vector.broadcast %276 : vector<1x1x128xf32> to vector<2x16x128xf32>
    %278 = arith.mulf %223, %277 : vector<2x16x128xf32>
    %279 = arith.addf %273, %278 : vector<2x16x128xf32>
    %c7_86 = arith.constant 7 : index
    %c0_87 = arith.constant 0 : index
    %280 = vector.load %arg10[%c7_86, %c0_87] : memref<9x128xf32, #tpu.memory_space<vmem>>, vector<1x128xf32>
    %281 = vector.shape_cast %280 : vector<1x128xf32> to vector<128xf32>
    %282 = vector.shape_cast %281 : vector<128xf32> to vector<1x1x128xf32>
    %283 = vector.broadcast %282 : vector<1x1x128xf32> to vector<2x16x128xf32>
    %284 = arith.mulf %262, %283 : vector<2x16x128xf32>
    %285 = arith.addf %279, %284 : vector<2x16x128xf32>
    %286 = vector.extract_strided_slice %215 {offsets = [0, 0, 0], sizes = [2, 16, 128], strides = [1, 1, 1]} : vector<2x24x128xf32> to vector<2x16x128xf32>
    %c2_88 = arith.constant 2 : index
    %c0_89 = arith.constant 0 : index
    %287 = vector.load %arg11[%c2_88, %c0_89] : memref<25x128xf32, #tpu.memory_space<vmem>>, vector<1x128xf32>
    %288 = vector.shape_cast %287 : vector<1x128xf32> to vector<128xf32>
    %289 = vector.shape_cast %288 : vector<128xf32> to vector<1x1x128xf32>
    %290 = vector.broadcast %289 : vector<1x1x128xf32> to vector<2x16x128xf32>
    %291 = arith.mulf %286, %290 : vector<2x16x128xf32>
    %c7_90 = arith.constant 7 : index
    %c0_91 = arith.constant 0 : index
    %292 = vector.load %arg11[%c7_90, %c0_91] : memref<25x128xf32, #tpu.memory_space<vmem>>, vector<1x128xf32>
    %293 = vector.shape_cast %292 : vector<1x128xf32> to vector<128xf32>
    %294 = vector.shape_cast %293 : vector<128xf32> to vector<1x1x128xf32>
    %295 = vector.broadcast %294 : vector<1x1x128xf32> to vector<2x16x128xf32>
    %296 = arith.mulf %237, %295 : vector<2x16x128xf32>
    %297 = arith.addf %291, %296 : vector<2x16x128xf32>
    %c12_92 = arith.constant 12 : index
    %c0_93 = arith.constant 0 : index
    %298 = vector.load %arg11[%c12_92, %c0_93] : memref<25x128xf32, #tpu.memory_space<vmem>>, vector<1x128xf32>
    %299 = vector.shape_cast %298 : vector<1x128xf32> to vector<128xf32>
    %300 = vector.shape_cast %299 : vector<128xf32> to vector<1x1x128xf32>
    %301 = vector.broadcast %300 : vector<1x1x128xf32> to vector<2x16x128xf32>
    %302 = arith.mulf %223, %301 : vector<2x16x128xf32>
    %303 = arith.addf %297, %302 : vector<2x16x128xf32>
    %c17_94 = arith.constant 17 : index
    %c0_95 = arith.constant 0 : index
    %304 = vector.load %arg11[%c17_94, %c0_95] : memref<25x128xf32, #tpu.memory_space<vmem>>, vector<1x128xf32>
    %305 = vector.shape_cast %304 : vector<1x128xf32> to vector<128xf32>
    %306 = vector.shape_cast %305 : vector<128xf32> to vector<1x1x128xf32>
    %307 = vector.broadcast %306 : vector<1x1x128xf32> to vector<2x16x128xf32>
    %308 = arith.mulf %262, %307 : vector<2x16x128xf32>
    %309 = arith.addf %303, %308 : vector<2x16x128xf32>
    %310 = vector.extract_strided_slice %215 {offsets = [0, 8, 0], sizes = [2, 16, 128], strides = [1, 1, 1]} : vector<2x24x128xf32> to vector<2x16x128xf32>
    %c22_96 = arith.constant 22 : index
    %c0_97 = arith.constant 0 : index
    %311 = vector.load %arg11[%c22_96, %c0_97] : memref<25x128xf32, #tpu.memory_space<vmem>>, vector<1x128xf32>
    %312 = vector.shape_cast %311 : vector<1x128xf32> to vector<128xf32>
    %313 = vector.shape_cast %312 : vector<128xf32> to vector<1x1x128xf32>
    %314 = vector.broadcast %313 : vector<1x1x128xf32> to vector<2x16x128xf32>
    %315 = arith.mulf %310, %314 : vector<2x16x128xf32>
    %316 = arith.addf %309, %315 : vector<2x16x128xf32>
    %317 = vector.shape_cast %6 : vector<2x24x128xf32> to vector<48x128xf32>
    %c32_i32 = arith.constant 32 : i32
    %318 = tpu.dynamic_rotate %317 by %c32_i32 dim 1 : vector<48x128xf32>, i32 -> vector<48x128xf32>
    %319 = vector.shape_cast %318 : vector<48x128xf32> to vector<2x24x128xf32>
    %c0_98 = arith.constant 0 : index
    %c0_99 = arith.constant 0 : index
    %320 = vector.load %arg2[%c0_98, %c0_99] : memref<6x128xf32, #tpu.memory_space<vmem>>, vector<1x128xf32>
    %321 = vector.shape_cast %320 : vector<1x128xf32> to vector<128xf32>
    %322 = vector.shape_cast %321 : vector<128xf32> to vector<1x1x128xf32>
    %323 = vector.broadcast %322 : vector<1x1x128xf32> to vector<2x24x128xf32>
    %324 = arith.mulf %319, %323 : vector<2x24x128xf32>
    %cst_100 = arith.constant 0.000000e+00 : f32
    %325 = vector.broadcast %cst_100 : f32 to vector<2x24x128xf32>
    %326 = arith.maximumf %324, %325 : vector<2x24x128xf32>
    %327 = vector.extract_strided_slice %326 {offsets = [0, 0, 0], sizes = [2, 16, 128], strides = [1, 1, 1]} : vector<2x24x128xf32> to vector<2x16x128xf32>
    %c0_101 = arith.constant 0 : index
    %c0_102 = arith.constant 0 : index
    %328 = vector.load %arg11[%c0_101, %c0_102] : memref<25x128xf32, #tpu.memory_space<vmem>>, vector<1x128xf32>
    %329 = vector.shape_cast %328 : vector<1x128xf32> to vector<128xf32>
    %330 = vector.shape_cast %329 : vector<128xf32> to vector<1x1x128xf32>
    %331 = vector.broadcast %330 : vector<1x1x128xf32> to vector<2x16x128xf32>
    %332 = arith.mulf %327, %331 : vector<2x16x128xf32>
    %333 = arith.addf %316, %332 : vector<2x16x128xf32>
    %334 = vector.extract_strided_slice %326 {offsets = [0, 2, 0], sizes = [2, 16, 128], strides = [1, 1, 1]} : vector<2x24x128xf32> to vector<2x16x128xf32>
    %c5_103 = arith.constant 5 : index
    %c0_104 = arith.constant 0 : index
    %335 = vector.load %arg11[%c5_103, %c0_104] : memref<25x128xf32, #tpu.memory_space<vmem>>, vector<1x128xf32>
    %336 = vector.shape_cast %335 : vector<1x128xf32> to vector<128xf32>
    %337 = vector.shape_cast %336 : vector<128xf32> to vector<1x1x128xf32>
    %338 = vector.broadcast %337 : vector<1x1x128xf32> to vector<2x16x128xf32>
    %339 = arith.mulf %334, %338 : vector<2x16x128xf32>
    %340 = arith.addf %333, %339 : vector<2x16x128xf32>
    %341 = vector.extract_strided_slice %326 {offsets = [0, 4, 0], sizes = [2, 16, 128], strides = [1, 1, 1]} : vector<2x24x128xf32> to vector<2x16x128xf32>
    %c10 = arith.constant 10 : index
    %c0_105 = arith.constant 0 : index
    %342 = vector.load %arg11[%c10, %c0_105] : memref<25x128xf32, #tpu.memory_space<vmem>>, vector<1x128xf32>
    %343 = vector.shape_cast %342 : vector<1x128xf32> to vector<128xf32>
    %344 = vector.shape_cast %343 : vector<128xf32> to vector<1x1x128xf32>
    %345 = vector.broadcast %344 : vector<1x1x128xf32> to vector<2x16x128xf32>
    %346 = arith.mulf %341, %345 : vector<2x16x128xf32>
    %347 = arith.addf %340, %346 : vector<2x16x128xf32>
    %348 = vector.extract_strided_slice %326 {offsets = [0, 6, 0], sizes = [2, 16, 128], strides = [1, 1, 1]} : vector<2x24x128xf32> to vector<2x16x128xf32>
    %c15 = arith.constant 15 : index
    %c0_106 = arith.constant 0 : index
    %349 = vector.load %arg11[%c15, %c0_106] : memref<25x128xf32, #tpu.memory_space<vmem>>, vector<1x128xf32>
    %350 = vector.shape_cast %349 : vector<1x128xf32> to vector<128xf32>
    %351 = vector.shape_cast %350 : vector<128xf32> to vector<1x1x128xf32>
    %352 = vector.broadcast %351 : vector<1x1x128xf32> to vector<2x16x128xf32>
    %353 = arith.mulf %348, %352 : vector<2x16x128xf32>
    %354 = arith.addf %347, %353 : vector<2x16x128xf32>
    %355 = vector.extract_strided_slice %326 {offsets = [0, 8, 0], sizes = [2, 16, 128], strides = [1, 1, 1]} : vector<2x24x128xf32> to vector<2x16x128xf32>
    %c20 = arith.constant 20 : index
    %c0_107 = arith.constant 0 : index
    %356 = vector.load %arg11[%c20, %c0_107] : memref<25x128xf32, #tpu.memory_space<vmem>>, vector<1x128xf32>
    %357 = vector.shape_cast %356 : vector<1x128xf32> to vector<128xf32>
    %358 = vector.shape_cast %357 : vector<128xf32> to vector<1x1x128xf32>
    %359 = vector.broadcast %358 : vector<1x1x128xf32> to vector<2x16x128xf32>
    %360 = arith.mulf %355, %359 : vector<2x16x128xf32>
    %361 = arith.addf %354, %360 : vector<2x16x128xf32>
    %362 = vector.shape_cast %6 : vector<2x24x128xf32> to vector<48x128xf32>
    %c16_i32 = arith.constant 16 : i32
    %363 = tpu.dynamic_rotate %362 by %c16_i32 dim 1 : vector<48x128xf32>, i32 -> vector<48x128xf32>
    %364 = vector.shape_cast %363 : vector<48x128xf32> to vector<2x24x128xf32>
    %c1_108 = arith.constant 1 : index
    %c0_109 = arith.constant 0 : index
    %365 = vector.load %arg2[%c1_108, %c0_109] : memref<6x128xf32, #tpu.memory_space<vmem>>, vector<1x128xf32>
    %366 = vector.shape_cast %365 : vector<1x128xf32> to vector<128xf32>
    %367 = vector.shape_cast %366 : vector<128xf32> to vector<1x1x128xf32>
    %368 = vector.broadcast %367 : vector<1x1x128xf32> to vector<2x24x128xf32>
    %369 = arith.mulf %364, %368 : vector<2x24x128xf32>
    %cst_110 = arith.constant 0.000000e+00 : f32
    %370 = vector.broadcast %cst_110 : f32 to vector<2x24x128xf32>
    %371 = arith.maximumf %369, %370 : vector<2x24x128xf32>
    %372 = vector.extract_strided_slice %371 {offsets = [0, 2, 0], sizes = [2, 16, 128], strides = [1, 1, 1]} : vector<2x24x128xf32> to vector<2x16x128xf32>
    %c0_111 = arith.constant 0 : index
    %c0_112 = arith.constant 0 : index
    %373 = vector.load %arg8[%c0_111, %c0_112] : memref<25x128xf32, #tpu.memory_space<vmem>>, vector<1x128xf32>
    %374 = vector.shape_cast %373 : vector<1x128xf32> to vector<128xf32>
    %375 = vector.shape_cast %374 : vector<128xf32> to vector<1x1x128xf32>
    %376 = vector.broadcast %375 : vector<1x1x128xf32> to vector<2x16x128xf32>
    %377 = arith.mulf %372, %376 : vector<2x16x128xf32>
    %378 = arith.addf %268, %377 : vector<2x16x128xf32>
    %379 = vector.extract_strided_slice %371 {offsets = [0, 3, 0], sizes = [2, 16, 128], strides = [1, 1, 1]} : vector<2x24x128xf32> to vector<2x16x128xf32>
    %c5_113 = arith.constant 5 : index
    %c0_114 = arith.constant 0 : index
    %380 = vector.load %arg8[%c5_113, %c0_114] : memref<25x128xf32, #tpu.memory_space<vmem>>, vector<1x128xf32>
    %381 = vector.shape_cast %380 : vector<1x128xf32> to vector<128xf32>
    %382 = vector.shape_cast %381 : vector<128xf32> to vector<1x1x128xf32>
    %383 = vector.broadcast %382 : vector<1x1x128xf32> to vector<2x16x128xf32>
    %384 = arith.mulf %379, %383 : vector<2x16x128xf32>
    %385 = arith.addf %378, %384 : vector<2x16x128xf32>
    %386 = vector.extract_strided_slice %371 {offsets = [0, 4, 0], sizes = [2, 16, 128], strides = [1, 1, 1]} : vector<2x24x128xf32> to vector<2x16x128xf32>
    %c10_115 = arith.constant 10 : index
    %c0_116 = arith.constant 0 : index
    %387 = vector.load %arg8[%c10_115, %c0_116] : memref<25x128xf32, #tpu.memory_space<vmem>>, vector<1x128xf32>
    %388 = vector.shape_cast %387 : vector<1x128xf32> to vector<128xf32>
    %389 = vector.shape_cast %388 : vector<128xf32> to vector<1x1x128xf32>
    %390 = vector.broadcast %389 : vector<1x1x128xf32> to vector<2x16x128xf32>
    %391 = arith.mulf %386, %390 : vector<2x16x128xf32>
    %392 = arith.addf %385, %391 : vector<2x16x128xf32>
    %393 = vector.extract_strided_slice %371 {offsets = [0, 5, 0], sizes = [2, 16, 128], strides = [1, 1, 1]} : vector<2x24x128xf32> to vector<2x16x128xf32>
    %c15_117 = arith.constant 15 : index
    %c0_118 = arith.constant 0 : index
    %394 = vector.load %arg8[%c15_117, %c0_118] : memref<25x128xf32, #tpu.memory_space<vmem>>, vector<1x128xf32>
    %395 = vector.shape_cast %394 : vector<1x128xf32> to vector<128xf32>
    %396 = vector.shape_cast %395 : vector<128xf32> to vector<1x1x128xf32>
    %397 = vector.broadcast %396 : vector<1x1x128xf32> to vector<2x16x128xf32>
    %398 = arith.mulf %393, %397 : vector<2x16x128xf32>
    %399 = arith.addf %392, %398 : vector<2x16x128xf32>
    %400 = vector.extract_strided_slice %371 {offsets = [0, 6, 0], sizes = [2, 16, 128], strides = [1, 1, 1]} : vector<2x24x128xf32> to vector<2x16x128xf32>
    %c20_119 = arith.constant 20 : index
    %c0_120 = arith.constant 0 : index
    %401 = vector.load %arg8[%c20_119, %c0_120] : memref<25x128xf32, #tpu.memory_space<vmem>>, vector<1x128xf32>
    %402 = vector.shape_cast %401 : vector<1x128xf32> to vector<128xf32>
    %403 = vector.shape_cast %402 : vector<128xf32> to vector<1x1x128xf32>
    %404 = vector.broadcast %403 : vector<1x1x128xf32> to vector<2x16x128xf32>
    %405 = arith.mulf %400, %404 : vector<2x16x128xf32>
    %406 = arith.addf %399, %405 : vector<2x16x128xf32>
    %c0_121 = arith.constant 0 : index
    %c0_122 = arith.constant 0 : index
    %407 = vector.load %arg10[%c0_121, %c0_122] : memref<9x128xf32, #tpu.memory_space<vmem>>, vector<1x128xf32>
    %408 = vector.shape_cast %407 : vector<1x128xf32> to vector<128xf32>
    %409 = vector.shape_cast %408 : vector<128xf32> to vector<1x1x128xf32>
    %410 = vector.broadcast %409 : vector<1x1x128xf32> to vector<2x16x128xf32>
    %411 = arith.mulf %372, %410 : vector<2x16x128xf32>
    %412 = arith.addf %285, %411 : vector<2x16x128xf32>
    %c3_123 = arith.constant 3 : index
    %c0_124 = arith.constant 0 : index
    %413 = vector.load %arg10[%c3_123, %c0_124] : memref<9x128xf32, #tpu.memory_space<vmem>>, vector<1x128xf32>
    %414 = vector.shape_cast %413 : vector<1x128xf32> to vector<128xf32>
    %415 = vector.shape_cast %414 : vector<128xf32> to vector<1x1x128xf32>
    %416 = vector.broadcast %415 : vector<1x1x128xf32> to vector<2x16x128xf32>
    %417 = arith.mulf %386, %416 : vector<2x16x128xf32>
    %418 = arith.addf %412, %417 : vector<2x16x128xf32>
    %c6_125 = arith.constant 6 : index
    %c0_126 = arith.constant 0 : index
    %419 = vector.load %arg10[%c6_125, %c0_126] : memref<9x128xf32, #tpu.memory_space<vmem>>, vector<1x128xf32>
    %420 = vector.shape_cast %419 : vector<1x128xf32> to vector<128xf32>
    %421 = vector.shape_cast %420 : vector<128xf32> to vector<1x1x128xf32>
    %422 = vector.broadcast %421 : vector<1x1x128xf32> to vector<2x16x128xf32>
    %423 = arith.mulf %400, %422 : vector<2x16x128xf32>
    %424 = arith.addf %418, %423 : vector<2x16x128xf32>
    %425 = vector.extract_strided_slice %371 {offsets = [0, 0, 0], sizes = [2, 16, 128], strides = [1, 1, 1]} : vector<2x24x128xf32> to vector<2x16x128xf32>
    %c1_127 = arith.constant 1 : index
    %c0_128 = arith.constant 0 : index
    %426 = vector.load %arg11[%c1_127, %c0_128] : memref<25x128xf32, #tpu.memory_space<vmem>>, vector<1x128xf32>
    %427 = vector.shape_cast %426 : vector<1x128xf32> to vector<128xf32>
    %428 = vector.shape_cast %427 : vector<128xf32> to vector<1x1x128xf32>
    %429 = vector.broadcast %428 : vector<1x1x128xf32> to vector<2x16x128xf32>
    %430 = arith.mulf %425, %429 : vector<2x16x128xf32>
    %431 = arith.addf %361, %430 : vector<2x16x128xf32>
    %c6_129 = arith.constant 6 : index
    %c0_130 = arith.constant 0 : index
    %432 = vector.load %arg11[%c6_129, %c0_130] : memref<25x128xf32, #tpu.memory_space<vmem>>, vector<1x128xf32>
    %433 = vector.shape_cast %432 : vector<1x128xf32> to vector<128xf32>
    %434 = vector.shape_cast %433 : vector<128xf32> to vector<1x1x128xf32>
    %435 = vector.broadcast %434 : vector<1x1x128xf32> to vector<2x16x128xf32>
    %436 = arith.mulf %372, %435 : vector<2x16x128xf32>
    %437 = arith.addf %431, %436 : vector<2x16x128xf32>
    %c11_131 = arith.constant 11 : index
    %c0_132 = arith.constant 0 : index
    %438 = vector.load %arg11[%c11_131, %c0_132] : memref<25x128xf32, #tpu.memory_space<vmem>>, vector<1x128xf32>
    %439 = vector.shape_cast %438 : vector<1x128xf32> to vector<128xf32>
    %440 = vector.shape_cast %439 : vector<128xf32> to vector<1x1x128xf32>
    %441 = vector.broadcast %440 : vector<1x1x128xf32> to vector<2x16x128xf32>
    %442 = arith.mulf %386, %441 : vector<2x16x128xf32>
    %443 = arith.addf %437, %442 : vector<2x16x128xf32>
    %c16_133 = arith.constant 16 : index
    %c0_134 = arith.constant 0 : index
    %444 = vector.load %arg11[%c16_133, %c0_134] : memref<25x128xf32, #tpu.memory_space<vmem>>, vector<1x128xf32>
    %445 = vector.shape_cast %444 : vector<1x128xf32> to vector<128xf32>
    %446 = vector.shape_cast %445 : vector<128xf32> to vector<1x1x128xf32>
    %447 = vector.broadcast %446 : vector<1x1x128xf32> to vector<2x16x128xf32>
    %448 = arith.mulf %400, %447 : vector<2x16x128xf32>
    %449 = arith.addf %443, %448 : vector<2x16x128xf32>
    %450 = vector.extract_strided_slice %371 {offsets = [0, 8, 0], sizes = [2, 16, 128], strides = [1, 1, 1]} : vector<2x24x128xf32> to vector<2x16x128xf32>
    %c21_135 = arith.constant 21 : index
    %c0_136 = arith.constant 0 : index
    %451 = vector.load %arg11[%c21_135, %c0_136] : memref<25x128xf32, #tpu.memory_space<vmem>>, vector<1x128xf32>
    %452 = vector.shape_cast %451 : vector<1x128xf32> to vector<128xf32>
    %453 = vector.shape_cast %452 : vector<128xf32> to vector<1x1x128xf32>
    %454 = vector.broadcast %453 : vector<1x1x128xf32> to vector<2x16x128xf32>
    %455 = arith.mulf %450, %454 : vector<2x16x128xf32>
    %456 = arith.addf %449, %455 : vector<2x16x128xf32>
    %457 = vector.shape_cast %6 : vector<2x24x128xf32> to vector<48x128xf32>
    %c112_i32 = arith.constant 112 : i32
    %458 = tpu.dynamic_rotate %457 by %c112_i32 dim 1 : vector<48x128xf32>, i32 -> vector<48x128xf32>
    %459 = vector.shape_cast %458 : vector<48x128xf32> to vector<2x24x128xf32>
    %c4_137 = arith.constant 4 : index
    %c0_138 = arith.constant 0 : index
    %460 = vector.load %arg2[%c4_137, %c0_138] : memref<6x128xf32, #tpu.memory_space<vmem>>, vector<1x128xf32>
    %461 = vector.shape_cast %460 : vector<1x128xf32> to vector<128xf32>
    %462 = vector.shape_cast %461 : vector<128xf32> to vector<1x1x128xf32>
    %463 = vector.broadcast %462 : vector<1x1x128xf32> to vector<2x24x128xf32>
    %464 = arith.mulf %459, %463 : vector<2x24x128xf32>
    %cst_139 = arith.constant 0.000000e+00 : f32
    %465 = vector.broadcast %cst_139 : f32 to vector<2x24x128xf32>
    %466 = arith.maximumf %464, %465 : vector<2x24x128xf32>
    %467 = vector.extract_strided_slice %466 {offsets = [0, 2, 0], sizes = [2, 16, 128], strides = [1, 1, 1]} : vector<2x24x128xf32> to vector<2x16x128xf32>
    %c4_140 = arith.constant 4 : index
    %c0_141 = arith.constant 0 : index
    %468 = vector.load %arg8[%c4_140, %c0_141] : memref<25x128xf32, #tpu.memory_space<vmem>>, vector<1x128xf32>
    %469 = vector.shape_cast %468 : vector<1x128xf32> to vector<128xf32>
    %470 = vector.shape_cast %469 : vector<128xf32> to vector<1x1x128xf32>
    %471 = vector.broadcast %470 : vector<1x1x128xf32> to vector<2x16x128xf32>
    %472 = arith.mulf %467, %471 : vector<2x16x128xf32>
    %473 = arith.addf %406, %472 : vector<2x16x128xf32>
    %474 = vector.extract_strided_slice %466 {offsets = [0, 3, 0], sizes = [2, 16, 128], strides = [1, 1, 1]} : vector<2x24x128xf32> to vector<2x16x128xf32>
    %c9 = arith.constant 9 : index
    %c0_142 = arith.constant 0 : index
    %475 = vector.load %arg8[%c9, %c0_142] : memref<25x128xf32, #tpu.memory_space<vmem>>, vector<1x128xf32>
    %476 = vector.shape_cast %475 : vector<1x128xf32> to vector<128xf32>
    %477 = vector.shape_cast %476 : vector<128xf32> to vector<1x1x128xf32>
    %478 = vector.broadcast %477 : vector<1x1x128xf32> to vector<2x16x128xf32>
    %479 = arith.mulf %474, %478 : vector<2x16x128xf32>
    %480 = arith.addf %473, %479 : vector<2x16x128xf32>
    %481 = vector.extract_strided_slice %466 {offsets = [0, 4, 0], sizes = [2, 16, 128], strides = [1, 1, 1]} : vector<2x24x128xf32> to vector<2x16x128xf32>
    %c14 = arith.constant 14 : index
    %c0_143 = arith.constant 0 : index
    %482 = vector.load %arg8[%c14, %c0_143] : memref<25x128xf32, #tpu.memory_space<vmem>>, vector<1x128xf32>
    %483 = vector.shape_cast %482 : vector<1x128xf32> to vector<128xf32>
    %484 = vector.shape_cast %483 : vector<128xf32> to vector<1x1x128xf32>
    %485 = vector.broadcast %484 : vector<1x1x128xf32> to vector<2x16x128xf32>
    %486 = arith.mulf %481, %485 : vector<2x16x128xf32>
    %487 = arith.addf %480, %486 : vector<2x16x128xf32>
    %488 = vector.extract_strided_slice %466 {offsets = [0, 5, 0], sizes = [2, 16, 128], strides = [1, 1, 1]} : vector<2x24x128xf32> to vector<2x16x128xf32>
    %c19 = arith.constant 19 : index
    %c0_144 = arith.constant 0 : index
    %489 = vector.load %arg8[%c19, %c0_144] : memref<25x128xf32, #tpu.memory_space<vmem>>, vector<1x128xf32>
    %490 = vector.shape_cast %489 : vector<1x128xf32> to vector<128xf32>
    %491 = vector.shape_cast %490 : vector<128xf32> to vector<1x1x128xf32>
    %492 = vector.broadcast %491 : vector<1x1x128xf32> to vector<2x16x128xf32>
    %493 = arith.mulf %488, %492 : vector<2x16x128xf32>
    %494 = arith.addf %487, %493 : vector<2x16x128xf32>
    %495 = vector.extract_strided_slice %466 {offsets = [0, 6, 0], sizes = [2, 16, 128], strides = [1, 1, 1]} : vector<2x24x128xf32> to vector<2x16x128xf32>
    %c24 = arith.constant 24 : index
    %c0_145 = arith.constant 0 : index
    %496 = vector.load %arg8[%c24, %c0_145] : memref<25x128xf32, #tpu.memory_space<vmem>>, vector<1x128xf32>
    %497 = vector.shape_cast %496 : vector<1x128xf32> to vector<128xf32>
    %498 = vector.shape_cast %497 : vector<128xf32> to vector<1x1x128xf32>
    %499 = vector.broadcast %498 : vector<1x1x128xf32> to vector<2x16x128xf32>
    %500 = arith.mulf %495, %499 : vector<2x16x128xf32>
    %501 = arith.addf %494, %500 : vector<2x16x128xf32>
    %c2_146 = arith.constant 2 : index
    %c0_147 = arith.constant 0 : index
    %502 = vector.load %arg10[%c2_146, %c0_147] : memref<9x128xf32, #tpu.memory_space<vmem>>, vector<1x128xf32>
    %503 = vector.shape_cast %502 : vector<1x128xf32> to vector<128xf32>
    %504 = vector.shape_cast %503 : vector<128xf32> to vector<1x1x128xf32>
    %505 = vector.broadcast %504 : vector<1x1x128xf32> to vector<2x16x128xf32>
    %506 = arith.mulf %467, %505 : vector<2x16x128xf32>
    %507 = arith.addf %424, %506 : vector<2x16x128xf32>
    %c5_148 = arith.constant 5 : index
    %c0_149 = arith.constant 0 : index
    %508 = vector.load %arg10[%c5_148, %c0_149] : memref<9x128xf32, #tpu.memory_space<vmem>>, vector<1x128xf32>
    %509 = vector.shape_cast %508 : vector<1x128xf32> to vector<128xf32>
    %510 = vector.shape_cast %509 : vector<128xf32> to vector<1x1x128xf32>
    %511 = vector.broadcast %510 : vector<1x1x128xf32> to vector<2x16x128xf32>
    %512 = arith.mulf %481, %511 : vector<2x16x128xf32>
    %513 = arith.addf %507, %512 : vector<2x16x128xf32>
    %c8_150 = arith.constant 8 : index
    %c0_151 = arith.constant 0 : index
    %514 = vector.load %arg10[%c8_150, %c0_151] : memref<9x128xf32, #tpu.memory_space<vmem>>, vector<1x128xf32>
    %515 = vector.shape_cast %514 : vector<1x128xf32> to vector<128xf32>
    %516 = vector.shape_cast %515 : vector<128xf32> to vector<1x1x128xf32>
    %517 = vector.broadcast %516 : vector<1x1x128xf32> to vector<2x16x128xf32>
    %518 = arith.mulf %495, %517 : vector<2x16x128xf32>
    %519 = arith.addf %513, %518 : vector<2x16x128xf32>
    %520 = vector.extract_strided_slice %466 {offsets = [0, 0, 0], sizes = [2, 16, 128], strides = [1, 1, 1]} : vector<2x24x128xf32> to vector<2x16x128xf32>
    %c3_152 = arith.constant 3 : index
    %c0_153 = arith.constant 0 : index
    %521 = vector.load %arg11[%c3_152, %c0_153] : memref<25x128xf32, #tpu.memory_space<vmem>>, vector<1x128xf32>
    %522 = vector.shape_cast %521 : vector<1x128xf32> to vector<128xf32>
    %523 = vector.shape_cast %522 : vector<128xf32> to vector<1x1x128xf32>
    %524 = vector.broadcast %523 : vector<1x1x128xf32> to vector<2x16x128xf32>
    %525 = arith.mulf %520, %524 : vector<2x16x128xf32>
    %526 = arith.addf %456, %525 : vector<2x16x128xf32>
    %c8_154 = arith.constant 8 : index
    %c0_155 = arith.constant 0 : index
    %527 = vector.load %arg11[%c8_154, %c0_155] : memref<25x128xf32, #tpu.memory_space<vmem>>, vector<1x128xf32>
    %528 = vector.shape_cast %527 : vector<1x128xf32> to vector<128xf32>
    %529 = vector.shape_cast %528 : vector<128xf32> to vector<1x1x128xf32>
    %530 = vector.broadcast %529 : vector<1x1x128xf32> to vector<2x16x128xf32>
    %531 = arith.mulf %467, %530 : vector<2x16x128xf32>
    %532 = arith.addf %526, %531 : vector<2x16x128xf32>
    %c13_156 = arith.constant 13 : index
    %c0_157 = arith.constant 0 : index
    %533 = vector.load %arg11[%c13_156, %c0_157] : memref<25x128xf32, #tpu.memory_space<vmem>>, vector<1x128xf32>
    %534 = vector.shape_cast %533 : vector<1x128xf32> to vector<128xf32>
    %535 = vector.shape_cast %534 : vector<128xf32> to vector<1x1x128xf32>
    %536 = vector.broadcast %535 : vector<1x1x128xf32> to vector<2x16x128xf32>
    %537 = arith.mulf %481, %536 : vector<2x16x128xf32>
    %538 = arith.addf %532, %537 : vector<2x16x128xf32>
    %c18_158 = arith.constant 18 : index
    %c0_159 = arith.constant 0 : index
    %539 = vector.load %arg11[%c18_158, %c0_159] : memref<25x128xf32, #tpu.memory_space<vmem>>, vector<1x128xf32>
    %540 = vector.shape_cast %539 : vector<1x128xf32> to vector<128xf32>
    %541 = vector.shape_cast %540 : vector<128xf32> to vector<1x1x128xf32>
    %542 = vector.broadcast %541 : vector<1x1x128xf32> to vector<2x16x128xf32>
    %543 = arith.mulf %495, %542 : vector<2x16x128xf32>
    %544 = arith.addf %538, %543 : vector<2x16x128xf32>
    %545 = vector.extract_strided_slice %466 {offsets = [0, 8, 0], sizes = [2, 16, 128], strides = [1, 1, 1]} : vector<2x24x128xf32> to vector<2x16x128xf32>
    %c23_160 = arith.constant 23 : index
    %c0_161 = arith.constant 0 : index
    %546 = vector.load %arg11[%c23_160, %c0_161] : memref<25x128xf32, #tpu.memory_space<vmem>>, vector<1x128xf32>
    %547 = vector.shape_cast %546 : vector<1x128xf32> to vector<128xf32>
    %548 = vector.shape_cast %547 : vector<128xf32> to vector<1x1x128xf32>
    %549 = vector.broadcast %548 : vector<1x1x128xf32> to vector<2x16x128xf32>
    %550 = arith.mulf %545, %549 : vector<2x16x128xf32>
    %551 = arith.addf %544, %550 : vector<2x16x128xf32>
    %552 = vector.shape_cast %6 : vector<2x24x128xf32> to vector<48x128xf32>
    %c96_i32 = arith.constant 96 : i32
    %553 = tpu.dynamic_rotate %552 by %c96_i32 dim 1 : vector<48x128xf32>, i32 -> vector<48x128xf32>
    %554 = vector.shape_cast %553 : vector<48x128xf32> to vector<2x24x128xf32>
    %c5_162 = arith.constant 5 : index
    %c0_163 = arith.constant 0 : index
    %555 = vector.load %arg2[%c5_162, %c0_163] : memref<6x128xf32, #tpu.memory_space<vmem>>, vector<1x128xf32>
    %556 = vector.shape_cast %555 : vector<1x128xf32> to vector<128xf32>
    %557 = vector.shape_cast %556 : vector<128xf32> to vector<1x1x128xf32>
    %558 = vector.broadcast %557 : vector<1x1x128xf32> to vector<2x24x128xf32>
    %559 = arith.mulf %554, %558 : vector<2x24x128xf32>
    %cst_164 = arith.constant 0.000000e+00 : f32
    %560 = vector.broadcast %cst_164 : f32 to vector<2x24x128xf32>
    %561 = arith.maximumf %559, %560 : vector<2x24x128xf32>
    %562 = vector.extract_strided_slice %561 {offsets = [0, 0, 0], sizes = [2, 16, 128], strides = [1, 1, 1]} : vector<2x24x128xf32> to vector<2x16x128xf32>
    %c4_165 = arith.constant 4 : index
    %c0_166 = arith.constant 0 : index
    %563 = vector.load %arg11[%c4_165, %c0_166] : memref<25x128xf32, #tpu.memory_space<vmem>>, vector<1x128xf32>
    %564 = vector.shape_cast %563 : vector<1x128xf32> to vector<128xf32>
    %565 = vector.shape_cast %564 : vector<128xf32> to vector<1x1x128xf32>
    %566 = vector.broadcast %565 : vector<1x1x128xf32> to vector<2x16x128xf32>
    %567 = arith.mulf %562, %566 : vector<2x16x128xf32>
    %568 = arith.addf %551, %567 : vector<2x16x128xf32>
    %569 = vector.extract_strided_slice %561 {offsets = [0, 2, 0], sizes = [2, 16, 128], strides = [1, 1, 1]} : vector<2x24x128xf32> to vector<2x16x128xf32>
    %c9_167 = arith.constant 9 : index
    %c0_168 = arith.constant 0 : index
    %570 = vector.load %arg11[%c9_167, %c0_168] : memref<25x128xf32, #tpu.memory_space<vmem>>, vector<1x128xf32>
    %571 = vector.shape_cast %570 : vector<1x128xf32> to vector<128xf32>
    %572 = vector.shape_cast %571 : vector<128xf32> to vector<1x1x128xf32>
    %573 = vector.broadcast %572 : vector<1x1x128xf32> to vector<2x16x128xf32>
    %574 = arith.mulf %569, %573 : vector<2x16x128xf32>
    %575 = arith.addf %568, %574 : vector<2x16x128xf32>
    %576 = vector.extract_strided_slice %561 {offsets = [0, 4, 0], sizes = [2, 16, 128], strides = [1, 1, 1]} : vector<2x24x128xf32> to vector<2x16x128xf32>
    %c14_169 = arith.constant 14 : index
    %c0_170 = arith.constant 0 : index
    %577 = vector.load %arg11[%c14_169, %c0_170] : memref<25x128xf32, #tpu.memory_space<vmem>>, vector<1x128xf32>
    %578 = vector.shape_cast %577 : vector<1x128xf32> to vector<128xf32>
    %579 = vector.shape_cast %578 : vector<128xf32> to vector<1x1x128xf32>
    %580 = vector.broadcast %579 : vector<1x1x128xf32> to vector<2x16x128xf32>
    %581 = arith.mulf %576, %580 : vector<2x16x128xf32>
    %582 = arith.addf %575, %581 : vector<2x16x128xf32>
    %583 = vector.extract_strided_slice %561 {offsets = [0, 6, 0], sizes = [2, 16, 128], strides = [1, 1, 1]} : vector<2x24x128xf32> to vector<2x16x128xf32>
    %c19_171 = arith.constant 19 : index
    %c0_172 = arith.constant 0 : index
    %584 = vector.load %arg11[%c19_171, %c0_172] : memref<25x128xf32, #tpu.memory_space<vmem>>, vector<1x128xf32>
    %585 = vector.shape_cast %584 : vector<1x128xf32> to vector<128xf32>
    %586 = vector.shape_cast %585 : vector<128xf32> to vector<1x1x128xf32>
    %587 = vector.broadcast %586 : vector<1x1x128xf32> to vector<2x16x128xf32>
    %588 = arith.mulf %583, %587 : vector<2x16x128xf32>
    %589 = arith.addf %582, %588 : vector<2x16x128xf32>
    %590 = vector.extract_strided_slice %561 {offsets = [0, 8, 0], sizes = [2, 16, 128], strides = [1, 1, 1]} : vector<2x24x128xf32> to vector<2x16x128xf32>
    %c24_173 = arith.constant 24 : index
    %c0_174 = arith.constant 0 : index
    %591 = vector.load %arg11[%c24_173, %c0_174] : memref<25x128xf32, #tpu.memory_space<vmem>>, vector<1x128xf32>
    %592 = vector.shape_cast %591 : vector<1x128xf32> to vector<128xf32>
    %593 = vector.shape_cast %592 : vector<128xf32> to vector<1x1x128xf32>
    %594 = vector.broadcast %593 : vector<1x1x128xf32> to vector<2x16x128xf32>
    %595 = arith.mulf %590, %594 : vector<2x16x128xf32>
    %596 = arith.addf %589, %595 : vector<2x16x128xf32>
    %597 = vector.shape_cast %519 : vector<2x16x128xf32> to vector<32x128xf32>
    %c0_175 = arith.constant 0 : index
    %c0_176 = arith.constant 0 : index
    %598 = vector.load %arg18[%c0_175, %c0_176] : memref<32x256xf32, #tpu.memory_space<vmem>>, vector<32x128xf32>
    tpu.vector_store %arg18[%c0_175, %c0_176], %597 {strides = array<i32>} : memref<32x256xf32, #tpu.memory_space<vmem>>, vector<32x128xf32>,
    %599 = vector.shape_cast %596 : vector<2x16x128xf32> to vector<32x128xf32>
    %c0_177 = arith.constant 0 : index
    %c128 = arith.constant 128 : index
    %600 = vector.load %arg18[%c0_177, %c128] : memref<32x256xf32, #tpu.memory_space<vmem>>, vector<32x128xf32>
    tpu.vector_store %arg18[%c0_177, %c128], %599 {strides = array<i32>} : memref<32x256xf32, #tpu.memory_space<vmem>>, vector<32x128xf32>,
    %c0_178 = arith.constant 0 : index
    %c0_179 = arith.constant 0 : index
    %601 = vector.load %arg18[%c0_178, %c0_179] : memref<32x256xf32, #tpu.memory_space<vmem>>, vector<32x256xf32>
    %c0_180 = arith.constant 0 : index
    %c0_181 = arith.constant 0 : index
    %602 = vector.load %arg14[%c0_180, %c0_181] : memref<256x256xf32, #tpu.memory_space<vmem>>, vector<256x256xf32>
    %cst_182 = arith.constant dense<0.000000e+00> : vector<32x256xf32>
    %603 = tpu.matmul %601, %602, %cst_182 {dimension_numbers = #tpu.dot_dimension_numbers<[1], [0], [0], [1], [0, 0, 1, 1], [], []>} : vector<32x256xf32>, vector<256x256xf32>, vector<32x256xf32> -> vector<32x256xf32>
    %604 = vector.extract_strided_slice %603 {offsets = [0, 0], sizes = [32, 128], strides = [1, 1]} : vector<32x256xf32> to vector<32x128xf32>
    %605 = vector.shape_cast %604 : vector<32x128xf32> to vector<2x16x128xf32>
    %606 = vector.extract_strided_slice %603 {offsets = [0, 128], sizes = [32, 128], strides = [1, 1]} : vector<32x256xf32> to vector<32x128xf32>
    %607 = vector.shape_cast %606 : vector<32x128xf32> to vector<2x16x128xf32>
    %c6_183 = arith.constant 6 : index
    %608 = memref.load %arg0[%c6_183] : memref<8xf32, #tpu.memory_space<smem>>
    %609 = vector.shape_cast %605 : vector<2x16x128xf32> to vector<32x128xf32>
    %cst_184 = arith.constant dense<0.000000e+00> : vector<128xf32>
    %610 = vector.multi_reduction <add>, %609, %cst_184 [0] : vector<32x128xf32> to vector<128xf32>
    %611 = vector.shape_cast %610 : vector<128xf32> to vector<1x128xf32>
    %c0_185 = arith.constant 0 : index
    %c0_186 = arith.constant 0 : index
    %612 = vector.load %arg5[%c0_185, %c0_186] : memref<128x128xf32, #tpu.memory_space<vmem>>, vector<128x128xf32>
    %cst_187 = arith.constant dense<0.000000e+00> : vector<1x128xf32>
    %613 = tpu.matmul %611, %612, %cst_187 {dimension_numbers = #tpu.dot_dimension_numbers<[1], [0], [0], [1], [0, 0, 1, 1], [], []>} : vector<1x128xf32>, vector<128x128xf32>, vector<1x128xf32> -> vector<1x128xf32>
    %614 = vector.broadcast %613 : vector<1x128xf32> to vector<32x128xf32>
    %615 = arith.subf %609, %614 : vector<32x128xf32>
    %616 = arith.mulf %615, %615 : vector<32x128xf32>
    %cst_188 = arith.constant dense<0.000000e+00> : vector<128xf32>
    %617 = vector.multi_reduction <add>, %616, %cst_188 [0] : vector<32x128xf32> to vector<128xf32>
    %618 = vector.shape_cast %617 : vector<128xf32> to vector<1x128xf32>
    %c0_189 = arith.constant 0 : index
    %c0_190 = arith.constant 0 : index
    %619 = vector.load %arg5[%c0_189, %c0_190] : memref<128x128xf32, #tpu.memory_space<vmem>>, vector<128x128xf32>
    %cst_191 = arith.constant dense<0.000000e+00> : vector<1x128xf32>
    %620 = tpu.matmul %618, %619, %cst_191 {dimension_numbers = #tpu.dot_dimension_numbers<[1], [0], [0], [1], [0, 0, 1, 1], [], []>} : vector<1x128xf32>, vector<128x128xf32>, vector<1x128xf32> -> vector<1x128xf32>
    %cst_192 = arith.constant 9.99999974E-6 : f32
    %621 = vector.broadcast %cst_192 : f32 to vector<1x128xf32>
    %622 = arith.addf %620, %621 : vector<1x128xf32>
    %623 = math.rsqrt %622 : vector<1x128xf32>
    %624 = vector.broadcast %623 : vector<1x128xf32> to vector<32x128xf32>
    %625 = arith.mulf %615, %624 : vector<32x128xf32>
    %626 = vector.shape_cast %625 : vector<32x128xf32> to vector<2x16x128xf32>
    %627 = vector.broadcast %608 : f32 to vector<2x16x128xf32>
    %628 = arith.mulf %627, %626 : vector<2x16x128xf32>
    %629 = arith.addf %105, %628 : vector<2x16x128xf32>
    %c7_193 = arith.constant 7 : index
    %630 = memref.load %arg0[%c7_193] : memref<8xf32, #tpu.memory_space<smem>>
    %631 = vector.shape_cast %607 : vector<2x16x128xf32> to vector<32x128xf32>
    %cst_194 = arith.constant dense<0.000000e+00> : vector<128xf32>
    %632 = vector.multi_reduction <add>, %631, %cst_194 [0] : vector<32x128xf32> to vector<128xf32>
    %633 = vector.shape_cast %632 : vector<128xf32> to vector<1x128xf32>
    %c0_195 = arith.constant 0 : index
    %c0_196 = arith.constant 0 : index
    %634 = vector.load %arg5[%c0_195, %c0_196] : memref<128x128xf32, #tpu.memory_space<vmem>>, vector<128x128xf32>
    %cst_197 = arith.constant dense<0.000000e+00> : vector<1x128xf32>
    %635 = tpu.matmul %633, %634, %cst_197 {dimension_numbers = #tpu.dot_dimension_numbers<[1], [0], [0], [1], [0, 0, 1, 1], [], []>} : vector<1x128xf32>, vector<128x128xf32>, vector<1x128xf32> -> vector<1x128xf32>
    %636 = vector.broadcast %635 : vector<1x128xf32> to vector<32x128xf32>
    %637 = arith.subf %631, %636 : vector<32x128xf32>
    %638 = arith.mulf %637, %637 : vector<32x128xf32>
    %cst_198 = arith.constant dense<0.000000e+00> : vector<128xf32>
    %639 = vector.multi_reduction <add>, %638, %cst_198 [0] : vector<32x128xf32> to vector<128xf32>
    %640 = vector.shape_cast %639 : vector<128xf32> to vector<1x128xf32>
    %c0_199 = arith.constant 0 : index
    %c0_200 = arith.constant 0 : index
    %641 = vector.load %arg5[%c0_199, %c0_200] : memref<128x128xf32, #tpu.memory_space<vmem>>, vector<128x128xf32>
    %cst_201 = arith.constant dense<0.000000e+00> : vector<1x128xf32>
    %642 = tpu.matmul %640, %641, %cst_201 {dimension_numbers = #tpu.dot_dimension_numbers<[1], [0], [0], [1], [0, 0, 1, 1], [], []>} : vector<1x128xf32>, vector<128x128xf32>, vector<1x128xf32> -> vector<1x128xf32>
    %cst_202 = arith.constant 9.99999974E-6 : f32
    %643 = vector.broadcast %cst_202 : f32 to vector<1x128xf32>
    %644 = arith.addf %642, %643 : vector<1x128xf32>
    %645 = math.rsqrt %644 : vector<1x128xf32>
    %646 = vector.broadcast %645 : vector<1x128xf32> to vector<32x128xf32>
    %647 = arith.mulf %637, %646 : vector<32x128xf32>
    %648 = vector.shape_cast %647 : vector<32x128xf32> to vector<2x16x128xf32>
    %649 = vector.broadcast %630 : f32 to vector<2x16x128xf32>
    %650 = arith.mulf %649, %648 : vector<2x16x128xf32>
    %651 = arith.addf %629, %650 : vector<2x16x128xf32>
    %652 = vector.shape_cast %236 : vector<2x16x128xf32> to vector<32x128xf32>
    %c0_203 = arith.constant 0 : index
    %c0_204 = arith.constant 0 : index
    %653 = vector.load %arg18[%c0_203, %c0_204] : memref<32x256xf32, #tpu.memory_space<vmem>>, vector<32x128xf32>
    tpu.vector_store %arg18[%c0_203, %c0_204], %652 {strides = array<i32>} : memref<32x256xf32, #tpu.memory_space<vmem>>, vector<32x128xf32>,
    %654 = vector.shape_cast %501 : vector<2x16x128xf32> to vector<32x128xf32>
    %c0_205 = arith.constant 0 : index
    %c128_206 = arith.constant 128 : index
    %655 = vector.load %arg18[%c0_205, %c128_206] : memref<32x256xf32, #tpu.memory_space<vmem>>, vector<32x128xf32>
    tpu.vector_store %arg18[%c0_205, %c128_206], %654 {strides = array<i32>} : memref<32x256xf32, #tpu.memory_space<vmem>>, vector<32x128xf32>,
    %c0_207 = arith.constant 0 : index
    %c0_208 = arith.constant 0 : index
    %656 = vector.load %arg18[%c0_207, %c0_208] : memref<32x256xf32, #tpu.memory_space<vmem>>, vector<32x256xf32>
    %c0_209 = arith.constant 0 : index
    %c0_210 = arith.constant 0 : index
    %657 = vector.load %arg12[%c0_209, %c0_210] : memref<256x256xf32, #tpu.memory_space<vmem>>, vector<256x256xf32>
    %cst_211 = arith.constant dense<0.000000e+00> : vector<32x256xf32>
    %658 = tpu.matmul %656, %657, %cst_211 {dimension_numbers = #tpu.dot_dimension_numbers<[1], [0], [0], [1], [0, 0, 1, 1], [], []>} : vector<32x256xf32>, vector<256x256xf32>, vector<32x256xf32> -> vector<32x256xf32>
    %659 = vector.extract_strided_slice %658 {offsets = [0, 0], sizes = [32, 128], strides = [1, 1]} : vector<32x256xf32> to vector<32x128xf32>
    %660 = vector.shape_cast %659 : vector<32x128xf32> to vector<2x16x128xf32>
    %661 = vector.extract_strided_slice %658 {offsets = [0, 128], sizes = [32, 128], strides = [1, 1]} : vector<32x256xf32> to vector<32x128xf32>
    %662 = vector.shape_cast %661 : vector<32x128xf32> to vector<2x16x128xf32>
    %663 = vector.shape_cast %660 : vector<2x16x128xf32> to vector<32x128xf32>
    %cst_212 = arith.constant dense<0.000000e+00> : vector<128xf32>
    %664 = vector.multi_reduction <add>, %663, %cst_212 [0] : vector<32x128xf32> to vector<128xf32>
    %665 = vector.shape_cast %664 : vector<128xf32> to vector<1x128xf32>
    %c0_213 = arith.constant 0 : index
    %c0_214 = arith.constant 0 : index
    %666 = vector.load %arg5[%c0_213, %c0_214] : memref<128x128xf32, #tpu.memory_space<vmem>>, vector<128x128xf32>
    %cst_215 = arith.constant dense<0.000000e+00> : vector<1x128xf32>
    %667 = tpu.matmul %665, %666, %cst_215 {dimension_numbers = #tpu.dot_dimension_numbers<[1], [0], [0], [1], [0, 0, 1, 1], [], []>} : vector<1x128xf32>, vector<128x128xf32>, vector<1x128xf32> -> vector<1x128xf32>
    %668 = vector.broadcast %667 : vector<1x128xf32> to vector<32x128xf32>
    %669 = arith.subf %663, %668 : vector<32x128xf32>
    %670 = arith.mulf %669, %669 : vector<32x128xf32>
    %cst_216 = arith.constant dense<0.000000e+00> : vector<128xf32>
    %671 = vector.multi_reduction <add>, %670, %cst_216 [0] : vector<32x128xf32> to vector<128xf32>
    %672 = vector.shape_cast %671 : vector<128xf32> to vector<1x128xf32>
    %c0_217 = arith.constant 0 : index
    %c0_218 = arith.constant 0 : index
    %673 = vector.load %arg5[%c0_217, %c0_218] : memref<128x128xf32, #tpu.memory_space<vmem>>, vector<128x128xf32>
    %cst_219 = arith.constant dense<0.000000e+00> : vector<1x128xf32>
    %674 = tpu.matmul %672, %673, %cst_219 {dimension_numbers = #tpu.dot_dimension_numbers<[1], [0], [0], [1], [0, 0, 1, 1], [], []>} : vector<1x128xf32>, vector<128x128xf32>, vector<1x128xf32> -> vector<1x128xf32>
    %cst_220 = arith.constant 9.99999974E-6 : f32
    %675 = vector.broadcast %cst_220 : f32 to vector<1x128xf32>
    %676 = arith.addf %674, %675 : vector<1x128xf32>
    %677 = math.rsqrt %676 : vector<1x128xf32>
    %678 = vector.broadcast %677 : vector<1x128xf32> to vector<32x128xf32>
    %679 = arith.mulf %669, %678 : vector<32x128xf32>
    %680 = vector.shape_cast %679 : vector<32x128xf32> to vector<2x16x128xf32>
    %cst_221 = arith.constant 0.000000e+00 : f32
    %681 = vector.broadcast %cst_221 : f32 to vector<2x16x128xf32>
    %682 = arith.maximumf %680, %681 : vector<2x16x128xf32>
    %683 = vector.shape_cast %662 : vector<2x16x128xf32> to vector<32x128xf32>
    %cst_222 = arith.constant dense<0.000000e+00> : vector<128xf32>
    %684 = vector.multi_reduction <add>, %683, %cst_222 [0] : vector<32x128xf32> to vector<128xf32>
    %685 = vector.shape_cast %684 : vector<128xf32> to vector<1x128xf32>
    %c0_223 = arith.constant 0 : index
    %c0_224 = arith.constant 0 : index
    %686 = vector.load %arg5[%c0_223, %c0_224] : memref<128x128xf32, #tpu.memory_space<vmem>>, vector<128x128xf32>
    %cst_225 = arith.constant dense<0.000000e+00> : vector<1x128xf32>
    %687 = tpu.matmul %685, %686, %cst_225 {dimension_numbers = #tpu.dot_dimension_numbers<[1], [0], [0], [1], [0, 0, 1, 1], [], []>} : vector<1x128xf32>, vector<128x128xf32>, vector<1x128xf32> -> vector<1x128xf32>
    %688 = vector.broadcast %687 : vector<1x128xf32> to vector<32x128xf32>
    %689 = arith.subf %683, %688 : vector<32x128xf32>
    %690 = arith.mulf %689, %689 : vector<32x128xf32>
    %cst_226 = arith.constant dense<0.000000e+00> : vector<128xf32>
    %691 = vector.multi_reduction <add>, %690, %cst_226 [0] : vector<32x128xf32> to vector<128xf32>
    %692 = vector.shape_cast %691 : vector<128xf32> to vector<1x128xf32>
    %c0_227 = arith.constant 0 : index
    %c0_228 = arith.constant 0 : index
    %693 = vector.load %arg5[%c0_227, %c0_228] : memref<128x128xf32, #tpu.memory_space<vmem>>, vector<128x128xf32>
    %cst_229 = arith.constant dense<0.000000e+00> : vector<1x128xf32>
    %694 = tpu.matmul %692, %693, %cst_229 {dimension_numbers = #tpu.dot_dimension_numbers<[1], [0], [0], [1], [0, 0, 1, 1], [], []>} : vector<1x128xf32>, vector<128x128xf32>, vector<1x128xf32> -> vector<1x128xf32>
    %cst_230 = arith.constant 9.99999974E-6 : f32
    %695 = vector.broadcast %cst_230 : f32 to vector<1x128xf32>
    %696 = arith.addf %694, %695 : vector<1x128xf32>
    %697 = math.rsqrt %696 : vector<1x128xf32>
    %698 = vector.broadcast %697 : vector<1x128xf32> to vector<32x128xf32>
    %699 = arith.mulf %689, %698 : vector<32x128xf32>
    %700 = vector.shape_cast %699 : vector<32x128xf32> to vector<2x16x128xf32>
    %cst_231 = arith.constant 0.000000e+00 : f32
    %701 = vector.broadcast %cst_231 : f32 to vector<2x16x128xf32>
    %702 = arith.maximumf %700, %701 : vector<2x16x128xf32>
    %c0_232 = arith.constant 0 : index
    %c2_233 = arith.constant 2 : index
    %c0_234 = arith.constant 0 : index
    %703 = vector.load %arg17[%c0_232, %c2_233, %c0_234] : memref<2x20x128xf32, #tpu.memory_space<vmem>>, vector<2x16x128xf32>
    tpu.vector_store %arg17[%c0_232, %c2_233, %c0_234], %682 {strides = array<i32>} : memref<2x20x128xf32, #tpu.memory_space<vmem>>, vector<2x16x128xf32>,
    %c0_235 = arith.constant 0 : index
    %c0_236 = arith.constant 0 : index
    %c0_237 = arith.constant 0 : index
    %704 = vector.load %arg17[%c0_235, %c0_236, %c0_237] : memref<2x20x128xf32, #tpu.memory_space<vmem>>, vector<2x20x128xf32>
    %705 = vector.shape_cast %704 : vector<2x20x128xf32> to vector<40x128xf32>
    %c8_i32_238 = arith.constant 8 : i32
    %706 = tpu.dynamic_rotate %705 by %c8_i32_238 dim 1 : vector<40x128xf32>, i32 -> vector<40x128xf32>
    %707 = vector.shape_cast %706 : vector<40x128xf32> to vector<2x20x128xf32>
    %c2_239 = arith.constant 2 : index
    %c0_240 = arith.constant 0 : index
    %708 = vector.load %arg2[%c2_239, %c0_240] : memref<6x128xf32, #tpu.memory_space<vmem>>, vector<1x128xf32>
    %709 = vector.shape_cast %708 : vector<1x128xf32> to vector<128xf32>
    %710 = vector.shape_cast %709 : vector<128xf32> to vector<1x1x128xf32>
    %711 = vector.broadcast %710 : vector<1x1x128xf32> to vector<2x20x128xf32>
    %712 = arith.mulf %707, %711 : vector<2x20x128xf32>
    %713 = vector.extract_strided_slice %712 {offsets = [0, 1, 0], sizes = [2, 16, 128], strides = [1, 1, 1]} : vector<2x20x128xf32> to vector<2x16x128xf32>
    %c0_241 = arith.constant 0 : index
    %c0_242 = arith.constant 0 : index
    %714 = vector.load %arg7[%c0_241, %c0_242] : memref<9x128xf32, #tpu.memory_space<vmem>>, vector<1x128xf32>
    %715 = vector.shape_cast %714 : vector<1x128xf32> to vector<128xf32>
    %716 = vector.shape_cast %715 : vector<128xf32> to vector<1x1x128xf32>
    %717 = vector.broadcast %716 : vector<1x1x128xf32> to vector<2x16x128xf32>
    %718 = arith.mulf %713, %717 : vector<2x16x128xf32>
    %719 = vector.extract_strided_slice %712 {offsets = [0, 2, 0], sizes = [2, 16, 128], strides = [1, 1, 1]} : vector<2x20x128xf32> to vector<2x16x128xf32>
    %c3_243 = arith.constant 3 : index
    %c0_244 = arith.constant 0 : index
    %720 = vector.load %arg7[%c3_243, %c0_244] : memref<9x128xf32, #tpu.memory_space<vmem>>, vector<1x128xf32>
    %721 = vector.shape_cast %720 : vector<1x128xf32> to vector<128xf32>
    %722 = vector.shape_cast %721 : vector<128xf32> to vector<1x1x128xf32>
    %723 = vector.broadcast %722 : vector<1x1x128xf32> to vector<2x16x128xf32>
    %724 = arith.mulf %719, %723 : vector<2x16x128xf32>
    %725 = arith.addf %718, %724 : vector<2x16x128xf32>
    %726 = vector.extract_strided_slice %712 {offsets = [0, 3, 0], sizes = [2, 16, 128], strides = [1, 1, 1]} : vector<2x20x128xf32> to vector<2x16x128xf32>
    %c6_245 = arith.constant 6 : index
    %c0_246 = arith.constant 0 : index
    %727 = vector.load %arg7[%c6_245, %c0_246] : memref<9x128xf32, #tpu.memory_space<vmem>>, vector<1x128xf32>
    %728 = vector.shape_cast %727 : vector<1x128xf32> to vector<128xf32>
    %729 = vector.shape_cast %728 : vector<128xf32> to vector<1x1x128xf32>
    %730 = vector.broadcast %729 : vector<1x1x128xf32> to vector<2x16x128xf32>
    %731 = arith.mulf %726, %730 : vector<2x16x128xf32>
    %732 = arith.addf %725, %731 : vector<2x16x128xf32>
    %733 = vector.extract_strided_slice %704 {offsets = [0, 1, 0], sizes = [2, 16, 128], strides = [1, 1, 1]} : vector<2x20x128xf32> to vector<2x16x128xf32>
    %c1_247 = arith.constant 1 : index
    %c0_248 = arith.constant 0 : index
    %734 = vector.load %arg7[%c1_247, %c0_248] : memref<9x128xf32, #tpu.memory_space<vmem>>, vector<1x128xf32>
    %735 = vector.shape_cast %734 : vector<1x128xf32> to vector<128xf32>
    %736 = vector.shape_cast %735 : vector<128xf32> to vector<1x1x128xf32>
    %737 = vector.broadcast %736 : vector<1x1x128xf32> to vector<2x16x128xf32>
    %738 = arith.mulf %733, %737 : vector<2x16x128xf32>
    %739 = arith.addf %732, %738 : vector<2x16x128xf32>
    %740 = vector.extract_strided_slice %704 {offsets = [0, 2, 0], sizes = [2, 16, 128], strides = [1, 1, 1]} : vector<2x20x128xf32> to vector<2x16x128xf32>
    %c4_249 = arith.constant 4 : index
    %c0_250 = arith.constant 0 : index
    %741 = vector.load %arg7[%c4_249, %c0_250] : memref<9x128xf32, #tpu.memory_space<vmem>>, vector<1x128xf32>
    %742 = vector.shape_cast %741 : vector<1x128xf32> to vector<128xf32>
    %743 = vector.shape_cast %742 : vector<128xf32> to vector<1x1x128xf32>
    %744 = vector.broadcast %743 : vector<1x1x128xf32> to vector<2x16x128xf32>
    %745 = arith.mulf %740, %744 : vector<2x16x128xf32>
    %746 = arith.addf %739, %745 : vector<2x16x128xf32>
    %747 = vector.extract_strided_slice %704 {offsets = [0, 3, 0], sizes = [2, 16, 128], strides = [1, 1, 1]} : vector<2x20x128xf32> to vector<2x16x128xf32>
    %c7_251 = arith.constant 7 : index
    %c0_252 = arith.constant 0 : index
    %748 = vector.load %arg7[%c7_251, %c0_252] : memref<9x128xf32, #tpu.memory_space<vmem>>, vector<1x128xf32>
    %749 = vector.shape_cast %748 : vector<1x128xf32> to vector<128xf32>
    %750 = vector.shape_cast %749 : vector<128xf32> to vector<1x1x128xf32>
    %751 = vector.broadcast %750 : vector<1x1x128xf32> to vector<2x16x128xf32>
    %752 = arith.mulf %747, %751 : vector<2x16x128xf32>
    %753 = arith.addf %746, %752 : vector<2x16x128xf32>
    %754 = vector.shape_cast %704 : vector<2x20x128xf32> to vector<40x128xf32>
    %c120_i32_253 = arith.constant 120 : i32
    %755 = tpu.dynamic_rotate %754 by %c120_i32_253 dim 1 : vector<40x128xf32>, i32 -> vector<40x128xf32>
    %756 = vector.shape_cast %755 : vector<40x128xf32> to vector<2x20x128xf32>
    %c3_254 = arith.constant 3 : index
    %c0_255 = arith.constant 0 : index
    %757 = vector.load %arg2[%c3_254, %c0_255] : memref<6x128xf32, #tpu.memory_space<vmem>>, vector<1x128xf32>
    %758 = vector.shape_cast %757 : vector<1x128xf32> to vector<128xf32>
    %759 = vector.shape_cast %758 : vector<128xf32> to vector<1x1x128xf32>
    %760 = vector.broadcast %759 : vector<1x1x128xf32> to vector<2x20x128xf32>
    %761 = arith.mulf %756, %760 : vector<2x20x128xf32>
    %762 = vector.extract_strided_slice %761 {offsets = [0, 1, 0], sizes = [2, 16, 128], strides = [1, 1, 1]} : vector<2x20x128xf32> to vector<2x16x128xf32>
    %c2_256 = arith.constant 2 : index
    %c0_257 = arith.constant 0 : index
    %763 = vector.load %arg7[%c2_256, %c0_257] : memref<9x128xf32, #tpu.memory_space<vmem>>, vector<1x128xf32>
    %764 = vector.shape_cast %763 : vector<1x128xf32> to vector<128xf32>
    %765 = vector.shape_cast %764 : vector<128xf32> to vector<1x1x128xf32>
    %766 = vector.broadcast %765 : vector<1x1x128xf32> to vector<2x16x128xf32>
    %767 = arith.mulf %762, %766 : vector<2x16x128xf32>
    %768 = arith.addf %753, %767 : vector<2x16x128xf32>
    %769 = vector.extract_strided_slice %761 {offsets = [0, 2, 0], sizes = [2, 16, 128], strides = [1, 1, 1]} : vector<2x20x128xf32> to vector<2x16x128xf32>
    %c5_258 = arith.constant 5 : index
    %c0_259 = arith.constant 0 : index
    %770 = vector.load %arg7[%c5_258, %c0_259] : memref<9x128xf32, #tpu.memory_space<vmem>>, vector<1x128xf32>
    %771 = vector.shape_cast %770 : vector<1x128xf32> to vector<128xf32>
    %772 = vector.shape_cast %771 : vector<128xf32> to vector<1x1x128xf32>
    %773 = vector.broadcast %772 : vector<1x1x128xf32> to vector<2x16x128xf32>
    %774 = arith.mulf %769, %773 : vector<2x16x128xf32>
    %775 = arith.addf %768, %774 : vector<2x16x128xf32>
    %776 = vector.extract_strided_slice %761 {offsets = [0, 3, 0], sizes = [2, 16, 128], strides = [1, 1, 1]} : vector<2x20x128xf32> to vector<2x16x128xf32>
    %c8_260 = arith.constant 8 : index
    %c0_261 = arith.constant 0 : index
    %777 = vector.load %arg7[%c8_260, %c0_261] : memref<9x128xf32, #tpu.memory_space<vmem>>, vector<1x128xf32>
    %778 = vector.shape_cast %777 : vector<1x128xf32> to vector<128xf32>
    %779 = vector.shape_cast %778 : vector<128xf32> to vector<1x1x128xf32>
    %780 = vector.broadcast %779 : vector<1x1x128xf32> to vector<2x16x128xf32>
    %781 = arith.mulf %776, %780 : vector<2x16x128xf32>
    %782 = arith.addf %775, %781 : vector<2x16x128xf32>
    %c0_262 = arith.constant 0 : index
    %c2_263 = arith.constant 2 : index
    %c0_264 = arith.constant 0 : index
    %783 = vector.load %arg17[%c0_262, %c2_263, %c0_264] : memref<2x20x128xf32, #tpu.memory_space<vmem>>, vector<2x16x128xf32>
    tpu.vector_store %arg17[%c0_262, %c2_263, %c0_264], %702 {strides = array<i32>} : memref<2x20x128xf32, #tpu.memory_space<vmem>>, vector<2x16x128xf32>,
    %c0_265 = arith.constant 0 : index
    %c0_266 = arith.constant 0 : index
    %c0_267 = arith.constant 0 : index
    %784 = vector.load %arg17[%c0_265, %c0_266, %c0_267] : memref<2x20x128xf32, #tpu.memory_space<vmem>>, vector<2x20x128xf32>
    %785 = vector.shape_cast %784 : vector<2x20x128xf32> to vector<40x128xf32>
    %c16_i32_268 = arith.constant 16 : i32
    %786 = tpu.dynamic_rotate %785 by %c16_i32_268 dim 1 : vector<40x128xf32>, i32 -> vector<40x128xf32>
    %787 = vector.shape_cast %786 : vector<40x128xf32> to vector<2x20x128xf32>
    %c1_269 = arith.constant 1 : index
    %c0_270 = arith.constant 0 : index
    %788 = vector.load %arg2[%c1_269, %c0_270] : memref<6x128xf32, #tpu.memory_space<vmem>>, vector<1x128xf32>
    %789 = vector.shape_cast %788 : vector<1x128xf32> to vector<128xf32>
    %790 = vector.shape_cast %789 : vector<128xf32> to vector<1x1x128xf32>
    %791 = vector.broadcast %790 : vector<1x1x128xf32> to vector<2x20x128xf32>
    %792 = arith.mulf %787, %791 : vector<2x20x128xf32>
    %793 = vector.extract_strided_slice %792 {offsets = [0, 0, 0], sizes = [2, 16, 128], strides = [1, 1, 1]} : vector<2x20x128xf32> to vector<2x16x128xf32>
    %c0_271 = arith.constant 0 : index
    %c0_272 = arith.constant 0 : index
    %794 = vector.load %arg9[%c0_271, %c0_272] : memref<25x128xf32, #tpu.memory_space<vmem>>, vector<1x128xf32>
    %795 = vector.shape_cast %794 : vector<1x128xf32> to vector<128xf32>
    %796 = vector.shape_cast %795 : vector<128xf32> to vector<1x1x128xf32>
    %797 = vector.broadcast %796 : vector<1x1x128xf32> to vector<2x16x128xf32>
    %798 = arith.mulf %793, %797 : vector<2x16x128xf32>
    %799 = vector.extract_strided_slice %792 {offsets = [0, 1, 0], sizes = [2, 16, 128], strides = [1, 1, 1]} : vector<2x20x128xf32> to vector<2x16x128xf32>
    %c5_273 = arith.constant 5 : index
    %c0_274 = arith.constant 0 : index
    %800 = vector.load %arg9[%c5_273, %c0_274] : memref<25x128xf32, #tpu.memory_space<vmem>>, vector<1x128xf32>
    %801 = vector.shape_cast %800 : vector<1x128xf32> to vector<128xf32>
    %802 = vector.shape_cast %801 : vector<128xf32> to vector<1x1x128xf32>
    %803 = vector.broadcast %802 : vector<1x1x128xf32> to vector<2x16x128xf32>
    %804 = arith.mulf %799, %803 : vector<2x16x128xf32>
    %805 = arith.addf %798, %804 : vector<2x16x128xf32>
    %806 = vector.extract_strided_slice %792 {offsets = [0, 2, 0], sizes = [2, 16, 128], strides = [1, 1, 1]} : vector<2x20x128xf32> to vector<2x16x128xf32>
    %c10_275 = arith.constant 10 : index
    %c0_276 = arith.constant 0 : index
    %807 = vector.load %arg9[%c10_275, %c0_276] : memref<25x128xf32, #tpu.memory_space<vmem>>, vector<1x128xf32>
    %808 = vector.shape_cast %807 : vector<1x128xf32> to vector<128xf32>
    %809 = vector.shape_cast %808 : vector<128xf32> to vector<1x1x128xf32>
    %810 = vector.broadcast %809 : vector<1x1x128xf32> to vector<2x16x128xf32>
    %811 = arith.mulf %806, %810 : vector<2x16x128xf32>
    %812 = arith.addf %805, %811 : vector<2x16x128xf32>
    %813 = vector.extract_strided_slice %792 {offsets = [0, 3, 0], sizes = [2, 16, 128], strides = [1, 1, 1]} : vector<2x20x128xf32> to vector<2x16x128xf32>
    %c15_277 = arith.constant 15 : index
    %c0_278 = arith.constant 0 : index
    %814 = vector.load %arg9[%c15_277, %c0_278] : memref<25x128xf32, #tpu.memory_space<vmem>>, vector<1x128xf32>
    %815 = vector.shape_cast %814 : vector<1x128xf32> to vector<128xf32>
    %816 = vector.shape_cast %815 : vector<128xf32> to vector<1x1x128xf32>
    %817 = vector.broadcast %816 : vector<1x1x128xf32> to vector<2x16x128xf32>
    %818 = arith.mulf %813, %817 : vector<2x16x128xf32>
    %819 = arith.addf %812, %818 : vector<2x16x128xf32>
    %820 = vector.extract_strided_slice %792 {offsets = [0, 4, 0], sizes = [2, 16, 128], strides = [1, 1, 1]} : vector<2x20x128xf32> to vector<2x16x128xf32>
    %c20_279 = arith.constant 20 : index
    %c0_280 = arith.constant 0 : index
    %821 = vector.load %arg9[%c20_279, %c0_280] : memref<25x128xf32, #tpu.memory_space<vmem>>, vector<1x128xf32>
    %822 = vector.shape_cast %821 : vector<1x128xf32> to vector<128xf32>
    %823 = vector.shape_cast %822 : vector<128xf32> to vector<1x1x128xf32>
    %824 = vector.broadcast %823 : vector<1x1x128xf32> to vector<2x16x128xf32>
    %825 = arith.mulf %820, %824 : vector<2x16x128xf32>
    %826 = arith.addf %819, %825 : vector<2x16x128xf32>
    %827 = vector.shape_cast %784 : vector<2x20x128xf32> to vector<40x128xf32>
    %c8_i32_281 = arith.constant 8 : i32
    %828 = tpu.dynamic_rotate %827 by %c8_i32_281 dim 1 : vector<40x128xf32>, i32 -> vector<40x128xf32>
    %829 = vector.shape_cast %828 : vector<40x128xf32> to vector<2x20x128xf32>
    %c2_282 = arith.constant 2 : index
    %c0_283 = arith.constant 0 : index
    %830 = vector.load %arg2[%c2_282, %c0_283] : memref<6x128xf32, #tpu.memory_space<vmem>>, vector<1x128xf32>
    %831 = vector.shape_cast %830 : vector<1x128xf32> to vector<128xf32>
    %832 = vector.shape_cast %831 : vector<128xf32> to vector<1x1x128xf32>
    %833 = vector.broadcast %832 : vector<1x1x128xf32> to vector<2x20x128xf32>
    %834 = arith.mulf %829, %833 : vector<2x20x128xf32>
    %835 = vector.extract_strided_slice %834 {offsets = [0, 0, 0], sizes = [2, 16, 128], strides = [1, 1, 1]} : vector<2x20x128xf32> to vector<2x16x128xf32>
    %c1_284 = arith.constant 1 : index
    %c0_285 = arith.constant 0 : index
    %836 = vector.load %arg9[%c1_284, %c0_285] : memref<25x128xf32, #tpu.memory_space<vmem>>, vector<1x128xf32>
    %837 = vector.shape_cast %836 : vector<1x128xf32> to vector<128xf32>
    %838 = vector.shape_cast %837 : vector<128xf32> to vector<1x1x128xf32>
    %839 = vector.broadcast %838 : vector<1x1x128xf32> to vector<2x16x128xf32>
    %840 = arith.mulf %835, %839 : vector<2x16x128xf32>
    %841 = arith.addf %826, %840 : vector<2x16x128xf32>
    %842 = vector.extract_strided_slice %834 {offsets = [0, 1, 0], sizes = [2, 16, 128], strides = [1, 1, 1]} : vector<2x20x128xf32> to vector<2x16x128xf32>
    %c6_286 = arith.constant 6 : index
    %c0_287 = arith.constant 0 : index
    %843 = vector.load %arg9[%c6_286, %c0_287] : memref<25x128xf32, #tpu.memory_space<vmem>>, vector<1x128xf32>
    %844 = vector.shape_cast %843 : vector<1x128xf32> to vector<128xf32>
    %845 = vector.shape_cast %844 : vector<128xf32> to vector<1x1x128xf32>
    %846 = vector.broadcast %845 : vector<1x1x128xf32> to vector<2x16x128xf32>
    %847 = arith.mulf %842, %846 : vector<2x16x128xf32>
    %848 = arith.addf %841, %847 : vector<2x16x128xf32>
    %849 = vector.extract_strided_slice %834 {offsets = [0, 2, 0], sizes = [2, 16, 128], strides = [1, 1, 1]} : vector<2x20x128xf32> to vector<2x16x128xf32>
    %c11_288 = arith.constant 11 : index
    %c0_289 = arith.constant 0 : index
    %850 = vector.load %arg9[%c11_288, %c0_289] : memref<25x128xf32, #tpu.memory_space<vmem>>, vector<1x128xf32>
    %851 = vector.shape_cast %850 : vector<1x128xf32> to vector<128xf32>
    %852 = vector.shape_cast %851 : vector<128xf32> to vector<1x1x128xf32>
    %853 = vector.broadcast %852 : vector<1x1x128xf32> to vector<2x16x128xf32>
    %854 = arith.mulf %849, %853 : vector<2x16x128xf32>
    %855 = arith.addf %848, %854 : vector<2x16x128xf32>
    %856 = vector.extract_strided_slice %834 {offsets = [0, 3, 0], sizes = [2, 16, 128], strides = [1, 1, 1]} : vector<2x20x128xf32> to vector<2x16x128xf32>
    %c16_290 = arith.constant 16 : index
    %c0_291 = arith.constant 0 : index
    %857 = vector.load %arg9[%c16_290, %c0_291] : memref<25x128xf32, #tpu.memory_space<vmem>>, vector<1x128xf32>
    %858 = vector.shape_cast %857 : vector<1x128xf32> to vector<128xf32>
    %859 = vector.shape_cast %858 : vector<128xf32> to vector<1x1x128xf32>
    %860 = vector.broadcast %859 : vector<1x1x128xf32> to vector<2x16x128xf32>
    %861 = arith.mulf %856, %860 : vector<2x16x128xf32>
    %862 = arith.addf %855, %861 : vector<2x16x128xf32>
    %863 = vector.extract_strided_slice %834 {offsets = [0, 4, 0], sizes = [2, 16, 128], strides = [1, 1, 1]} : vector<2x20x128xf32> to vector<2x16x128xf32>
    %c21_292 = arith.constant 21 : index
    %c0_293 = arith.constant 0 : index
    %864 = vector.load %arg9[%c21_292, %c0_293] : memref<25x128xf32, #tpu.memory_space<vmem>>, vector<1x128xf32>
    %865 = vector.shape_cast %864 : vector<1x128xf32> to vector<128xf32>
    %866 = vector.shape_cast %865 : vector<128xf32> to vector<1x1x128xf32>
    %867 = vector.broadcast %866 : vector<1x1x128xf32> to vector<2x16x128xf32>
    %868 = arith.mulf %863, %867 : vector<2x16x128xf32>
    %869 = arith.addf %862, %868 : vector<2x16x128xf32>
    %870 = vector.extract_strided_slice %784 {offsets = [0, 0, 0], sizes = [2, 16, 128], strides = [1, 1, 1]} : vector<2x20x128xf32> to vector<2x16x128xf32>
    %c2_294 = arith.constant 2 : index
    %c0_295 = arith.constant 0 : index
    %871 = vector.load %arg9[%c2_294, %c0_295] : memref<25x128xf32, #tpu.memory_space<vmem>>, vector<1x128xf32>
    %872 = vector.shape_cast %871 : vector<1x128xf32> to vector<128xf32>
    %873 = vector.shape_cast %872 : vector<128xf32> to vector<1x1x128xf32>
    %874 = vector.broadcast %873 : vector<1x1x128xf32> to vector<2x16x128xf32>
    %875 = arith.mulf %870, %874 : vector<2x16x128xf32>
    %876 = arith.addf %869, %875 : vector<2x16x128xf32>
    %877 = vector.extract_strided_slice %784 {offsets = [0, 1, 0], sizes = [2, 16, 128], strides = [1, 1, 1]} : vector<2x20x128xf32> to vector<2x16x128xf32>
    %c7_296 = arith.constant 7 : index
    %c0_297 = arith.constant 0 : index
    %878 = vector.load %arg9[%c7_296, %c0_297] : memref<25x128xf32, #tpu.memory_space<vmem>>, vector<1x128xf32>
    %879 = vector.shape_cast %878 : vector<1x128xf32> to vector<128xf32>
    %880 = vector.shape_cast %879 : vector<128xf32> to vector<1x1x128xf32>
    %881 = vector.broadcast %880 : vector<1x1x128xf32> to vector<2x16x128xf32>
    %882 = arith.mulf %877, %881 : vector<2x16x128xf32>
    %883 = arith.addf %876, %882 : vector<2x16x128xf32>
    %884 = vector.extract_strided_slice %784 {offsets = [0, 2, 0], sizes = [2, 16, 128], strides = [1, 1, 1]} : vector<2x20x128xf32> to vector<2x16x128xf32>
    %c12_298 = arith.constant 12 : index
    %c0_299 = arith.constant 0 : index
    %885 = vector.load %arg9[%c12_298, %c0_299] : memref<25x128xf32, #tpu.memory_space<vmem>>, vector<1x128xf32>
    %886 = vector.shape_cast %885 : vector<1x128xf32> to vector<128xf32>
    %887 = vector.shape_cast %886 : vector<128xf32> to vector<1x1x128xf32>
    %888 = vector.broadcast %887 : vector<1x1x128xf32> to vector<2x16x128xf32>
    %889 = arith.mulf %884, %888 : vector<2x16x128xf32>
    %890 = arith.addf %883, %889 : vector<2x16x128xf32>
    %891 = vector.extract_strided_slice %784 {offsets = [0, 3, 0], sizes = [2, 16, 128], strides = [1, 1, 1]} : vector<2x20x128xf32> to vector<2x16x128xf32>
    %c17_300 = arith.constant 17 : index
    %c0_301 = arith.constant 0 : index
    %892 = vector.load %arg9[%c17_300, %c0_301] : memref<25x128xf32, #tpu.memory_space<vmem>>, vector<1x128xf32>
    %893 = vector.shape_cast %892 : vector<1x128xf32> to vector<128xf32>
    %894 = vector.shape_cast %893 : vector<128xf32> to vector<1x1x128xf32>
    %895 = vector.broadcast %894 : vector<1x1x128xf32> to vector<2x16x128xf32>
    %896 = arith.mulf %891, %895 : vector<2x16x128xf32>
    %897 = arith.addf %890, %896 : vector<2x16x128xf32>
    %898 = vector.extract_strided_slice %784 {offsets = [0, 4, 0], sizes = [2, 16, 128], strides = [1, 1, 1]} : vector<2x20x128xf32> to vector<2x16x128xf32>
    %c22_302 = arith.constant 22 : index
    %c0_303 = arith.constant 0 : index
    %899 = vector.load %arg9[%c22_302, %c0_303] : memref<25x128xf32, #tpu.memory_space<vmem>>, vector<1x128xf32>
    %900 = vector.shape_cast %899 : vector<1x128xf32> to vector<128xf32>
    %901 = vector.shape_cast %900 : vector<128xf32> to vector<1x1x128xf32>
    %902 = vector.broadcast %901 : vector<1x1x128xf32> to vector<2x16x128xf32>
    %903 = arith.mulf %898, %902 : vector<2x16x128xf32>
    %904 = arith.addf %897, %903 : vector<2x16x128xf32>
    %905 = vector.shape_cast %784 : vector<2x20x128xf32> to vector<40x128xf32>
    %c120_i32_304 = arith.constant 120 : i32
    %906 = tpu.dynamic_rotate %905 by %c120_i32_304 dim 1 : vector<40x128xf32>, i32 -> vector<40x128xf32>
    %907 = vector.shape_cast %906 : vector<40x128xf32> to vector<2x20x128xf32>
    %c3_305 = arith.constant 3 : index
    %c0_306 = arith.constant 0 : index
    %908 = vector.load %arg2[%c3_305, %c0_306] : memref<6x128xf32, #tpu.memory_space<vmem>>, vector<1x128xf32>
    %909 = vector.shape_cast %908 : vector<1x128xf32> to vector<128xf32>
    %910 = vector.shape_cast %909 : vector<128xf32> to vector<1x1x128xf32>
    %911 = vector.broadcast %910 : vector<1x1x128xf32> to vector<2x20x128xf32>
    %912 = arith.mulf %907, %911 : vector<2x20x128xf32>
    %913 = vector.extract_strided_slice %912 {offsets = [0, 0, 0], sizes = [2, 16, 128], strides = [1, 1, 1]} : vector<2x20x128xf32> to vector<2x16x128xf32>
    %c3_307 = arith.constant 3 : index
    %c0_308 = arith.constant 0 : index
    %914 = vector.load %arg9[%c3_307, %c0_308] : memref<25x128xf32, #tpu.memory_space<vmem>>, vector<1x128xf32>
    %915 = vector.shape_cast %914 : vector<1x128xf32> to vector<128xf32>
    %916 = vector.shape_cast %915 : vector<128xf32> to vector<1x1x128xf32>
    %917 = vector.broadcast %916 : vector<1x1x128xf32> to vector<2x16x128xf32>
    %918 = arith.mulf %913, %917 : vector<2x16x128xf32>
    %919 = arith.addf %904, %918 : vector<2x16x128xf32>
    %920 = vector.extract_strided_slice %912 {offsets = [0, 1, 0], sizes = [2, 16, 128], strides = [1, 1, 1]} : vector<2x20x128xf32> to vector<2x16x128xf32>
    %c8_309 = arith.constant 8 : index
    %c0_310 = arith.constant 0 : index
    %921 = vector.load %arg9[%c8_309, %c0_310] : memref<25x128xf32, #tpu.memory_space<vmem>>, vector<1x128xf32>
    %922 = vector.shape_cast %921 : vector<1x128xf32> to vector<128xf32>
    %923 = vector.shape_cast %922 : vector<128xf32> to vector<1x1x128xf32>
    %924 = vector.broadcast %923 : vector<1x1x128xf32> to vector<2x16x128xf32>
    %925 = arith.mulf %920, %924 : vector<2x16x128xf32>
    %926 = arith.addf %919, %925 : vector<2x16x128xf32>
    %927 = vector.extract_strided_slice %912 {offsets = [0, 2, 0], sizes = [2, 16, 128], strides = [1, 1, 1]} : vector<2x20x128xf32> to vector<2x16x128xf32>
    %c13_311 = arith.constant 13 : index
    %c0_312 = arith.constant 0 : index
    %928 = vector.load %arg9[%c13_311, %c0_312] : memref<25x128xf32, #tpu.memory_space<vmem>>, vector<1x128xf32>
    %929 = vector.shape_cast %928 : vector<1x128xf32> to vector<128xf32>
    %930 = vector.shape_cast %929 : vector<128xf32> to vector<1x1x128xf32>
    %931 = vector.broadcast %930 : vector<1x1x128xf32> to vector<2x16x128xf32>
    %932 = arith.mulf %927, %931 : vector<2x16x128xf32>
    %933 = arith.addf %926, %932 : vector<2x16x128xf32>
    %934 = vector.extract_strided_slice %912 {offsets = [0, 3, 0], sizes = [2, 16, 128], strides = [1, 1, 1]} : vector<2x20x128xf32> to vector<2x16x128xf32>
    %c18_313 = arith.constant 18 : index
    %c0_314 = arith.constant 0 : index
    %935 = vector.load %arg9[%c18_313, %c0_314] : memref<25x128xf32, #tpu.memory_space<vmem>>, vector<1x128xf32>
    %936 = vector.shape_cast %935 : vector<1x128xf32> to vector<128xf32>
    %937 = vector.shape_cast %936 : vector<128xf32> to vector<1x1x128xf32>
    %938 = vector.broadcast %937 : vector<1x1x128xf32> to vector<2x16x128xf32>
    %939 = arith.mulf %934, %938 : vector<2x16x128xf32>
    %940 = arith.addf %933, %939 : vector<2x16x128xf32>
    %941 = vector.extract_strided_slice %912 {offsets = [0, 4, 0], sizes = [2, 16, 128], strides = [1, 1, 1]} : vector<2x20x128xf32> to vector<2x16x128xf32>
    %c23_315 = arith.constant 23 : index
    %c0_316 = arith.constant 0 : index
    %942 = vector.load %arg9[%c23_315, %c0_316] : memref<25x128xf32, #tpu.memory_space<vmem>>, vector<1x128xf32>
    %943 = vector.shape_cast %942 : vector<1x128xf32> to vector<128xf32>
    %944 = vector.shape_cast %943 : vector<128xf32> to vector<1x1x128xf32>
    %945 = vector.broadcast %944 : vector<1x1x128xf32> to vector<2x16x128xf32>
    %946 = arith.mulf %941, %945 : vector<2x16x128xf32>
    %947 = arith.addf %940, %946 : vector<2x16x128xf32>
    %948 = vector.shape_cast %784 : vector<2x20x128xf32> to vector<40x128xf32>
    %c112_i32_317 = arith.constant 112 : i32
    %949 = tpu.dynamic_rotate %948 by %c112_i32_317 dim 1 : vector<40x128xf32>, i32 -> vector<40x128xf32>
    %950 = vector.shape_cast %949 : vector<40x128xf32> to vector<2x20x128xf32>
    %c4_318 = arith.constant 4 : index
    %c0_319 = arith.constant 0 : index
    %951 = vector.load %arg2[%c4_318, %c0_319] : memref<6x128xf32, #tpu.memory_space<vmem>>, vector<1x128xf32>
    %952 = vector.shape_cast %951 : vector<1x128xf32> to vector<128xf32>
    %953 = vector.shape_cast %952 : vector<128xf32> to vector<1x1x128xf32>
    %954 = vector.broadcast %953 : vector<1x1x128xf32> to vector<2x20x128xf32>
    %955 = arith.mulf %950, %954 : vector<2x20x128xf32>
    %956 = vector.extract_strided_slice %955 {offsets = [0, 0, 0], sizes = [2, 16, 128], strides = [1, 1, 1]} : vector<2x20x128xf32> to vector<2x16x128xf32>
    %c4_320 = arith.constant 4 : index
    %c0_321 = arith.constant 0 : index
    %957 = vector.load %arg9[%c4_320, %c0_321] : memref<25x128xf32, #tpu.memory_space<vmem>>, vector<1x128xf32>
    %958 = vector.shape_cast %957 : vector<1x128xf32> to vector<128xf32>
    %959 = vector.shape_cast %958 : vector<128xf32> to vector<1x1x128xf32>
    %960 = vector.broadcast %959 : vector<1x1x128xf32> to vector<2x16x128xf32>
    %961 = arith.mulf %956, %960 : vector<2x16x128xf32>
    %962 = arith.addf %947, %961 : vector<2x16x128xf32>
    %963 = vector.extract_strided_slice %955 {offsets = [0, 1, 0], sizes = [2, 16, 128], strides = [1, 1, 1]} : vector<2x20x128xf32> to vector<2x16x128xf32>
    %c9_322 = arith.constant 9 : index
    %c0_323 = arith.constant 0 : index
    %964 = vector.load %arg9[%c9_322, %c0_323] : memref<25x128xf32, #tpu.memory_space<vmem>>, vector<1x128xf32>
    %965 = vector.shape_cast %964 : vector<1x128xf32> to vector<128xf32>
    %966 = vector.shape_cast %965 : vector<128xf32> to vector<1x1x128xf32>
    %967 = vector.broadcast %966 : vector<1x1x128xf32> to vector<2x16x128xf32>
    %968 = arith.mulf %963, %967 : vector<2x16x128xf32>
    %969 = arith.addf %962, %968 : vector<2x16x128xf32>
    %970 = vector.extract_strided_slice %955 {offsets = [0, 2, 0], sizes = [2, 16, 128], strides = [1, 1, 1]} : vector<2x20x128xf32> to vector<2x16x128xf32>
    %c14_324 = arith.constant 14 : index
    %c0_325 = arith.constant 0 : index
    %971 = vector.load %arg9[%c14_324, %c0_325] : memref<25x128xf32, #tpu.memory_space<vmem>>, vector<1x128xf32>
    %972 = vector.shape_cast %971 : vector<1x128xf32> to vector<128xf32>
    %973 = vector.shape_cast %972 : vector<128xf32> to vector<1x1x128xf32>
    %974 = vector.broadcast %973 : vector<1x1x128xf32> to vector<2x16x128xf32>
    %975 = arith.mulf %970, %974 : vector<2x16x128xf32>
    %976 = arith.addf %969, %975 : vector<2x16x128xf32>
    %977 = vector.extract_strided_slice %955 {offsets = [0, 3, 0], sizes = [2, 16, 128], strides = [1, 1, 1]} : vector<2x20x128xf32> to vector<2x16x128xf32>
    %c19_326 = arith.constant 19 : index
    %c0_327 = arith.constant 0 : index
    %978 = vector.load %arg9[%c19_326, %c0_327] : memref<25x128xf32, #tpu.memory_space<vmem>>, vector<1x128xf32>
    %979 = vector.shape_cast %978 : vector<1x128xf32> to vector<128xf32>
    %980 = vector.shape_cast %979 : vector<128xf32> to vector<1x1x128xf32>
    %981 = vector.broadcast %980 : vector<1x1x128xf32> to vector<2x16x128xf32>
    %982 = arith.mulf %977, %981 : vector<2x16x128xf32>
    %983 = arith.addf %976, %982 : vector<2x16x128xf32>
    %984 = vector.extract_strided_slice %955 {offsets = [0, 4, 0], sizes = [2, 16, 128], strides = [1, 1, 1]} : vector<2x20x128xf32> to vector<2x16x128xf32>
    %c24_328 = arith.constant 24 : index
    %c0_329 = arith.constant 0 : index
    %985 = vector.load %arg9[%c24_328, %c0_329] : memref<25x128xf32, #tpu.memory_space<vmem>>, vector<1x128xf32>
    %986 = vector.shape_cast %985 : vector<1x128xf32> to vector<128xf32>
    %987 = vector.shape_cast %986 : vector<128xf32> to vector<1x1x128xf32>
    %988 = vector.broadcast %987 : vector<1x1x128xf32> to vector<2x16x128xf32>
    %989 = arith.mulf %984, %988 : vector<2x16x128xf32>
    %990 = arith.addf %983, %989 : vector<2x16x128xf32>
    %991 = vector.shape_cast %782 : vector<2x16x128xf32> to vector<32x128xf32>
    %c0_330 = arith.constant 0 : index
    %c0_331 = arith.constant 0 : index
    %992 = vector.load %arg18[%c0_330, %c0_331] : memref<32x256xf32, #tpu.memory_space<vmem>>, vector<32x128xf32>
    tpu.vector_store %arg18[%c0_330, %c0_331], %991 {strides = array<i32>} : memref<32x256xf32, #tpu.memory_space<vmem>>, vector<32x128xf32>,
    %993 = vector.shape_cast %990 : vector<2x16x128xf32> to vector<32x128xf32>
    %c0_332 = arith.constant 0 : index
    %c128_333 = arith.constant 128 : index
    %994 = vector.load %arg18[%c0_332, %c128_333] : memref<32x256xf32, #tpu.memory_space<vmem>>, vector<32x128xf32>
    tpu.vector_store %arg18[%c0_332, %c128_333], %993 {strides = array<i32>} : memref<32x256xf32, #tpu.memory_space<vmem>>, vector<32x128xf32>,
    %c0_334 = arith.constant 0 : index
    %c0_335 = arith.constant 0 : index
    %995 = vector.load %arg18[%c0_334, %c0_335] : memref<32x256xf32, #tpu.memory_space<vmem>>, vector<32x256xf32>
    %c0_336 = arith.constant 0 : index
    %c0_337 = arith.constant 0 : index
    %996 = vector.load %arg13[%c0_336, %c0_337] : memref<256x256xf32, #tpu.memory_space<vmem>>, vector<256x256xf32>
    %cst_338 = arith.constant dense<0.000000e+00> : vector<32x256xf32>
    %997 = tpu.matmul %995, %996, %cst_338 {dimension_numbers = #tpu.dot_dimension_numbers<[1], [0], [0], [1], [0, 0, 1, 1], [], []>} : vector<32x256xf32>, vector<256x256xf32>, vector<32x256xf32> -> vector<32x256xf32>
    %998 = vector.extract_strided_slice %997 {offsets = [0, 0], sizes = [32, 128], strides = [1, 1]} : vector<32x256xf32> to vector<32x128xf32>
    %999 = vector.shape_cast %998 : vector<32x128xf32> to vector<2x16x128xf32>
    %1000 = vector.extract_strided_slice %997 {offsets = [0, 128], sizes = [32, 128], strides = [1, 1]} : vector<32x256xf32> to vector<32x128xf32>
    %1001 = vector.shape_cast %1000 : vector<32x128xf32> to vector<2x16x128xf32>
    %c4_339 = arith.constant 4 : index
    %1002 = memref.load %arg0[%c4_339] : memref<8xf32, #tpu.memory_space<smem>>
    %1003 = vector.shape_cast %999 : vector<2x16x128xf32> to vector<32x128xf32>
    %cst_340 = arith.constant dense<0.000000e+00> : vector<128xf32>
    %1004 = vector.multi_reduction <add>, %1003, %cst_340 [0] : vector<32x128xf32> to vector<128xf32>
    %1005 = vector.shape_cast %1004 : vector<128xf32> to vector<1x128xf32>
    %c0_341 = arith.constant 0 : index
    %c0_342 = arith.constant 0 : index
    %1006 = vector.load %arg5[%c0_341, %c0_342] : memref<128x128xf32, #tpu.memory_space<vmem>>, vector<128x128xf32>
    %cst_343 = arith.constant dense<0.000000e+00> : vector<1x128xf32>
    %1007 = tpu.matmul %1005, %1006, %cst_343 {dimension_numbers = #tpu.dot_dimension_numbers<[1], [0], [0], [1], [0, 0, 1, 1], [], []>} : vector<1x128xf32>, vector<128x128xf32>, vector<1x128xf32> -> vector<1x128xf32>
    %1008 = vector.broadcast %1007 : vector<1x128xf32> to vector<32x128xf32>
    %1009 = arith.subf %1003, %1008 : vector<32x128xf32>
    %1010 = arith.mulf %1009, %1009 : vector<32x128xf32>
    %cst_344 = arith.constant dense<0.000000e+00> : vector<128xf32>
    %1011 = vector.multi_reduction <add>, %1010, %cst_344 [0] : vector<32x128xf32> to vector<128xf32>
    %1012 = vector.shape_cast %1011 : vector<128xf32> to vector<1x128xf32>
    %c0_345 = arith.constant 0 : index
    %c0_346 = arith.constant 0 : index
    %1013 = vector.load %arg5[%c0_345, %c0_346] : memref<128x128xf32, #tpu.memory_space<vmem>>, vector<128x128xf32>
    %cst_347 = arith.constant dense<0.000000e+00> : vector<1x128xf32>
    %1014 = tpu.matmul %1012, %1013, %cst_347 {dimension_numbers = #tpu.dot_dimension_numbers<[1], [0], [0], [1], [0, 0, 1, 1], [], []>} : vector<1x128xf32>, vector<128x128xf32>, vector<1x128xf32> -> vector<1x128xf32>
    %cst_348 = arith.constant 9.99999974E-6 : f32
    %1015 = vector.broadcast %cst_348 : f32 to vector<1x128xf32>
    %1016 = arith.addf %1014, %1015 : vector<1x128xf32>
    %1017 = math.rsqrt %1016 : vector<1x128xf32>
    %1018 = vector.broadcast %1017 : vector<1x128xf32> to vector<32x128xf32>
    %1019 = arith.mulf %1009, %1018 : vector<32x128xf32>
    %1020 = vector.shape_cast %1019 : vector<32x128xf32> to vector<2x16x128xf32>
    %1021 = vector.broadcast %1002 : f32 to vector<2x16x128xf32>
    %1022 = arith.mulf %1021, %1020 : vector<2x16x128xf32>
    %1023 = arith.addf %651, %1022 : vector<2x16x128xf32>
    %c5_349 = arith.constant 5 : index
    %1024 = memref.load %arg0[%c5_349] : memref<8xf32, #tpu.memory_space<smem>>
    %1025 = vector.shape_cast %1001 : vector<2x16x128xf32> to vector<32x128xf32>
    %cst_350 = arith.constant dense<0.000000e+00> : vector<128xf32>
    %1026 = vector.multi_reduction <add>, %1025, %cst_350 [0] : vector<32x128xf32> to vector<128xf32>
    %1027 = vector.shape_cast %1026 : vector<128xf32> to vector<1x128xf32>
    %c0_351 = arith.constant 0 : index
    %c0_352 = arith.constant 0 : index
    %1028 = vector.load %arg5[%c0_351, %c0_352] : memref<128x128xf32, #tpu.memory_space<vmem>>, vector<128x128xf32>
    %cst_353 = arith.constant dense<0.000000e+00> : vector<1x128xf32>
    %1029 = tpu.matmul %1027, %1028, %cst_353 {dimension_numbers = #tpu.dot_dimension_numbers<[1], [0], [0], [1], [0, 0, 1, 1], [], []>} : vector<1x128xf32>, vector<128x128xf32>, vector<1x128xf32> -> vector<1x128xf32>
    %1030 = vector.broadcast %1029 : vector<1x128xf32> to vector<32x128xf32>
    %1031 = arith.subf %1025, %1030 : vector<32x128xf32>
    %1032 = arith.mulf %1031, %1031 : vector<32x128xf32>
    %cst_354 = arith.constant dense<0.000000e+00> : vector<128xf32>
    %1033 = vector.multi_reduction <add>, %1032, %cst_354 [0] : vector<32x128xf32> to vector<128xf32>
    %1034 = vector.shape_cast %1033 : vector<128xf32> to vector<1x128xf32>
    %c0_355 = arith.constant 0 : index
    %c0_356 = arith.constant 0 : index
    %1035 = vector.load %arg5[%c0_355, %c0_356] : memref<128x128xf32, #tpu.memory_space<vmem>>, vector<128x128xf32>
    %cst_357 = arith.constant dense<0.000000e+00> : vector<1x128xf32>
    %1036 = tpu.matmul %1034, %1035, %cst_357 {dimension_numbers = #tpu.dot_dimension_numbers<[1], [0], [0], [1], [0, 0, 1, 1], [], []>} : vector<1x128xf32>, vector<128x128xf32>, vector<1x128xf32> -> vector<1x128xf32>
    %cst_358 = arith.constant 9.99999974E-6 : f32
    %1037 = vector.broadcast %cst_358 : f32 to vector<1x128xf32>
    %1038 = arith.addf %1036, %1037 : vector<1x128xf32>
    %1039 = math.rsqrt %1038 : vector<1x128xf32>
    %1040 = vector.broadcast %1039 : vector<1x128xf32> to vector<32x128xf32>
    %1041 = arith.mulf %1031, %1040 : vector<32x128xf32>
    %1042 = vector.shape_cast %1041 : vector<32x128xf32> to vector<2x16x128xf32>
    %1043 = vector.broadcast %1024 : f32 to vector<2x16x128xf32>
    %1044 = arith.mulf %1043, %1042 : vector<2x16x128xf32>
    %1045 = arith.addf %1023, %1044 : vector<2x16x128xf32>
    %c0_359 = arith.constant 0 : index
    %c0_360 = arith.constant 0 : index
    %c0_361 = arith.constant 0 : index
    %1046 = vector.load %arg15[%c0_359, %c0_360, %c0_361] : memref<2x16x128xf32, #tpu.memory_space<vmem>>, vector<2x16x128xf32>
    tpu.vector_store %arg15[%c0_359, %c0_360, %c0_361], %1045 {strides = array<i32>} : memref<2x16x128xf32, #tpu.memory_space<vmem>>, vector<2x16x128xf32>,
    return
  }
}

</mosaic_0001>

<llo_original>
// kernel: tile.34
$region0: #{tile.34}
  %s0 = inlined_call_operand.vmem [shape: f32[9,16,8], index: 0, kind: input, shape index: {}]
  %s1 = inlined_call_operand.vmem [shape: f32[9,128], index: 1, kind: output, shape index: {}]
  %s2 = smov 3
  %v3 = vld [vmem:[%s0] ss:$16 sm:%s2]
  %s4 = smov 12
  %v5 = vld [vmem:[%s0] ss:$16 sm:%s4]
  %vm6 = vcmask 1043458
  %v7 = vsel %vm6, %v5, %v3
  %s8 = smov 48
  %v9 = vld [vmem:[%s0] ss:$16 sm:%s8]
  %vm10 = vcmask 1045508
  %v11 = vsel %vm10, %v9, %v7
  %s12 = smov 192
  %v13 = vld [vmem:[%s0] ss:$16 sm:%s12]
  %vm14 = vcmask 1047558
  %v15 = vsel %vm14, %v13, %v11
  %vm16 = vcmask 64512
  %17 = vst.msk [vmem:[%s1] sm:$0xff] %vm16, %v15
  %s18 = scalar_lea.vmem %s0, 128
  %v19 = vld [vmem:[%s18] sm:$0x1]
  %vm20 = vcmask 64512
  %s21 = scalar_lea.vmem %s1, 8
  %22 = vst.msk [vmem:[%s21] sm:$0x1] %vm20, %v19
  %s23 = scalar_lea.vmem %s0, 15
  %s24 = smov 3
  %v25 = vld [vmem:[%s23] ss:$16 sm:%s24]
  %s26 = scalar_lea.vmem %s0, 15
  %s27 = smov 12
  %v28 = vld [vmem:[%s26] ss:$16 sm:%s27]
  %vm29 = vcmask 1043458
  %v30 = vsel %vm29, %v28, %v25
  %s31 = scalar_lea.vmem %s0, 15
  %s32 = smov 48
  %v33 = vld [vmem:[%s31] ss:$16 sm:%s32]
  %vm34 = vcmask 1045508
  %v35 = vsel %vm34, %v33, %v30
  %s36 = scalar_lea.vmem %s0, 15
  %s37 = smov 192
  %v38 = vld [vmem:[%s36] ss:$16 sm:%s37]
  %vm39 = vcmask 1047558
  %v40 = vsel %vm39, %v38, %v35
  %41 = vrot.lane.b32.xlu0 %v40, 120
  %v42 = vpop.permute.xlu0 %41
  %vm43 = vcmask 1048512
  %44 = vst.msk [vmem:[%s1] sm:$0xff] %vm43, %v42
  %s45 = scalar_lea.vmem %s0, 143
  %v46 = vld [vmem:[%s45] sm:$0x1]
  %47 = vrot.lane.b32.xlu0 %v46, 120
  %v48 = vpop.permute.xlu0 %47
  %vm49 = vcmask 1048512
  %s50 = scalar_lea.vmem %s1, 8
  %51 = vst.msk [vmem:[%s50] sm:$0x1] %vm49, %v48
  %s52 = scalar_lea.vmem %s0, 14
  %s53 = smov 3
  %v54 = vld [vmem:[%s52] ss:$16 sm:%s53]
  %s55 = scalar_lea.vmem %s0, 14
  %s56 = smov 12
  %v57 = vld [vmem:[%s55] ss:$16 sm:%s56]
  %vm58 = vcmask 1043458
  %v59 = vsel %vm58, %v57, %v54
  %s60 = scalar_lea.vmem %s0, 14
  %s61 = smov 48
  %v62 = vld [vmem:[%s60] ss:$16 sm:%s61]
  %vm63 = vcmask 1045508
  %v64 = vsel %vm63, %v62, %v59
  %s65 = scalar_lea.vmem %s0, 14
  %s66 = smov 192
  %v67 = vld [vmem:[%s65] ss:$16 sm:%s66]
  %vm68 = vcmask 1047558
  %v69 = vsel %vm68, %v67, %v64
  %70 = vrot.lane.b32.xlu0 %v69, 112
  %v71 = vpop.permute.xlu0 %70
  %vm72 = vcmask 982912
  %73 = vst.msk [vmem:[%s1] sm:$0xff] %vm72, %v71
  %s74 = scalar_lea.vmem %s0, 142
  %v75 = vld [vmem:[%s74] sm:$0x1]
  %76 = vrot.lane.b32.xlu0 %v75, 112
  %v77 = vpop.permute.xlu0 %76
  %vm78 = vcmask 982912
  %s79 = scalar_lea.vmem %s1, 8
  %80 = vst.msk [vmem:[%s79] sm:$0x1] %vm78, %v77
  %s81 = scalar_lea.vmem %s0, 13
  %s82 = smov 3
  %v83 = vld [vmem:[%s81] ss:$16 sm:%s82]
  %s84 = scalar_lea.vmem %s0, 13
  %s85 = smov 12
  %v86 = vld [vmem:[%s84] ss:$16 sm:%s85]
  %vm87 = vcmask 1043458
  %v88 = vsel %vm87, %v86, %v83
  %s89 = scalar_lea.vmem %s0, 13
  %s90 = smov 48
  %v91 = vld [vmem:[%s89] ss:$16 sm:%s90]
  %vm92 = vcmask 1045508
  %v93 = vsel %vm92, %v91, %v88
  %s94 = scalar_lea.vmem %s0, 13
  %s95 = smov 192
  %v96 = vld [vmem:[%s94] ss:$16 sm:%s95]
  %vm97 = vcmask 1047558
  %v98 = vsel %vm97, %v96, %v93
  %99 = vrot.lane.b32.xlu0 %v98, 104
  %v100 = vpop.permute.xlu0 %99
  %vm101 = vcmask 917312
  %102 = vst.msk [vmem:[%s1] sm:$0xff] %vm101, %v100
  %s103 = scalar_lea.vmem %s0, 141
  %v104 = vld [vmem:[%s103] sm:$0x1]
  %105 = vrot.lane.b32.xlu0 %v104, 104
  %v106 = vpop.permute.xlu0 %105
  %vm107 = vcmask 917312
  %s108 = scalar_lea.vmem %s1, 8
  %109 = vst.msk [vmem:[%s108] sm:$0x1] %vm107, %v106
  %s110 = scalar_lea.vmem %s0, 12
  %s111 = smov 3
  %v112 = vld [vmem:[%s110] ss:$16 sm:%s111]
  %s113 = scalar_lea.vmem %s0, 12
  %s114 = smov 12
  %v115 = vld [vmem:[%s113] ss:$16 sm:%s114]
  %vm116 = vcmask 1043458
  %v117 = vsel %vm116, %v115, %v112
  %s118 = scalar_lea.vmem %s0, 12
  %s119 = smov 48
  %v120 = vld [vmem:[%s118] ss:$16 sm:%s119]
  %vm121 = vcmask 1045508
  %v122 = vsel %vm121, %v120, %v117
  %s123 = scalar_lea.vmem %s0, 12
  %s124 = smov 192
  %v125 = vld [vmem:[%s123] ss:$16 sm:%s124]
  %vm126 = vcmask 1047558
  %v127 = vsel %vm126, %v125, %v122
  %128 = vrot.lane.b32.xlu0 %v127, 96
  %v129 = vpop.permute.xlu0 %128
  %vm130 = vcmask 851712
  %131 = vst.msk [vmem:[%s1] sm:$0xff] %vm130, %v129
  %s132 = scalar_lea.vmem %s0, 140
  %v133 = vld [vmem:[%s132] sm:$0x1]
  %134 = vrot.lane.b32.xlu0 %v133, 96
  %v135 = vpop.permute.xlu0 %134
  %vm136 = vcmask 851712
  %s137 = scalar_lea.vmem %s1, 8
  %138 = vst.msk [vmem:[%s137] sm:$0x1] %vm136, %v135
  %s139 = scalar_lea.vmem %s0, 11
  %s140 = smov 3
  %v141 = vld [vmem:[%s139] ss:$16 sm:%s140]
  %s142 = scalar_lea.vmem %s0, 11
  %s143 = smov 12
  %v144 = vld [vmem:[%s142] ss:$16 sm:%s143]
  %vm145 = vcmask 1043458
  %v146 = vsel %vm145, %v144, %v141
  %s147 = scalar_lea.vmem %s0, 11
  %s148 = smov 48
  %v149 = vld [vmem:[%s147] ss:$16 sm:%s148]
  %vm150 = vcmask 1045508
  %v151 = vsel %vm150, %v149, %v146
  %s152 = scalar_lea.vmem %s0, 11
  %s153 = smov 192
  %v154 = vld [vmem:[%s152] ss:$16 sm:%s153]
  %vm155 = vcmask 1047558
  %v156 = vsel %vm155, %v154, %v151
  %157 = vrot.lane.b32.xlu0 %v156, 88
  %v158 = vpop.permute.xlu0 %157
  %vm159 = vcmask 786112
  %160 = vst.msk [vmem:[%s1] sm:$0xff] %vm159, %v158
  %s161 = scalar_lea.vmem %s0, 139
  %v162 = vld [vmem:[%s161] sm:$0x1]
  %163 = vrot.lane.b32.xlu0 %v162, 88
  %v164 = vpop.permute.xlu0 %163
  %vm165 = vcmask 786112
  %s166 = scalar_lea.vmem %s1, 8
  %167 = vst.msk [vmem:[%s166] sm:$0x1] %vm165, %v164
  %s168 = scalar_lea.vmem %s0, 10
  %s169 = smov 3
  %v170 = vld [vmem:[%s168] ss:$16 sm:%s169]
  %s171 = scalar_lea.vmem %s0, 10
  %s172 = smov 12
  %v173 = vld [vmem:[%s171] ss:$16 sm:%s172]
  %vm174 = vcmask 1043458
  %v175 = vsel %vm174, %v173, %v170
  %s176 = scalar_lea.vmem %s0, 10
  %s177 = smov 48
  %v178 = vld [vmem:[%s176] ss:$16 sm:%s177]
  %vm179 = vcmask 1045508
  %v180 = vsel %vm179, %v178, %v175
  %s181 = scalar_lea.vmem %s0, 10
  %s182 = smov 192
  %v183 = vld [vmem:[%s181] ss:$16 sm:%s182]
  %vm184 = vcmask 1047558
  %v185 = vsel %vm184, %v183, %v180
  %186 = vrot.lane.b32.xlu0 %v185, 80
  %v187 = vpop.permute.xlu0 %186
  %vm188 = vcmask 720512
  %189 = vst.msk [vmem:[%s1] sm:$0xff] %vm188, %v187
  %s190 = scalar_lea.vmem %s0, 138
  %v191 = vld [vmem:[%s190] sm:$0x1]
  %192 = vrot.lane.b32.xlu0 %v191, 80
  %v193 = vpop.permute.xlu0 %192
  %vm194 = vcmask 720512
  %s195 = scalar_lea.vmem %s1, 8
  %196 = vst.msk [vmem:[%s195] sm:$0x1] %vm194, %v193
  %s197 = scalar_lea.vmem %s0, 9
  %s198 = smov 3
  %v199 = vld [vmem:[%s197] ss:$16 sm:%s198]
  %s200 = scalar_lea.vmem %s0, 9
  %s201 = smov 12
  %v202 = vld [vmem:[%s200] ss:$16 sm:%s201]
  %vm203 = vcmask 1043458
  %v204 = vsel %vm203, %v202, %v199
  %s205 = scalar_lea.vmem %s0, 9
  %s206 = smov 48
  %v207 = vld [vmem:[%s205] ss:$16 sm:%s206]
  %vm208 = vcmask 1045508
  %v209 = vsel %vm208, %v207, %v204
  %s210 = scalar_lea.vmem %s0, 9
  %s211 = smov 192
  %v212 = vld [vmem:[%s210] ss:$16 sm:%s211]
  %vm213 = vcmask 1047558
  %v214 = vsel %vm213, %v212, %v209
  %215 = vrot.lane.b32.xlu0 %v214, 72
  %v216 = vpop.permute.xlu0 %215
  %vm217 = vcmask 654912
  %218 = vst.msk [vmem:[%s1] sm:$0xff] %vm217, %v216
  %s219 = scalar_lea.vmem %s0, 137
  %v220 = vld [vmem:[%s219] sm:$0x1]
  %221 = vrot.lane.b32.xlu0 %v220, 72
  %v222 = vpop.permute.xlu0 %221
  %vm223 = vcmask 654912
  %s224 = scalar_lea.vmem %s1, 8
  %225 = vst.msk [vmem:[%s224] sm:$0x1] %vm223, %v222
  %s226 = scalar_lea.vmem %s0, 8
  %s227 = smov 3
  %v228 = vld [vmem:[%s226] ss:$16 sm:%s227]
  %s229 = scalar_lea.vmem %s0, 8
  %s230 = smov 12
  %v231 = vld [vmem:[%s229] ss:$16 sm:%s230]
  %vm232 = vcmask 1043458
  %v233 = vsel %vm232, %v231, %v228
  %s234 = scalar_lea.vmem %s0, 8
  %s235 = smov 48
  %v236 = vld [vmem:[%s234] ss:$16 sm:%s235]
  %vm237 = vcmask 1045508
  %v238 = vsel %vm237, %v236, %v233
  %s239 = scalar_lea.vmem %s0, 8
  %s240 = smov 192
  %v241 = vld [vmem:[%s239] ss:$16 sm:%s240]
  %vm242 = vcmask 1047558
  %v243 = vsel %vm242, %v241, %v238
  %244 = vrot.lane.b32.xlu0 %v243, 64
  %v245 = vpop.permute.xlu0 %244
  %vm246 = vcmask 589312
  %247 = vst.msk [vmem:[%s1] sm:$0xff] %vm246, %v245
  %s248 = scalar_lea.vmem %s0, 136
  %v249 = vld [vmem:[%s248] sm:$0x1]
  %250 = vrot.lane.b32.xlu0 %v249, 64
  %v251 = vpop.permute.xlu0 %250
  %vm252 = vcmask 589312
  %s253 = scalar_lea.vmem %s1, 8
  %254 = vst.msk [vmem:[%s253] sm:$0x1] %vm252, %v251
  %s255 = scalar_lea.vmem %s0, 7
  %s256 = smov 3
  %v257 = vld [vmem:[%s255] ss:$16 sm:%s256]
  %s258 = scalar_lea.vmem %s0, 7
  %s259 = smov 12
  %v260 = vld [vmem:[%s258] ss:$16 sm:%s259]
  %vm261 = vcmask 1043458
  %v262 = vsel %vm261, %v260, %v257
  %s263 = scalar_lea.vmem %s0, 7
  %s264 = smov 48
  %v265 = vld [vmem:[%s263] ss:$16 sm:%s264]
  %vm266 = vcmask 1045508
  %v267 = vsel %vm266, %v265, %v262
  %s268 = scalar_lea.vmem %s0, 7
  %s269 = smov 192
  %v270 = vld [vmem:[%s268] ss:$16 sm:%s269]
  %vm271 = vcmask 1047558
  %v272 = vsel %vm271, %v270, %v267
  %273 = vrot.lane.b32.xlu0 %v272, 56
  %v274 = vpop.permute.xlu0 %273
  %vm275 = vcmask 523712
  %276 = vst.msk [vmem:[%s1] sm:$0xff] %vm275, %v274
  %s277 = scalar_lea.vmem %s0, 135
  %v278 = vld [vmem:[%s277] sm:$0x1]
  %279 = vrot.lane.b32.xlu0 %v278, 56
  %v280 = vpop.permute.xlu0 %279
  %vm281 = vcmask 523712
  %s282 = scalar_lea.vmem %s1, 8
  %283 = vst.msk [vmem:[%s282] sm:$0x1] %vm281, %v280
  %s284 = scalar_lea.vmem %s0, 6
  %s285 = smov 3
  %v286 = vld [vmem:[%s284] ss:$16 sm:%s285]
  %s287 = scalar_lea.vmem %s0, 6
  %s288 = smov 12
  %v289 = vld [vmem:[%s287] ss:$16 sm:%s288]
  %vm290 = vcmask 1043458
  %v291 = vsel %vm290, %v289, %v286
  %s292 = scalar_lea.vmem %s0, 6
  %s293 = smov 48
  %v294 = vld [vmem:[%s292] ss:$16 sm:%s293]
  %vm295 = vcmask 1045508
  %v296 = vsel %vm295, %v294, %v291
  %s297 = scalar_lea.vmem %s0, 6
  %s298 = smov 192
  %v299 = vld [vmem:[%s297] ss:$16 sm:%s298]
  %vm300 = vcmask 1047558
  %v301 = vsel %vm300, %v299, %v296
  %302 = vrot.lane.b32.xlu0 %v301, 48
  %v303 = vpop.permute.xlu0 %302
  %vm304 = vcmask 458112
  %305 = vst.msk [vmem:[%s1] sm:$0xff] %vm304, %v303
  %s306 = scalar_lea.vmem %s0, 134
  %v307 = vld [vmem:[%s306] sm:$0x1]
  %308 = vrot.lane.b32.xlu0 %v307, 48
  %v309 = vpop.permute.xlu0 %308
  %vm310 = vcmask 458112
  %s311 = scalar_lea.vmem %s1, 8
  %312 = vst.msk [vmem:[%s311] sm:$0x1] %vm310, %v309
  %s313 = scalar_lea.vmem %s0, 5
  %s314 = smov 3
  %v315 = vld [vmem:[%s313] ss:$16 sm:%s314]
  %s316 = scalar_lea.vmem %s0, 5
  %s317 = smov 12
  %v318 = vld [vmem:[%s316] ss:$16 sm:%s317]
  %vm319 = vcmask 1043458
  %v320 = vsel %vm319, %v318, %v315
  %s321 = scalar_lea.vmem %s0, 5
  %s322 = smov 48
  %v323 = vld [vmem:[%s321] ss:$16 sm:%s322]
  %vm324 = vcmask 1045508
  %v325 = vsel %vm324, %v323, %v320
  %s326 = scalar_lea.vmem %s0, 5
  %s327 = smov 192
  %v328 = vld [vmem:[%s326] ss:$16 sm:%s327]
  %vm329 = vcmask 1047558
  %v330 = vsel %vm329, %v328, %v325
  %331 = vrot.lane.b32.xlu0 %v330, 40
  %v332 = vpop.permute.xlu0 %331
  %vm333 = vcmask 392512
  %334 = vst.msk [vmem:[%s1] sm:$0xff] %vm333, %v332
  %s335 = scalar_lea.vmem %s0, 133
  %v336 = vld [vmem:[%s335] sm:$0x1]
  %337 = vrot.lane.b32.xlu0 %v336, 40
  %v338 = vpop.permute.xlu0 %337
  %vm339 = vcmask 392512
  %s340 = scalar_lea.vmem %s1, 8
  %341 = vst.msk [vmem:[%s340] sm:$0x1] %vm339, %v338
  %s342 = scalar_lea.vmem %s0, 4
  %s343 = smov 3
  %v344 = vld [vmem:[%s342] ss:$16 sm:%s343]
  %s345 = scalar_lea.vmem %s0, 4
  %s346 = smov 12
  %v347 = vld [vmem:[%s345] ss:$16 sm:%s346]
  %vm348 = vcmask 1043458
  %v349 = vsel %vm348, %v347, %v344
  %s350 = scalar_lea.vmem %s0, 4
  %s351 = smov 48
  %v352 = vld [vmem:[%s350] ss:$16 sm:%s351]
  %vm353 = vcmask 1045508
  %v354 = vsel %vm353, %v352, %v349
  %s355 = scalar_lea.vmem %s0, 4
  %s356 = smov 192
  %v357 = vld [vmem:[%s355] ss:$16 sm:%s356]
  %vm358 = vcmask 1047558
  %v359 = vsel %vm358, %v357, %v354
  %360 = vrot.lane.b32.xlu0 %v359, 32
  %v361 = vpop.permute.xlu0 %360
  %vm362 = vcmask 326912
  %363 = vst.msk [vmem:[%s1] sm:$0xff] %vm362, %v361
  %s364 = scalar_lea.vmem %s0, 132
  %v365 = vld [vmem:[%s364] sm:$0x1]
  %366 = vrot.lane.b32.xlu0 %v365, 32
  %v367 = vpop.permute.xlu0 %366
  %vm368 = vcmask 326912
  %s369 = scalar_lea.vmem %s1, 8
  %370 = vst.msk [vmem:[%s369] sm:$0x1] %vm368, %v367
  %s371 = scalar_lea.vmem %s0, 3
  %s372 = smov 3
  %v373 = vld [vmem:[%s371] ss:$16 sm:%s372]
  %s374 = scalar_lea.vmem %s0, 3
  %s375 = smov 12
  %v376 = vld [vmem:[%s374] ss:$16 sm:%s375]
  %vm377 = vcmask 1043458
  %v378 = vsel %vm377, %v376, %v373
  %s379 = scalar_lea.vmem %s0, 3
  %s380 = smov 48
  %v381 = vld [vmem:[%s379] ss:$16 sm:%s380]
  %vm382 = vcmask 1045508
  %v383 = vsel %vm382, %v381, %v378
  %s384 = scalar_lea.vmem %s0, 3
  %s385 = smov 192
  %v386 = vld [vmem:[%s384] ss:$16 sm:%s385]
  %vm387 = vcmask 1047558
  %v388 = vsel %vm387, %v386, %v383
  %389 = vrot.lane.b32.xlu0 %v388, 24
  %v390 = vpop.permute.xlu0 %389
  %vm391 = vcmask 261312
  %392 = vst.msk [vmem:[%s1] sm:$0xff] %vm391, %v390
  %s393 = scalar_lea.vmem %s0, 131
  %v394 = vld [vmem:[%s393] sm:$0x1]
  %395 = vrot.lane.b32.xlu0 %v394, 24
  %v396 = vpop.permute.xlu0 %395
  %vm397 = vcmask 261312
  %s398 = scalar_lea.vmem %s1, 8
  %399 = vst.msk [vmem:[%s398] sm:$0x1] %vm397, %v396
  %s400 = scalar_lea.vmem %s0, 2
  %s401 = smov 3
  %v402 = vld [vmem:[%s400] ss:$16 sm:%s401]
  %s403 = scalar_lea.vmem %s0, 2
  %s404 = smov 12
  %v405 = vld [vmem:[%s403] ss:$16 sm:%s404]
  %vm406 = vcmask 1043458
  %v407 = vsel %vm406, %v405, %v402
  %s408 = scalar_lea.vmem %s0, 2
  %s409 = smov 48
  %v410 = vld [vmem:[%s408] ss:$16 sm:%s409]
  %vm411 = vcmask 1045508
  %v412 = vsel %vm411, %v410, %v407
  %s413 = scalar_lea.vmem %s0, 2
  %s414 = smov 192
  %v415 = vld [vmem:[%s413] ss:$16 sm:%s414]
  %vm416 = vcmask 1047558
  %v417 = vsel %vm416, %v415, %v412
  %418 = vrot.lane.b32.xlu0 %v417, 16
  %v419 = vpop.permute.xlu0 %418
  %vm420 = vcmask 195712
  %421 = vst.msk [vmem:[%s1] sm:$0xff] %vm420, %v419
  %s422 = scalar_lea.vmem %s0, 130
  %v423 = vld [vmem:[%s422] sm:$0x1]
  %424 = vrot.lane.b32.xlu0 %v423, 16
  %v425 = vpop.permute.xlu0 %424
  %vm426 = vcmask 195712
  %s427 = scalar_lea.vmem %s1, 8
  %428 = vst.msk [vmem:[%s427] sm:$0x1] %vm426, %v425
  %s429 = scalar_lea.vmem %s0, 1
  %s430 = smov 3
  %v431 = vld [vmem:[%s429] ss:$16 sm:%s430]
  %s432 = scalar_lea.vmem %s0, 1
  %s433 = smov 12
  %v434 = vld [vmem:[%s432] ss:$16 sm:%s433]
  %vm435 = vcmask 1043458
  %v436 = vsel %vm435, %v434, %v431
  %s437 = scalar_lea.vmem %s0, 1
  %s438 = smov 48
  %v439 = vld [vmem:[%s437] ss:$16 sm:%s438]
  %vm440 = vcmask 1045508
  %v441 = vsel %vm440, %v439, %v436
  %s442 = scalar_lea.vmem %s0, 1
  %s443 = smov 192
  %v444 = vld [vmem:[%s442] ss:$16 sm:%s443]
  %vm445 = vcmask 1047558
  %v446 = vsel %vm445, %v444, %v441
  %447 = vrot.lane.b32.xlu0 %v446, 8
  %v448 = vpop.permute.xlu0 %447
  %vm449 = vcmask 130112
  %450 = vst.msk [vmem:[%s1] sm:$0xff] %vm449, %v448
  %s451 = scalar_lea.vmem %s0, 129
  %v452 = vld [vmem:[%s451] sm:$0x1]
  %453 = vrot.lane.b32.xlu0 %v452, 8
  %v454 = vpop.permute.xlu0 %453
  %vm455 = vcmask 130112
  %s456 = scalar_lea.vmem %s1, 8
  %457 = vst.msk [vmem:[%s456] sm:$0x1] %vm455, %v454

// kernel: mixed_op_forward.1
$region0: #{mixed_op_forward.1}
  #allocation0 [shape = 'u32[]', space=smem, size = 0x4, offset = 0x4, fixed_abs, tag = 'smem constant byte address 0x4 - core index']
  #allocation1 [shape = 'u32[144,128]{1,0:T(1,128)}', space=vmem, size = 0x12000, scoped, tag = 'internal scratch']
  #allocation2 [shape = 'f32[2,24,128]{2,1,0:T(8,128)}', space=vmem, size = 0x6000, scoped, tag = 'scratch operand']
  #allocation3 [shape = 'f32[2,20,128]{2,1,0:T(8,128)}', space=vmem, size = 0x6000, scoped, tag = 'scratch operand']
  #allocation4 [shape = 'f32[32,256]{1,0:T(8,128)}', space=vmem, size = 0x8000, scoped, tag = 'scratch operand']
  %s0 = inlined_call_operand.vmem [shape: f32[8], index: 0, kind: input, shape index: {}]
  %s1 = inlined_call_operand.vmem [shape: f32[2,16,128], index: 1, kind: input, shape index: {}]
  %s2 = inlined_call_operand.vmem [shape: f32[6,128], index: 2, kind: input, shape index: {}]
  %s3 = inlined_call_operand.vmem [shape: f32[24,128], index: 3, kind: input, shape index: {}]
  %s4 = inlined_call_operand.vmem [shape: f32[16,128], index: 4, kind: input, shape index: {}]
  %s5 = inlined_call_operand.vmem [shape: f32[128,128], index: 5, kind: input, shape index: {}]
  %s6 = inlined_call_operand.vmem [shape: f32[9,128], index: 6, kind: input, shape index: {}]
  %s7 = inlined_call_operand.vmem [shape: f32[9,128], index: 7, kind: input, shape index: {}]
  %s8 = inlined_call_operand.vmem [shape: f32[25,128], index: 8, kind: input, shape index: {}]
  %s9 = inlined_call_operand.vmem [shape: f32[25,128], index: 9, kind: input, shape index: {}]
  %s10 = inlined_call_operand.vmem [shape: f32[9,128], index: 10, kind: input, shape index: {}]
  %s11 = inlined_call_operand.vmem [shape: f32[25,128], index: 11, kind: input, shape index: {}]
  %s12 = inlined_call_operand.vmem [shape: f32[256,256], index: 12, kind: input, shape index: {}]
  %s13 = inlined_call_operand.vmem [shape: f32[256,256], index: 13, kind: input, shape index: {}]
  %s14 = inlined_call_operand.vmem [shape: f32[256,256], index: 14, kind: input, shape index: {}]
  %s15 = inlined_call_operand.vmem [shape: f32[2,16,128], index: 15, kind: output, shape index: {}]
  %s16 = sld [smem:[#allocation0]]
  $region74: #{mixed_op_forward.1} parent=0
    _
  %s18 = ssub.s32 1, %s16
  %s19 = scalar_select 0, %s18, %s16
  $region1: #{mixed_op_forward.1} parent=0
    #allocation5 [shape = 'u8[512]{0}', space=smem, size = 0x200, scoped, tag = 'input window, operand 0, single buffered']
    #allocation6 [shape = 's32[1]{0}', space=sflag, size = 0x4, scoped, tag = 'scoped memory for mixed_op_forward.1']
    %20 = vsyncpa [#allocation6], 0
    // Predicated region
    $region2: #{mixed_op_forward.1} parent=1 // pred_check
      _
    $region3: #{mixed_op_forward.1} parent=1 // pred_check_branch
      %22 = sbr.rel (0) target = $region5
    $region4: #{mixed_op_forward.1} parent=1 // pred_region
      %s24 = ssub.s32 16, 16
      %25 = vsyncadd [#allocation6], %s24
      %s27 = sshll.u32 %s0, 4
      %s28 = int_to_ptr.vmem [resolvable:$true] %s27
      %30 = dma.vmem_to_smem %s28, 16, [#allocation5], [#allocation6]
    $region5: #{mixed_op_forward.1} parent=1 // pred_fallthru
      _
    // Predicated region
    $region6: #{mixed_op_forward.1} parent=1 // pred_check
      _
    $region7: #{mixed_op_forward.1} parent=1 // pred_check_branch
      %32 = sbr.rel (0) target = $region9
    $region8: #{mixed_op_forward.1} parent=1 // pred_region
      _
    $region9: #{mixed_op_forward.1} parent=1 // pred_fallthru
      _
    // Predicated region
    $region10: #{mixed_op_forward.1} parent=1 // pred_check
      _
    $region11: #{mixed_op_forward.1} parent=1 // pred_check_branch
      %34 = sbr.rel (0) target = $region13
    $region12: #{mixed_op_forward.1} parent=1 // pred_region
      _
    $region13: #{mixed_op_forward.1} parent=1 // pred_fallthru
      _
    // Predicated region
    $region14: #{mixed_op_forward.1} parent=1 // pred_check
      _
    $region15: #{mixed_op_forward.1} parent=1 // pred_check_branch
      %36 = sbr.rel (0) target = $region17
    $region16: #{mixed_op_forward.1} parent=1 // pred_region
      _
    $region17: #{mixed_op_forward.1} parent=1 // pred_fallthru
      _
    // Predicated region
    $region18: #{mixed_op_forward.1} parent=1 // pred_check
      _
    $region19: #{mixed_op_forward.1} parent=1 // pred_check_branch
      %38 = sbr.rel (0) target = $region21
    $region20: #{mixed_op_forward.1} parent=1 // pred_region
      _
    $region21: #{mixed_op_forward.1} parent=1 // pred_fallthru
      _
    // Predicated region
    $region22: #{mixed_op_forward.1} parent=1 // pred_check
      _
    $region23: #{mixed_op_forward.1} parent=1 // pred_check_branch
      %40 = sbr.rel (0) target = $region25
    $region24: #{mixed_op_forward.1} parent=1 // pred_region
      _
    $region25: #{mixed_op_forward.1} parent=1 // pred_fallthru
      _
    // Predicated region
    $region26: #{mixed_op_forward.1} parent=1 // pred_check
      _
    $region27: #{mixed_op_forward.1} parent=1 // pred_check_branch
      %42 = sbr.rel (0) target = $region29
    $region28: #{mixed_op_forward.1} parent=1 // pred_region
      _
    $region29: #{mixed_op_forward.1} parent=1 // pred_fallthru
      _
    // Predicated region
    $region30: #{mixed_op_forward.1} parent=1 // pred_check
      _
    $region31: #{mixed_op_forward.1} parent=1 // pred_check_branch
      %44 = sbr.rel (0) target = $region33
    $region32: #{mixed_op_forward.1} parent=1 // pred_region
      _
    $region33: #{mixed_op_forward.1} parent=1 // pred_fallthru
      _
    // Predicated region
    $region34: #{mixed_op_forward.1} parent=1 // pred_check
      _
    $region35: #{mixed_op_forward.1} parent=1 // pred_check_branch
      %46 = sbr.rel (0) target = $region37
    $region36: #{mixed_op_forward.1} parent=1 // pred_region
      _
    $region37: #{mixed_op_forward.1} parent=1 // pred_fallthru
      _
    // Predicated region
    $region38: #{mixed_op_forward.1} parent=1 // pred_check
      _
    $region39: #{mixed_op_forward.1} parent=1 // pred_check_branch
      %48 = sbr.rel (0) target = $region41
    $region40: #{mixed_op_forward.1} parent=1 // pred_region
      _
    $region41: #{mixed_op_forward.1} parent=1 // pred_fallthru
      _
    // Predicated region
    $region42: #{mixed_op_forward.1} parent=1 // pred_check
      _
    $region43: #{mixed_op_forward.1} parent=1 // pred_check_branch
      %50 = sbr.rel (0) target = $region45
    $region44: #{mixed_op_forward.1} parent=1 // pred_region
      _
    $region45: #{mixed_op_forward.1} parent=1 // pred_fallthru
      _
    // Predicated region
    $region46: #{mixed_op_forward.1} parent=1 // pred_check
      _
    $region47: #{mixed_op_forward.1} parent=1 // pred_check_branch
      %52 = sbr.rel (0) target = $region49
    $region48: #{mixed_op_forward.1} parent=1 // pred_region
      _
    $region49: #{mixed_op_forward.1} parent=1 // pred_fallthru
      _
    // Predicated region
    $region50: #{mixed_op_forward.1} parent=1 // pred_check
      _
    $region51: #{mixed_op_forward.1} parent=1 // pred_check_branch
      %54 = sbr.rel (0) target = $region53
    $region52: #{mixed_op_forward.1} parent=1 // pred_region
      _
    $region53: #{mixed_op_forward.1} parent=1 // pred_fallthru
      _
    // Predicated region
    $region54: #{mixed_op_forward.1} parent=1 // pred_check
      _
    $region55: #{mixed_op_forward.1} parent=1 // pred_check_branch
      %56 = sbr.rel (0) target = $region57
    $region56: #{mixed_op_forward.1} parent=1 // pred_region
      _
    $region57: #{mixed_op_forward.1} parent=1 // pred_fallthru
      _
    // Predicated region
    $region58: #{mixed_op_forward.1} parent=1 // pred_check
      _
    $region59: #{mixed_op_forward.1} parent=1 // pred_check_branch
      %58 = sbr.rel (0) target = $region61
    $region60: #{mixed_op_forward.1} parent=1 // pred_region
      _
    $region61: #{mixed_op_forward.1} parent=1 // pred_fallthru
      _
    // Predicated region
    $region62: #{mixed_op_forward.1} parent=1 // pred_check
      _
    $region63: #{mixed_op_forward.1} parent=1 // pred_check_branch
      %60 = sbr.rel (0) target = $region65
    $region64: #{mixed_op_forward.1} parent=1 // pred_region
      %61 = dma.done [#allocation6], 16
    $region65: #{mixed_op_forward.1} parent=1 // pred_fallthru
      _
    %62 = sfence
    %63 = vst [vmem:[#allocation2] sm:$0xff] 0.0
    %64 = vst [vmem:[#allocation2 + $0x8] sm:$0xff] 0.0
    %65 = vst [vmem:[#allocation2 + $0x10] sm:$0xff] 0.0
    %66 = vst [vmem:[#allocation2 + $0x18] sm:$0xff] 0.0
    %67 = vst [vmem:[#allocation2 + $0x20] sm:$0xff] 0.0
    %68 = vst [vmem:[#allocation2 + $0x28] sm:$0xff] 0.0
    %69 = vst [vmem:[#allocation3] sm:$0xff] 0.0
    %70 = vst [vmem:[#allocation3 + $0x8] sm:$0xff] 0.0
    %71 = vst [vmem:[#allocation3 + $0x10] sm:$0xf] 0.0
    %72 = vst [vmem:[#allocation3 + $0x18] sm:$0xff] 0.0
    %73 = vst [vmem:[#allocation3 + $0x20] sm:$0xff] 0.0
    %74 = vst [vmem:[#allocation3 + $0x28] sm:$0xf] 0.0
    %v75 = vld [vmem:[%s1] sm:$0xff]
    %v76 = vld [vmem:[%s1 + $0x8] sm:$0xff]
    %v77 = vld [vmem:[%s1 + $0x10] sm:$0xff]
    %v78 = vld [vmem:[%s1 + $0x18] sm:$0xff]
    %79 = vst [vmem:[#allocation2 + $0x4] sm:$0xff] %v75
    %80 = vst [vmem:[#allocation2 + $0xc] sm:$0xff] %v76
    %81 = vst [vmem:[#allocation2 + $0x1c] sm:$0xff] %v77
    %82 = vst [vmem:[#allocation2 + $0x24] sm:$0xff] %v78
    %v83 = vld [vmem:[#allocation2] sm:$0xff]
    %v84 = vld [vmem:[#allocation2 + $0x8] sm:$0xff]
    %v85 = vld [vmem:[#allocation2 + $0x10] sm:$0xff]
    %v86 = vld [vmem:[#allocation2 + $0x18] sm:$0xff]
    %v87 = vld [vmem:[#allocation2 + $0x20] sm:$0xff]
    %v88 = vld [vmem:[#allocation2 + $0x28] sm:$0xff]
    %s89 = sld [smem:[#allocation5 + $0x3]]
    %v90 = vstv %s89
    %v91 = vmul.f32 %v90, %v75
    %v92 = vmul.f32 %v90, %v76
    %v93 = vmul.f32 %v90, %v77
    %v94 = vmul.f32 %v90, %v78
    %95 = vrot.lane.b32.xlu0 %v83, 8
    %v96 = vpop.permute.xlu0 %95
    %97 = vrot.lane.b32.xlu0 %v84, 8
    %v98 = vpop.permute.xlu0 %97
    %99 = vrot.lane.b32.xlu0 %v85, 8
    %v100 = vpop.permute.xlu0 %99
    %101 = vrot.lane.b32.xlu0 %v86, 8
    %v102 = vpop.permute.xlu0 %101
    %103 = vrot.lane.b32.xlu0 %v87, 8
    %v104 = vpop.permute.xlu0 %103
    %105 = vrot.lane.b32.xlu0 %v88, 8
    %v106 = vpop.permute.xlu0 %105
    %107 = vrot.lane.b32.xlu0 %v83, 120
    %v108 = vpop.permute.xlu0 %107
    %109 = vrot.lane.b32.xlu0 %v84, 120
    %v110 = vpop.permute.xlu0 %109
    %111 = vrot.lane.b32.xlu0 %v85, 120
    %v112 = vpop.permute.xlu0 %111
    %113 = vrot.lane.b32.xlu0 %v86, 120
    %v114 = vpop.permute.xlu0 %113
    %115 = vrot.lane.b32.xlu0 %v87, 120
    %v116 = vpop.permute.xlu0 %115
    %117 = vrot.lane.b32.xlu0 %v88, 120
    %v118 = vpop.permute.xlu0 %117
    %v119 = vld [vmem:[%s2 + $0x2] sm:$0x1]
    %v120 = vld [vmem:[%s2 + $0x3] sm:$0x1]
    %v121 = vlaneseq
    %v122 = vshrl.u32 %v121, 7
    %v123 = vsub.s32 0, %v122
    %v124 = vrot.slane %v119, %v123
    %v125 = vmul.f32 %v96, %v124
    %v126 = vmul.f32 %v98, %v124
    %v127 = vmul.f32 %v100, %v124
    %v128 = vmul.f32 %v102, %v124
    %v129 = vmul.f32 %v104, %v124
    %v130 = vmul.f32 %v106, %v124
    %v131 = vlaneseq
    %v132 = vshrl.u32 %v131, 7
    %v133 = vsub.s32 0, %v132
    %v134 = vrot.slane %v120, %v133
    %v135 = vmul.f32 %v108, %v134
    %v136 = vmul.f32 %v110, %v134
    %v137 = vmul.f32 %v112, %v134
    %v138 = vmul.f32 %v114, %v134
    %v139 = vmul.f32 %v116, %v134
    %v140 = vmul.f32 %v118, %v134
    %v141 = vsub.f32 %v119, 1.0
    %v142 = vmul.f32 %v141, 1e+30
    %v143 = vlaneseq
    %v144 = vshrl.u32 %v143, 7
    %v145 = vsub.s32 0, %v144
    %v146 = vrot.slane %v142, %v145
    %v147 = vadd.f32 %v96, %v146
    %v148 = vadd.f32 %v98, %v146
    %v149 = vadd.f32 %v100, %v146
    %v150 = vadd.f32 %v102, %v146
    %v151 = vadd.f32 %v104, %v146
    %v152 = vadd.f32 %v106, %v146
    %v153 = vmax.f32 %v83, %v147
    %v154 = vmax.f32 %v84, %v148
    %v155 = vmax.f32 %v85, %v149
    %v156 = vmax.f32 %v86, %v150
    %v157 = vmax.f32 %v87, %v151
    %v158 = vmax.f32 %v88, %v152
    %v159 = vsub.f32 %v120, 1.0
    %v160 = vmul.f32 %v159, 1e+30
    %v161 = vlaneseq
    %v162 = vshrl.u32 %v161, 7
    %v163 = vsub.s32 0, %v162
    %v164 = vrot.slane %v160, %v163
    %v165 = vadd.f32 %v108, %v164
    %v166 = vadd.f32 %v110, %v164
    %v167 = vadd.f32 %v112, %v164
    %v168 = vadd.f32 %v114, %v164
    %v169 = vadd.f32 %v116, %v164
    %v170 = vadd.f32 %v118, %v164
    %v171 = vmax.f32 %v153, %v165
    %v172 = vmax.f32 %v154, %v166
    %v173 = vmax.f32 %v155, %v167
    %v174 = vmax.f32 %v156, %v168
    %v175 = vmax.f32 %v157, %v169
    %v176 = vmax.f32 %v158, %v170
    %v177 = vld [vmem:[%s3] sm:$0xff]
    %v178 = vld [vmem:[%s3 + $0x8] sm:$0xff]
    %v179 = vld [vmem:[%s3 + $0x10] sm:$0xff]
    %v180 = vadd.f32 %v171, %v177
    %v181 = vadd.f32 %v172, %v178
    %v182 = vadd.f32 %v173, %v179
    %v183 = vadd.f32 %v174, %v177
    %v184 = vadd.f32 %v175, %v178
    %v185 = vadd.f32 %v176, %v179
    %vm192 = vcmask 1046528
    %v193 = vrot.slane %v180, 1
    %v194 = vrot.slane %v181, 1
    %v195 = vsel %vm192, %v193, %v194
    %v196 = vrot.slane %v182, 1
    %v197 = vsel %vm192, %v194, %v196
    %v198 = vrot.slane %v183, 1
    %v199 = vrot.slane %v184, 1
    %v200 = vsel %vm192, %v198, %v199
    %v201 = vrot.slane %v185, 1
    %v202 = vsel %vm192, %v199, %v201
    %v209 = vmax.f32 %v180, %v195
    %v210 = vmax.f32 %v181, %v197
    %v211 = vmax.f32 %v182, %v196
    %v212 = vmax.f32 %v183, %v200
    %v213 = vmax.f32 %v184, %v202
    %v214 = vmax.f32 %v185, %v201
    %vm215 = vcmask 1045504
    %v216 = vrot.slane %v180, 2
    %v217 = vrot.slane %v181, 2
    %v218 = vsel %vm215, %v216, %v217
    %v219 = vrot.slane %v182, 2
    %v220 = vsel %vm215, %v217, %v219
    %v221 = vrot.slane %v183, 2
    %v222 = vrot.slane %v184, 2
    %v223 = vsel %vm215, %v221, %v222
    %v224 = vrot.slane %v185, 2
    %v225 = vsel %vm215, %v222, %v224
    %v232 = vmax.f32 %v209, %v218
    %v233 = vmax.f32 %v210, %v220
    %v234 = vmax.f32 %v211, %v219
    %v235 = vmax.f32 %v212, %v223
    %v236 = vmax.f32 %v213, %v225
    %v237 = vmax.f32 %v214, %v224
    %s238 = sld [smem:[#allocation5 + $0x1]]
    %vm245 = vcmask 1044480
    %v246 = vrot.slane %v232, 3
    %v247 = vrot.slane %v233, 3
    %v248 = vsel %vm245, %v246, %v247
    %v249 = vrot.slane %v234, 3
    %v250 = vsel %vm245, %v247, %v249
    %v251 = vrot.slane %v235, 3
    %v252 = vrot.slane %v236, 3
    %v253 = vsel %vm245, %v251, %v252
    %v254 = vrot.slane %v237, 3
    %v255 = vsel %vm245, %v252, %v254
    %v260 = vadd.f32 %v248, %v250
    %v261 = vadd.f32 %v260, %v253
    %v262 = vadd.f32 %v261, %v255
    %v263 = vrot.slane %v262, 4
    %v264 = vadd.f32 %v262, %v263
    %v265 = vrot.slane %v264, 2
    %v266 = vadd.f32 %v264, %v265
    %v267 = vrot.slane %v266, 1
    %v268 = vadd.f32 %v266, %v267
    %v269 = vld [vmem:[%s5] sm:$0xff]
    %v270 = vld [vmem:[%s5 + $0x8] sm:$0xff]
    %v271 = vld [vmem:[%s5 + $0x10] sm:$0xff]
    %v272 = vld [vmem:[%s5 + $0x18] sm:$0xff]
    %v273 = vld [vmem:[%s5 + $0x20] sm:$0xff]
    %v274 = vld [vmem:[%s5 + $0x28] sm:$0xff]
    %v275 = vld [vmem:[%s5 + $0x30] sm:$0xff]
    %v276 = vld [vmem:[%s5 + $0x38] sm:$0xff]
    %v277 = vld [vmem:[%s5 + $0x40] sm:$0xff]
    %v278 = vld [vmem:[%s5 + $0x48] sm:$0xff]
    %v279 = vld [vmem:[%s5 + $0x50] sm:$0xff]
    %v280 = vld [vmem:[%s5 + $0x58] sm:$0xff]
    %v281 = vld [vmem:[%s5 + $0x60] sm:$0xff]
    %v282 = vld [vmem:[%s5 + $0x68] sm:$0xff]
    %v283 = vld [vmem:[%s5 + $0x70] sm:$0xff]
    %v284 = vld [vmem:[%s5 + $0x78] sm:$0xff]
    %285 = vmatprep.subr.mxu0 0.0
    %286 = vmatpush1.msra.mxu0 %v284
    %287 = vmatprep.subr.mxu0 0.0
    %288 = vmatpush1.msra.mxu0 %v283
    %289 = vmatprep.subr.mxu0 0.0
    %290 = vmatpush1.msra.mxu0 %v282
    %291 = vmatprep.subr.mxu0 0.0
    %292 = vmatpush1.msra.mxu0 %v281
    %293 = vmatprep.subr.mxu0 0.0
    %294 = vmatpush1.msra.mxu0 %v280
    %295 = vmatprep.subr.mxu0 0.0
    %296 = vmatpush1.msra.mxu0 %v279
    %297 = vmatprep.subr.mxu0 0.0
    %298 = vmatpush1.msra.mxu0 %v278
    %299 = vmatprep.subr.mxu0 0.0
    %300 = vmatpush1.msra.mxu0 %v277
    %301 = vmatprep.subr.mxu0 0.0
    %302 = vmatpush1.msra.mxu0 %v276
    %303 = vmatprep.subr.mxu0 0.0
    %304 = vmatpush1.msra.mxu0 %v275
    %305 = vmatprep.subr.mxu0 0.0
    %306 = vmatpush1.msra.mxu0 %v274
    %307 = vmatprep.subr.mxu0 0.0
    %308 = vmatpush1.msra.mxu0 %v273
    %309 = vmatprep.subr.mxu0 0.0
    %310 = vmatpush1.msra.mxu0 %v272
    %311 = vmatprep.subr.mxu0 0.0
    %312 = vmatpush1.msra.mxu0 %v271
    %313 = vmatprep.subr.mxu0 0.0
    %314 = vmatpush1.msra.mxu0 %v270
    %315 = vmatprep.subr.mxu0 0.0
    %316 = vmatpush1.msra.mxu0 %v269
    %317 = vmatprep.subr.mxu0 0.0
    %318 = vmatpush2.msra.mxu0 0.0
    %319 = vmatprep.subr.mxu0 0.0
    %320 = vmatpush2.msra.mxu0 0.0
    %321 = vmatprep.subr.mxu0 0.0
    %322 = vmatpush2.msra.mxu0 0.0
    %323 = vmatprep.subr.mxu0 0.0
    %324 = vmatpush2.msra.mxu0 0.0
    %325 = vmatprep.subr.mxu0 0.0
    %326 = vmatpush2.msra.mxu0 0.0
    %327 = vmatprep.subr.mxu0 0.0
    %328 = vmatpush2.msra.mxu0 0.0
    %329 = vmatprep.subr.mxu0 0.0
    %330 = vmatpush2.msra.mxu0 0.0
    %331 = vmatprep.subr.mxu0 0.0
    %332 = vmatpush2.msra.mxu0 0.0
    %333 = vmatprep.subr.mxu0 0.0
    %334 = vmatpush2.msra.mxu0 0.0
    %335 = vmatprep.subr.mxu0 0.0
    %336 = vmatpush2.msra.mxu0 0.0
    %337 = vmatprep.subr.mxu0 0.0
    %338 = vmatpush2.msra.mxu0 0.0
    %339 = vmatprep.subr.mxu0 0.0
    %340 = vmatpush2.msra.mxu0 0.0
    %341 = vmatprep.subr.mxu0 0.0
    %342 = vmatpush2.msra.mxu0 0.0
    %343 = vmatprep.subr.mxu0 0.0
    %344 = vmatpush2.msra.mxu0 0.0
    %345 = vmatprep.subr.mxu0 0.0
    %346 = vmatpush2.msra.mxu0 0.0
    %347 = vmatprep.subr.mxu0 0.0
    %348 = vmatpush2.msra.mxu0 0.0
    %349 = vmatprep.mubr.f32.mxu0 0.0
    %350 = vmatmul.mubr.f32.gmra.mxu0 %v268
    %v351 = vpop.f32.mrf.mxu0
    %v352 = vadd.f32 0.0, %v351
    %v353 = vpop.f32.mrf.mxu0
    %354 = vdwg.mxu0
    %v355 = vlaneseq
    %v356 = vshrl.u32 %v355, 7
    %v357 = vsub.s32 0, %v356
    %v358 = vrot.slane %v352, %v357
    %v359 = vsub.f32 %v248, %v358
    %v360 = vsub.f32 %v250, %v358
    %v361 = vsub.f32 %v253, %v358
    %v362 = vsub.f32 %v255, %v358
    %v363 = vmul.f32 %v359, %v359
    %v364 = vmul.f32 %v360, %v360
    %v365 = vmul.f32 %v361, %v361
    %v366 = vmul.f32 %v362, %v362
    %v367 = vadd.f32 %v363, %v364
    %v368 = vadd.f32 %v367, %v365
    %v369 = vadd.f32 %v368, %v366
    %v370 = vrot.slane %v369, 4
    %v371 = vadd.f32 %v369, %v370
    %v372 = vrot.slane %v371, 2
    %v373 = vadd.f32 %v371, %v372
    %v374 = vrot.slane %v373, 1
    %v375 = vadd.f32 %v373, %v374
    %376 = vmatprep.subr.mxu0 0.0
    %377 = vmatpush1.msra.mxu0 %v284
    %378 = vmatprep.subr.mxu0 0.0
    %379 = vmatpush1.msra.mxu0 %v283
    %380 = vmatprep.subr.mxu0 0.0
    %381 = vmatpush1.msra.mxu0 %v282
    %382 = vmatprep.subr.mxu0 0.0
    %383 = vmatpush1.msra.mxu0 %v281
    %384 = vmatprep.subr.mxu0 0.0
    %385 = vmatpush1.msra.mxu0 %v280
    %386 = vmatprep.subr.mxu0 0.0
    %387 = vmatpush1.msra.mxu0 %v279
    %388 = vmatprep.subr.mxu0 0.0
    %389 = vmatpush1.msra.mxu0 %v278
    %390 = vmatprep.subr.mxu0 0.0
    %391 = vmatpush1.msra.mxu0 %v277
    %392 = vmatprep.subr.mxu0 0.0
    %393 = vmatpush1.msra.mxu0 %v276
    %394 = vmatprep.subr.mxu0 0.0
    %395 = vmatpush1.msra.mxu0 %v275
    %396 = vmatprep.subr.mxu0 0.0
    %397 = vmatpush1.msra.mxu0 %v274
    %398 = vmatprep.subr.mxu0 0.0
    %399 = vmatpush1.msra.mxu0 %v273
    %400 = vmatprep.subr.mxu0 0.0
    %401 = vmatpush1.msra.mxu0 %v272
    %402 = vmatprep.subr.mxu0 0.0
    %403 = vmatpush1.msra.mxu0 %v271
    %404 = vmatprep.subr.mxu0 0.0
    %405 = vmatpush1.msra.mxu0 %v270
    %406 = vmatprep.subr.mxu0 0.0
    %407 = vmatpush1.msra.mxu0 %v269
    %408 = vmatprep.subr.mxu0 0.0
    %409 = vmatpush2.msra.mxu0 0.0
    %410 = vmatprep.subr.mxu0 0.0
    %411 = vmatpush2.msra.mxu0 0.0
    %412 = vmatprep.subr.mxu0 0.0
    %413 = vmatpush2.msra.mxu0 0.0
    %414 = vmatprep.subr.mxu0 0.0
    %415 = vmatpush2.msra.mxu0 0.0
    %416 = vmatprep.subr.mxu0 0.0
    %417 = vmatpush2.msra.mxu0 0.0
    %418 = vmatprep.subr.mxu0 0.0
    %419 = vmatpush2.msra.mxu0 0.0
    %420 = vmatprep.subr.mxu0 0.0
    %421 = vmatpush2.msra.mxu0 0.0
    %422 = vmatprep.subr.mxu0 0.0
    %423 = vmatpush2.msra.mxu0 0.0
    %424 = vmatprep.subr.mxu0 0.0
    %425 = vmatpush2.msra.mxu0 0.0
    %426 = vmatprep.subr.mxu0 0.0
    %427 = vmatpush2.msra.mxu0 0.0
    %428 = vmatprep.subr.mxu0 0.0
    %429 = vmatpush2.msra.mxu0 0.0
    %430 = vmatprep.subr.mxu0 0.0
    %431 = vmatpush2.msra.mxu0 0.0
    %432 = vmatprep.subr.mxu0 0.0
    %433 = vmatpush2.msra.mxu0 0.0
    %434 = vmatprep.subr.mxu0 0.0
    %435 = vmatpush2.msra.mxu0 0.0
    %436 = vmatprep.subr.mxu0 0.0
    %437 = vmatpush2.msra.mxu0 0.0
    %438 = vmatprep.subr.mxu0 0.0
    %439 = vmatpush2.msra.mxu0 0.0
    %440 = vmatprep.mubr.f32.mxu0 0.0
    %441 = vmatmul.mubr.f32.gmra.mxu0 %v375
    %v442 = vpop.f32.mrf.mxu0
    %v443 = vadd.f32 1e-05, %v442
    %v444 = vpop.f32.mrf.mxu0
    %445 = vdwg.mxu0
    %v446 = vrsqrt.pop %v443
    %v447 = vlaneseq
    %v448 = vshrl.u32 %v447, 7
    %v449 = vsub.s32 0, %v448
    %v450 = vrot.slane %v446, %v449
    %v451 = vmul.f32 %v359, %v450
    %v452 = vmul.f32 %v360, %v450
    %v453 = vmul.f32 %v361, %v450
    %v454 = vmul.f32 %v362, %v450
    %v455 = vstv %s238
    %v456 = vmul.f32 %v455, %v451
    %v457 = vmul.f32 %v455, %v452
    %v458 = vmul.f32 %v455, %v453
    %v459 = vmul.f32 %v455, %v454
    %v460 = vadd.f32 %v91, %v456
    %v461 = vadd.f32 %v92, %v457
    %v462 = vadd.f32 %v93, %v458
    %v463 = vadd.f32 %v94, %v459
    %v464 = vadd.f32 %v83, %v125
    %v465 = vadd.f32 %v84, %v126
    %v466 = vadd.f32 %v85, %v127
    %v467 = vadd.f32 %v86, %v128
    %v468 = vadd.f32 %v87, %v129
    %v469 = vadd.f32 %v88, %v130
    %v470 = vadd.f32 %v464, %v135
    %v471 = vadd.f32 %v465, %v136
    %v472 = vadd.f32 %v466, %v137
    %v473 = vadd.f32 %v467, %v138
    %v474 = vadd.f32 %v468, %v139
    %v475 = vadd.f32 %v469, %v140
    %v482 = vrot.slane %v470, 1
    %v483 = vrot.slane %v471, 1
    %v484 = vsel %vm192, %v482, %v483
    %v485 = vrot.slane %v472, 1
    %v486 = vsel %vm192, %v483, %v485
    %v487 = vrot.slane %v473, 1
    %v488 = vrot.slane %v474, 1
    %v489 = vsel %vm192, %v487, %v488
    %v490 = vrot.slane %v475, 1
    %v491 = vsel %vm192, %v488, %v490
    %v498 = vadd.f32 %v470, %v484
    %v499 = vadd.f32 %v471, %v486
    %v500 = vadd.f32 %v472, %v485
    %v501 = vadd.f32 %v473, %v489
    %v502 = vadd.f32 %v474, %v491
    %v503 = vadd.f32 %v475, %v490
    %v504 = vrot.slane %v470, 2
    %v505 = vrot.slane %v471, 2
    %v506 = vsel %vm215, %v504, %v505
    %v507 = vrot.slane %v472, 2
    %v508 = vsel %vm215, %v505, %v507
    %v509 = vrot.slane %v473, 2
    %v510 = vrot.slane %v474, 2
    %v511 = vsel %vm215, %v509, %v510
    %v512 = vrot.slane %v475, 2
    %v513 = vsel %vm215, %v510, %v512
    %v520 = vadd.f32 %v498, %v506
    %v521 = vadd.f32 %v499, %v508
    %v522 = vadd.f32 %v500, %v507
    %v523 = vadd.f32 %v501, %v511
    %v524 = vadd.f32 %v502, %v513
    %v525 = vadd.f32 %v503, %v512
    %v526 = vld [vmem:[%s4] sm:$0xff]
    %v527 = vld [vmem:[%s4 + $0x8] sm:$0xff]
    %vm530 = vcmask 1042432
    %v531 = vrot.slane %v526, 5
    %v532 = vrot.slane %v527, 5
    %v533 = vsel %vm530, %v531, %v532
    %v537 = vmul.f32 %v520, %v531
    %v538 = vmul.f32 %v521, %v533
    %v539 = vmul.f32 %v522, %v532
    %v540 = vmul.f32 %v523, %v531
    %v541 = vmul.f32 %v524, %v533
    %v542 = vmul.f32 %v525, %v532
    %s543 = sld [smem:[#allocation5 + $0x2]]
    %v550 = vrot.slane %v537, 3
    %v551 = vrot.slane %v538, 3
    %v552 = vsel %vm245, %v550, %v551
    %v553 = vrot.slane %v539, 3
    %v554 = vsel %vm245, %v551, %v553
    %v555 = vrot.slane %v540, 3
    %v556 = vrot.slane %v541, 3
    %v557 = vsel %vm245, %v555, %v556
    %v558 = vrot.slane %v542, 3
    %v559 = vsel %vm245, %v556, %v558
    %v564 = vadd.f32 %v552, %v554
    %v565 = vadd.f32 %v564, %v557
    %v566 = vadd.f32 %v565, %v559
    %v567 = vrot.slane %v566, 4
    %v568 = vadd.f32 %v566, %v567
    %v569 = vrot.slane %v568, 2
    %v570 = vadd.f32 %v568, %v569
    %v571 = vrot.slane %v570, 1
    %v572 = vadd.f32 %v570, %v571
    %573 = vmatprep.subr.mxu0 0.0
    %574 = vmatpush1.msra.mxu0 %v284
    %575 = vmatprep.subr.mxu0 0.0
    %576 = vmatpush1.msra.mxu0 %v283
    %577 = vmatprep.subr.mxu0 0.0
    %578 = vmatpush1.msra.mxu0 %v282
    %579 = vmatprep.subr.mxu0 0.0
    %580 = vmatpush1.msra.mxu0 %v281
    %581 = vmatprep.subr.mxu0 0.0
    %582 = vmatpush1.msra.mxu0 %v280
    %583 = vmatprep.subr.mxu0 0.0
    %584 = vmatpush1.msra.mxu0 %v279
    %585 = vmatprep.subr.mxu0 0.0
    %586 = vmatpush1.msra.mxu0 %v278
    %587 = vmatprep.subr.mxu0 0.0
    %588 = vmatpush1.msra.mxu0 %v277
    %589 = vmatprep.subr.mxu0 0.0
    %590 = vmatpush1.msra.mxu0 %v276
    %591 = vmatprep.subr.mxu0 0.0
    %592 = vmatpush1.msra.mxu0 %v275
    %593 = vmatprep.subr.mxu0 0.0
    %594 = vmatpush1.msra.mxu0 %v274
    %595 = vmatprep.subr.mxu0 0.0
    %596 = vmatpush1.msra.mxu0 %v273
    %597 = vmatprep.subr.mxu0 0.0
    %598 = vmatpush1.msra.mxu0 %v272
    %599 = vmatprep.subr.mxu0 0.0
    %600 = vmatpush1.msra.mxu0 %v271
    %601 = vmatprep.subr.mxu0 0.0
    %602 = vmatpush1.msra.mxu0 %v270
    %603 = vmatprep.subr.mxu0 0.0
    %604 = vmatpush1.msra.mxu0 %v269
    %605 = vmatprep.subr.mxu0 0.0
    %606 = vmatpush2.msra.mxu0 0.0
    %607 = vmatprep.subr.mxu0 0.0
    %608 = vmatpush2.msra.mxu0 0.0
    %609 = vmatprep.subr.mxu0 0.0
    %610 = vmatpush2.msra.mxu0 0.0
    %611 = vmatprep.subr.mxu0 0.0
    %612 = vmatpush2.msra.mxu0 0.0
    %613 = vmatprep.subr.mxu0 0.0
    %614 = vmatpush2.msra.mxu0 0.0
    %615 = vmatprep.subr.mxu0 0.0
    %616 = vmatpush2.msra.mxu0 0.0
    %617 = vmatprep.subr.mxu0 0.0
    %618 = vmatpush2.msra.mxu0 0.0
    %619 = vmatprep.subr.mxu0 0.0
    %620 = vmatpush2.msra.mxu0 0.0
    %621 = vmatprep.subr.mxu0 0.0
    %622 = vmatpush2.msra.mxu0 0.0
    %623 = vmatprep.subr.mxu0 0.0
    %624 = vmatpush2.msra.mxu0 0.0
    %625 = vmatprep.subr.mxu0 0.0
    %626 = vmatpush2.msra.mxu0 0.0
    %627 = vmatprep.subr.mxu0 0.0
    %628 = vmatpush2.msra.mxu0 0.0
    %629 = vmatprep.subr.mxu0 0.0
    %630 = vmatpush2.msra.mxu0 0.0
    %631 = vmatprep.subr.mxu0 0.0
    %632 = vmatpush2.msra.mxu0 0.0
    %633 = vmatprep.subr.mxu0 0.0
    %634 = vmatpush2.msra.mxu0 0.0
    %635 = vmatprep.subr.mxu0 0.0
    %636 = vmatpush2.msra.mxu0 0.0
    %637 = vmatprep.mubr.f32.mxu0 0.0
    %638 = vmatmul.mubr.f32.gmra.mxu0 %v572
    %v639 = vpop.f32.mrf.mxu0
    %v640 = vadd.f32 0.0, %v639
    %v641 = vpop.f32.mrf.mxu0
    %642 = vdwg.mxu0
    %v643 = vlaneseq
    %v644 = vshrl.u32 %v643, 7
    %v645 = vsub.s32 0, %v644
    %v646 = vrot.slane %v640, %v645
    %v647 = vsub.f32 %v552, %v646
    %v648 = vsub.f32 %v554, %v646
    %v649 = vsub.f32 %v557, %v646
    %v650 = vsub.f32 %v559, %v646
    %v651 = vmul.f32 %v647, %v647
    %v652 = vmul.f32 %v648, %v648
    %v653 = vmul.f32 %v649, %v649
    %v654 = vmul.f32 %v650, %v650
    %v655 = vadd.f32 %v651, %v652
    %v656 = vadd.f32 %v655, %v653
    %v657 = vadd.f32 %v656, %v654
    %v658 = vrot.slane %v657, 4
    %v659 = vadd.f32 %v657, %v658
    %v660 = vrot.slane %v659, 2
    %v661 = vadd.f32 %v659, %v660
    %v662 = vrot.slane %v661, 1
    %v663 = vadd.f32 %v661, %v662
    %664 = vmatprep.subr.mxu0 0.0
    %665 = vmatpush1.msra.mxu0 %v284
    %666 = vmatprep.subr.mxu0 0.0
    %667 = vmatpush1.msra.mxu0 %v283
    %668 = vmatprep.subr.mxu0 0.0
    %669 = vmatpush1.msra.mxu0 %v282
    %670 = vmatprep.subr.mxu0 0.0
    %671 = vmatpush1.msra.mxu0 %v281
    %672 = vmatprep.subr.mxu0 0.0
    %673 = vmatpush1.msra.mxu0 %v280
    %674 = vmatprep.subr.mxu0 0.0
    %675 = vmatpush1.msra.mxu0 %v279
    %676 = vmatprep.subr.mxu0 0.0
    %677 = vmatpush1.msra.mxu0 %v278
    %678 = vmatprep.subr.mxu0 0.0
    %679 = vmatpush1.msra.mxu0 %v277
    %680 = vmatprep.subr.mxu0 0.0
    %681 = vmatpush1.msra.mxu0 %v276
    %682 = vmatprep.subr.mxu0 0.0
    %683 = vmatpush1.msra.mxu0 %v275
    %684 = vmatprep.subr.mxu0 0.0
    %685 = vmatpush1.msra.mxu0 %v274
    %686 = vmatprep.subr.mxu0 0.0
    %687 = vmatpush1.msra.mxu0 %v273
    %688 = vmatprep.subr.mxu0 0.0
    %689 = vmatpush1.msra.mxu0 %v272
    %690 = vmatprep.subr.mxu0 0.0
    %691 = vmatpush1.msra.mxu0 %v271
    %692 = vmatprep.subr.mxu0 0.0
    %693 = vmatpush1.msra.mxu0 %v270
    %694 = vmatprep.subr.mxu0 0.0
    %695 = vmatpush1.msra.mxu0 %v269
    %696 = vmatprep.subr.mxu0 0.0
    %697 = vmatpush2.msra.mxu0 0.0
    %698 = vmatprep.subr.mxu0 0.0
    %699 = vmatpush2.msra.mxu0 0.0
    %700 = vmatprep.subr.mxu0 0.0
    %701 = vmatpush2.msra.mxu0 0.0
    %702 = vmatprep.subr.mxu0 0.0
    %703 = vmatpush2.msra.mxu0 0.0
    %704 = vmatprep.subr.mxu0 0.0
    %705 = vmatpush2.msra.mxu0 0.0
    %706 = vmatprep.subr.mxu0 0.0
    %707 = vmatpush2.msra.mxu0 0.0
    %708 = vmatprep.subr.mxu0 0.0
    %709 = vmatpush2.msra.mxu0 0.0
    %710 = vmatprep.subr.mxu0 0.0
    %711 = vmatpush2.msra.mxu0 0.0
    %712 = vmatprep.subr.mxu0 0.0
    %713 = vmatpush2.msra.mxu0 0.0
    %714 = vmatprep.subr.mxu0 0.0
    %715 = vmatpush2.msra.mxu0 0.0
    %716 = vmatprep.subr.mxu0 0.0
    %717 = vmatpush2.msra.mxu0 0.0
    %718 = vmatprep.subr.mxu0 0.0
    %719 = vmatpush2.msra.mxu0 0.0
    %720 = vmatprep.subr.mxu0 0.0
    %721 = vmatpush2.msra.mxu0 0.0
    %722 = vmatprep.subr.mxu0 0.0
    %723 = vmatpush2.msra.mxu0 0.0
    %724 = vmatprep.subr.mxu0 0.0
    %725 = vmatpush2.msra.mxu0 0.0
    %726 = vmatprep.subr.mxu0 0.0
    %727 = vmatpush2.msra.mxu0 0.0
    %728 = vmatprep.mubr.f32.mxu0 0.0
    %729 = vmatmul.mubr.f32.gmra.mxu0 %v663
    %v730 = vpop.f32.mrf.mxu0
    %v731 = vadd.f32 1e-05, %v730
    %v732 = vpop.f32.mrf.mxu0
    %733 = vdwg.mxu0
    %v734 = vrsqrt.pop %v731
    %v735 = vlaneseq
    %v736 = vshrl.u32 %v735, 7
    %v737 = vsub.s32 0, %v736
    %v738 = vrot.slane %v734, %v737
    %v739 = vmul.f32 %v647, %v738
    %v740 = vmul.f32 %v648, %v738
    %v741 = vmul.f32 %v649, %v738
    %v742 = vmul.f32 %v650, %v738
    %v743 = vstv %s543
    %v744 = vmul.f32 %v743, %v739
    %v745 = vmul.f32 %v743, %v740
    %v746 = vmul.f32 %v743, %v741
    %v747 = vmul.f32 %v743, %v742
    %v748 = vadd.f32 %v460, %v744
    %v749 = vadd.f32 %v461, %v745
    %v750 = vadd.f32 %v462, %v746
    %v751 = vadd.f32 %v463, %v747
    %v752 = vmax.f32 %v125, 0.0
    %v753 = vmax.f32 %v126, 0.0
    %v754 = vmax.f32 %v127, 0.0
    %v755 = vmax.f32 %v128, 0.0
    %v756 = vmax.f32 %v129, 0.0
    %v757 = vmax.f32 %v130, 0.0
    %v758 = vld [vmem:[%s6] sm:$0x1]
    %v759 = vlaneseq
    %v760 = vshrl.u32 %v759, 7
    %v761 = vsub.s32 0, %v760
    %v762 = vrot.slane %v758, %v761
    %v763 = vmul.f32 %v752, %v762
    %v764 = vmul.f32 %v753, %v762
    %v765 = vmul.f32 %v754, %v762
    %v766 = vmul.f32 %v755, %v762
    %v767 = vmul.f32 %v756, %v762
    %v768 = vmul.f32 %v757, %v762
    %v769 = vld [vmem:[%s6 + $0x3] sm:$0x1]
    %v770 = vlaneseq
    %v771 = vshrl.u32 %v770, 7
    %v772 = vsub.s32 0, %v771
    %v773 = vrot.slane %v769, %v772
    %v774 = vmul.f32 %v752, %v773
    %v775 = vmul.f32 %v753, %v773
    %v776 = vmul.f32 %v754, %v773
    %v777 = vmul.f32 %v755, %v773
    %v778 = vmul.f32 %v756, %v773
    %v779 = vmul.f32 %v757, %v773
    %v786 = vrot.slane %v774, 1
    %v787 = vrot.slane %v775, 1
    %v788 = vsel %vm192, %v786, %v787
    %v789 = vrot.slane %v776, 1
    %v790 = vsel %vm192, %v787, %v789
    %v791 = vrot.slane %v777, 1
    %v792 = vrot.slane %v778, 1
    %v793 = vsel %vm192, %v791, %v792
    %v794 = vrot.slane %v779, 1
    %v795 = vsel %vm192, %v792, %v794
    %v802 = vadd.f32 %v763, %v788
    %v803 = vadd.f32 %v764, %v790
    %v804 = vadd.f32 %v765, %v789
    %v805 = vadd.f32 %v766, %v793
    %v806 = vadd.f32 %v767, %v795
    %v807 = vadd.f32 %v768, %v794
    %v808 = vld [vmem:[%s6 + $0x6] sm:$0x1]
    %v809 = vlaneseq
    %v810 = vshrl.u32 %v809, 7
    %v811 = vsub.s32 0, %v810
    %v812 = vrot.slane %v808, %v811
    %v813 = vmul.f32 %v752, %v812
    %v814 = vmul.f32 %v753, %v812
    %v815 = vmul.f32 %v754, %v812
    %v816 = vmul.f32 %v755, %v812
    %v817 = vmul.f32 %v756, %v812
    %v818 = vmul.f32 %v757, %v812
    %v825 = vrot.slane %v813, 2
    %v826 = vrot.slane %v814, 2
    %v827 = vsel %vm215, %v825, %v826
    %v828 = vrot.slane %v815, 2
    %v829 = vsel %vm215, %v826, %v828
    %v830 = vrot.slane %v816, 2
    %v831 = vrot.slane %v817, 2
    %v832 = vsel %vm215, %v830, %v831
    %v833 = vrot.slane %v818, 2
    %v834 = vsel %vm215, %v831, %v833
    %v841 = vadd.f32 %v802, %v827
    %v842 = vadd.f32 %v803, %v829
    %v843 = vadd.f32 %v804, %v828
    %v844 = vadd.f32 %v805, %v832
    %v845 = vadd.f32 %v806, %v834
    %v846 = vadd.f32 %v807, %v833
    %v847 = vld [vmem:[%s8 + $0x1] sm:$0x1]
    %v848 = vlaneseq
    %v849 = vshrl.u32 %v848, 7
    %v850 = vsub.s32 0, %v849
    %v851 = vrot.slane %v847, %v850
    %v852 = vmul.f32 %v752, %v851
    %v853 = vmul.f32 %v753, %v851
    %v854 = vmul.f32 %v754, %v851
    %v855 = vmul.f32 %v755, %v851
    %v856 = vmul.f32 %v756, %v851
    %v857 = vmul.f32 %v757, %v851
    %v858 = vld [vmem:[%s8 + $0x6] sm:$0x1]
    %v859 = vlaneseq
    %v860 = vshrl.u32 %v859, 7
    %v861 = vsub.s32 0, %v860
    %v862 = vrot.slane %v858, %v861
    %v863 = vmul.f32 %v752, %v862
    %v864 = vmul.f32 %v753, %v862
    %v865 = vmul.f32 %v754, %v862
    %v866 = vmul.f32 %v755, %v862
    %v867 = vmul.f32 %v756, %v862
    %v868 = vmul.f32 %v757, %v862
    %v875 = vrot.slane %v863, 1
    %v876 = vrot.slane %v864, 1
    %v877 = vsel %vm192, %v875, %v876
    %v878 = vrot.slane %v865, 1
    %v879 = vsel %vm192, %v876, %v878
    %v880 = vrot.slane %v866, 1
    %v881 = vrot.slane %v867, 1
    %v882 = vsel %vm192, %v880, %v881
    %v883 = vrot.slane %v868, 1
    %v884 = vsel %vm192, %v881, %v883
    %v891 = vadd.f32 %v852, %v877
    %v892 = vadd.f32 %v853, %v879
    %v893 = vadd.f32 %v854, %v878
    %v894 = vadd.f32 %v855, %v882
    %v895 = vadd.f32 %v856, %v884
    %v896 = vadd.f32 %v857, %v883
    %v897 = vld [vmem:[%s8 + $0xb] sm:$0x1]
    %v898 = vlaneseq
    %v899 = vshrl.u32 %v898, 7
    %v900 = vsub.s32 0, %v899
    %v901 = vrot.slane %v897, %v900
    %v902 = vmul.f32 %v752, %v901
    %v903 = vmul.f32 %v753, %v901
    %v904 = vmul.f32 %v754, %v901
    %v905 = vmul.f32 %v755, %v901
    %v906 = vmul.f32 %v756, %v901
    %v907 = vmul.f32 %v757, %v901
    %v914 = vrot.slane %v902, 2
    %v915 = vrot.slane %v903, 2
    %v916 = vsel %vm215, %v914, %v915
    %v917 = vrot.slane %v904, 2
    %v918 = vsel %vm215, %v915, %v917
    %v919 = vrot.slane %v905, 2
    %v920 = vrot.slane %v906, 2
    %v921 = vsel %vm215, %v919, %v920
    %v922 = vrot.slane %v907, 2
    %v923 = vsel %vm215, %v920, %v922
    %v930 = vadd.f32 %v891, %v916
    %v931 = vadd.f32 %v892, %v918
    %v932 = vadd.f32 %v893, %v917
    %v933 = vadd.f32 %v894, %v921
    %v934 = vadd.f32 %v895, %v923
    %v935 = vadd.f32 %v896, %v922
    %v936 = vld [vmem:[%s8 + $0x10] sm:$0x1]
    %v937 = vlaneseq
    %v938 = vshrl.u32 %v937, 7
    %v939 = vsub.s32 0, %v938
    %v940 = vrot.slane %v936, %v939
    %v941 = vmul.f32 %v752, %v940
    %v942 = vmul.f32 %v753, %v940
    %v943 = vmul.f32 %v754, %v940
    %v944 = vmul.f32 %v755, %v940
    %v945 = vmul.f32 %v756, %v940
    %v946 = vmul.f32 %v757, %v940
    %v953 = vrot.slane %v941, 3
    %v954 = vrot.slane %v942, 3
    %v955 = vsel %vm245, %v953, %v954
    %v956 = vrot.slane %v943, 3
    %v957 = vsel %vm245, %v954, %v956
    %v958 = vrot.slane %v944, 3
    %v959 = vrot.slane %v945, 3
    %v960 = vsel %vm245, %v958, %v959
    %v961 = vrot.slane %v946, 3
    %v962 = vsel %vm245, %v959, %v961
    %v969 = vadd.f32 %v930, %v955
    %v970 = vadd.f32 %v931, %v957
    %v971 = vadd.f32 %v932, %v956
    %v972 = vadd.f32 %v933, %v960
    %v973 = vadd.f32 %v934, %v962
    %v974 = vadd.f32 %v935, %v961
    %v975 = vld [vmem:[%s8 + $0x15] sm:$0x1]
    %v976 = vlaneseq
    %v977 = vshrl.u32 %v976, 7
    %v978 = vsub.s32 0, %v977
    %v979 = vrot.slane %v975, %v978
    %v980 = vmul.f32 %v752, %v979
    %v981 = vmul.f32 %v753, %v979
    %v982 = vmul.f32 %v754, %v979
    %v983 = vmul.f32 %v755, %v979
    %v984 = vmul.f32 %v756, %v979
    %v985 = vmul.f32 %v757, %v979
    %vm992 = vcmask 1043456
    %v993 = vrot.slane %v980, 4
    %v994 = vrot.slane %v981, 4
    %v995 = vsel %vm992, %v993, %v994
    %v996 = vrot.slane %v982, 4
    %v997 = vsel %vm992, %v994, %v996
    %v998 = vrot.slane %v983, 4
    %v999 = vrot.slane %v984, 4
    %v1000 = vsel %vm992, %v998, %v999
    %v1001 = vrot.slane %v985, 4
    %v1002 = vsel %vm992, %v999, %v1001
    %v1009 = vadd.f32 %v969, %v995
    %v1010 = vadd.f32 %v970, %v997
    %v1011 = vadd.f32 %v971, %v996
    %v1012 = vadd.f32 %v972, %v1000
    %v1013 = vadd.f32 %v973, %v1002
    %v1014 = vadd.f32 %v974, %v1001
    %v1015 = vmax.f32 %v135, 0.0
    %v1016 = vmax.f32 %v136, 0.0
    %v1017 = vmax.f32 %v137, 0.0
    %v1018 = vmax.f32 %v138, 0.0
    %v1019 = vmax.f32 %v139, 0.0
    %v1020 = vmax.f32 %v140, 0.0
    %v1021 = vld [vmem:[%s6 + $0x2] sm:$0x1]
    %v1022 = vlaneseq
    %v1023 = vshrl.u32 %v1022, 7
    %v1024 = vsub.s32 0, %v1023
    %v1025 = vrot.slane %v1021, %v1024
    %v1026 = vmul.f32 %v1015, %v1025
    %v1027 = vmul.f32 %v1016, %v1025
    %v1028 = vmul.f32 %v1017, %v1025
    %v1029 = vmul.f32 %v1018, %v1025
    %v1030 = vmul.f32 %v1019, %v1025
    %v1031 = vmul.f32 %v1020, %v1025
    %v1032 = vadd.f32 %v841, %v1026
    %v1033 = vadd.f32 %v842, %v1027
    %v1034 = vadd.f32 %v843, %v1028
    %v1035 = vadd.f32 %v844, %v1029
    %v1036 = vadd.f32 %v845, %v1030
    %v1037 = vadd.f32 %v846, %v1031
    %v1038 = vld [vmem:[%s6 + $0x5] sm:$0x1]
    %v1039 = vlaneseq
    %v1040 = vshrl.u32 %v1039, 7
    %v1041 = vsub.s32 0, %v1040
    %v1042 = vrot.slane %v1038, %v1041
    %v1043 = vmul.f32 %v1015, %v1042
    %v1044 = vmul.f32 %v1016, %v1042
    %v1045 = vmul.f32 %v1017, %v1042
    %v1046 = vmul.f32 %v1018, %v1042
    %v1047 = vmul.f32 %v1019, %v1042
    %v1048 = vmul.f32 %v1020, %v1042
    %v1055 = vrot.slane %v1043, 1
    %v1056 = vrot.slane %v1044, 1
    %v1057 = vsel %vm192, %v1055, %v1056
    %v1058 = vrot.slane %v1045, 1
    %v1059 = vsel %vm192, %v1056, %v1058
    %v1060 = vrot.slane %v1046, 1
    %v1061 = vrot.slane %v1047, 1
    %v1062 = vsel %vm192, %v1060, %v1061
    %v1063 = vrot.slane %v1048, 1
    %v1064 = vsel %vm192, %v1061, %v1063
    %v1071 = vadd.f32 %v1032, %v1057
    %v1072 = vadd.f32 %v1033, %v1059
    %v1073 = vadd.f32 %v1034, %v1058
    %v1074 = vadd.f32 %v1035, %v1062
    %v1075 = vadd.f32 %v1036, %v1064
    %v1076 = vadd.f32 %v1037, %v1063
    %v1077 = vld [vmem:[%s6 + $0x8] sm:$0x1]
    %v1078 = vlaneseq
    %v1079 = vshrl.u32 %v1078, 7
    %v1080 = vsub.s32 0, %v1079
    %v1081 = vrot.slane %v1077, %v1080
    %v1082 = vmul.f32 %v1015, %v1081
    %v1083 = vmul.f32 %v1016, %v1081
    %v1084 = vmul.f32 %v1017, %v1081
    %v1085 = vmul.f32 %v1018, %v1081
    %v1086 = vmul.f32 %v1019, %v1081
    %v1087 = vmul.f32 %v1020, %v1081
    %v1094 = vrot.slane %v1082, 2
    %v1095 = vrot.slane %v1083, 2
    %v1096 = vsel %vm215, %v1094, %v1095
    %v1097 = vrot.slane %v1084, 2
    %v1098 = vsel %vm215, %v1095, %v1097
    %v1099 = vrot.slane %v1085, 2
    %v1100 = vrot.slane %v1086, 2
    %v1101 = vsel %vm215, %v1099, %v1100
    %v1102 = vrot.slane %v1087, 2
    %v1103 = vsel %vm215, %v1100, %v1102
    %v1110 = vadd.f32 %v1071, %v1096
    %v1111 = vadd.f32 %v1072, %v1098
    %v1112 = vadd.f32 %v1073, %v1097
    %v1113 = vadd.f32 %v1074, %v1101
    %v1114 = vadd.f32 %v1075, %v1103
    %v1115 = vadd.f32 %v1076, %v1102
    %v1116 = vld [vmem:[%s8 + $0x3] sm:$0x1]
    %v1117 = vlaneseq
    %v1118 = vshrl.u32 %v1117, 7
    %v1119 = vsub.s32 0, %v1118
    %v1120 = vrot.slane %v1116, %v1119
    %v1121 = vmul.f32 %v1015, %v1120
    %v1122 = vmul.f32 %v1016, %v1120
    %v1123 = vmul.f32 %v1017, %v1120
    %v1124 = vmul.f32 %v1018, %v1120
    %v1125 = vmul.f32 %v1019, %v1120
    %v1126 = vmul.f32 %v1020, %v1120
    %v1127 = vadd.f32 %v1009, %v1121
    %v1128 = vadd.f32 %v1010, %v1122
    %v1129 = vadd.f32 %v1011, %v1123
    %v1130 = vadd.f32 %v1012, %v1124
    %v1131 = vadd.f32 %v1013, %v1125
    %v1132 = vadd.f32 %v1014, %v1126
    %v1133 = vld [vmem:[%s8 + $0x8] sm:$0x1]
    %v1134 = vlaneseq
    %v1135 = vshrl.u32 %v1134, 7
    %v1136 = vsub.s32 0, %v1135
    %v1137 = vrot.slane %v1133, %v1136
    %v1138 = vmul.f32 %v1015, %v1137
    %v1139 = vmul.f32 %v1016, %v1137
    %v1140 = vmul.f32 %v1017, %v1137
    %v1141 = vmul.f32 %v1018, %v1137
    %v1142 = vmul.f32 %v1019, %v1137
    %v1143 = vmul.f32 %v1020, %v1137
    %v1150 = vrot.slane %v1138, 1
    %v1151 = vrot.slane %v1139, 1
    %v1152 = vsel %vm192, %v1150, %v1151
    %v1153 = vrot.slane %v1140, 1
    %v1154 = vsel %vm192, %v1151, %v1153
    %v1155 = vrot.slane %v1141, 1
    %v1156 = vrot.slane %v1142, 1
    %v1157 = vsel %vm192, %v1155, %v1156
    %v1158 = vrot.slane %v1143, 1
    %v1159 = vsel %vm192, %v1156, %v1158
    %v1166 = vadd.f32 %v1127, %v1152
    %v1167 = vadd.f32 %v1128, %v1154
    %v1168 = vadd.f32 %v1129, %v1153
    %v1169 = vadd.f32 %v1130, %v1157
    %v1170 = vadd.f32 %v1131, %v1159
    %v1171 = vadd.f32 %v1132, %v1158
    %v1172 = vld [vmem:[%s8 + $0xd] sm:$0x1]
    %v1173 = vlaneseq
    %v1174 = vshrl.u32 %v1173, 7
    %v1175 = vsub.s32 0, %v1174
    %v1176 = vrot.slane %v1172, %v1175
    %v1177 = vmul.f32 %v1015, %v1176
    %v1178 = vmul.f32 %v1016, %v1176
    %v1179 = vmul.f32 %v1017, %v1176
    %v1180 = vmul.f32 %v1018, %v1176
    %v1181 = vmul.f32 %v1019, %v1176
    %v1182 = vmul.f32 %v1020, %v1176
    %v1189 = vrot.slane %v1177, 2
    %v1190 = vrot.slane %v1178, 2
    %v1191 = vsel %vm215, %v1189, %v1190
    %v1192 = vrot.slane %v1179, 2
    %v1193 = vsel %vm215, %v1190, %v1192
    %v1194 = vrot.slane %v1180, 2
    %v1195 = vrot.slane %v1181, 2
    %v1196 = vsel %vm215, %v1194, %v1195
    %v1197 = vrot.slane %v1182, 2
    %v1198 = vsel %vm215, %v1195, %v1197
    %v1205 = vadd.f32 %v1166, %v1191
    %v1206 = vadd.f32 %v1167, %v1193
    %v1207 = vadd.f32 %v1168, %v1192
    %v1208 = vadd.f32 %v1169, %v1196
    %v1209 = vadd.f32 %v1170, %v1198
    %v1210 = vadd.f32 %v1171, %v1197
    %v1211 = vld [vmem:[%s8 + $0x12] sm:$0x1]
    %v1212 = vlaneseq
    %v1213 = vshrl.u32 %v1212, 7
    %v1214 = vsub.s32 0, %v1213
    %v1215 = vrot.slane %v1211, %v1214
    %v1216 = vmul.f32 %v1015, %v1215
    %v1217 = vmul.f32 %v1016, %v1215
    %v1218 = vmul.f32 %v1017, %v1215
    %v1219 = vmul.f32 %v1018, %v1215
    %v1220 = vmul.f32 %v1019, %v1215
    %v1221 = vmul.f32 %v1020, %v1215
    %v1228 = vrot.slane %v1216, 3
    %v1229 = vrot.slane %v1217, 3
    %v1230 = vsel %vm245, %v1228, %v1229
    %v1231 = vrot.slane %v1218, 3
    %v1232 = vsel %vm245, %v1229, %v1231
    %v1233 = vrot.slane %v1219, 3
    %v1234 = vrot.slane %v1220, 3
    %v1235 = vsel %vm245, %v1233, %v1234
    %v1236 = vrot.slane %v1221, 3
    %v1237 = vsel %vm245, %v1234, %v1236
    %v1244 = vadd.f32 %v1205, %v1230
    %v1245 = vadd.f32 %v1206, %v1232
    %v1246 = vadd.f32 %v1207, %v1231
    %v1247 = vadd.f32 %v1208, %v1235
    %v1248 = vadd.f32 %v1209, %v1237
    %v1249 = vadd.f32 %v1210, %v1236
    %v1250 = vld [vmem:[%s8 + $0x17] sm:$0x1]
    %v1251 = vlaneseq
    %v1252 = vshrl.u32 %v1251, 7
    %v1253 = vsub.s32 0, %v1252
    %v1254 = vrot.slane %v1250, %v1253
    %v1255 = vmul.f32 %v1015, %v1254
    %v1256 = vmul.f32 %v1016, %v1254
    %v1257 = vmul.f32 %v1017, %v1254
    %v1258 = vmul.f32 %v1018, %v1254
    %v1259 = vmul.f32 %v1019, %v1254
    %v1260 = vmul.f32 %v1020, %v1254
    %v1267 = vrot.slane %v1255, 4
    %v1268 = vrot.slane %v1256, 4
    %v1269 = vsel %vm992, %v1267, %v1268
    %v1270 = vrot.slane %v1257, 4
    %v1271 = vsel %vm992, %v1268, %v1270
    %v1272 = vrot.slane %v1258, 4
    %v1273 = vrot.slane %v1259, 4
    %v1274 = vsel %vm992, %v1272, %v1273
    %v1275 = vrot.slane %v1260, 4
    %v1276 = vsel %vm992, %v1273, %v1275
    %v1283 = vadd.f32 %v1244, %v1269
    %v1284 = vadd.f32 %v1245, %v1271
    %v1285 = vadd.f32 %v1246, %v1270
    %v1286 = vadd.f32 %v1247, %v1274
    %v1287 = vadd.f32 %v1248, %v1276
    %v1288 = vadd.f32 %v1249, %v1275
    %v1289 = vmax.f32 %v83, 0.0
    %v1290 = vmax.f32 %v84, 0.0
    %v1291 = vmax.f32 %v85, 0.0
    %v1292 = vmax.f32 %v86, 0.0
    %v1293 = vmax.f32 %v87, 0.0
    %v1294 = vmax.f32 %v88, 0.0
    %v1295 = vld [vmem:[%s6 + $0x1] sm:$0x1]
    %v1296 = vlaneseq
    %v1297 = vshrl.u32 %v1296, 7
    %v1298 = vsub.s32 0, %v1297
    %v1299 = vrot.slane %v1295, %v1298
    %v1300 = vmul.f32 %v1289, %v1299
    %v1301 = vmul.f32 %v1290, %v1299
    %v1302 = vmul.f32 %v1291, %v1299
    %v1303 = vmul.f32 %v1292, %v1299
    %v1304 = vmul.f32 %v1293, %v1299
    %v1305 = vmul.f32 %v1294, %v1299
    %v1306 = vadd.f32 %v1110, %v1300
    %v1307 = vadd.f32 %v1111, %v1301
    %v1308 = vadd.f32 %v1112, %v1302
    %v1309 = vadd.f32 %v1113, %v1303
    %v1310 = vadd.f32 %v1114, %v1304
    %v1311 = vadd.f32 %v1115, %v1305
    %v1312 = vld [vmem:[%s6 + $0x4] sm:$0x1]
    %v1313 = vlaneseq
    %v1314 = vshrl.u32 %v1313, 7
    %v1315 = vsub.s32 0, %v1314
    %v1316 = vrot.slane %v1312, %v1315
    %v1317 = vmul.f32 %v1289, %v1316
    %v1318 = vmul.f32 %v1290, %v1316
    %v1319 = vmul.f32 %v1291, %v1316
    %v1320 = vmul.f32 %v1292, %v1316
    %v1321 = vmul.f32 %v1293, %v1316
    %v1322 = vmul.f32 %v1294, %v1316
    %v1329 = vrot.slane %v1317, 1
    %v1330 = vrot.slane %v1318, 1
    %v1331 = vsel %vm192, %v1329, %v1330
    %v1332 = vrot.slane %v1319, 1
    %v1333 = vsel %vm192, %v1330, %v1332
    %v1334 = vrot.slane %v1320, 1
    %v1335 = vrot.slane %v1321, 1
    %v1336 = vsel %vm192, %v1334, %v1335
    %v1337 = vrot.slane %v1322, 1
    %v1338 = vsel %vm192, %v1335, %v1337
    %v1345 = vadd.f32 %v1306, %v1331
    %v1346 = vadd.f32 %v1307, %v1333
    %v1347 = vadd.f32 %v1308, %v1332
    %v1348 = vadd.f32 %v1309, %v1336
    %v1349 = vadd.f32 %v1310, %v1338
    %v1350 = vadd.f32 %v1311, %v1337
    %v1351 = vld [vmem:[%s6 + $0x7] sm:$0x1]
    %v1352 = vlaneseq
    %v1353 = vshrl.u32 %v1352, 7
    %v1354 = vsub.s32 0, %v1353
    %v1355 = vrot.slane %v1351, %v1354
    %v1356 = vmul.f32 %v1289, %v1355
    %v1357 = vmul.f32 %v1290, %v1355
    %v1358 = vmul.f32 %v1291, %v1355
    %v1359 = vmul.f32 %v1292, %v1355
    %v1360 = vmul.f32 %v1293, %v1355
    %v1361 = vmul.f32 %v1294, %v1355
    %v1368 = vrot.slane %v1356, 2
    %v1369 = vrot.slane %v1357, 2
    %v1370 = vsel %vm215, %v1368, %v1369
    %v1371 = vrot.slane %v1358, 2
    %v1372 = vsel %vm215, %v1369, %v1371
    %v1373 = vrot.slane %v1359, 2
    %v1374 = vrot.slane %v1360, 2
    %v1375 = vsel %vm215, %v1373, %v1374
    %v1376 = vrot.slane %v1361, 2
    %v1377 = vsel %vm215, %v1374, %v1376
    %v1384 = vadd.f32 %v1345, %v1370
    %v1385 = vadd.f32 %v1346, %v1372
    %v1386 = vadd.f32 %v1347, %v1371
    %v1387 = vadd.f32 %v1348, %v1375
    %v1388 = vadd.f32 %v1349, %v1377
    %v1389 = vadd.f32 %v1350, %v1376
    %v1390 = vld [vmem:[%s8 + $0x2] sm:$0x1]
    %v1391 = vlaneseq
    %v1392 = vshrl.u32 %v1391, 7
    %v1393 = vsub.s32 0, %v1392
    %v1394 = vrot.slane %v1390, %v1393
    %v1395 = vmul.f32 %v1289, %v1394
    %v1396 = vmul.f32 %v1290, %v1394
    %v1397 = vmul.f32 %v1291, %v1394
    %v1398 = vmul.f32 %v1292, %v1394
    %v1399 = vmul.f32 %v1293, %v1394
    %v1400 = vmul.f32 %v1294, %v1394
    %v1401 = vadd.f32 %v1283, %v1395
    %v1402 = vadd.f32 %v1284, %v1396
    %v1403 = vadd.f32 %v1285, %v1397
    %v1404 = vadd.f32 %v1286, %v1398
    %v1405 = vadd.f32 %v1287, %v1399
    %v1406 = vadd.f32 %v1288, %v1400
    %v1407 = vld [vmem:[%s8 + $0x7] sm:$0x1]
    %v1408 = vlaneseq
    %v1409 = vshrl.u32 %v1408, 7
    %v1410 = vsub.s32 0, %v1409
    %v1411 = vrot.slane %v1407, %v1410
    %v1412 = vmul.f32 %v1289, %v1411
    %v1413 = vmul.f32 %v1290, %v1411
    %v1414 = vmul.f32 %v1291, %v1411
    %v1415 = vmul.f32 %v1292, %v1411
    %v1416 = vmul.f32 %v1293, %v1411
    %v1417 = vmul.f32 %v1294, %v1411
    %v1424 = vrot.slane %v1412, 1
    %v1425 = vrot.slane %v1413, 1
    %v1426 = vsel %vm192, %v1424, %v1425
    %v1427 = vrot.slane %v1414, 1
    %v1428 = vsel %vm192, %v1425, %v1427
    %v1429 = vrot.slane %v1415, 1
    %v1430 = vrot.slane %v1416, 1
    %v1431 = vsel %vm192, %v1429, %v1430
    %v1432 = vrot.slane %v1417, 1
    %v1433 = vsel %vm192, %v1430, %v1432
    %v1440 = vadd.f32 %v1401, %v1426
    %v1441 = vadd.f32 %v1402, %v1428
    %v1442 = vadd.f32 %v1403, %v1427
    %v1443 = vadd.f32 %v1404, %v1431
    %v1444 = vadd.f32 %v1405, %v1433
    %v1445 = vadd.f32 %v1406, %v1432
    %v1446 = vld [vmem:[%s8 + $0xc] sm:$0x1]
    %v1447 = vlaneseq
    %v1448 = vshrl.u32 %v1447, 7
    %v1449 = vsub.s32 0, %v1448
    %v1450 = vrot.slane %v1446, %v1449
    %v1451 = vmul.f32 %v1289, %v1450
    %v1452 = vmul.f32 %v1290, %v1450
    %v1453 = vmul.f32 %v1291, %v1450
    %v1454 = vmul.f32 %v1292, %v1450
    %v1455 = vmul.f32 %v1293, %v1450
    %v1456 = vmul.f32 %v1294, %v1450
    %v1463 = vrot.slane %v1451, 2
    %v1464 = vrot.slane %v1452, 2
    %v1465 = vsel %vm215, %v1463, %v1464
    %v1466 = vrot.slane %v1453, 2
    %v1467 = vsel %vm215, %v1464, %v1466
    %v1468 = vrot.slane %v1454, 2
    %v1469 = vrot.slane %v1455, 2
    %v1470 = vsel %vm215, %v1468, %v1469
    %v1471 = vrot.slane %v1456, 2
    %v1472 = vsel %vm215, %v1469, %v1471
    %v1479 = vadd.f32 %v1440, %v1465
    %v1480 = vadd.f32 %v1441, %v1467
    %v1481 = vadd.f32 %v1442, %v1466
    %v1482 = vadd.f32 %v1443, %v1470
    %v1483 = vadd.f32 %v1444, %v1472
    %v1484 = vadd.f32 %v1445, %v1471
    %v1485 = vld [vmem:[%s8 + $0x11] sm:$0x1]
    %v1486 = vlaneseq
    %v1487 = vshrl.u32 %v1486, 7
    %v1488 = vsub.s32 0, %v1487
    %v1489 = vrot.slane %v1485, %v1488
    %v1490 = vmul.f32 %v1289, %v1489
    %v1491 = vmul.f32 %v1290, %v1489
    %v1492 = vmul.f32 %v1291, %v1489
    %v1493 = vmul.f32 %v1292, %v1489
    %v1494 = vmul.f32 %v1293, %v1489
    %v1495 = vmul.f32 %v1294, %v1489
    %v1502 = vrot.slane %v1490, 3
    %v1503 = vrot.slane %v1491, 3
    %v1504 = vsel %vm245, %v1502, %v1503
    %v1505 = vrot.slane %v1492, 3
    %v1506 = vsel %vm245, %v1503, %v1505
    %v1507 = vrot.slane %v1493, 3
    %v1508 = vrot.slane %v1494, 3
    %v1509 = vsel %vm245, %v1507, %v1508
    %v1510 = vrot.slane %v1495, 3
    %v1511 = vsel %vm245, %v1508, %v1510
    %v1518 = vadd.f32 %v1479, %v1504
    %v1519 = vadd.f32 %v1480, %v1506
    %v1520 = vadd.f32 %v1481, %v1505
    %v1521 = vadd.f32 %v1482, %v1509
    %v1522 = vadd.f32 %v1483, %v1511
    %v1523 = vadd.f32 %v1484, %v1510
    %v1524 = vld [vmem:[%s8 + $0x16] sm:$0x1]
    %v1525 = vlaneseq
    %v1526 = vshrl.u32 %v1525, 7
    %v1527 = vsub.s32 0, %v1526
    %v1528 = vrot.slane %v1524, %v1527
    %v1529 = vmul.f32 %v1289, %v1528
    %v1530 = vmul.f32 %v1290, %v1528
    %v1531 = vmul.f32 %v1291, %v1528
    %v1532 = vmul.f32 %v1292, %v1528
    %v1533 = vmul.f32 %v1293, %v1528
    %v1534 = vmul.f32 %v1294, %v1528
    %v1541 = vrot.slane %v1529, 4
    %v1542 = vrot.slane %v1530, 4
    %v1543 = vsel %vm992, %v1541, %v1542
    %v1544 = vrot.slane %v1531, 4
    %v1545 = vsel %vm992, %v1542, %v1544
    %v1546 = vrot.slane %v1532, 4
    %v1547 = vrot.slane %v1533, 4
    %v1548 = vsel %vm992, %v1546, %v1547
    %v1549 = vrot.slane %v1534, 4
    %v1550 = vsel %vm992, %v1547, %v1549
    %v1557 = vadd.f32 %v1518, %v1543
    %v1558 = vadd.f32 %v1519, %v1545
    %v1559 = vadd.f32 %v1520, %v1544
    %v1560 = vadd.f32 %v1521, %v1548
    %v1561 = vadd.f32 %v1522, %v1550
    %v1562 = vadd.f32 %v1523, %v1549
    %v1563 = vld [vmem:[%s10 + $0x1] sm:$0x1]
    %v1564 = vlaneseq
    %v1565 = vshrl.u32 %v1564, 7
    %v1566 = vsub.s32 0, %v1565
    %v1567 = vrot.slane %v1563, %v1566
    %v1568 = vmul.f32 %v1289, %v1567
    %v1569 = vmul.f32 %v1290, %v1567
    %v1570 = vmul.f32 %v1291, %v1567
    %v1571 = vmul.f32 %v1292, %v1567
    %v1572 = vmul.f32 %v1293, %v1567
    %v1573 = vmul.f32 %v1294, %v1567
    %v1574 = vld [vmem:[%s10 + $0x4] sm:$0x1]
    %v1575 = vlaneseq
    %v1576 = vshrl.u32 %v1575, 7
    %v1577 = vsub.s32 0, %v1576
    %v1578 = vrot.slane %v1574, %v1577
    %v1579 = vmul.f32 %v1289, %v1578
    %v1580 = vmul.f32 %v1290, %v1578
    %v1581 = vmul.f32 %v1291, %v1578
    %v1582 = vmul.f32 %v1292, %v1578
    %v1583 = vmul.f32 %v1293, %v1578
    %v1584 = vmul.f32 %v1294, %v1578
    %v1591 = vrot.slane %v1579, 2
    %v1592 = vrot.slane %v1580, 2
    %v1593 = vsel %vm215, %v1591, %v1592
    %v1594 = vrot.slane %v1581, 2
    %v1595 = vsel %vm215, %v1592, %v1594
    %v1596 = vrot.slane %v1582, 2
    %v1597 = vrot.slane %v1583, 2
    %v1598 = vsel %vm215, %v1596, %v1597
    %v1599 = vrot.slane %v1584, 2
    %v1600 = vsel %vm215, %v1597, %v1599
    %v1607 = vadd.f32 %v1568, %v1593
    %v1608 = vadd.f32 %v1569, %v1595
    %v1609 = vadd.f32 %v1570, %v1594
    %v1610 = vadd.f32 %v1571, %v1598
    %v1611 = vadd.f32 %v1572, %v1600
    %v1612 = vadd.f32 %v1573, %v1599
    %v1613 = vld [vmem:[%s10 + $0x7] sm:$0x1]
    %v1614 = vlaneseq
    %v1615 = vshrl.u32 %v1614, 7
    %v1616 = vsub.s32 0, %v1615
    %v1617 = vrot.slane %v1613, %v1616
    %v1618 = vmul.f32 %v1289, %v1617
    %v1619 = vmul.f32 %v1290, %v1617
    %v1620 = vmul.f32 %v1291, %v1617
    %v1621 = vmul.f32 %v1292, %v1617
    %v1622 = vmul.f32 %v1293, %v1617
    %v1623 = vmul.f32 %v1294, %v1617
    %v1630 = vrot.slane %v1618, 4
    %v1631 = vrot.slane %v1619, 4
    %v1632 = vsel %vm992, %v1630, %v1631
    %v1633 = vrot.slane %v1620, 4
    %v1634 = vsel %vm992, %v1631, %v1633
    %v1635 = vrot.slane %v1621, 4
    %v1636 = vrot.slane %v1622, 4
    %v1637 = vsel %vm992, %v1635, %v1636
    %v1638 = vrot.slane %v1623, 4
    %v1639 = vsel %vm992, %v1636, %v1638
    %v1646 = vadd.f32 %v1607, %v1632
    %v1647 = vadd.f32 %v1608, %v1634
    %v1648 = vadd.f32 %v1609, %v1633
    %v1649 = vadd.f32 %v1610, %v1637
    %v1650 = vadd.f32 %v1611, %v1639
    %v1651 = vadd.f32 %v1612, %v1638
    %v1652 = vld [vmem:[%s11 + $0x2] sm:$0x1]
    %v1653 = vlaneseq
    %v1654 = vshrl.u32 %v1653, 7
    %v1655 = vsub.s32 0, %v1654
    %v1656 = vrot.slane %v1652, %v1655
    %v1657 = vmul.f32 %v1289, %v1656
    %v1658 = vmul.f32 %v1290, %v1656
    %v1659 = vmul.f32 %v1292, %v1656
    %v1660 = vmul.f32 %v1293, %v1656
    %v1661 = vld [vmem:[%s11 + $0x7] sm:$0x1]
    %v1662 = vlaneseq
    %v1663 = vshrl.u32 %v1662, 7
    %v1664 = vsub.s32 0, %v1663
    %v1665 = vrot.slane %v1661, %v1664
    %v1666 = vmul.f32 %v1289, %v1665
    %v1667 = vmul.f32 %v1290, %v1665
    %v1668 = vmul.f32 %v1291, %v1665
    %v1669 = vmul.f32 %v1292, %v1665
    %v1670 = vmul.f32 %v1293, %v1665
    %v1671 = vmul.f32 %v1294, %v1665
    %v1678 = vrot.slane %v1666, 2
    %v1679 = vrot.slane %v1667, 2
    %v1680 = vsel %vm215, %v1678, %v1679
    %v1681 = vrot.slane %v1668, 2
    %v1682 = vsel %vm215, %v1679, %v1681
    %v1683 = vrot.slane %v1669, 2
    %v1684 = vrot.slane %v1670, 2
    %v1685 = vsel %vm215, %v1683, %v1684
    %v1686 = vrot.slane %v1671, 2
    %v1687 = vsel %vm215, %v1684, %v1686
    %v1692 = vadd.f32 %v1657, %v1680
    %v1693 = vadd.f32 %v1658, %v1682
    %v1694 = vadd.f32 %v1659, %v1685
    %v1695 = vadd.f32 %v1660, %v1687
    %v1696 = vld [vmem:[%s11 + $0xc] sm:$0x1]
    %v1697 = vlaneseq
    %v1698 = vshrl.u32 %v1697, 7
    %v1699 = vsub.s32 0, %v1698
    %v1700 = vrot.slane %v1696, %v1699
    %v1701 = vmul.f32 %v1289, %v1700
    %v1702 = vmul.f32 %v1290, %v1700
    %v1703 = vmul.f32 %v1291, %v1700
    %v1704 = vmul.f32 %v1292, %v1700
    %v1705 = vmul.f32 %v1293, %v1700
    %v1706 = vmul.f32 %v1294, %v1700
    %v1713 = vrot.slane %v1701, 4
    %v1714 = vrot.slane %v1702, 4
    %v1715 = vsel %vm992, %v1713, %v1714
    %v1716 = vrot.slane %v1703, 4
    %v1717 = vsel %vm992, %v1714, %v1716
    %v1718 = vrot.slane %v1704, 4
    %v1719 = vrot.slane %v1705, 4
    %v1720 = vsel %vm992, %v1718, %v1719
    %v1721 = vrot.slane %v1706, 4
    %v1722 = vsel %vm992, %v1719, %v1721
    %v1727 = vadd.f32 %v1692, %v1715
    %v1728 = vadd.f32 %v1693, %v1717
    %v1729 = vadd.f32 %v1694, %v1720
    %v1730 = vadd.f32 %v1695, %v1722
    %v1731 = vld [vmem:[%s11 + $0x11] sm:$0x1]
    %v1732 = vlaneseq
    %v1733 = vshrl.u32 %v1732, 7
    %v1734 = vsub.s32 0, %v1733
    %v1735 = vrot.slane %v1731, %v1734
    %v1736 = vmul.f32 %v1289, %v1735
    %v1737 = vmul.f32 %v1290, %v1735
    %v1738 = vmul.f32 %v1291, %v1735
    %v1739 = vmul.f32 %v1292, %v1735
    %v1740 = vmul.f32 %v1293, %v1735
    %v1741 = vmul.f32 %v1294, %v1735
    %vm1748 = vcmask 1041408
    %v1749 = vrot.slane %v1736, 6
    %v1750 = vrot.slane %v1737, 6
    %v1751 = vsel %vm1748, %v1749, %v1750
    %v1752 = vrot.slane %v1738, 6
    %v1753 = vsel %vm1748, %v1750, %v1752
    %v1754 = vrot.slane %v1739, 6
    %v1755 = vrot.slane %v1740, 6
    %v1756 = vsel %vm1748, %v1754, %v1755
    %v1757 = vrot.slane %v1741, 6
    %v1758 = vsel %vm1748, %v1755, %v1757
    %v1763 = vadd.f32 %v1727, %v1751
    %v1764 = vadd.f32 %v1728, %v1753
    %v1765 = vadd.f32 %v1729, %v1756
    %v1766 = vadd.f32 %v1730, %v1758
    %v1767 = vld [vmem:[%s11 + $0x16] sm:$0x1]
    %v1768 = vlaneseq
    %v1769 = vshrl.u32 %v1768, 7
    %v1770 = vsub.s32 0, %v1769
    %v1771 = vrot.slane %v1767, %v1770
    %v1772 = vmul.f32 %v1290, %v1771
    %v1773 = vmul.f32 %v1291, %v1771
    %v1774 = vmul.f32 %v1293, %v1771
    %v1775 = vmul.f32 %v1294, %v1771
    %v1776 = vadd.f32 %v1763, %v1772
    %v1777 = vadd.f32 %v1764, %v1773
    %v1778 = vadd.f32 %v1765, %v1774
    %v1779 = vadd.f32 %v1766, %v1775
    %1780 = vrot.lane.b32.xlu0 %v83, 32
    %v1781 = vpop.permute.xlu0 %1780
    %1782 = vrot.lane.b32.xlu0 %v84, 32
    %v1783 = vpop.permute.xlu0 %1782
    %1784 = vrot.lane.b32.xlu0 %v85, 32
    %v1785 = vpop.permute.xlu0 %1784
    %1786 = vrot.lane.b32.xlu0 %v86, 32
    %v1787 = vpop.permute.xlu0 %1786
    %1788 = vrot.lane.b32.xlu0 %v87, 32
    %v1789 = vpop.permute.xlu0 %1788
    %1790 = vrot.lane.b32.xlu0 %v88, 32
    %v1791 = vpop.permute.xlu0 %1790
    %v1792 = vld [vmem:[%s2] sm:$0x1]
    %v1793 = vlaneseq
    %v1794 = vshrl.u32 %v1793, 7
    %v1795 = vsub.s32 0, %v1794
    %v1796 = vrot.slane %v1792, %v1795
    %v1797 = vmul.f32 %v1781, %v1796
    %v1798 = vmul.f32 %v1783, %v1796
    %v1799 = vmul.f32 %v1785, %v1796
    %v1800 = vmul.f32 %v1787, %v1796
    %v1801 = vmul.f32 %v1789, %v1796
    %v1802 = vmul.f32 %v1791, %v1796
    %v1803 = vmax.f32 %v1797, 0.0
    %v1804 = vmax.f32 %v1798, 0.0
    %v1805 = vmax.f32 %v1799, 0.0
    %v1806 = vmax.f32 %v1800, 0.0
    %v1807 = vmax.f32 %v1801, 0.0
    %v1808 = vmax.f32 %v1802, 0.0
    %v1809 = vld [vmem:[%s11] sm:$0x1]
    %v1810 = vlaneseq
    %v1811 = vshrl.u32 %v1810, 7
    %v1812 = vsub.s32 0, %v1811
    %v1813 = vrot.slane %v1809, %v1812
    %v1814 = vmul.f32 %v1803, %v1813
    %v1815 = vmul.f32 %v1804, %v1813
    %v1816 = vmul.f32 %v1806, %v1813
    %v1817 = vmul.f32 %v1807, %v1813
    %v1818 = vadd.f32 %v1776, %v1814
    %v1819 = vadd.f32 %v1777, %v1815
    %v1820 = vadd.f32 %v1778, %v1816
    %v1821 = vadd.f32 %v1779, %v1817
    %v1822 = vld [vmem:[%s11 + $0x5] sm:$0x1]
    %v1823 = vlaneseq
    %v1824 = vshrl.u32 %v1823, 7
    %v1825 = vsub.s32 0, %v1824
    %v1826 = vrot.slane %v1822, %v1825
    %v1827 = vmul.f32 %v1803, %v1826
    %v1828 = vmul.f32 %v1804, %v1826
    %v1829 = vmul.f32 %v1805, %v1826
    %v1830 = vmul.f32 %v1806, %v1826
    %v1831 = vmul.f32 %v1807, %v1826
    %v1832 = vmul.f32 %v1808, %v1826
    %v1839 = vrot.slane %v1827, 2
    %v1840 = vrot.slane %v1828, 2
    %v1841 = vsel %vm215, %v1839, %v1840
    %v1842 = vrot.slane %v1829, 2
    %v1843 = vsel %vm215, %v1840, %v1842
    %v1844 = vrot.slane %v1830, 2
    %v1845 = vrot.slane %v1831, 2
    %v1846 = vsel %vm215, %v1844, %v1845
    %v1847 = vrot.slane %v1832, 2
    %v1848 = vsel %vm215, %v1845, %v1847
    %v1853 = vadd.f32 %v1818, %v1841
    %v1854 = vadd.f32 %v1819, %v1843
    %v1855 = vadd.f32 %v1820, %v1846
    %v1856 = vadd.f32 %v1821, %v1848
    %v1857 = vld [vmem:[%s11 + $0xa] sm:$0x1]
    %v1858 = vlaneseq
    %v1859 = vshrl.u32 %v1858, 7
    %v1860 = vsub.s32 0, %v1859
    %v1861 = vrot.slane %v1857, %v1860
    %v1862 = vmul.f32 %v1803, %v1861
    %v1863 = vmul.f32 %v1804, %v1861
    %v1864 = vmul.f32 %v1805, %v1861
    %v1865 = vmul.f32 %v1806, %v1861
    %v1866 = vmul.f32 %v1807, %v1861
    %v1867 = vmul.f32 %v1808, %v1861
    %v1874 = vrot.slane %v1862, 4
    %v1875 = vrot.slane %v1863, 4
    %v1876 = vsel %vm992, %v1874, %v1875
    %v1877 = vrot.slane %v1864, 4
    %v1878 = vsel %vm992, %v1875, %v1877
    %v1879 = vrot.slane %v1865, 4
    %v1880 = vrot.slane %v1866, 4
    %v1881 = vsel %vm992, %v1879, %v1880
    %v1882 = vrot.slane %v1867, 4
    %v1883 = vsel %vm992, %v1880, %v1882
    %v1888 = vadd.f32 %v1853, %v1876
    %v1889 = vadd.f32 %v1854, %v1878
    %v1890 = vadd.f32 %v1855, %v1881
    %v1891 = vadd.f32 %v1856, %v1883
    %v1892 = vld [vmem:[%s11 + $0xf] sm:$0x1]
    %v1893 = vlaneseq
    %v1894 = vshrl.u32 %v1893, 7
    %v1895 = vsub.s32 0, %v1894
    %v1896 = vrot.slane %v1892, %v1895
    %v1897 = vmul.f32 %v1803, %v1896
    %v1898 = vmul.f32 %v1804, %v1896
    %v1899 = vmul.f32 %v1805, %v1896
    %v1900 = vmul.f32 %v1806, %v1896
    %v1901 = vmul.f32 %v1807, %v1896
    %v1902 = vmul.f32 %v1808, %v1896
    %v1909 = vrot.slane %v1897, 6
    %v1910 = vrot.slane %v1898, 6
    %v1911 = vsel %vm1748, %v1909, %v1910
    %v1912 = vrot.slane %v1899, 6
    %v1913 = vsel %vm1748, %v1910, %v1912
    %v1914 = vrot.slane %v1900, 6
    %v1915 = vrot.slane %v1901, 6
    %v1916 = vsel %vm1748, %v1914, %v1915
    %v1917 = vrot.slane %v1902, 6
    %v1918 = vsel %vm1748, %v1915, %v1917
    %v1923 = vadd.f32 %v1888, %v1911
    %v1924 = vadd.f32 %v1889, %v1913
    %v1925 = vadd.f32 %v1890, %v1916
    %v1926 = vadd.f32 %v1891, %v1918
    %v1927 = vld [vmem:[%s11 + $0x14] sm:$0x1]
    %v1928 = vlaneseq
    %v1929 = vshrl.u32 %v1928, 7
    %v1930 = vsub.s32 0, %v1929
    %v1931 = vrot.slane %v1927, %v1930
    %v1932 = vmul.f32 %v1804, %v1931
    %v1933 = vmul.f32 %v1805, %v1931
    %v1934 = vmul.f32 %v1807, %v1931
    %v1935 = vmul.f32 %v1808, %v1931
    %v1936 = vadd.f32 %v1923, %v1932
    %v1937 = vadd.f32 %v1924, %v1933
    %v1938 = vadd.f32 %v1925, %v1934
    %v1939 = vadd.f32 %v1926, %v1935
    %1940 = vrot.lane.b32.xlu0 %v83, 16
    %v1941 = vpop.permute.xlu0 %1940
    %1942 = vrot.lane.b32.xlu0 %v84, 16
    %v1943 = vpop.permute.xlu0 %1942
    %1944 = vrot.lane.b32.xlu0 %v85, 16
    %v1945 = vpop.permute.xlu0 %1944
    %1946 = vrot.lane.b32.xlu0 %v86, 16
    %v1947 = vpop.permute.xlu0 %1946
    %1948 = vrot.lane.b32.xlu0 %v87, 16
    %v1949 = vpop.permute.xlu0 %1948
    %1950 = vrot.lane.b32.xlu0 %v88, 16
    %v1951 = vpop.permute.xlu0 %1950
    %v1952 = vld [vmem:[%s2 + $0x1] sm:$0x1]
    %v1953 = vlaneseq
    %v1954 = vshrl.u32 %v1953, 7
    %v1955 = vsub.s32 0, %v1954
    %v1956 = vrot.slane %v1952, %v1955
    %v1957 = vmul.f32 %v1941, %v1956
    %v1958 = vmul.f32 %v1943, %v1956
    %v1959 = vmul.f32 %v1945, %v1956
    %v1960 = vmul.f32 %v1947, %v1956
    %v1961 = vmul.f32 %v1949, %v1956
    %v1962 = vmul.f32 %v1951, %v1956
    %v1963 = vmax.f32 %v1957, 0.0
    %v1964 = vmax.f32 %v1958, 0.0
    %v1965 = vmax.f32 %v1959, 0.0
    %v1966 = vmax.f32 %v1960, 0.0
    %v1967 = vmax.f32 %v1961, 0.0
    %v1968 = vmax.f32 %v1962, 0.0
    %v1969 = vld [vmem:[%s8] sm:$0x1]
    %v1970 = vlaneseq
    %v1971 = vshrl.u32 %v1970, 7
    %v1972 = vsub.s32 0, %v1971
    %v1973 = vrot.slane %v1969, %v1972
    %v1974 = vmul.f32 %v1963, %v1973
    %v1975 = vmul.f32 %v1964, %v1973
    %v1976 = vmul.f32 %v1965, %v1973
    %v1977 = vmul.f32 %v1966, %v1973
    %v1978 = vmul.f32 %v1967, %v1973
    %v1979 = vmul.f32 %v1968, %v1973
    %v1980 = vadd.f32 %v1557, %v1974
    %v1981 = vadd.f32 %v1558, %v1975
    %v1982 = vadd.f32 %v1559, %v1976
    %v1983 = vadd.f32 %v1560, %v1977
    %v1984 = vadd.f32 %v1561, %v1978
    %v1985 = vadd.f32 %v1562, %v1979
    %v1986 = vld [vmem:[%s8 + $0x5] sm:$0x1]
    %v1987 = vlaneseq
    %v1988 = vshrl.u32 %v1987, 7
    %v1989 = vsub.s32 0, %v1988
    %v1990 = vrot.slane %v1986, %v1989
    %v1991 = vmul.f32 %v1963, %v1990
    %v1992 = vmul.f32 %v1964, %v1990
    %v1993 = vmul.f32 %v1965, %v1990
    %v1994 = vmul.f32 %v1966, %v1990
    %v1995 = vmul.f32 %v1967, %v1990
    %v1996 = vmul.f32 %v1968, %v1990
    %v2003 = vrot.slane %v1991, 1
    %v2004 = vrot.slane %v1992, 1
    %v2005 = vsel %vm192, %v2003, %v2004
    %v2006 = vrot.slane %v1993, 1
    %v2007 = vsel %vm192, %v2004, %v2006
    %v2008 = vrot.slane %v1994, 1
    %v2009 = vrot.slane %v1995, 1
    %v2010 = vsel %vm192, %v2008, %v2009
    %v2011 = vrot.slane %v1996, 1
    %v2012 = vsel %vm192, %v2009, %v2011
    %v2019 = vadd.f32 %v1980, %v2005
    %v2020 = vadd.f32 %v1981, %v2007
    %v2021 = vadd.f32 %v1982, %v2006
    %v2022 = vadd.f32 %v1983, %v2010
    %v2023 = vadd.f32 %v1984, %v2012
    %v2024 = vadd.f32 %v1985, %v2011
    %v2025 = vld [vmem:[%s8 + $0xa] sm:$0x1]
    %v2026 = vlaneseq
    %v2027 = vshrl.u32 %v2026, 7
    %v2028 = vsub.s32 0, %v2027
    %v2029 = vrot.slane %v2025, %v2028
    %v2030 = vmul.f32 %v1963, %v2029
    %v2031 = vmul.f32 %v1964, %v2029
    %v2032 = vmul.f32 %v1965, %v2029
    %v2033 = vmul.f32 %v1966, %v2029
    %v2034 = vmul.f32 %v1967, %v2029
    %v2035 = vmul.f32 %v1968, %v2029
    %v2042 = vrot.slane %v2030, 2
    %v2043 = vrot.slane %v2031, 2
    %v2044 = vsel %vm215, %v2042, %v2043
    %v2045 = vrot.slane %v2032, 2
    %v2046 = vsel %vm215, %v2043, %v2045
    %v2047 = vrot.slane %v2033, 2
    %v2048 = vrot.slane %v2034, 2
    %v2049 = vsel %vm215, %v2047, %v2048
    %v2050 = vrot.slane %v2035, 2
    %v2051 = vsel %vm215, %v2048, %v2050
    %v2058 = vadd.f32 %v2019, %v2044
    %v2059 = vadd.f32 %v2020, %v2046
    %v2060 = vadd.f32 %v2021, %v2045
    %v2061 = vadd.f32 %v2022, %v2049
    %v2062 = vadd.f32 %v2023, %v2051
    %v2063 = vadd.f32 %v2024, %v2050
    %v2064 = vld [vmem:[%s8 + $0xf] sm:$0x1]
    %v2065 = vlaneseq
    %v2066 = vshrl.u32 %v2065, 7
    %v2067 = vsub.s32 0, %v2066
    %v2068 = vrot.slane %v2064, %v2067
    %v2069 = vmul.f32 %v1963, %v2068
    %v2070 = vmul.f32 %v1964, %v2068
    %v2071 = vmul.f32 %v1965, %v2068
    %v2072 = vmul.f32 %v1966, %v2068
    %v2073 = vmul.f32 %v1967, %v2068
    %v2074 = vmul.f32 %v1968, %v2068
    %v2081 = vrot.slane %v2069, 3
    %v2082 = vrot.slane %v2070, 3
    %v2083 = vsel %vm245, %v2081, %v2082
    %v2084 = vrot.slane %v2071, 3
    %v2085 = vsel %vm245, %v2082, %v2084
    %v2086 = vrot.slane %v2072, 3
    %v2087 = vrot.slane %v2073, 3
    %v2088 = vsel %vm245, %v2086, %v2087
    %v2089 = vrot.slane %v2074, 3
    %v2090 = vsel %vm245, %v2087, %v2089
    %v2097 = vadd.f32 %v2058, %v2083
    %v2098 = vadd.f32 %v2059, %v2085
    %v2099 = vadd.f32 %v2060, %v2084
    %v2100 = vadd.f32 %v2061, %v2088
    %v2101 = vadd.f32 %v2062, %v2090
    %v2102 = vadd.f32 %v2063, %v2089
    %v2103 = vld [vmem:[%s8 + $0x14] sm:$0x1]
    %v2104 = vlaneseq
    %v2105 = vshrl.u32 %v2104, 7
    %v2106 = vsub.s32 0, %v2105
    %v2107 = vrot.slane %v2103, %v2106
    %v2108 = vmul.f32 %v1963, %v2107
    %v2109 = vmul.f32 %v1964, %v2107
    %v2110 = vmul.f32 %v1965, %v2107
    %v2111 = vmul.f32 %v1966, %v2107
    %v2112 = vmul.f32 %v1967, %v2107
    %v2113 = vmul.f32 %v1968, %v2107
    %v2120 = vrot.slane %v2108, 4
    %v2121 = vrot.slane %v2109, 4
    %v2122 = vsel %vm992, %v2120, %v2121
    %v2123 = vrot.slane %v2110, 4
    %v2124 = vsel %vm992, %v2121, %v2123
    %v2125 = vrot.slane %v2111, 4
    %v2126 = vrot.slane %v2112, 4
    %v2127 = vsel %vm992, %v2125, %v2126
    %v2128 = vrot.slane %v2113, 4
    %v2129 = vsel %vm992, %v2126, %v2128
    %v2136 = vadd.f32 %v2097, %v2122
    %v2137 = vadd.f32 %v2098, %v2124
    %v2138 = vadd.f32 %v2099, %v2123
    %v2139 = vadd.f32 %v2100, %v2127
    %v2140 = vadd.f32 %v2101, %v2129
    %v2141 = vadd.f32 %v2102, %v2128
    %v2142 = vld [vmem:[%s10] sm:$0x1]
    %v2143 = vlaneseq
    %v2144 = vshrl.u32 %v2143, 7
    %v2145 = vsub.s32 0, %v2144
    %v2146 = vrot.slane %v2142, %v2145
    %v2147 = vmul.f32 %v1963, %v2146
    %v2148 = vmul.f32 %v1964, %v2146
    %v2149 = vmul.f32 %v1965, %v2146
    %v2150 = vmul.f32 %v1966, %v2146
    %v2151 = vmul.f32 %v1967, %v2146
    %v2152 = vmul.f32 %v1968, %v2146
    %v2153 = vadd.f32 %v1646, %v2147
    %v2154 = vadd.f32 %v1647, %v2148
    %v2155 = vadd.f32 %v1648, %v2149
    %v2156 = vadd.f32 %v1649, %v2150
    %v2157 = vadd.f32 %v1650, %v2151
    %v2158 = vadd.f32 %v1651, %v2152
    %v2159 = vld [vmem:[%s10 + $0x3] sm:$0x1]
    %v2160 = vlaneseq
    %v2161 = vshrl.u32 %v2160, 7
    %v2162 = vsub.s32 0, %v2161
    %v2163 = vrot.slane %v2159, %v2162
    %v2164 = vmul.f32 %v1963, %v2163
    %v2165 = vmul.f32 %v1964, %v2163
    %v2166 = vmul.f32 %v1965, %v2163
    %v2167 = vmul.f32 %v1966, %v2163
    %v2168 = vmul.f32 %v1967, %v2163
    %v2169 = vmul.f32 %v1968, %v2163
    %v2176 = vrot.slane %v2164, 2
    %v2177 = vrot.slane %v2165, 2
    %v2178 = vsel %vm215, %v2176, %v2177
    %v2179 = vrot.slane %v2166, 2
    %v2180 = vsel %vm215, %v2177, %v2179
    %v2181 = vrot.slane %v2167, 2
    %v2182 = vrot.slane %v2168, 2
    %v2183 = vsel %vm215, %v2181, %v2182
    %v2184 = vrot.slane %v2169, 2
    %v2185 = vsel %vm215, %v2182, %v2184
    %v2192 = vadd.f32 %v2153, %v2178
    %v2193 = vadd.f32 %v2154, %v2180
    %v2194 = vadd.f32 %v2155, %v2179
    %v2195 = vadd.f32 %v2156, %v2183
    %v2196 = vadd.f32 %v2157, %v2185
    %v2197 = vadd.f32 %v2158, %v2184
    %v2198 = vld [vmem:[%s10 + $0x6] sm:$0x1]
    %v2199 = vlaneseq
    %v2200 = vshrl.u32 %v2199, 7
    %v2201 = vsub.s32 0, %v2200
    %v2202 = vrot.slane %v2198, %v2201
    %v2203 = vmul.f32 %v1963, %v2202
    %v2204 = vmul.f32 %v1964, %v2202
    %v2205 = vmul.f32 %v1965, %v2202
    %v2206 = vmul.f32 %v1966, %v2202
    %v2207 = vmul.f32 %v1967, %v2202
    %v2208 = vmul.f32 %v1968, %v2202
    %v2215 = vrot.slane %v2203, 4
    %v2216 = vrot.slane %v2204, 4
    %v2217 = vsel %vm992, %v2215, %v2216
    %v2218 = vrot.slane %v2205, 4
    %v2219 = vsel %vm992, %v2216, %v2218
    %v2220 = vrot.slane %v2206, 4
    %v2221 = vrot.slane %v2207, 4
    %v2222 = vsel %vm992, %v2220, %v2221
    %v2223 = vrot.slane %v2208, 4
    %v2224 = vsel %vm992, %v2221, %v2223
    %v2231 = vadd.f32 %v2192, %v2217
    %v2232 = vadd.f32 %v2193, %v2219
    %v2233 = vadd.f32 %v2194, %v2218
    %v2234 = vadd.f32 %v2195, %v2222
    %v2235 = vadd.f32 %v2196, %v2224
    %v2236 = vadd.f32 %v2197, %v2223
    %v2237 = vld [vmem:[%s11 + $0x1] sm:$0x1]
    %v2238 = vlaneseq
    %v2239 = vshrl.u32 %v2238, 7
    %v2240 = vsub.s32 0, %v2239
    %v2241 = vrot.slane %v2237, %v2240
    %v2242 = vmul.f32 %v1963, %v2241
    %v2243 = vmul.f32 %v1964, %v2241
    %v2244 = vmul.f32 %v1966, %v2241
    %v2245 = vmul.f32 %v1967, %v2241
    %v2246 = vadd.f32 %v1936, %v2242
    %v2247 = vadd.f32 %v1937, %v2243
    %v2248 = vadd.f32 %v1938, %v2244
    %v2249 = vadd.f32 %v1939, %v2245
    %v2250 = vld [vmem:[%s11 + $0x6] sm:$0x1]
    %v2251 = vlaneseq
    %v2252 = vshrl.u32 %v2251, 7
    %v2253 = vsub.s32 0, %v2252
    %v2254 = vrot.slane %v2250, %v2253
    %v2255 = vmul.f32 %v1963, %v2254
    %v2256 = vmul.f32 %v1964, %v2254
    %v2257 = vmul.f32 %v1965, %v2254
    %v2258 = vmul.f32 %v1966, %v2254
    %v2259 = vmul.f32 %v1967, %v2254
    %v2260 = vmul.f32 %v1968, %v2254
    %v2267 = vrot.slane %v2255, 2
    %v2268 = vrot.slane %v2256, 2
    %v2269 = vsel %vm215, %v2267, %v2268
    %v2270 = vrot.slane %v2257, 2
    %v2271 = vsel %vm215, %v2268, %v2270
    %v2272 = vrot.slane %v2258, 2
    %v2273 = vrot.slane %v2259, 2
    %v2274 = vsel %vm215, %v2272, %v2273
    %v2275 = vrot.slane %v2260, 2
    %v2276 = vsel %vm215, %v2273, %v2275
    %v2281 = vadd.f32 %v2246, %v2269
    %v2282 = vadd.f32 %v2247, %v2271
    %v2283 = vadd.f32 %v2248, %v2274
    %v2284 = vadd.f32 %v2249, %v2276
    %v2285 = vld [vmem:[%s11 + $0xb] sm:$0x1]
    %v2286 = vlaneseq
    %v2287 = vshrl.u32 %v2286, 7
    %v2288 = vsub.s32 0, %v2287
    %v2289 = vrot.slane %v2285, %v2288
    %v2290 = vmul.f32 %v1963, %v2289
    %v2291 = vmul.f32 %v1964, %v2289
    %v2292 = vmul.f32 %v1965, %v2289
    %v2293 = vmul.f32 %v1966, %v2289
    %v2294 = vmul.f32 %v1967, %v2289
    %v2295 = vmul.f32 %v1968, %v2289
    %v2302 = vrot.slane %v2290, 4
    %v2303 = vrot.slane %v2291, 4
    %v2304 = vsel %vm992, %v2302, %v2303
    %v2305 = vrot.slane %v2292, 4
    %v2306 = vsel %vm992, %v2303, %v2305
    %v2307 = vrot.slane %v2293, 4
    %v2308 = vrot.slane %v2294, 4
    %v2309 = vsel %vm992, %v2307, %v2308
    %v2310 = vrot.slane %v2295, 4
    %v2311 = vsel %vm992, %v2308, %v2310
    %v2316 = vadd.f32 %v2281, %v2304
    %v2317 = vadd.f32 %v2282, %v2306
    %v2318 = vadd.f32 %v2283, %v2309
    %v2319 = vadd.f32 %v2284, %v2311
    %v2320 = vld [vmem:[%s11 + $0x10] sm:$0x1]
    %v2321 = vlaneseq
    %v2322 = vshrl.u32 %v2321, 7
    %v2323 = vsub.s32 0, %v2322
    %v2324 = vrot.slane %v2320, %v2323
    %v2325 = vmul.f32 %v1963, %v2324
    %v2326 = vmul.f32 %v1964, %v2324
    %v2327 = vmul.f32 %v1965, %v2324
    %v2328 = vmul.f32 %v1966, %v2324
    %v2329 = vmul.f32 %v1967, %v2324
    %v2330 = vmul.f32 %v1968, %v2324
    %v2337 = vrot.slane %v2325, 6
    %v2338 = vrot.slane %v2326, 6
    %v2339 = vsel %vm1748, %v2337, %v2338
    %v2340 = vrot.slane %v2327, 6
    %v2341 = vsel %vm1748, %v2338, %v2340
    %v2342 = vrot.slane %v2328, 6
    %v2343 = vrot.slane %v2329, 6
    %v2344 = vsel %vm1748, %v2342, %v2343
    %v2345 = vrot.slane %v2330, 6
    %v2346 = vsel %vm1748, %v2343, %v2345
    %v2351 = vadd.f32 %v2316, %v2339
    %v2352 = vadd.f32 %v2317, %v2341
    %v2353 = vadd.f32 %v2318, %v2344
    %v2354 = vadd.f32 %v2319, %v2346
    %v2355 = vld [vmem:[%s11 + $0x15] sm:$0x1]
    %v2356 = vlaneseq
    %v2357 = vshrl.u32 %v2356, 7
    %v2358 = vsub.s32 0, %v2357
    %v2359 = vrot.slane %v2355, %v2358
    %v2360 = vmul.f32 %v1964, %v2359
    %v2361 = vmul.f32 %v1965, %v2359
    %v2362 = vmul.f32 %v1967, %v2359
    %v2363 = vmul.f32 %v1968, %v2359
    %v2364 = vadd.f32 %v2351, %v2360
    %v2365 = vadd.f32 %v2352, %v2361
    %v2366 = vadd.f32 %v2353, %v2362
    %v2367 = vadd.f32 %v2354, %v2363
    %2368 = vrot.lane.b32.xlu0 %v83, 112
    %v2369 = vpop.permute.xlu0 %2368
    %2370 = vrot.lane.b32.xlu0 %v84, 112
    %v2371 = vpop.permute.xlu0 %2370
    %2372 = vrot.lane.b32.xlu0 %v85, 112
    %v2373 = vpop.permute.xlu0 %2372
    %2374 = vrot.lane.b32.xlu0 %v86, 112
    %v2375 = vpop.permute.xlu0 %2374
    %2376 = vrot.lane.b32.xlu0 %v87, 112
    %v2377 = vpop.permute.xlu0 %2376
    %2378 = vrot.lane.b32.xlu0 %v88, 112
    %v2379 = vpop.permute.xlu0 %2378
    %v2380 = vld [vmem:[%s2 + $0x4] sm:$0x1]
    %v2381 = vlaneseq
    %v2382 = vshrl.u32 %v2381, 7
    %v2383 = vsub.s32 0, %v2382
    %v2384 = vrot.slane %v2380, %v2383
    %v2385 = vmul.f32 %v2369, %v2384
    %v2386 = vmul.f32 %v2371, %v2384
    %v2387 = vmul.f32 %v2373, %v2384
    %v2388 = vmul.f32 %v2375, %v2384
    %v2389 = vmul.f32 %v2377, %v2384
    %v2390 = vmul.f32 %v2379, %v2384
    %v2391 = vmax.f32 %v2385, 0.0
    %v2392 = vmax.f32 %v2386, 0.0
    %v2393 = vmax.f32 %v2387, 0.0
    %v2394 = vmax.f32 %v2388, 0.0
    %v2395 = vmax.f32 %v2389, 0.0
    %v2396 = vmax.f32 %v2390, 0.0
    %v2397 = vld [vmem:[%s8 + $0x4] sm:$0x1]
    %v2398 = vlaneseq
    %v2399 = vshrl.u32 %v2398, 7
    %v2400 = vsub.s32 0, %v2399
    %v2401 = vrot.slane %v2397, %v2400
    %v2402 = vmul.f32 %v2391, %v2401
    %v2403 = vmul.f32 %v2392, %v2401
    %v2404 = vmul.f32 %v2393, %v2401
    %v2405 = vmul.f32 %v2394, %v2401
    %v2406 = vmul.f32 %v2395, %v2401
    %v2407 = vmul.f32 %v2396, %v2401
    %v2408 = vadd.f32 %v2136, %v2402
    %v2409 = vadd.f32 %v2137, %v2403
    %v2410 = vadd.f32 %v2138, %v2404
    %v2411 = vadd.f32 %v2139, %v2405
    %v2412 = vadd.f32 %v2140, %v2406
    %v2413 = vadd.f32 %v2141, %v2407
    %v2414 = vld [vmem:[%s8 + $0x9] sm:$0x1]
    %v2415 = vlaneseq
    %v2416 = vshrl.u32 %v2415, 7
    %v2417 = vsub.s32 0, %v2416
    %v2418 = vrot.slane %v2414, %v2417
    %v2419 = vmul.f32 %v2391, %v2418
    %v2420 = vmul.f32 %v2392, %v2418
    %v2421 = vmul.f32 %v2393, %v2418
    %v2422 = vmul.f32 %v2394, %v2418
    %v2423 = vmul.f32 %v2395, %v2418
    %v2424 = vmul.f32 %v2396, %v2418
    %v2431 = vrot.slane %v2419, 1
    %v2432 = vrot.slane %v2420, 1
    %v2433 = vsel %vm192, %v2431, %v2432
    %v2434 = vrot.slane %v2421, 1
    %v2435 = vsel %vm192, %v2432, %v2434
    %v2436 = vrot.slane %v2422, 1
    %v2437 = vrot.slane %v2423, 1
    %v2438 = vsel %vm192, %v2436, %v2437
    %v2439 = vrot.slane %v2424, 1
    %v2440 = vsel %vm192, %v2437, %v2439
    %v2447 = vadd.f32 %v2408, %v2433
    %v2448 = vadd.f32 %v2409, %v2435
    %v2449 = vadd.f32 %v2410, %v2434
    %v2450 = vadd.f32 %v2411, %v2438
    %v2451 = vadd.f32 %v2412, %v2440
    %v2452 = vadd.f32 %v2413, %v2439
    %v2453 = vld [vmem:[%s8 + $0xe] sm:$0x1]
    %v2454 = vlaneseq
    %v2455 = vshrl.u32 %v2454, 7
    %v2456 = vsub.s32 0, %v2455
    %v2457 = vrot.slane %v2453, %v2456
    %v2458 = vmul.f32 %v2391, %v2457
    %v2459 = vmul.f32 %v2392, %v2457
    %v2460 = vmul.f32 %v2393, %v2457
    %v2461 = vmul.f32 %v2394, %v2457
    %v2462 = vmul.f32 %v2395, %v2457
    %v2463 = vmul.f32 %v2396, %v2457
    %v2470 = vrot.slane %v2458, 2
    %v2471 = vrot.slane %v2459, 2
    %v2472 = vsel %vm215, %v2470, %v2471
    %v2473 = vrot.slane %v2460, 2
    %v2474 = vsel %vm215, %v2471, %v2473
    %v2475 = vrot.slane %v2461, 2
    %v2476 = vrot.slane %v2462, 2
    %v2477 = vsel %vm215, %v2475, %v2476
    %v2478 = vrot.slane %v2463, 2
    %v2479 = vsel %vm215, %v2476, %v2478
    %v2486 = vadd.f32 %v2447, %v2472
    %v2487 = vadd.f32 %v2448, %v2474
    %v2488 = vadd.f32 %v2449, %v2473
    %v2489 = vadd.f32 %v2450, %v2477
    %v2490 = vadd.f32 %v2451, %v2479
    %v2491 = vadd.f32 %v2452, %v2478
    %v2492 = vld [vmem:[%s8 + $0x13] sm:$0x1]
    %v2493 = vlaneseq
    %v2494 = vshrl.u32 %v2493, 7
    %v2495 = vsub.s32 0, %v2494
    %v2496 = vrot.slane %v2492, %v2495
    %v2497 = vmul.f32 %v2391, %v2496
    %v2498 = vmul.f32 %v2392, %v2496
    %v2499 = vmul.f32 %v2393, %v2496
    %v2500 = vmul.f32 %v2394, %v2496
    %v2501 = vmul.f32 %v2395, %v2496
    %v2502 = vmul.f32 %v2396, %v2496
    %v2509 = vrot.slane %v2497, 3
    %v2510 = vrot.slane %v2498, 3
    %v2511 = vsel %vm245, %v2509, %v2510
    %v2512 = vrot.slane %v2499, 3
    %v2513 = vsel %vm245, %v2510, %v2512
    %v2514 = vrot.slane %v2500, 3
    %v2515 = vrot.slane %v2501, 3
    %v2516 = vsel %vm245, %v2514, %v2515
    %v2517 = vrot.slane %v2502, 3
    %v2518 = vsel %vm245, %v2515, %v2517
    %v2525 = vadd.f32 %v2486, %v2511
    %v2526 = vadd.f32 %v2487, %v2513
    %v2527 = vadd.f32 %v2488, %v2512
    %v2528 = vadd.f32 %v2489, %v2516
    %v2529 = vadd.f32 %v2490, %v2518
    %v2530 = vadd.f32 %v2491, %v2517
    %v2531 = vld [vmem:[%s8 + $0x18] sm:$0x1]
    %v2532 = vlaneseq
    %v2533 = vshrl.u32 %v2532, 7
    %v2534 = vsub.s32 0, %v2533
    %v2535 = vrot.slane %v2531, %v2534
    %v2536 = vmul.f32 %v2391, %v2535
    %v2537 = vmul.f32 %v2392, %v2535
    %v2538 = vmul.f32 %v2393, %v2535
    %v2539 = vmul.f32 %v2394, %v2535
    %v2540 = vmul.f32 %v2395, %v2535
    %v2541 = vmul.f32 %v2396, %v2535
    %v2548 = vrot.slane %v2536, 4
    %v2549 = vrot.slane %v2537, 4
    %v2550 = vsel %vm992, %v2548, %v2549
    %v2551 = vrot.slane %v2538, 4
    %v2552 = vsel %vm992, %v2549, %v2551
    %v2553 = vrot.slane %v2539, 4
    %v2554 = vrot.slane %v2540, 4
    %v2555 = vsel %vm992, %v2553, %v2554
    %v2556 = vrot.slane %v2541, 4
    %v2557 = vsel %vm992, %v2554, %v2556
    %v2564 = vadd.f32 %v2525, %v2550
    %v2565 = vadd.f32 %v2526, %v2552
    %v2566 = vadd.f32 %v2527, %v2551
    %v2567 = vadd.f32 %v2528, %v2555
    %v2568 = vadd.f32 %v2529, %v2557
    %v2569 = vadd.f32 %v2530, %v2556
    %v2570 = vld [vmem:[%s10 + $0x2] sm:$0x1]
    %v2571 = vlaneseq
    %v2572 = vshrl.u32 %v2571, 7
    %v2573 = vsub.s32 0, %v2572
    %v2574 = vrot.slane %v2570, %v2573
    %v2575 = vmul.f32 %v2391, %v2574
    %v2576 = vmul.f32 %v2392, %v2574
    %v2577 = vmul.f32 %v2393, %v2574
    %v2578 = vmul.f32 %v2394, %v2574
    %v2579 = vmul.f32 %v2395, %v2574
    %v2580 = vmul.f32 %v2396, %v2574
    %v2581 = vadd.f32 %v2231, %v2575
    %v2582 = vadd.f32 %v2232, %v2576
    %v2583 = vadd.f32 %v2233, %v2577
    %v2584 = vadd.f32 %v2234, %v2578
    %v2585 = vadd.f32 %v2235, %v2579
    %v2586 = vadd.f32 %v2236, %v2580
    %v2587 = vld [vmem:[%s10 + $0x5] sm:$0x1]
    %v2588 = vlaneseq
    %v2589 = vshrl.u32 %v2588, 7
    %v2590 = vsub.s32 0, %v2589
    %v2591 = vrot.slane %v2587, %v2590
    %v2592 = vmul.f32 %v2391, %v2591
    %v2593 = vmul.f32 %v2392, %v2591
    %v2594 = vmul.f32 %v2393, %v2591
    %v2595 = vmul.f32 %v2394, %v2591
    %v2596 = vmul.f32 %v2395, %v2591
    %v2597 = vmul.f32 %v2396, %v2591
    %v2604 = vrot.slane %v2592, 2
    %v2605 = vrot.slane %v2593, 2
    %v2606 = vsel %vm215, %v2604, %v2605
    %v2607 = vrot.slane %v2594, 2
    %v2608 = vsel %vm215, %v2605, %v2607
    %v2609 = vrot.slane %v2595, 2
    %v2610 = vrot.slane %v2596, 2
    %v2611 = vsel %vm215, %v2609, %v2610
    %v2612 = vrot.slane %v2597, 2
    %v2613 = vsel %vm215, %v2610, %v2612
    %v2620 = vadd.f32 %v2581, %v2606
    %v2621 = vadd.f32 %v2582, %v2608
    %v2622 = vadd.f32 %v2583, %v2607
    %v2623 = vadd.f32 %v2584, %v2611
    %v2624 = vadd.f32 %v2585, %v2613
    %v2625 = vadd.f32 %v2586, %v2612
    %v2626 = vld [vmem:[%s10 + $0x8] sm:$0x1]
    %v2627 = vlaneseq
    %v2628 = vshrl.u32 %v2627, 7
    %v2629 = vsub.s32 0, %v2628
    %v2630 = vrot.slane %v2626, %v2629
    %v2631 = vmul.f32 %v2391, %v2630
    %v2632 = vmul.f32 %v2392, %v2630
    %v2633 = vmul.f32 %v2393, %v2630
    %v2634 = vmul.f32 %v2394, %v2630
    %v2635 = vmul.f32 %v2395, %v2630
    %v2636 = vmul.f32 %v2396, %v2630
    %v2643 = vrot.slane %v2631, 4
    %v2644 = vrot.slane %v2632, 4
    %v2645 = vsel %vm992, %v2643, %v2644
    %v2646 = vrot.slane %v2633, 4
    %v2647 = vsel %vm992, %v2644, %v2646
    %v2648 = vrot.slane %v2634, 4
    %v2649 = vrot.slane %v2635, 4
    %v2650 = vsel %vm992, %v2648, %v2649
    %v2651 = vrot.slane %v2636, 4
    %v2652 = vsel %vm992, %v2649, %v2651
    %v2659 = vadd.f32 %v2620, %v2645
    %v2660 = vadd.f32 %v2621, %v2647
    %v2661 = vadd.f32 %v2622, %v2646
    %v2662 = vadd.f32 %v2623, %v2650
    %v2663 = vadd.f32 %v2624, %v2652
    %v2664 = vadd.f32 %v2625, %v2651
    %v2665 = vld [vmem:[%s11 + $0x3] sm:$0x1]
    %v2666 = vlaneseq
    %v2667 = vshrl.u32 %v2666, 7
    %v2668 = vsub.s32 0, %v2667
    %v2669 = vrot.slane %v2665, %v2668
    %v2670 = vmul.f32 %v2391, %v2669
    %v2671 = vmul.f32 %v2392, %v2669
    %v2672 = vmul.f32 %v2394, %v2669
    %v2673 = vmul.f32 %v2395, %v2669
    %v2674 = vadd.f32 %v2364, %v2670
    %v2675 = vadd.f32 %v2365, %v2671
    %v2676 = vadd.f32 %v2366, %v2672
    %v2677 = vadd.f32 %v2367, %v2673
    %v2678 = vld [vmem:[%s11 + $0x8] sm:$0x1]
    %v2679 = vlaneseq
    %v2680 = vshrl.u32 %v2679, 7
    %v2681 = vsub.s32 0, %v2680
    %v2682 = vrot.slane %v2678, %v2681
    %v2683 = vmul.f32 %v2391, %v2682
    %v2684 = vmul.f32 %v2392, %v2682
    %v2685 = vmul.f32 %v2393, %v2682
    %v2686 = vmul.f32 %v2394, %v2682
    %v2687 = vmul.f32 %v2395, %v2682
    %v2688 = vmul.f32 %v2396, %v2682
    %v2695 = vrot.slane %v2683, 2
    %v2696 = vrot.slane %v2684, 2
    %v2697 = vsel %vm215, %v2695, %v2696
    %v2698 = vrot.slane %v2685, 2
    %v2699 = vsel %vm215, %v2696, %v2698
    %v2700 = vrot.slane %v2686, 2
    %v2701 = vrot.slane %v2687, 2
    %v2702 = vsel %vm215, %v2700, %v2701
    %v2703 = vrot.slane %v2688, 2
    %v2704 = vsel %vm215, %v2701, %v2703
    %v2709 = vadd.f32 %v2674, %v2697
    %v2710 = vadd.f32 %v2675, %v2699
    %v2711 = vadd.f32 %v2676, %v2702
    %v2712 = vadd.f32 %v2677, %v2704
    %v2713 = vld [vmem:[%s11 + $0xd] sm:$0x1]
    %v2714 = vlaneseq
    %v2715 = vshrl.u32 %v2714, 7
    %v2716 = vsub.s32 0, %v2715
    %v2717 = vrot.slane %v2713, %v2716
    %v2718 = vmul.f32 %v2391, %v2717
    %v2719 = vmul.f32 %v2392, %v2717
    %v2720 = vmul.f32 %v2393, %v2717
    %v2721 = vmul.f32 %v2394, %v2717
    %v2722 = vmul.f32 %v2395, %v2717
    %v2723 = vmul.f32 %v2396, %v2717
    %v2730 = vrot.slane %v2718, 4
    %v2731 = vrot.slane %v2719, 4
    %v2732 = vsel %vm992, %v2730, %v2731
    %v2733 = vrot.slane %v2720, 4
    %v2734 = vsel %vm992, %v2731, %v2733
    %v2735 = vrot.slane %v2721, 4
    %v2736 = vrot.slane %v2722, 4
    %v2737 = vsel %vm992, %v2735, %v2736
    %v2738 = vrot.slane %v2723, 4
    %v2739 = vsel %vm992, %v2736, %v2738
    %v2744 = vadd.f32 %v2709, %v2732
    %v2745 = vadd.f32 %v2710, %v2734
    %v2746 = vadd.f32 %v2711, %v2737
    %v2747 = vadd.f32 %v2712, %v2739
    %v2748 = vld [vmem:[%s11 + $0x12] sm:$0x1]
    %v2749 = vlaneseq
    %v2750 = vshrl.u32 %v2749, 7
    %v2751 = vsub.s32 0, %v2750
    %v2752 = vrot.slane %v2748, %v2751
    %v2753 = vmul.f32 %v2391, %v2752
    %v2754 = vmul.f32 %v2392, %v2752
    %v2755 = vmul.f32 %v2393, %v2752
    %v2756 = vmul.f32 %v2394, %v2752
    %v2757 = vmul.f32 %v2395, %v2752
    %v2758 = vmul.f32 %v2396, %v2752
    %v2765 = vrot.slane %v2753, 6
    %v2766 = vrot.slane %v2754, 6
    %v2767 = vsel %vm1748, %v2765, %v2766
    %v2768 = vrot.slane %v2755, 6
    %v2769 = vsel %vm1748, %v2766, %v2768
    %v2770 = vrot.slane %v2756, 6
    %v2771 = vrot.slane %v2757, 6
    %v2772 = vsel %vm1748, %v2770, %v2771
    %v2773 = vrot.slane %v2758, 6
    %v2774 = vsel %vm1748, %v2771, %v2773
    %v2779 = vadd.f32 %v2744, %v2767
    %v2780 = vadd.f32 %v2745, %v2769
    %v2781 = vadd.f32 %v2746, %v2772
    %v2782 = vadd.f32 %v2747, %v2774
    %v2783 = vld [vmem:[%s11 + $0x17] sm:$0x1]
    %v2784 = vlaneseq
    %v2785 = vshrl.u32 %v2784, 7
    %v2786 = vsub.s32 0, %v2785
    %v2787 = vrot.slane %v2783, %v2786
    %v2788 = vmul.f32 %v2392, %v2787
    %v2789 = vmul.f32 %v2393, %v2787
    %v2790 = vmul.f32 %v2395, %v2787
    %v2791 = vmul.f32 %v2396, %v2787
    %v2792 = vadd.f32 %v2779, %v2788
    %v2793 = vadd.f32 %v2780, %v2789
    %v2794 = vadd.f32 %v2781, %v2790
    %v2795 = vadd.f32 %v2782, %v2791
    %2796 = vrot.lane.b32.xlu0 %v83, 96
    %v2797 = vpop.permute.xlu0 %2796
    %2798 = vrot.lane.b32.xlu0 %v84, 96
    %v2799 = vpop.permute.xlu0 %2798
    %2800 = vrot.lane.b32.xlu0 %v85, 96
    %v2801 = vpop.permute.xlu0 %2800
    %2802 = vrot.lane.b32.xlu0 %v86, 96
    %v2803 = vpop.permute.xlu0 %2802
    %2804 = vrot.lane.b32.xlu0 %v87, 96
    %v2805 = vpop.permute.xlu0 %2804
    %2806 = vrot.lane.b32.xlu0 %v88, 96
    %v2807 = vpop.permute.xlu0 %2806
    %v2808 = vld [vmem:[%s2 + $0x5] sm:$0x1]
    %v2809 = vlaneseq
    %v2810 = vshrl.u32 %v2809, 7
    %v2811 = vsub.s32 0, %v2810
    %v2812 = vrot.slane %v2808, %v2811
    %v2813 = vmul.f32 %v2797, %v2812
    %v2814 = vmul.f32 %v2799, %v2812
    %v2815 = vmul.f32 %v2801, %v2812
    %v2816 = vmul.f32 %v2803, %v2812
    %v2817 = vmul.f32 %v2805, %v2812
    %v2818 = vmul.f32 %v2807, %v2812
    %v2819 = vmax.f32 %v2813, 0.0
    %v2820 = vmax.f32 %v2814, 0.0
    %v2821 = vmax.f32 %v2815, 0.0
    %v2822 = vmax.f32 %v2816, 0.0
    %v2823 = vmax.f32 %v2817, 0.0
    %v2824 = vmax.f32 %v2818, 0.0
    %v2825 = vld [vmem:[%s11 + $0x4] sm:$0x1]
    %v2826 = vlaneseq
    %v2827 = vshrl.u32 %v2826, 7
    %v2828 = vsub.s32 0, %v2827
    %v2829 = vrot.slane %v2825, %v2828
    %v2830 = vmul.f32 %v2819, %v2829
    %v2831 = vmul.f32 %v2820, %v2829
    %v2832 = vmul.f32 %v2822, %v2829
    %v2833 = vmul.f32 %v2823, %v2829
    %v2834 = vadd.f32 %v2792, %v2830
    %v2835 = vadd.f32 %v2793, %v2831
    %v2836 = vadd.f32 %v2794, %v2832
    %v2837 = vadd.f32 %v2795, %v2833
    %v2838 = vld [vmem:[%s11 + $0x9] sm:$0x1]
    %v2839 = vlaneseq
    %v2840 = vshrl.u32 %v2839, 7
    %v2841 = vsub.s32 0, %v2840
    %v2842 = vrot.slane %v2838, %v2841
    %v2843 = vmul.f32 %v2819, %v2842
    %v2844 = vmul.f32 %v2820, %v2842
    %v2845 = vmul.f32 %v2821, %v2842
    %v2846 = vmul.f32 %v2822, %v2842
    %v2847 = vmul.f32 %v2823, %v2842
    %v2848 = vmul.f32 %v2824, %v2842
    %v2855 = vrot.slane %v2843, 2
    %v2856 = vrot.slane %v2844, 2
    %v2857 = vsel %vm215, %v2855, %v2856
    %v2858 = vrot.slane %v2845, 2
    %v2859 = vsel %vm215, %v2856, %v2858
    %v2860 = vrot.slane %v2846, 2
    %v2861 = vrot.slane %v2847, 2
    %v2862 = vsel %vm215, %v2860, %v2861
    %v2863 = vrot.slane %v2848, 2
    %v2864 = vsel %vm215, %v2861, %v2863
    %v2869 = vadd.f32 %v2834, %v2857
    %v2870 = vadd.f32 %v2835, %v2859
    %v2871 = vadd.f32 %v2836, %v2862
    %v2872 = vadd.f32 %v2837, %v2864
    %v2873 = vld [vmem:[%s11 + $0xe] sm:$0x1]
    %v2874 = vlaneseq
    %v2875 = vshrl.u32 %v2874, 7
    %v2876 = vsub.s32 0, %v2875
    %v2877 = vrot.slane %v2873, %v2876
    %v2878 = vmul.f32 %v2819, %v2877
    %v2879 = vmul.f32 %v2820, %v2877
    %v2880 = vmul.f32 %v2821, %v2877
    %v2881 = vmul.f32 %v2822, %v2877
    %v2882 = vmul.f32 %v2823, %v2877
    %v2883 = vmul.f32 %v2824, %v2877
    %v2890 = vrot.slane %v2878, 4
    %v2891 = vrot.slane %v2879, 4
    %v2892 = vsel %vm992, %v2890, %v2891
    %v2893 = vrot.slane %v2880, 4
    %v2894 = vsel %vm992, %v2891, %v2893
    %v2895 = vrot.slane %v2881, 4
    %v2896 = vrot.slane %v2882, 4
    %v2897 = vsel %vm992, %v2895, %v2896
    %v2898 = vrot.slane %v2883, 4
    %v2899 = vsel %vm992, %v2896, %v2898
    %v2904 = vadd.f32 %v2869, %v2892
    %v2905 = vadd.f32 %v2870, %v2894
    %v2906 = vadd.f32 %v2871, %v2897
    %v2907 = vadd.f32 %v2872, %v2899
    %v2908 = vld [vmem:[%s11 + $0x13] sm:$0x1]
    %v2909 = vlaneseq
    %v2910 = vshrl.u32 %v2909, 7
    %v2911 = vsub.s32 0, %v2910
    %v2912 = vrot.slane %v2908, %v2911
    %v2913 = vmul.f32 %v2819, %v2912
    %v2914 = vmul.f32 %v2820, %v2912
    %v2915 = vmul.f32 %v2821, %v2912
    %v2916 = vmul.f32 %v2822, %v2912
    %v2917 = vmul.f32 %v2823, %v2912
    %v2918 = vmul.f32 %v2824, %v2912
    %v2925 = vrot.slane %v2913, 6
    %v2926 = vrot.slane %v2914, 6
    %v2927 = vsel %vm1748, %v2925, %v2926
    %v2928 = vrot.slane %v2915, 6
    %v2929 = vsel %vm1748, %v2926, %v2928
    %v2930 = vrot.slane %v2916, 6
    %v2931 = vrot.slane %v2917, 6
    %v2932 = vsel %vm1748, %v2930, %v2931
    %v2933 = vrot.slane %v2918, 6
    %v2934 = vsel %vm1748, %v2931, %v2933
    %v2939 = vadd.f32 %v2904, %v2927
    %v2940 = vadd.f32 %v2905, %v2929
    %v2941 = vadd.f32 %v2906, %v2932
    %v2942 = vadd.f32 %v2907, %v2934
    %v2943 = vld [vmem:[%s11 + $0x18] sm:$0x1]
    %v2944 = vlaneseq
    %v2945 = vshrl.u32 %v2944, 7
    %v2946 = vsub.s32 0, %v2945
    %v2947 = vrot.slane %v2943, %v2946
    %v2948 = vmul.f32 %v2820, %v2947
    %v2949 = vmul.f32 %v2821, %v2947
    %v2950 = vmul.f32 %v2823, %v2947
    %v2951 = vmul.f32 %v2824, %v2947
    %v2952 = vadd.f32 %v2939, %v2948
    %v2953 = vadd.f32 %v2940, %v2949
    %v2954 = vadd.f32 %v2941, %v2950
    %v2955 = vadd.f32 %v2942, %v2951
    %v2962 = vrot.slane %v2659, 2
    %v2963 = vrot.slane %v2660, 2
    %v2964 = vsel %vm215, %v2962, %v2963
    %v2965 = vrot.slane %v2661, 2
    %v2966 = vsel %vm215, %v2963, %v2965
    %v2967 = vrot.slane %v2662, 2
    %v2968 = vrot.slane %v2663, 2
    %v2969 = vsel %vm215, %v2967, %v2968
    %v2970 = vrot.slane %v2664, 2
    %v2971 = vsel %vm215, %v2968, %v2970
    %2976 = vst [vmem:[#allocation4] sm:$0xff] %v2964
    %2977 = vst [vmem:[#allocation4 + $0x10] sm:$0xff] %v2966
    %2978 = vst [vmem:[#allocation4 + $0x20] sm:$0xff] %v2969
    %2979 = vst [vmem:[#allocation4 + $0x30] sm:$0xff] %v2971
    %2980 = vst [vmem:[#allocation4 + $0x8] sm:$0xff] %v2952
    %2981 = vst [vmem:[#allocation4 + $0x18] sm:$0xff] %v2953
    %2982 = vst [vmem:[#allocation4 + $0x28] sm:$0xff] %v2954
    %2983 = vst [vmem:[#allocation4 + $0x38] sm:$0xff] %v2955
    %v2984 = vld [vmem:[#allocation4] sm:$0xff]
    %v2985 = vld [vmem:[#allocation4 + $0x8] sm:$0xff]
    %v2986 = vld [vmem:[#allocation4 + $0x10] sm:$0xff]
    %v2987 = vld [vmem:[#allocation4 + $0x18] sm:$0xff]
    %v2988 = vld [vmem:[#allocation4 + $0x20] sm:$0xff]
    %v2989 = vld [vmem:[#allocation4 + $0x28] sm:$0xff]
    %v2990 = vld [vmem:[#allocation4 + $0x30] sm:$0xff]
    %v2991 = vld [vmem:[#allocation4 + $0x38] sm:$0xff]
    %v2992 = vld [vmem:[%s14] sm:$0xff]
    %v2993 = vld [vmem:[%s14 + $0x8] sm:$0xff]
    %v2994 = vld [vmem:[%s14 + $0x10] sm:$0xff]
    %v2995 = vld [vmem:[%s14 + $0x18] sm:$0xff]
    %v2996 = vld [vmem:[%s14 + $0x20] sm:$0xff]
    %v2997 = vld [vmem:[%s14 + $0x28] sm:$0xff]
    %v2998 = vld [vmem:[%s14 + $0x30] sm:$0xff]
    %v2999 = vld [vmem:[%s14 + $0x38] sm:$0xff]
    %v3000 = vld [vmem:[%s14 + $0x40] sm:$0xff]
    %v3001 = vld [vmem:[%s14 + $0x48] sm:$0xff]
    %v3002 = vld [vmem:[%s14 + $0x50] sm:$0xff]
    %v3003 = vld [vmem:[%s14 + $0x58] sm:$0xff]
    %v3004 = vld [vmem:[%s14 + $0x60] sm:$0xff]
    %v3005 = vld [vmem:[%s14 + $0x68] sm:$0xff]
    %v3006 = vld [vmem:[%s14 + $0x70] sm:$0xff]
    %v3007 = vld [vmem:[%s14 + $0x78] sm:$0xff]
    %v3008 = vld [vmem:[%s14 + $0x80] sm:$0xff]
    %v3009 = vld [vmem:[%s14 + $0x88] sm:$0xff]
    %v3010 = vld [vmem:[%s14 + $0x90] sm:$0xff]
    %v3011 = vld [vmem:[%s14 + $0x98] sm:$0xff]
    %v3012 = vld [vmem:[%s14 + $0xa0] sm:$0xff]
    %v3013 = vld [vmem:[%s14 + $0xa8] sm:$0xff]
    %v3014 = vld [vmem:[%s14 + $0xb0] sm:$0xff]
    %v3015 = vld [vmem:[%s14 + $0xb8] sm:$0xff]
    %v3016 = vld [vmem:[%s14 + $0xc0] sm:$0xff]
    %v3017 = vld [vmem:[%s14 + $0xc8] sm:$0xff]
    %v3018 = vld [vmem:[%s14 + $0xd0] sm:$0xff]
    %v3019 = vld [vmem:[%s14 + $0xd8] sm:$0xff]
    %v3020 = vld [vmem:[%s14 + $0xe0] sm:$0xff]
    %v3021 = vld [vmem:[%s14 + $0xe8] sm:$0xff]
    %v3022 = vld [vmem:[%s14 + $0xf0] sm:$0xff]
    %v3023 = vld [vmem:[%s14 + $0xf8] sm:$0xff]
    %v3024 = vld [vmem:[%s14 + $0x100] sm:$0xff]
    %v3025 = vld [vmem:[%s14 + $0x108] sm:$0xff]
    %v3026 = vld [vmem:[%s14 + $0x110] sm:$0xff]
    %v3027 = vld [vmem:[%s14 + $0x118] sm:$0xff]
    %v3028 = vld [vmem:[%s14 + $0x120] sm:$0xff]
    %v3029 = vld [vmem:[%s14 + $0x128] sm:$0xff]
    %v3030 = vld [vmem:[%s14 + $0x130] sm:$0xff]
    %v3031 = vld [vmem:[%s14 + $0x138] sm:$0xff]
    %v3032 = vld [vmem:[%s14 + $0x140] sm:$0xff]
    %v3033 = vld [vmem:[%s14 + $0x148] sm:$0xff]
    %v3034 = vld [vmem:[%s14 + $0x150] sm:$0xff]
    %v3035 = vld [vmem:[%s14 + $0x158] sm:$0xff]
    %v3036 = vld [vmem:[%s14 + $0x160] sm:$0xff]
    %v3037 = vld [vmem:[%s14 + $0x168] sm:$0xff]
    %v3038 = vld [vmem:[%s14 + $0x170] sm:$0xff]
    %v3039 = vld [vmem:[%s14 + $0x178] sm:$0xff]
    %v3040 = vld [vmem:[%s14 + $0x180] sm:$0xff]
    %v3041 = vld [vmem:[%s14 + $0x188] sm:$0xff]
    %v3042 = vld [vmem:[%s14 + $0x190] sm:$0xff]
    %v3043 = vld [vmem:[%s14 + $0x198] sm:$0xff]
    %v3044 = vld [vmem:[%s14 + $0x1a0] sm:$0xff]
    %v3045 = vld [vmem:[%s14 + $0x1a8] sm:$0xff]
    %v3046 = vld [vmem:[%s14 + $0x1b0] sm:$0xff]
    %v3047 = vld [vmem:[%s14 + $0x1b8] sm:$0xff]
    %v3048 = vld [vmem:[%s14 + $0x1c0] sm:$0xff]
    %v3049 = vld [vmem:[%s14 + $0x1c8] sm:$0xff]
    %v3050 = vld [vmem:[%s14 + $0x1d0] sm:$0xff]
    %v3051 = vld [vmem:[%s14 + $0x1d8] sm:$0xff]
    %v3052 = vld [vmem:[%s14 + $0x1e0] sm:$0xff]
    %v3053 = vld [vmem:[%s14 + $0x1e8] sm:$0xff]
    %v3054 = vld [vmem:[%s14 + $0x1f0] sm:$0xff]
    %v3055 = vld [vmem:[%s14 + $0x1f8] sm:$0xff]
    %3056 = vmatprep.subr.mxu0 %v3023
    %3057 = vmatpush1.msra.mxu0 %v3022
    %3058 = vmatprep.subr.mxu0 %v3021
    %3059 = vmatpush1.msra.mxu0 %v3020
    %3060 = vmatprep.subr.mxu0 %v3019
    %3061 = vmatpush1.msra.mxu0 %v3018
    %3062 = vmatprep.subr.mxu0 %v3017
    %3063 = vmatpush1.msra.mxu0 %v3016
    %3064 = vmatprep.subr.mxu0 %v3015
    %3065 = vmatpush1.msra.mxu0 %v3014
    %3066 = vmatprep.subr.mxu0 %v3013
    %3067 = vmatpush1.msra.mxu0 %v3012
    %3068 = vmatprep.subr.mxu0 %v3011
    %3069 = vmatpush1.msra.mxu0 %v3010
    %3070 = vmatprep.subr.mxu0 %v3009
    %3071 = vmatpush1.msra.mxu0 %v3008
    %3072 = vmatprep.subr.mxu0 %v3007
    %3073 = vmatpush1.msra.mxu0 %v3006
    %3074 = vmatprep.subr.mxu0 %v3005
    %3075 = vmatpush1.msra.mxu0 %v3004
    %3076 = vmatprep.subr.mxu0 %v3003
    %3077 = vmatpush1.msra.mxu0 %v3002
    %3078 = vmatprep.subr.mxu0 %v3001
    %3079 = vmatpush1.msra.mxu0 %v3000
    %3080 = vmatprep.subr.mxu0 %v2999
    %3081 = vmatpush1.msra.mxu0 %v2998
    %3082 = vmatprep.subr.mxu0 %v2997
    %3083 = vmatpush1.msra.mxu0 %v2996
    %3084 = vmatprep.subr.mxu0 %v2995
    %3085 = vmatpush1.msra.mxu0 %v2994
    %3086 = vmatprep.subr.mxu0 %v2993
    %3087 = vmatpush1.msra.mxu0 %v2992
    %3088 = vmatprep.subr.mxu0 %v3055
    %3089 = vmatpush2.msra.mxu0 %v3054
    %3090 = vmatprep.subr.mxu0 %v3053
    %3091 = vmatpush2.msra.mxu0 %v3052
    %3092 = vmatprep.subr.mxu0 %v3051
    %3093 = vmatpush2.msra.mxu0 %v3050
    %3094 = vmatprep.subr.mxu0 %v3049
    %3095 = vmatpush2.msra.mxu0 %v3048
    %3096 = vmatprep.subr.mxu0 %v3047
    %3097 = vmatpush2.msra.mxu0 %v3046
    %3098 = vmatprep.subr.mxu0 %v3045
    %3099 = vmatpush2.msra.mxu0 %v3044
    %3100 = vmatprep.subr.mxu0 %v3043
    %3101 = vmatpush2.msra.mxu0 %v3042
    %3102 = vmatprep.subr.mxu0 %v3041
    %3103 = vmatpush2.msra.mxu0 %v3040
    %3104 = vmatprep.subr.mxu0 %v3039
    %3105 = vmatpush2.msra.mxu0 %v3038
    %3106 = vmatprep.subr.mxu0 %v3037
    %3107 = vmatpush2.msra.mxu0 %v3036
    %3108 = vmatprep.subr.mxu0 %v3035
    %3109 = vmatpush2.msra.mxu0 %v3034
    %3110 = vmatprep.subr.mxu0 %v3033
    %3111 = vmatpush2.msra.mxu0 %v3032
    %3112 = vmatprep.subr.mxu0 %v3031
    %3113 = vmatpush2.msra.mxu0 %v3030
    %3114 = vmatprep.subr.mxu0 %v3029
    %3115 = vmatpush2.msra.mxu0 %v3028
    %3116 = vmatprep.subr.mxu0 %v3027
    %3117 = vmatpush2.msra.mxu0 %v3026
    %3118 = vmatprep.subr.mxu0 %v3025
    %3119 = vmatpush2.msra.mxu0 %v3024
    %3120 = vmatprep.mubr.f32.mxu0 %v2985
    %3121 = vmatmul.mubr.f32.gmra.mxu0 %v2984
    %v3122 = vpop.f32.mrf.mxu0
    %v3123 = vadd.f32 0.0, %v3122
    %v3124 = vpop.f32.mrf.mxu0
    %v3125 = vadd.f32 0.0, %v3124
    %3126 = vmatprep.mubr.f32.mxu0 %v2987
    %3127 = vmatmul.mubr.f32.gmra.mxu0 %v2986
    %v3128 = vpop.f32.mrf.mxu0
    %v3129 = vadd.f32 0.0, %v3128
    %v3130 = vpop.f32.mrf.mxu0
    %v3131 = vadd.f32 0.0, %v3130
    %3132 = vmatprep.mubr.f32.mxu0 %v2989
    %3133 = vmatmul.mubr.f32.gmra.mxu0 %v2988
    %v3134 = vpop.f32.mrf.mxu0
    %v3135 = vadd.f32 0.0, %v3134
    %v3136 = vpop.f32.mrf.mxu0
    %v3137 = vadd.f32 0.0, %v3136
    %3138 = vmatprep.mubr.f32.mxu0 %v2991
    %3139 = vmatmul.mubr.f32.gmra.mxu0 %v2990
    %v3140 = vpop.f32.mrf.mxu0
    %v3141 = vadd.f32 0.0, %v3140
    %v3142 = vpop.f32.mrf.mxu0
    %v3143 = vadd.f32 0.0, %v3142
    %3144 = vdwg.mxu0
    %s3145 = sld [smem:[#allocation5 + $0x6]]
    %v3146 = vadd.f32 %v3123, %v3129
    %v3147 = vadd.f32 %v3146, %v3135
    %v3148 = vadd.f32 %v3147, %v3141
    %v3149 = vrot.slane %v3148, 4
    %v3150 = vadd.f32 %v3148, %v3149
    %v3151 = vrot.slane %v3150, 2
    %v3152 = vadd.f32 %v3150, %v3151
    %v3153 = vrot.slane %v3152, 1
    %v3154 = vadd.f32 %v3152, %v3153
    %v3155 = vld [vmem:[%s5] sm:$0xff]
    %v3156 = vld [vmem:[%s5 + $0x8] sm:$0xff]
    %v3157 = vld [vmem:[%s5 + $0x10] sm:$0xff]
    %v3158 = vld [vmem:[%s5 + $0x18] sm:$0xff]
    %v3159 = vld [vmem:[%s5 + $0x20] sm:$0xff]
    %v3160 = vld [vmem:[%s5 + $0x28] sm:$0xff]
    %v3161 = vld [vmem:[%s5 + $0x30] sm:$0xff]
    %v3162 = vld [vmem:[%s5 + $0x38] sm:$0xff]
    %v3163 = vld [vmem:[%s5 + $0x40] sm:$0xff]
    %v3164 = vld [vmem:[%s5 + $0x48] sm:$0xff]
    %v3165 = vld [vmem:[%s5 + $0x50] sm:$0xff]
    %v3166 = vld [vmem:[%s5 + $0x58] sm:$0xff]
    %v3167 = vld [vmem:[%s5 + $0x60] sm:$0xff]
    %v3168 = vld [vmem:[%s5 + $0x68] sm:$0xff]
    %v3169 = vld [vmem:[%s5 + $0x70] sm:$0xff]
    %v3170 = vld [vmem:[%s5 + $0x78] sm:$0xff]
    %3171 = vmatprep.subr.mxu0 0.0
    %3172 = vmatpush1.msra.mxu0 %v3170
    %3173 = vmatprep.subr.mxu0 0.0
    %3174 = vmatpush1.msra.mxu0 %v3169
    %3175 = vmatprep.subr.mxu0 0.0
    %3176 = vmatpush1.msra.mxu0 %v3168
    %3177 = vmatprep.subr.mxu0 0.0
    %3178 = vmatpush1.msra.mxu0 %v3167
    %3179 = vmatprep.subr.mxu0 0.0
    %3180 = vmatpush1.msra.mxu0 %v3166
    %3181 = vmatprep.subr.mxu0 0.0
    %3182 = vmatpush1.msra.mxu0 %v3165
    %3183 = vmatprep.subr.mxu0 0.0
    %3184 = vmatpush1.msra.mxu0 %v3164
    %3185 = vmatprep.subr.mxu0 0.0
    %3186 = vmatpush1.msra.mxu0 %v3163
    %3187 = vmatprep.subr.mxu0 0.0
    %3188 = vmatpush1.msra.mxu0 %v3162
    %3189 = vmatprep.subr.mxu0 0.0
    %3190 = vmatpush1.msra.mxu0 %v3161
    %3191 = vmatprep.subr.mxu0 0.0
    %3192 = vmatpush1.msra.mxu0 %v3160
    %3193 = vmatprep.subr.mxu0 0.0
    %3194 = vmatpush1.msra.mxu0 %v3159
    %3195 = vmatprep.subr.mxu0 0.0
    %3196 = vmatpush1.msra.mxu0 %v3158
    %3197 = vmatprep.subr.mxu0 0.0
    %3198 = vmatpush1.msra.mxu0 %v3157
    %3199 = vmatprep.subr.mxu0 0.0
    %3200 = vmatpush1.msra.mxu0 %v3156
    %3201 = vmatprep.subr.mxu0 0.0
    %3202 = vmatpush1.msra.mxu0 %v3155
    %3203 = vmatprep.subr.mxu0 0.0
    %3204 = vmatpush2.msra.mxu0 0.0
    %3205 = vmatprep.subr.mxu0 0.0
    %3206 = vmatpush2.msra.mxu0 0.0
    %3207 = vmatprep.subr.mxu0 0.0
    %3208 = vmatpush2.msra.mxu0 0.0
    %3209 = vmatprep.subr.mxu0 0.0
    %3210 = vmatpush2.msra.mxu0 0.0
    %3211 = vmatprep.subr.mxu0 0.0
    %3212 = vmatpush2.msra.mxu0 0.0
    %3213 = vmatprep.subr.mxu0 0.0
    %3214 = vmatpush2.msra.mxu0 0.0
    %3215 = vmatprep.subr.mxu0 0.0
    %3216 = vmatpush2.msra.mxu0 0.0
    %3217 = vmatprep.subr.mxu0 0.0
    %3218 = vmatpush2.msra.mxu0 0.0
    %3219 = vmatprep.subr.mxu0 0.0
    %3220 = vmatpush2.msra.mxu0 0.0
    %3221 = vmatprep.subr.mxu0 0.0
    %3222 = vmatpush2.msra.mxu0 0.0
    %3223 = vmatprep.subr.mxu0 0.0
    %3224 = vmatpush2.msra.mxu0 0.0
    %3225 = vmatprep.subr.mxu0 0.0
    %3226 = vmatpush2.msra.mxu0 0.0
    %3227 = vmatprep.subr.mxu0 0.0
    %3228 = vmatpush2.msra.mxu0 0.0
    %3229 = vmatprep.subr.mxu0 0.0
    %3230 = vmatpush2.msra.mxu0 0.0
    %3231 = vmatprep.subr.mxu0 0.0
    %3232 = vmatpush2.msra.mxu0 0.0
    %3233 = vmatprep.subr.mxu0 0.0
    %3234 = vmatpush2.msra.mxu0 0.0
    %3235 = vmatprep.mubr.f32.mxu0 0.0
    %3236 = vmatmul.mubr.f32.gmra.mxu0 %v3154
    %v3237 = vpop.f32.mrf.mxu0
    %v3238 = vadd.f32 0.0, %v3237
    %v3239 = vpop.f32.mrf.mxu0
    %3240 = vdwg.mxu0
    %v3241 = vlaneseq
    %v3242 = vshrl.u32 %v3241, 7
    %v3243 = vsub.s32 0, %v3242
    %v3244 = vrot.slane %v3238, %v3243
    %v3245 = vsub.f32 %v3123, %v3244
    %v3246 = vsub.f32 %v3129, %v3244
    %v3247 = vsub.f32 %v3135, %v3244
    %v3248 = vsub.f32 %v3141, %v3244
    %v3249 = vmul.f32 %v3245, %v3245
    %v3250 = vmul.f32 %v3246, %v3246
    %v3251 = vmul.f32 %v3247, %v3247
    %v3252 = vmul.f32 %v3248, %v3248
    %v3253 = vadd.f32 %v3249, %v3250
    %v3254 = vadd.f32 %v3253, %v3251
    %v3255 = vadd.f32 %v3254, %v3252
    %v3256 = vrot.slane %v3255, 4
    %v3257 = vadd.f32 %v3255, %v3256
    %v3258 = vrot.slane %v3257, 2
    %v3259 = vadd.f32 %v3257, %v3258
    %v3260 = vrot.slane %v3259, 1
    %v3261 = vadd.f32 %v3259, %v3260
    %3262 = vmatprep.subr.mxu0 0.0
    %3263 = vmatpush1.msra.mxu0 %v3170
    %3264 = vmatprep.subr.mxu0 0.0
    %3265 = vmatpush1.msra.mxu0 %v3169
    %3266 = vmatprep.subr.mxu0 0.0
    %3267 = vmatpush1.msra.mxu0 %v3168
    %3268 = vmatprep.subr.mxu0 0.0
    %3269 = vmatpush1.msra.mxu0 %v3167
    %3270 = vmatprep.subr.mxu0 0.0
    %3271 = vmatpush1.msra.mxu0 %v3166
    %3272 = vmatprep.subr.mxu0 0.0
    %3273 = vmatpush1.msra.mxu0 %v3165
    %3274 = vmatprep.subr.mxu0 0.0
    %3275 = vmatpush1.msra.mxu0 %v3164
    %3276 = vmatprep.subr.mxu0 0.0
    %3277 = vmatpush1.msra.mxu0 %v3163
    %3278 = vmatprep.subr.mxu0 0.0
    %3279 = vmatpush1.msra.mxu0 %v3162
    %3280 = vmatprep.subr.mxu0 0.0
    %3281 = vmatpush1.msra.mxu0 %v3161
    %3282 = vmatprep.subr.mxu0 0.0
    %3283 = vmatpush1.msra.mxu0 %v3160
    %3284 = vmatprep.subr.mxu0 0.0
    %3285 = vmatpush1.msra.mxu0 %v3159
    %3286 = vmatprep.subr.mxu0 0.0
    %3287 = vmatpush1.msra.mxu0 %v3158
    %3288 = vmatprep.subr.mxu0 0.0
    %3289 = vmatpush1.msra.mxu0 %v3157
    %3290 = vmatprep.subr.mxu0 0.0
    %3291 = vmatpush1.msra.mxu0 %v3156
    %3292 = vmatprep.subr.mxu0 0.0
    %3293 = vmatpush1.msra.mxu0 %v3155
    %3294 = vmatprep.subr.mxu0 0.0
    %3295 = vmatpush2.msra.mxu0 0.0
    %3296 = vmatprep.subr.mxu0 0.0
    %3297 = vmatpush2.msra.mxu0 0.0
    %3298 = vmatprep.subr.mxu0 0.0
    %3299 = vmatpush2.msra.mxu0 0.0
    %3300 = vmatprep.subr.mxu0 0.0
    %3301 = vmatpush2.msra.mxu0 0.0
    %3302 = vmatprep.subr.mxu0 0.0
    %3303 = vmatpush2.msra.mxu0 0.0
    %3304 = vmatprep.subr.mxu0 0.0
    %3305 = vmatpush2.msra.mxu0 0.0
    %3306 = vmatprep.subr.mxu0 0.0
    %3307 = vmatpush2.msra.mxu0 0.0
    %3308 = vmatprep.subr.mxu0 0.0
    %3309 = vmatpush2.msra.mxu0 0.0
    %3310 = vmatprep.subr.mxu0 0.0
    %3311 = vmatpush2.msra.mxu0 0.0
    %3312 = vmatprep.subr.mxu0 0.0
    %3313 = vmatpush2.msra.mxu0 0.0
    %3314 = vmatprep.subr.mxu0 0.0
    %3315 = vmatpush2.msra.mxu0 0.0
    %3316 = vmatprep.subr.mxu0 0.0
    %3317 = vmatpush2.msra.mxu0 0.0
    %3318 = vmatprep.subr.mxu0 0.0
    %3319 = vmatpush2.msra.mxu0 0.0
    %3320 = vmatprep.subr.mxu0 0.0
    %3321 = vmatpush2.msra.mxu0 0.0
    %3322 = vmatprep.subr.mxu0 0.0
    %3323 = vmatpush2.msra.mxu0 0.0
    %3324 = vmatprep.subr.mxu0 0.0
    %3325 = vmatpush2.msra.mxu0 0.0
    %3326 = vmatprep.mubr.f32.mxu0 0.0
    %3327 = vmatmul.mubr.f32.gmra.mxu0 %v3261
    %v3328 = vpop.f32.mrf.mxu0
    %v3329 = vadd.f32 1e-05, %v3328
    %v3330 = vpop.f32.mrf.mxu0
    %3331 = vdwg.mxu0
    %v3332 = vrsqrt.pop %v3329
    %v3333 = vlaneseq
    %v3334 = vshrl.u32 %v3333, 7
    %v3335 = vsub.s32 0, %v3334
    %v3336 = vrot.slane %v3332, %v3335
    %v3337 = vmul.f32 %v3245, %v3336
    %v3338 = vmul.f32 %v3246, %v3336
    %v3339 = vmul.f32 %v3247, %v3336
    %v3340 = vmul.f32 %v3248, %v3336
    %v3341 = vstv %s3145
    %v3342 = vmul.f32 %v3341, %v3337
    %v3343 = vmul.f32 %v3341, %v3338
    %v3344 = vmul.f32 %v3341, %v3339
    %v3345 = vmul.f32 %v3341, %v3340
    %v3346 = vadd.f32 %v748, %v3342
    %v3347 = vadd.f32 %v749, %v3343
    %v3348 = vadd.f32 %v750, %v3344
    %v3349 = vadd.f32 %v751, %v3345
    %s3350 = sld [smem:[#allocation5 + $0x7]]
    %v3351 = vadd.f32 %v3125, %v3131
    %v3352 = vadd.f32 %v3351, %v3137
    %v3353 = vadd.f32 %v3352, %v3143
    %v3354 = vrot.slane %v3353, 4
    %v3355 = vadd.f32 %v3353, %v3354
    %v3356 = vrot.slane %v3355, 2
    %v3357 = vadd.f32 %v3355, %v3356
    %v3358 = vrot.slane %v3357, 1
    %v3359 = vadd.f32 %v3357, %v3358
    %3360 = vmatprep.subr.mxu0 0.0
    %3361 = vmatpush1.msra.mxu0 %v3170
    %3362 = vmatprep.subr.mxu0 0.0
    %3363 = vmatpush1.msra.mxu0 %v3169
    %3364 = vmatprep.subr.mxu0 0.0
    %3365 = vmatpush1.msra.mxu0 %v3168
    %3366 = vmatprep.subr.mxu0 0.0
    %3367 = vmatpush1.msra.mxu0 %v3167
    %3368 = vmatprep.subr.mxu0 0.0
    %3369 = vmatpush1.msra.mxu0 %v3166
    %3370 = vmatprep.subr.mxu0 0.0
    %3371 = vmatpush1.msra.mxu0 %v3165
    %3372 = vmatprep.subr.mxu0 0.0
    %3373 = vmatpush1.msra.mxu0 %v3164
    %3374 = vmatprep.subr.mxu0 0.0
    %3375 = vmatpush1.msra.mxu0 %v3163
    %3376 = vmatprep.subr.mxu0 0.0
    %3377 = vmatpush1.msra.mxu0 %v3162
    %3378 = vmatprep.subr.mxu0 0.0
    %3379 = vmatpush1.msra.mxu0 %v3161
    %3380 = vmatprep.subr.mxu0 0.0
    %3381 = vmatpush1.msra.mxu0 %v3160
    %3382 = vmatprep.subr.mxu0 0.0
    %3383 = vmatpush1.msra.mxu0 %v3159
    %3384 = vmatprep.subr.mxu0 0.0
    %3385 = vmatpush1.msra.mxu0 %v3158
    %3386 = vmatprep.subr.mxu0 0.0
    %3387 = vmatpush1.msra.mxu0 %v3157
    %3388 = vmatprep.subr.mxu0 0.0
    %3389 = vmatpush1.msra.mxu0 %v3156
    %3390 = vmatprep.subr.mxu0 0.0
    %3391 = vmatpush1.msra.mxu0 %v3155
    %3392 = vmatprep.subr.mxu0 0.0
    %3393 = vmatpush2.msra.mxu0 0.0
    %3394 = vmatprep.subr.mxu0 0.0
    %3395 = vmatpush2.msra.mxu0 0.0
    %3396 = vmatprep.subr.mxu0 0.0
    %3397 = vmatpush2.msra.mxu0 0.0
    %3398 = vmatprep.subr.mxu0 0.0
    %3399 = vmatpush2.msra.mxu0 0.0
    %3400 = vmatprep.subr.mxu0 0.0
    %3401 = vmatpush2.msra.mxu0 0.0
    %3402 = vmatprep.subr.mxu0 0.0
    %3403 = vmatpush2.msra.mxu0 0.0
    %3404 = vmatprep.subr.mxu0 0.0
    %3405 = vmatpush2.msra.mxu0 0.0
    %3406 = vmatprep.subr.mxu0 0.0
    %3407 = vmatpush2.msra.mxu0 0.0
    %3408 = vmatprep.subr.mxu0 0.0
    %3409 = vmatpush2.msra.mxu0 0.0
    %3410 = vmatprep.subr.mxu0 0.0
    %3411 = vmatpush2.msra.mxu0 0.0
    %3412 = vmatprep.subr.mxu0 0.0
    %3413 = vmatpush2.msra.mxu0 0.0
    %3414 = vmatprep.subr.mxu0 0.0
    %3415 = vmatpush2.msra.mxu0 0.0
    %3416 = vmatprep.subr.mxu0 0.0
    %3417 = vmatpush2.msra.mxu0 0.0
    %3418 = vmatprep.subr.mxu0 0.0
    %3419 = vmatpush2.msra.mxu0 0.0
    %3420 = vmatprep.subr.mxu0 0.0
    %3421 = vmatpush2.msra.mxu0 0.0
    %3422 = vmatprep.subr.mxu0 0.0
    %3423 = vmatpush2.msra.mxu0 0.0
    %3424 = vmatprep.mubr.f32.mxu0 0.0
    %3425 = vmatmul.mubr.f32.gmra.mxu0 %v3359
    %v3426 = vpop.f32.mrf.mxu0
    %v3427 = vadd.f32 0.0, %v3426
    %v3428 = vpop.f32.mrf.mxu0
    %3429 = vdwg.mxu0
    %v3430 = vlaneseq
    %v3431 = vshrl.u32 %v3430, 7
    %v3432 = vsub.s32 0, %v3431
    %v3433 = vrot.slane %v3427, %v3432
    %v3434 = vsub.f32 %v3125, %v3433
    %v3435 = vsub.f32 %v3131, %v3433
    %v3436 = vsub.f32 %v3137, %v3433
    %v3437 = vsub.f32 %v3143, %v3433
    %v3438 = vmul.f32 %v3434, %v3434
    %v3439 = vmul.f32 %v3435, %v3435
    %v3440 = vmul.f32 %v3436, %v3436
    %v3441 = vmul.f32 %v3437, %v3437
    %v3442 = vadd.f32 %v3438, %v3439
    %v3443 = vadd.f32 %v3442, %v3440
    %v3444 = vadd.f32 %v3443, %v3441
    %v3445 = vrot.slane %v3444, 4
    %v3446 = vadd.f32 %v3444, %v3445
    %v3447 = vrot.slane %v3446, 2
    %v3448 = vadd.f32 %v3446, %v3447
    %v3449 = vrot.slane %v3448, 1
    %v3450 = vadd.f32 %v3448, %v3449
    %3451 = vmatprep.subr.mxu0 0.0
    %3452 = vmatpush1.msra.mxu0 %v3170
    %3453 = vmatprep.subr.mxu0 0.0
    %3454 = vmatpush1.msra.mxu0 %v3169
    %3455 = vmatprep.subr.mxu0 0.0
    %3456 = vmatpush1.msra.mxu0 %v3168
    %3457 = vmatprep.subr.mxu0 0.0
    %3458 = vmatpush1.msra.mxu0 %v3167
    %3459 = vmatprep.subr.mxu0 0.0
    %3460 = vmatpush1.msra.mxu0 %v3166
    %3461 = vmatprep.subr.mxu0 0.0
    %3462 = vmatpush1.msra.mxu0 %v3165
    %3463 = vmatprep.subr.mxu0 0.0
    %3464 = vmatpush1.msra.mxu0 %v3164
    %3465 = vmatprep.subr.mxu0 0.0
    %3466 = vmatpush1.msra.mxu0 %v3163
    %3467 = vmatprep.subr.mxu0 0.0
    %3468 = vmatpush1.msra.mxu0 %v3162
    %3469 = vmatprep.subr.mxu0 0.0
    %3470 = vmatpush1.msra.mxu0 %v3161
    %3471 = vmatprep.subr.mxu0 0.0
    %3472 = vmatpush1.msra.mxu0 %v3160
    %3473 = vmatprep.subr.mxu0 0.0
    %3474 = vmatpush1.msra.mxu0 %v3159
    %3475 = vmatprep.subr.mxu0 0.0
    %3476 = vmatpush1.msra.mxu0 %v3158
    %3477 = vmatprep.subr.mxu0 0.0
    %3478 = vmatpush1.msra.mxu0 %v3157
    %3479 = vmatprep.subr.mxu0 0.0
    %3480 = vmatpush1.msra.mxu0 %v3156
    %3481 = vmatprep.subr.mxu0 0.0
    %3482 = vmatpush1.msra.mxu0 %v3155
    %3483 = vmatprep.subr.mxu0 0.0
    %3484 = vmatpush2.msra.mxu0 0.0
    %3485 = vmatprep.subr.mxu0 0.0
    %3486 = vmatpush2.msra.mxu0 0.0
    %3487 = vmatprep.subr.mxu0 0.0
    %3488 = vmatpush2.msra.mxu0 0.0
    %3489 = vmatprep.subr.mxu0 0.0
    %3490 = vmatpush2.msra.mxu0 0.0
    %3491 = vmatprep.subr.mxu0 0.0
    %3492 = vmatpush2.msra.mxu0 0.0
    %3493 = vmatprep.subr.mxu0 0.0
    %3494 = vmatpush2.msra.mxu0 0.0
    %3495 = vmatprep.subr.mxu0 0.0
    %3496 = vmatpush2.msra.mxu0 0.0
    %3497 = vmatprep.subr.mxu0 0.0
    %3498 = vmatpush2.msra.mxu0 0.0
    %3499 = vmatprep.subr.mxu0 0.0
    %3500 = vmatpush2.msra.mxu0 0.0
    %3501 = vmatprep.subr.mxu0 0.0
    %3502 = vmatpush2.msra.mxu0 0.0
    %3503 = vmatprep.subr.mxu0 0.0
    %3504 = vmatpush2.msra.mxu0 0.0
    %3505 = vmatprep.subr.mxu0 0.0
    %3506 = vmatpush2.msra.mxu0 0.0
    %3507 = vmatprep.subr.mxu0 0.0
    %3508 = vmatpush2.msra.mxu0 0.0
    %3509 = vmatprep.subr.mxu0 0.0
    %3510 = vmatpush2.msra.mxu0 0.0
    %3511 = vmatprep.subr.mxu0 0.0
    %3512 = vmatpush2.msra.mxu0 0.0
    %3513 = vmatprep.subr.mxu0 0.0
    %3514 = vmatpush2.msra.mxu0 0.0
    %3515 = vmatprep.mubr.f32.mxu0 0.0
    %3516 = vmatmul.mubr.f32.gmra.mxu0 %v3450
    %v3517 = vpop.f32.mrf.mxu0
    %v3518 = vadd.f32 1e-05, %v3517
    %v3519 = vpop.f32.mrf.mxu0
    %3520 = vdwg.mxu0
    %v3521 = vrsqrt.pop %v3518
    %v3522 = vlaneseq
    %v3523 = vshrl.u32 %v3522, 7
    %v3524 = vsub.s32 0, %v3523
    %v3525 = vrot.slane %v3521, %v3524
    %v3526 = vmul.f32 %v3434, %v3525
    %v3527 = vmul.f32 %v3435, %v3525
    %v3528 = vmul.f32 %v3436, %v3525
    %v3529 = vmul.f32 %v3437, %v3525
    %v3530 = vstv %s3350
    %v3531 = vmul.f32 %v3530, %v3526
    %v3532 = vmul.f32 %v3530, %v3527
    %v3533 = vmul.f32 %v3530, %v3528
    %v3534 = vmul.f32 %v3530, %v3529
    %v3535 = vadd.f32 %v3346, %v3531
    %v3536 = vadd.f32 %v3347, %v3532
    %v3537 = vadd.f32 %v3348, %v3533
    %v3538 = vadd.f32 %v3349, %v3534
    %v3545 = vrot.slane %v1384, 3
    %v3546 = vrot.slane %v1385, 3
    %v3547 = vsel %vm245, %v3545, %v3546
    %v3548 = vrot.slane %v1386, 3
    %v3549 = vsel %vm245, %v3546, %v3548
    %v3550 = vrot.slane %v1387, 3
    %v3551 = vrot.slane %v1388, 3
    %v3552 = vsel %vm245, %v3550, %v3551
    %v3553 = vrot.slane %v1389, 3
    %v3554 = vsel %vm245, %v3551, %v3553
    %3559 = vst [vmem:[#allocation4] sm:$0xff] %v3547
    %3560 = vst [vmem:[#allocation4 + $0x10] sm:$0xff] %v3549
    %3561 = vst [vmem:[#allocation4 + $0x20] sm:$0xff] %v3552
    %3562 = vst [vmem:[#allocation4 + $0x30] sm:$0xff] %v3554
    %v3569 = vrot.slane %v2564, 2
    %v3570 = vrot.slane %v2565, 2
    %v3571 = vsel %vm215, %v3569, %v3570
    %v3572 = vrot.slane %v2566, 2
    %v3573 = vsel %vm215, %v3570, %v3572
    %v3574 = vrot.slane %v2567, 2
    %v3575 = vrot.slane %v2568, 2
    %v3576 = vsel %vm215, %v3574, %v3575
    %v3577 = vrot.slane %v2569, 2
    %v3578 = vsel %vm215, %v3575, %v3577
    %3583 = vst [vmem:[#allocation4 + $0x8] sm:$0xff] %v3571
    %3584 = vst [vmem:[#allocation4 + $0x18] sm:$0xff] %v3573
    %3585 = vst [vmem:[#allocation4 + $0x28] sm:$0xff] %v3576
    %3586 = vst [vmem:[#allocation4 + $0x38] sm:$0xff] %v3578
    %v3587 = vld [vmem:[#allocation4] sm:$0xff]
    %v3588 = vld [vmem:[#allocation4 + $0x8] sm:$0xff]
    %v3589 = vld [vmem:[#allocation4 + $0x10] sm:$0xff]
    %v3590 = vld [vmem:[#allocation4 + $0x18] sm:$0xff]
    %v3591 = vld [vmem:[#allocation4 + $0x20] sm:$0xff]
    %v3592 = vld [vmem:[#allocation4 + $0x28] sm:$0xff]
    %v3593 = vld [vmem:[#allocation4 + $0x30] sm:$0xff]
    %v3594 = vld [vmem:[#allocation4 + $0x38] sm:$0xff]
    %v3595 = vld [vmem:[%s12] sm:$0xff]
    %v3596 = vld [vmem:[%s12 + $0x8] sm:$0xff]
    %v3597 = vld [vmem:[%s12 + $0x10] sm:$0xff]
    %v3598 = vld [vmem:[%s12 + $0x18] sm:$0xff]
    %v3599 = vld [vmem:[%s12 + $0x20] sm:$0xff]
    %v3600 = vld [vmem:[%s12 + $0x28] sm:$0xff]
    %v3601 = vld [vmem:[%s12 + $0x30] sm:$0xff]
    %v3602 = vld [vmem:[%s12 + $0x38] sm:$0xff]
    %v3603 = vld [vmem:[%s12 + $0x40] sm:$0xff]
    %v3604 = vld [vmem:[%s12 + $0x48] sm:$0xff]
    %v3605 = vld [vmem:[%s12 + $0x50] sm:$0xff]
    %v3606 = vld [vmem:[%s12 + $0x58] sm:$0xff]
    %v3607 = vld [vmem:[%s12 + $0x60] sm:$0xff]
    %v3608 = vld [vmem:[%s12 + $0x68] sm:$0xff]
    %v3609 = vld [vmem:[%s12 + $0x70] sm:$0xff]
    %v3610 = vld [vmem:[%s12 + $0x78] sm:$0xff]
    %v3611 = vld [vmem:[%s12 + $0x80] sm:$0xff]
    %v3612 = vld [vmem:[%s12 + $0x88] sm:$0xff]
    %v3613 = vld [vmem:[%s12 + $0x90] sm:$0xff]
    %v3614 = vld [vmem:[%s12 + $0x98] sm:$0xff]
    %v3615 = vld [vmem:[%s12 + $0xa0] sm:$0xff]
    %v3616 = vld [vmem:[%s12 + $0xa8] sm:$0xff]
    %v3617 = vld [vmem:[%s12 + $0xb0] sm:$0xff]
    %v3618 = vld [vmem:[%s12 + $0xb8] sm:$0xff]
    %v3619 = vld [vmem:[%s12 + $0xc0] sm:$0xff]
    %v3620 = vld [vmem:[%s12 + $0xc8] sm:$0xff]
    %v3621 = vld [vmem:[%s12 + $0xd0] sm:$0xff]
    %v3622 = vld [vmem:[%s12 + $0xd8] sm:$0xff]
    %v3623 = vld [vmem:[%s12 + $0xe0] sm:$0xff]
    %v3624 = vld [vmem:[%s12 + $0xe8] sm:$0xff]
    %v3625 = vld [vmem:[%s12 + $0xf0] sm:$0xff]
    %v3626 = vld [vmem:[%s12 + $0xf8] sm:$0xff]
    %v3627 = vld [vmem:[%s12 + $0x100] sm:$0xff]
    %v3628 = vld [vmem:[%s12 + $0x108] sm:$0xff]
    %v3629 = vld [vmem:[%s12 + $0x110] sm:$0xff]
    %v3630 = vld [vmem:[%s12 + $0x118] sm:$0xff]
    %v3631 = vld [vmem:[%s12 + $0x120] sm:$0xff]
    %v3632 = vld [vmem:[%s12 + $0x128] sm:$0xff]
    %v3633 = vld [vmem:[%s12 + $0x130] sm:$0xff]
    %v3634 = vld [vmem:[%s12 + $0x138] sm:$0xff]
    %v3635 = vld [vmem:[%s12 + $0x140] sm:$0xff]
    %v3636 = vld [vmem:[%s12 + $0x148] sm:$0xff]
    %v3637 = vld [vmem:[%s12 + $0x150] sm:$0xff]
    %v3638 = vld [vmem:[%s12 + $0x158] sm:$0xff]
    %v3639 = vld [vmem:[%s12 + $0x160] sm:$0xff]
    %v3640 = vld [vmem:[%s12 + $0x168] sm:$0xff]
    %v3641 = vld [vmem:[%s12 + $0x170] sm:$0xff]
    %v3642 = vld [vmem:[%s12 + $0x178] sm:$0xff]
    %v3643 = vld [vmem:[%s12 + $0x180] sm:$0xff]
    %v3644 = vld [vmem:[%s12 + $0x188] sm:$0xff]
    %v3645 = vld [vmem:[%s12 + $0x190] sm:$0xff]
    %v3646 = vld [vmem:[%s12 + $0x198] sm:$0xff]
    %v3647 = vld [vmem:[%s12 + $0x1a0] sm:$0xff]
    %v3648 = vld [vmem:[%s12 + $0x1a8] sm:$0xff]
    %v3649 = vld [vmem:[%s12 + $0x1b0] sm:$0xff]
    %v3650 = vld [vmem:[%s12 + $0x1b8] sm:$0xff]
    %v3651 = vld [vmem:[%s12 + $0x1c0] sm:$0xff]
    %v3652 = vld [vmem:[%s12 + $0x1c8] sm:$0xff]
    %v3653 = vld [vmem:[%s12 + $0x1d0] sm:$0xff]
    %v3654 = vld [vmem:[%s12 + $0x1d8] sm:$0xff]
    %v3655 = vld [vmem:[%s12 + $0x1e0] sm:$0xff]
    %v3656 = vld [vmem:[%s12 + $0x1e8] sm:$0xff]
    %v3657 = vld [vmem:[%s12 + $0x1f0] sm:$0xff]
    %v3658 = vld [vmem:[%s12 + $0x1f8] sm:$0xff]
    %3659 = vmatprep.subr.mxu0 %v3626
    %3660 = vmatpush1.msra.mxu0 %v3625
    %3661 = vmatprep.subr.mxu0 %v3624
    %3662 = vmatpush1.msra.mxu0 %v3623
    %3663 = vmatprep.subr.mxu0 %v3622
    %3664 = vmatpush1.msra.mxu0 %v3621
    %3665 = vmatprep.subr.mxu0 %v3620
    %3666 = vmatpush1.msra.mxu0 %v3619
    %3667 = vmatprep.subr.mxu0 %v3618
    %3668 = vmatpush1.msra.mxu0 %v3617
    %3669 = vmatprep.subr.mxu0 %v3616
    %3670 = vmatpush1.msra.mxu0 %v3615
    %3671 = vmatprep.subr.mxu0 %v3614
    %3672 = vmatpush1.msra.mxu0 %v3613
    %3673 = vmatprep.subr.mxu0 %v3612
    %3674 = vmatpush1.msra.mxu0 %v3611
    %3675 = vmatprep.subr.mxu0 %v3610
    %3676 = vmatpush1.msra.mxu0 %v3609
    %3677 = vmatprep.subr.mxu0 %v3608
    %3678 = vmatpush1.msra.mxu0 %v3607
    %3679 = vmatprep.subr.mxu0 %v3606
    %3680 = vmatpush1.msra.mxu0 %v3605
    %3681 = vmatprep.subr.mxu0 %v3604
    %3682 = vmatpush1.msra.mxu0 %v3603
    %3683 = vmatprep.subr.mxu0 %v3602
    %3684 = vmatpush1.msra.mxu0 %v3601
    %3685 = vmatprep.subr.mxu0 %v3600
    %3686 = vmatpush1.msra.mxu0 %v3599
    %3687 = vmatprep.subr.mxu0 %v3598
    %3688 = vmatpush1.msra.mxu0 %v3597
    %3689 = vmatprep.subr.mxu0 %v3596
    %3690 = vmatpush1.msra.mxu0 %v3595
    %3691 = vmatprep.subr.mxu0 %v3658
    %3692 = vmatpush2.msra.mxu0 %v3657
    %3693 = vmatprep.subr.mxu0 %v3656
    %3694 = vmatpush2.msra.mxu0 %v3655
    %3695 = vmatprep.subr.mxu0 %v3654
    %3696 = vmatpush2.msra.mxu0 %v3653
    %3697 = vmatprep.subr.mxu0 %v3652
    %3698 = vmatpush2.msra.mxu0 %v3651
    %3699 = vmatprep.subr.mxu0 %v3650
    %3700 = vmatpush2.msra.mxu0 %v3649
    %3701 = vmatprep.subr.mxu0 %v3648
    %3702 = vmatpush2.msra.mxu0 %v3647
    %3703 = vmatprep.subr.mxu0 %v3646
    %3704 = vmatpush2.msra.mxu0 %v3645
    %3705 = vmatprep.subr.mxu0 %v3644
    %3706 = vmatpush2.msra.mxu0 %v3643
    %3707 = vmatprep.subr.mxu0 %v3642
    %3708 = vmatpush2.msra.mxu0 %v3641
    %3709 = vmatprep.subr.mxu0 %v3640
    %3710 = vmatpush2.msra.mxu0 %v3639
    %3711 = vmatprep.subr.mxu0 %v3638
    %3712 = vmatpush2.msra.mxu0 %v3637
    %3713 = vmatprep.subr.mxu0 %v3636
    %3714 = vmatpush2.msra.mxu0 %v3635
    %3715 = vmatprep.subr.mxu0 %v3634
    %3716 = vmatpush2.msra.mxu0 %v3633
    %3717 = vmatprep.subr.mxu0 %v3632
    %3718 = vmatpush2.msra.mxu0 %v3631
    %3719 = vmatprep.subr.mxu0 %v3630
    %3720 = vmatpush2.msra.mxu0 %v3629
    %3721 = vmatprep.subr.mxu0 %v3628
    %3722 = vmatpush2.msra.mxu0 %v3627
    %3723 = vmatprep.mubr.f32.mxu0 %v3588
    %3724 = vmatmul.mubr.f32.gmra.mxu0 %v3587
    %v3725 = vpop.f32.mrf.mxu0
    %v3726 = vadd.f32 0.0, %v3725
    %v3727 = vpop.f32.mrf.mxu0
    %v3728 = vadd.f32 0.0, %v3727
    %3729 = vmatprep.mubr.f32.mxu0 %v3590
    %3730 = vmatmul.mubr.f32.gmra.mxu0 %v3589
    %v3731 = vpop.f32.mrf.mxu0
    %v3732 = vadd.f32 0.0, %v3731
    %v3733 = vpop.f32.mrf.mxu0
    %v3734 = vadd.f32 0.0, %v3733
    %3735 = vmatprep.mubr.f32.mxu0 %v3592
    %3736 = vmatmul.mubr.f32.gmra.mxu0 %v3591
    %v3737 = vpop.f32.mrf.mxu0
    %v3738 = vadd.f32 0.0, %v3737
    %v3739 = vpop.f32.mrf.mxu0
    %v3740 = vadd.f32 0.0, %v3739
    %3741 = vmatprep.mubr.f32.mxu0 %v3594
    %3742 = vmatmul.mubr.f32.gmra.mxu0 %v3593
    %v3743 = vpop.f32.mrf.mxu0
    %v3744 = vadd.f32 0.0, %v3743
    %v3745 = vpop.f32.mrf.mxu0
    %v3746 = vadd.f32 0.0, %v3745
    %3747 = vdwg.mxu0
    %v3748 = vadd.f32 %v3726, %v3732
    %v3749 = vadd.f32 %v3748, %v3738
    %v3750 = vadd.f32 %v3749, %v3744
    %v3751 = vrot.slane %v3750, 4
    %v3752 = vadd.f32 %v3750, %v3751
    %v3753 = vrot.slane %v3752, 2
    %v3754 = vadd.f32 %v3752, %v3753
    %v3755 = vrot.slane %v3754, 1
    %v3756 = vadd.f32 %v3754, %v3755
    %v3757 = vld [vmem:[%s5] sm:$0xff]
    %v3758 = vld [vmem:[%s5 + $0x8] sm:$0xff]
    %v3759 = vld [vmem:[%s5 + $0x10] sm:$0xff]
    %v3760 = vld [vmem:[%s5 + $0x18] sm:$0xff]
    %v3761 = vld [vmem:[%s5 + $0x20] sm:$0xff]
    %v3762 = vld [vmem:[%s5 + $0x28] sm:$0xff]
    %v3763 = vld [vmem:[%s5 + $0x30] sm:$0xff]
    %v3764 = vld [vmem:[%s5 + $0x38] sm:$0xff]
    %v3765 = vld [vmem:[%s5 + $0x40] sm:$0xff]
    %v3766 = vld [vmem:[%s5 + $0x48] sm:$0xff]
    %v3767 = vld [vmem:[%s5 + $0x50] sm:$0xff]
    %v3768 = vld [vmem:[%s5 + $0x58] sm:$0xff]
    %v3769 = vld [vmem:[%s5 + $0x60] sm:$0xff]
    %v3770 = vld [vmem:[%s5 + $0x68] sm:$0xff]
    %v3771 = vld [vmem:[%s5 + $0x70] sm:$0xff]
    %v3772 = vld [vmem:[%s5 + $0x78] sm:$0xff]
    %3773 = vmatprep.subr.mxu0 0.0
    %3774 = vmatpush1.msra.mxu0 %v3772
    %3775 = vmatprep.subr.mxu0 0.0
    %3776 = vmatpush1.msra.mxu0 %v3771
    %3777 = vmatprep.subr.mxu0 0.0
    %3778 = vmatpush1.msra.mxu0 %v3770
    %3779 = vmatprep.subr.mxu0 0.0
    %3780 = vmatpush1.msra.mxu0 %v3769
    %3781 = vmatprep.subr.mxu0 0.0
    %3782 = vmatpush1.msra.mxu0 %v3768
    %3783 = vmatprep.subr.mxu0 0.0
    %3784 = vmatpush1.msra.mxu0 %v3767
    %3785 = vmatprep.subr.mxu0 0.0
    %3786 = vmatpush1.msra.mxu0 %v3766
    %3787 = vmatprep.subr.mxu0 0.0
    %3788 = vmatpush1.msra.mxu0 %v3765
    %3789 = vmatprep.subr.mxu0 0.0
    %3790 = vmatpush1.msra.mxu0 %v3764
    %3791 = vmatprep.subr.mxu0 0.0
    %3792 = vmatpush1.msra.mxu0 %v3763
    %3793 = vmatprep.subr.mxu0 0.0
    %3794 = vmatpush1.msra.mxu0 %v3762
    %3795 = vmatprep.subr.mxu0 0.0
    %3796 = vmatpush1.msra.mxu0 %v3761
    %3797 = vmatprep.subr.mxu0 0.0
    %3798 = vmatpush1.msra.mxu0 %v3760
    %3799 = vmatprep.subr.mxu0 0.0
    %3800 = vmatpush1.msra.mxu0 %v3759
    %3801 = vmatprep.subr.mxu0 0.0
    %3802 = vmatpush1.msra.mxu0 %v3758
    %3803 = vmatprep.subr.mxu0 0.0
    %3804 = vmatpush1.msra.mxu0 %v3757
    %3805 = vmatprep.subr.mxu0 0.0
    %3806 = vmatpush2.msra.mxu0 0.0
    %3807 = vmatprep.subr.mxu0 0.0
    %3808 = vmatpush2.msra.mxu0 0.0
    %3809 = vmatprep.subr.mxu0 0.0
    %3810 = vmatpush2.msra.mxu0 0.0
    %3811 = vmatprep.subr.mxu0 0.0
    %3812 = vmatpush2.msra.mxu0 0.0
    %3813 = vmatprep.subr.mxu0 0.0
    %3814 = vmatpush2.msra.mxu0 0.0
    %3815 = vmatprep.subr.mxu0 0.0
    %3816 = vmatpush2.msra.mxu0 0.0
    %3817 = vmatprep.subr.mxu0 0.0
    %3818 = vmatpush2.msra.mxu0 0.0
    %3819 = vmatprep.subr.mxu0 0.0
    %3820 = vmatpush2.msra.mxu0 0.0
    %3821 = vmatprep.subr.mxu0 0.0
    %3822 = vmatpush2.msra.mxu0 0.0
    %3823 = vmatprep.subr.mxu0 0.0
    %3824 = vmatpush2.msra.mxu0 0.0
    %3825 = vmatprep.subr.mxu0 0.0
    %3826 = vmatpush2.msra.mxu0 0.0
    %3827 = vmatprep.subr.mxu0 0.0
    %3828 = vmatpush2.msra.mxu0 0.0
    %3829 = vmatprep.subr.mxu0 0.0
    %3830 = vmatpush2.msra.mxu0 0.0
    %3831 = vmatprep.subr.mxu0 0.0
    %3832 = vmatpush2.msra.mxu0 0.0
    %3833 = vmatprep.subr.mxu0 0.0
    %3834 = vmatpush2.msra.mxu0 0.0
    %3835 = vmatprep.subr.mxu0 0.0
    %3836 = vmatpush2.msra.mxu0 0.0
    %3837 = vmatprep.mubr.f32.mxu0 0.0
    %3838 = vmatmul.mubr.f32.gmra.mxu0 %v3756
    %v3839 = vpop.f32.mrf.mxu0
    %v3840 = vadd.f32 0.0, %v3839
    %v3841 = vpop.f32.mrf.mxu0
    %3842 = vdwg.mxu0
    %v3843 = vlaneseq
    %v3844 = vshrl.u32 %v3843, 7
    %v3845 = vsub.s32 0, %v3844
    %v3846 = vrot.slane %v3840, %v3845
    %v3847 = vsub.f32 %v3726, %v3846
    %v3848 = vsub.f32 %v3732, %v3846
    %v3849 = vsub.f32 %v3738, %v3846
    %v3850 = vsub.f32 %v3744, %v3846
    %v3851 = vmul.f32 %v3847, %v3847
    %v3852 = vmul.f32 %v3848, %v3848
    %v3853 = vmul.f32 %v3849, %v3849
    %v3854 = vmul.f32 %v3850, %v3850
    %v3855 = vadd.f32 %v3851, %v3852
    %v3856 = vadd.f32 %v3855, %v3853
    %v3857 = vadd.f32 %v3856, %v3854
    %v3858 = vrot.slane %v3857, 4
    %v3859 = vadd.f32 %v3857, %v3858
    %v3860 = vrot.slane %v3859, 2
    %v3861 = vadd.f32 %v3859, %v3860
    %v3862 = vrot.slane %v3861, 1
    %v3863 = vadd.f32 %v3861, %v3862
    %3864 = vmatprep.subr.mxu0 0.0
    %3865 = vmatpush1.msra.mxu0 %v3772
    %3866 = vmatprep.subr.mxu0 0.0
    %3867 = vmatpush1.msra.mxu0 %v3771
    %3868 = vmatprep.subr.mxu0 0.0
    %3869 = vmatpush1.msra.mxu0 %v3770
    %3870 = vmatprep.subr.mxu0 0.0
    %3871 = vmatpush1.msra.mxu0 %v3769
    %3872 = vmatprep.subr.mxu0 0.0
    %3873 = vmatpush1.msra.mxu0 %v3768
    %3874 = vmatprep.subr.mxu0 0.0
    %3875 = vmatpush1.msra.mxu0 %v3767
    %3876 = vmatprep.subr.mxu0 0.0
    %3877 = vmatpush1.msra.mxu0 %v3766
    %3878 = vmatprep.subr.mxu0 0.0
    %3879 = vmatpush1.msra.mxu0 %v3765
    %3880 = vmatprep.subr.mxu0 0.0
    %3881 = vmatpush1.msra.mxu0 %v3764
    %3882 = vmatprep.subr.mxu0 0.0
    %3883 = vmatpush1.msra.mxu0 %v3763
    %3884 = vmatprep.subr.mxu0 0.0
    %3885 = vmatpush1.msra.mxu0 %v3762
    %3886 = vmatprep.subr.mxu0 0.0
    %3887 = vmatpush1.msra.mxu0 %v3761
    %3888 = vmatprep.subr.mxu0 0.0
    %3889 = vmatpush1.msra.mxu0 %v3760
    %3890 = vmatprep.subr.mxu0 0.0
    %3891 = vmatpush1.msra.mxu0 %v3759
    %3892 = vmatprep.subr.mxu0 0.0
    %3893 = vmatpush1.msra.mxu0 %v3758
    %3894 = vmatprep.subr.mxu0 0.0
    %3895 = vmatpush1.msra.mxu0 %v3757
    %3896 = vmatprep.subr.mxu0 0.0
    %3897 = vmatpush2.msra.mxu0 0.0
    %3898 = vmatprep.subr.mxu0 0.0
    %3899 = vmatpush2.msra.mxu0 0.0
    %3900 = vmatprep.subr.mxu0 0.0
    %3901 = vmatpush2.msra.mxu0 0.0
    %3902 = vmatprep.subr.mxu0 0.0
    %3903 = vmatpush2.msra.mxu0 0.0
    %3904 = vmatprep.subr.mxu0 0.0
    %3905 = vmatpush2.msra.mxu0 0.0
    %3906 = vmatprep.subr.mxu0 0.0
    %3907 = vmatpush2.msra.mxu0 0.0
    %3908 = vmatprep.subr.mxu0 0.0
    %3909 = vmatpush2.msra.mxu0 0.0
    %3910 = vmatprep.subr.mxu0 0.0
    %3911 = vmatpush2.msra.mxu0 0.0
    %3912 = vmatprep.subr.mxu0 0.0
    %3913 = vmatpush2.msra.mxu0 0.0
    %3914 = vmatprep.subr.mxu0 0.0
    %3915 = vmatpush2.msra.mxu0 0.0
    %3916 = vmatprep.subr.mxu0 0.0
    %3917 = vmatpush2.msra.mxu0 0.0
    %3918 = vmatprep.subr.mxu0 0.0
    %3919 = vmatpush2.msra.mxu0 0.0
    %3920 = vmatprep.subr.mxu0 0.0
    %3921 = vmatpush2.msra.mxu0 0.0
    %3922 = vmatprep.subr.mxu0 0.0
    %3923 = vmatpush2.msra.mxu0 0.0
    %3924 = vmatprep.subr.mxu0 0.0
    %3925 = vmatpush2.msra.mxu0 0.0
    %3926 = vmatprep.subr.mxu0 0.0
    %3927 = vmatpush2.msra.mxu0 0.0
    %3928 = vmatprep.mubr.f32.mxu0 0.0
    %3929 = vmatmul.mubr.f32.gmra.mxu0 %v3863
    %v3930 = vpop.f32.mrf.mxu0
    %v3931 = vadd.f32 1e-05, %v3930
    %v3932 = vpop.f32.mrf.mxu0
    %3933 = vdwg.mxu0
    %v3934 = vrsqrt.pop %v3931
    %v3935 = vlaneseq
    %v3936 = vshrl.u32 %v3935, 7
    %v3937 = vsub.s32 0, %v3936
    %v3938 = vrot.slane %v3934, %v3937
    %v3939 = vmul.f32 %v3847, %v3938
    %v3940 = vmul.f32 %v3848, %v3938
    %v3941 = vmul.f32 %v3849, %v3938
    %v3942 = vmul.f32 %v3850, %v3938
    %v3943 = vmax.f32 %v3939, 0.0
    %v3944 = vmax.f32 %v3940, 0.0
    %v3945 = vmax.f32 %v3941, 0.0
    %v3946 = vmax.f32 %v3942, 0.0
    %v3947 = vadd.f32 %v3728, %v3734
    %v3948 = vadd.f32 %v3947, %v3740
    %v3949 = vadd.f32 %v3948, %v3746
    %v3950 = vrot.slane %v3949, 4
    %v3951 = vadd.f32 %v3949, %v3950
    %v3952 = vrot.slane %v3951, 2
    %v3953 = vadd.f32 %v3951, %v3952
    %v3954 = vrot.slane %v3953, 1
    %v3955 = vadd.f32 %v3953, %v3954
    %3956 = vmatprep.subr.mxu0 0.0
    %3957 = vmatpush1.msra.mxu0 %v3772
    %3958 = vmatprep.subr.mxu0 0.0
    %3959 = vmatpush1.msra.mxu0 %v3771
    %3960 = vmatprep.subr.mxu0 0.0
    %3961 = vmatpush1.msra.mxu0 %v3770
    %3962 = vmatprep.subr.mxu0 0.0
    %3963 = vmatpush1.msra.mxu0 %v3769
    %3964 = vmatprep.subr.mxu0 0.0
    %3965 = vmatpush1.msra.mxu0 %v3768
    %3966 = vmatprep.subr.mxu0 0.0
    %3967 = vmatpush1.msra.mxu0 %v3767
    %3968 = vmatprep.subr.mxu0 0.0
    %3969 = vmatpush1.msra.mxu0 %v3766
    %3970 = vmatprep.subr.mxu0 0.0
    %3971 = vmatpush1.msra.mxu0 %v3765
    %3972 = vmatprep.subr.mxu0 0.0
    %3973 = vmatpush1.msra.mxu0 %v3764
    %3974 = vmatprep.subr.mxu0 0.0
    %3975 = vmatpush1.msra.mxu0 %v3763
    %3976 = vmatprep.subr.mxu0 0.0
    %3977 = vmatpush1.msra.mxu0 %v3762
    %3978 = vmatprep.subr.mxu0 0.0
    %3979 = vmatpush1.msra.mxu0 %v3761
    %3980 = vmatprep.subr.mxu0 0.0
    %3981 = vmatpush1.msra.mxu0 %v3760
    %3982 = vmatprep.subr.mxu0 0.0
    %3983 = vmatpush1.msra.mxu0 %v3759
    %3984 = vmatprep.subr.mxu0 0.0
    %3985 = vmatpush1.msra.mxu0 %v3758
    %3986 = vmatprep.subr.mxu0 0.0
    %3987 = vmatpush1.msra.mxu0 %v3757
    %3988 = vmatprep.subr.mxu0 0.0
    %3989 = vmatpush2.msra.mxu0 0.0
    %3990 = vmatprep.subr.mxu0 0.0
    %3991 = vmatpush2.msra.mxu0 0.0
    %3992 = vmatprep.subr.mxu0 0.0
    %3993 = vmatpush2.msra.mxu0 0.0
    %3994 = vmatprep.subr.mxu0 0.0
    %3995 = vmatpush2.msra.mxu0 0.0
    %3996 = vmatprep.subr.mxu0 0.0
    %3997 = vmatpush2.msra.mxu0 0.0
    %3998 = vmatprep.subr.mxu0 0.0
    %3999 = vmatpush2.msra.mxu0 0.0
    %4000 = vmatprep.subr.mxu0 0.0
    %4001 = vmatpush2.msra.mxu0 0.0
    %4002 = vmatprep.subr.mxu0 0.0
    %4003 = vmatpush2.msra.mxu0 0.0
    %4004 = vmatprep.subr.mxu0 0.0
    %4005 = vmatpush2.msra.mxu0 0.0
    %4006 = vmatprep.subr.mxu0 0.0
    %4007 = vmatpush2.msra.mxu0 0.0
    %4008 = vmatprep.subr.mxu0 0.0
    %4009 = vmatpush2.msra.mxu0 0.0
    %4010 = vmatprep.subr.mxu0 0.0
    %4011 = vmatpush2.msra.mxu0 0.0
    %4012 = vmatprep.subr.mxu0 0.0
    %4013 = vmatpush2.msra.mxu0 0.0
    %4014 = vmatprep.subr.mxu0 0.0
    %4015 = vmatpush2.msra.mxu0 0.0
    %4016 = vmatprep.subr.mxu0 0.0
    %4017 = vmatpush2.msra.mxu0 0.0
    %4018 = vmatprep.subr.mxu0 0.0
    %4019 = vmatpush2.msra.mxu0 0.0
    %4020 = vmatprep.mubr.f32.mxu0 0.0
    %4021 = vmatmul.mubr.f32.gmra.mxu0 %v3955
    %v4022 = vpop.f32.mrf.mxu0
    %v4023 = vadd.f32 0.0, %v4022
    %v4024 = vpop.f32.mrf.mxu0
    %4025 = vdwg.mxu0
    %v4026 = vlaneseq
    %v4027 = vshrl.u32 %v4026, 7
    %v4028 = vsub.s32 0, %v4027
    %v4029 = vrot.slane %v4023, %v4028
    %v4030 = vsub.f32 %v3728, %v4029
    %v4031 = vsub.f32 %v3734, %v4029
    %v4032 = vsub.f32 %v3740, %v4029
    %v4033 = vsub.f32 %v3746, %v4029
    %v4034 = vmul.f32 %v4030, %v4030
    %v4035 = vmul.f32 %v4031, %v4031
    %v4036 = vmul.f32 %v4032, %v4032
    %v4037 = vmul.f32 %v4033, %v4033
    %v4038 = vadd.f32 %v4034, %v4035
    %v4039 = vadd.f32 %v4038, %v4036
    %v4040 = vadd.f32 %v4039, %v4037
    %v4041 = vrot.slane %v4040, 4
    %v4042 = vadd.f32 %v4040, %v4041
    %v4043 = vrot.slane %v4042, 2
    %v4044 = vadd.f32 %v4042, %v4043
    %v4045 = vrot.slane %v4044, 1
    %v4046 = vadd.f32 %v4044, %v4045
    %4047 = vmatprep.subr.mxu0 0.0
    %4048 = vmatpush1.msra.mxu0 %v3772
    %4049 = vmatprep.subr.mxu0 0.0
    %4050 = vmatpush1.msra.mxu0 %v3771
    %4051 = vmatprep.subr.mxu0 0.0
    %4052 = vmatpush1.msra.mxu0 %v3770
    %4053 = vmatprep.subr.mxu0 0.0
    %4054 = vmatpush1.msra.mxu0 %v3769
    %4055 = vmatprep.subr.mxu0 0.0
    %4056 = vmatpush1.msra.mxu0 %v3768
    %4057 = vmatprep.subr.mxu0 0.0
    %4058 = vmatpush1.msra.mxu0 %v3767
    %4059 = vmatprep.subr.mxu0 0.0
    %4060 = vmatpush1.msra.mxu0 %v3766
    %4061 = vmatprep.subr.mxu0 0.0
    %4062 = vmatpush1.msra.mxu0 %v3765
    %4063 = vmatprep.subr.mxu0 0.0
    %4064 = vmatpush1.msra.mxu0 %v3764
    %4065 = vmatprep.subr.mxu0 0.0
    %4066 = vmatpush1.msra.mxu0 %v3763
    %4067 = vmatprep.subr.mxu0 0.0
    %4068 = vmatpush1.msra.mxu0 %v3762
    %4069 = vmatprep.subr.mxu0 0.0
    %4070 = vmatpush1.msra.mxu0 %v3761
    %4071 = vmatprep.subr.mxu0 0.0
    %4072 = vmatpush1.msra.mxu0 %v3760
    %4073 = vmatprep.subr.mxu0 0.0
    %4074 = vmatpush1.msra.mxu0 %v3759
    %4075 = vmatprep.subr.mxu0 0.0
    %4076 = vmatpush1.msra.mxu0 %v3758
    %4077 = vmatprep.subr.mxu0 0.0
    %4078 = vmatpush1.msra.mxu0 %v3757
    %4079 = vmatprep.subr.mxu0 0.0
    %4080 = vmatpush2.msra.mxu0 0.0
    %4081 = vmatprep.subr.mxu0 0.0
    %4082 = vmatpush2.msra.mxu0 0.0
    %4083 = vmatprep.subr.mxu0 0.0
    %4084 = vmatpush2.msra.mxu0 0.0
    %4085 = vmatprep.subr.mxu0 0.0
    %4086 = vmatpush2.msra.mxu0 0.0
    %4087 = vmatprep.subr.mxu0 0.0
    %4088 = vmatpush2.msra.mxu0 0.0
    %4089 = vmatprep.subr.mxu0 0.0
    %4090 = vmatpush2.msra.mxu0 0.0
    %4091 = vmatprep.subr.mxu0 0.0
    %4092 = vmatpush2.msra.mxu0 0.0
    %4093 = vmatprep.subr.mxu0 0.0
    %4094 = vmatpush2.msra.mxu0 0.0
    %4095 = vmatprep.subr.mxu0 0.0
    %4096 = vmatpush2.msra.mxu0 0.0
    %4097 = vmatprep.subr.mxu0 0.0
    %4098 = vmatpush2.msra.mxu0 0.0
    %4099 = vmatprep.subr.mxu0 0.0
    %4100 = vmatpush2.msra.mxu0 0.0
    %4101 = vmatprep.subr.mxu0 0.0
    %4102 = vmatpush2.msra.mxu0 0.0
    %4103 = vmatprep.subr.mxu0 0.0
    %4104 = vmatpush2.msra.mxu0 0.0
    %4105 = vmatprep.subr.mxu0 0.0
    %4106 = vmatpush2.msra.mxu0 0.0
    %4107 = vmatprep.subr.mxu0 0.0
    %4108 = vmatpush2.msra.mxu0 0.0
    %4109 = vmatprep.subr.mxu0 0.0
    %4110 = vmatpush2.msra.mxu0 0.0
    %4111 = vmatprep.mubr.f32.mxu0 0.0
    %4112 = vmatmul.mubr.f32.gmra.mxu0 %v4046
    %v4113 = vpop.f32.mrf.mxu0
    %v4114 = vadd.f32 1e-05, %v4113
    %v4115 = vpop.f32.mrf.mxu0
    %4116 = vdwg.mxu0
    %v4117 = vrsqrt.pop %v4114
    %v4118 = vlaneseq
    %v4119 = vshrl.u32 %v4118, 7
    %v4120 = vsub.s32 0, %v4119
    %v4121 = vrot.slane %v4117, %v4120
    %v4122 = vmul.f32 %v4030, %v4121
    %v4123 = vmul.f32 %v4031, %v4121
    %v4124 = vmul.f32 %v4032, %v4121
    %v4125 = vmul.f32 %v4033, %v4121
    %v4126 = vmax.f32 %v4122, 0.0
    %v4127 = vmax.f32 %v4123, 0.0
    %v4128 = vmax.f32 %v4124, 0.0
    %v4129 = vmax.f32 %v4125, 0.0
    %4130 = vst [vmem:[#allocation3 + $0x2] sm:$0xff] %v3943
    %4131 = vst [vmem:[#allocation3 + $0xa] sm:$0xff] %v3944
    %4132 = vst [vmem:[#allocation3 + $0x1a] sm:$0xff] %v3945
    %4133 = vst [vmem:[#allocation3 + $0x22] sm:$0xff] %v3946
    %v4134 = vld [vmem:[#allocation3] sm:$0xff]
    %v4135 = vld [vmem:[#allocation3 + $0x8] sm:$0xff]
    %v4136 = vld [vmem:[#allocation3 + $0x10] sm:$0xf]
    %v4137 = vld [vmem:[#allocation3 + $0x18] sm:$0xff]
    %v4138 = vld [vmem:[#allocation3 + $0x20] sm:$0xff]
    %v4139 = vld [vmem:[#allocation3 + $0x28] sm:$0xf]
    %v4146 = vcombine.high %v4134, %v4134
    %v4147 = vcombine.high %v4135, %v4135
    %v4148 = vcombine.high %v4137, %v4137
    %v4149 = vcombine.high %v4138, %v4138
    %v4150 = vcombine.low %v4134, %v4146
    %v4151 = vcombine.low %v4135, %v4147
    %v4152 = vcombine.low %v4136, %v4137
    %v4153 = vcombine.low %v4148, %v4138
    %v4154 = vcombine.low %v4149, %v4139
    %4160 = vrot.lane.b32.xlu0 %v4150, 8
    %v4161 = vpop.permute.xlu0 %4160
    %4162 = vrot.lane.b32.xlu0 %v4151, 8
    %v4163 = vpop.permute.xlu0 %4162
    %4164 = vrot.lane.b32.xlu0 %v4152, 8
    %v4165 = vpop.permute.xlu0 %4164
    %4166 = vrot.lane.b32.xlu0 %v4153, 8
    %v4167 = vpop.permute.xlu0 %4166
    %4168 = vrot.lane.b32.xlu0 %v4154, 8
    %v4169 = vpop.permute.xlu0 %4168
    %v4175 = vcombine.high %v4161, %v4161
    %v4176 = vcombine.high %v4163, %v4163
    %v4177 = vcombine.high %v4165, %v4165
    %v4178 = vcombine.high %v4167, %v4167
    %v4179 = vcombine.high %v4169, %v4169
    %v4185 = vld [vmem:[%s2 + $0x2] sm:$0x1]
    %v4186 = vlaneseq
    %v4187 = vshrl.u32 %v4186, 7
    %v4188 = vsub.s32 0, %v4187
    %v4189 = vrot.slane %v4185, %v4188
    %v4191 = vcombine.high %v4189, %v4189
    %v4193 = vmul.f32 %v4161, %v4189
    %v4194 = vmul.f32 %v4175, %v4191
    %v4195 = vmul.f32 %v4163, %v4189
    %v4196 = vmul.f32 %v4176, %v4191
    %v4197 = vmul.f32 %v4165, %v4189
    %v4198 = vmul.f32 %v4177, %v4189
    %v4199 = vmul.f32 %v4167, %v4191
    %v4200 = vmul.f32 %v4178, %v4189
    %v4201 = vmul.f32 %v4169, %v4191
    %v4202 = vmul.f32 %v4179, %v4189
    %v4203 = vld [vmem:[%s7] sm:$0x1]
    %v4204 = vlaneseq
    %v4205 = vshrl.u32 %v4204, 7
    %v4206 = vsub.s32 0, %v4205
    %v4207 = vrot.slane %v4203, %v4206
    %v4209 = vcombine.high %v4207, %v4207
    %vm4210 = vcmask 1040384
    %vm4211 = vcmask 1044484
    %vm4212 = vmor %vm4210, %vm4211
    %v4213 = vrot.slane %v4207, 7
    %v4214 = vrot.slane %v4213, 4
    %v4215 = vrot.slane %v4209, 7
    %v4216 = vsel %vm4212, %v4214, %v4215
    %v4217 = vrot.slane %v4215, 4
    %v4218 = vsel %vm4212, %v4217, %v4213
    %v4223 = vmul.f32 %v4193, %v4213
    %v4224 = vmul.f32 %v4194, %v4216
    %v4225 = vmul.f32 %v4195, %v4218
    %v4226 = vmul.f32 %v4196, %v4216
    %v4227 = vmul.f32 %v4197, %v4217
    %v4228 = vmul.f32 %v4198, %v4213
    %v4229 = vmul.f32 %v4199, %v4216
    %v4230 = vmul.f32 %v4200, %v4218
    %v4231 = vmul.f32 %v4201, %v4216
    %v4232 = vmul.f32 %v4202, %v4217
    %v4233 = vld [vmem:[%s7 + $0x3] sm:$0x1]
    %v4234 = vlaneseq
    %v4235 = vshrl.u32 %v4234, 7
    %v4236 = vsub.s32 0, %v4235
    %v4237 = vrot.slane %v4233, %v4236
    %v4239 = vcombine.high %v4237, %v4237
    %vm4240 = vcmask 1045508
    %vm4241 = vmor %vm1748, %vm4240
    %v4242 = vrot.slane %v4237, 6
    %v4243 = vrot.slane %v4242, 4
    %v4244 = vrot.slane %v4239, 6
    %v4245 = vsel %vm4241, %v4243, %v4244
    %v4246 = vrot.slane %v4244, 4
    %v4247 = vsel %vm4241, %v4246, %v4242
    %v4252 = vmul.f32 %v4193, %v4242
    %v4253 = vmul.f32 %v4194, %v4245
    %v4254 = vmul.f32 %v4195, %v4247
    %v4255 = vmul.f32 %v4196, %v4245
    %v4256 = vmul.f32 %v4197, %v4246
    %v4257 = vmul.f32 %v4198, %v4242
    %v4258 = vmul.f32 %v4199, %v4245
    %v4259 = vmul.f32 %v4200, %v4247
    %v4260 = vmul.f32 %v4201, %v4245
    %v4261 = vmul.f32 %v4202, %v4246
    %vm4272 = vcmask 1046532
    %vm4273 = vmor %vm530, %vm4272
    %v4274 = vrot.slane %v4252, 5
    %v4275 = vrot.slane %v4274, 4
    %v4276 = vrot.slane %v4253, 5
    %v4277 = vsel %vm4273, %v4275, %v4276
    %v4278 = vrot.slane %v4276, 4
    %v4279 = vrot.slane %v4254, 5
    %v4280 = vsel %vm4273, %v4278, %v4279
    %v4281 = vrot.slane %v4279, 4
    %v4282 = vrot.slane %v4255, 5
    %v4283 = vsel %vm4273, %v4281, %v4282
    %v4284 = vrot.slane %v4282, 4
    %v4285 = vrot.slane %v4256, 5
    %v4286 = vsel %vm4273, %v4284, %v4285
    %v4287 = vrot.slane %v4285, 4
    %v4288 = vrot.slane %v4257, 5
    %v4289 = vrot.slane %v4288, 4
    %v4290 = vrot.slane %v4258, 5
    %v4291 = vsel %vm4273, %v4289, %v4290
    %v4292 = vrot.slane %v4290, 4
    %v4293 = vrot.slane %v4259, 5
    %v4294 = vsel %vm4273, %v4292, %v4293
    %v4295 = vrot.slane %v4293, 4
    %v4296 = vrot.slane %v4260, 5
    %v4297 = vsel %vm4273, %v4295, %v4296
    %v4298 = vrot.slane %v4296, 4
    %v4299 = vrot.slane %v4261, 5
    %v4300 = vsel %vm4273, %v4298, %v4299
    %v4301 = vrot.slane %v4299, 4
    %v4312 = vadd.f32 %v4223, %v4277
    %v4313 = vadd.f32 %v4224, %v4280
    %v4314 = vadd.f32 %v4225, %v4283
    %v4315 = vadd.f32 %v4226, %v4286
    %v4316 = vadd.f32 %v4227, %v4287
    %v4317 = vadd.f32 %v4228, %v4291
    %v4318 = vadd.f32 %v4229, %v4294
    %v4319 = vadd.f32 %v4230, %v4297
    %v4320 = vadd.f32 %v4231, %v4300
    %v4321 = vadd.f32 %v4232, %v4301
    %v4322 = vld [vmem:[%s7 + $0x6] sm:$0x1]
    %v4323 = vlaneseq
    %v4324 = vshrl.u32 %v4323, 7
    %v4325 = vsub.s32 0, %v4324
    %v4326 = vrot.slane %v4322, %v4325
    %v4328 = vcombine.high %v4326, %v4326
    %v4329 = vrot.slane %v4326, 5
    %v4330 = vrot.slane %v4329, 4
    %v4331 = vrot.slane %v4328, 5
    %v4332 = vsel %vm4273, %v4330, %v4331
    %v4333 = vrot.slane %v4331, 4
    %v4334 = vsel %vm4273, %v4333, %v4329
    %v4339 = vmul.f32 %v4193, %v4329
    %v4340 = vmul.f32 %v4194, %v4332
    %v4341 = vmul.f32 %v4195, %v4334
    %v4342 = vmul.f32 %v4196, %v4332
    %v4343 = vmul.f32 %v4197, %v4333
    %v4344 = vmul.f32 %v4198, %v4329
    %v4345 = vmul.f32 %v4199, %v4332
    %v4346 = vmul.f32 %v4200, %v4334
    %v4347 = vmul.f32 %v4201, %v4332
    %v4348 = vmul.f32 %v4202, %v4333
    %v4359 = vrot.slane %v4339, 6
    %v4360 = vrot.slane %v4359, 4
    %v4361 = vrot.slane %v4340, 6
    %v4362 = vsel %vm4241, %v4360, %v4361
    %v4363 = vrot.slane %v4361, 4
    %v4364 = vrot.slane %v4341, 6
    %v4365 = vsel %vm4241, %v4363, %v4364
    %v4366 = vrot.slane %v4364, 4
    %v4367 = vrot.slane %v4342, 6
    %v4368 = vsel %vm4241, %v4366, %v4367
    %v4369 = vrot.slane %v4367, 4
    %v4370 = vrot.slane %v4343, 6
    %v4371 = vsel %vm4241, %v4369, %v4370
    %v4372 = vrot.slane %v4370, 4
    %v4373 = vrot.slane %v4344, 6
    %v4374 = vrot.slane %v4373, 4
    %v4375 = vrot.slane %v4345, 6
    %v4376 = vsel %vm4241, %v4374, %v4375
    %v4377 = vrot.slane %v4375, 4
    %v4378 = vrot.slane %v4346, 6
    %v4379 = vsel %vm4241, %v4377, %v4378
    %v4380 = vrot.slane %v4378, 4
    %v4381 = vrot.slane %v4347, 6
    %v4382 = vsel %vm4241, %v4380, %v4381
    %v4383 = vrot.slane %v4381, 4
    %v4384 = vrot.slane %v4348, 6
    %v4385 = vsel %vm4241, %v4383, %v4384
    %v4386 = vrot.slane %v4384, 4
    %v4397 = vadd.f32 %v4312, %v4362
    %v4398 = vadd.f32 %v4313, %v4365
    %v4399 = vadd.f32 %v4314, %v4368
    %v4400 = vadd.f32 %v4315, %v4371
    %v4401 = vadd.f32 %v4316, %v4372
    %v4402 = vadd.f32 %v4317, %v4376
    %v4403 = vadd.f32 %v4318, %v4379
    %v4404 = vadd.f32 %v4319, %v4382
    %v4405 = vadd.f32 %v4320, %v4385
    %v4406 = vadd.f32 %v4321, %v4386
    %v4407 = vld [vmem:[%s7 + $0x1] sm:$0x1]
    %v4408 = vlaneseq
    %v4409 = vshrl.u32 %v4408, 7
    %v4410 = vsub.s32 0, %v4409
    %v4411 = vrot.slane %v4407, %v4410
    %v4412 = vmul.f32 %v4134, %v4411
    %v4413 = vmul.f32 %v4135, %v4411
    %v4414 = vmul.f32 %v4136, %v4411
    %v4415 = vmul.f32 %v4137, %v4411
    %v4416 = vmul.f32 %v4138, %v4411
    %v4417 = vmul.f32 %v4139, %v4411
    %v4422 = vcombine.high %v4412, %v4412
    %v4423 = vcombine.high %v4413, %v4413
    %v4424 = vcombine.high %v4415, %v4415
    %v4425 = vcombine.high %v4416, %v4416
    %v4430 = vadd.f32 %v4397, %v4412
    %v4431 = vadd.f32 %v4398, %v4422
    %v4432 = vadd.f32 %v4399, %v4413
    %v4433 = vadd.f32 %v4400, %v4423
    %v4434 = vadd.f32 %v4401, %v4414
    %v4435 = vadd.f32 %v4402, %v4415
    %v4436 = vadd.f32 %v4403, %v4424
    %v4437 = vadd.f32 %v4404, %v4416
    %v4438 = vadd.f32 %v4405, %v4425
    %v4439 = vadd.f32 %v4406, %v4417
    %v4440 = vld [vmem:[%s7 + $0x4] sm:$0x1]
    %v4441 = vlaneseq
    %v4442 = vshrl.u32 %v4441, 7
    %v4443 = vsub.s32 0, %v4442
    %v4444 = vrot.slane %v4440, %v4443
    %v4445 = vmul.f32 %v4134, %v4444
    %v4446 = vmul.f32 %v4135, %v4444
    %v4447 = vmul.f32 %v4136, %v4444
    %v4448 = vmul.f32 %v4137, %v4444
    %v4449 = vmul.f32 %v4138, %v4444
    %v4450 = vmul.f32 %v4139, %v4444
    %v4457 = vcombine.high %v4445, %v4445
    %v4458 = vcombine.high %v4446, %v4446
    %v4459 = vcombine.high %v4448, %v4448
    %v4460 = vcombine.high %v4449, %v4449
    %v4461 = vrot.slane %v4445, 5
    %v4462 = vrot.slane %v4461, 4
    %v4463 = vrot.slane %v4457, 5
    %v4464 = vsel %vm4273, %v4462, %v4463
    %v4465 = vrot.slane %v4463, 4
    %v4466 = vrot.slane %v4446, 5
    %v4467 = vsel %vm4273, %v4465, %v4466
    %v4468 = vrot.slane %v4466, 4
    %v4469 = vrot.slane %v4458, 5
    %v4470 = vsel %vm4273, %v4468, %v4469
    %v4471 = vrot.slane %v4469, 4
    %v4472 = vrot.slane %v4447, 5
    %v4473 = vsel %vm4273, %v4471, %v4472
    %v4474 = vrot.slane %v4472, 4
    %v4475 = vrot.slane %v4448, 5
    %v4476 = vrot.slane %v4475, 4
    %v4477 = vrot.slane %v4459, 5
    %v4478 = vsel %vm4273, %v4476, %v4477
    %v4479 = vrot.slane %v4477, 4
    %v4480 = vrot.slane %v4449, 5
    %v4481 = vsel %vm4273, %v4479, %v4480
    %v4482 = vrot.slane %v4480, 4
    %v4483 = vrot.slane %v4460, 5
    %v4484 = vsel %vm4273, %v4482, %v4483
    %v4485 = vrot.slane %v4483, 4
    %v4486 = vrot.slane %v4450, 5
    %v4487 = vsel %vm4273, %v4485, %v4486
    %v4488 = vrot.slane %v4486, 4
    %v4499 = vadd.f32 %v4430, %v4464
    %v4500 = vadd.f32 %v4431, %v4467
    %v4501 = vadd.f32 %v4432, %v4470
    %v4502 = vadd.f32 %v4433, %v4473
    %v4503 = vadd.f32 %v4434, %v4474
    %v4504 = vadd.f32 %v4435, %v4478
    %v4505 = vadd.f32 %v4436, %v4481
    %v4506 = vadd.f32 %v4437, %v4484
    %v4507 = vadd.f32 %v4438, %v4487
    %v4508 = vadd.f32 %v4439, %v4488
    %v4509 = vld [vmem:[%s7 + $0x7] sm:$0x1]
    %v4510 = vlaneseq
    %v4511 = vshrl.u32 %v4510, 7
    %v4512 = vsub.s32 0, %v4511
    %v4513 = vrot.slane %v4509, %v4512
    %v4514 = vmul.f32 %v4134, %v4513
    %v4515 = vmul.f32 %v4135, %v4513
    %v4516 = vmul.f32 %v4136, %v4513
    %v4517 = vmul.f32 %v4137, %v4513
    %v4518 = vmul.f32 %v4138, %v4513
    %v4519 = vmul.f32 %v4139, %v4513
    %v4526 = vcombine.high %v4514, %v4514
    %v4527 = vcombine.high %v4515, %v4515
    %v4528 = vcombine.high %v4517, %v4517
    %v4529 = vcombine.high %v4518, %v4518
    %v4530 = vrot.slane %v4514, 6
    %v4531 = vrot.slane %v4530, 4
    %v4532 = vrot.slane %v4526, 6
    %v4533 = vsel %vm4241, %v4531, %v4532
    %v4534 = vrot.slane %v4532, 4
    %v4535 = vrot.slane %v4515, 6
    %v4536 = vsel %vm4241, %v4534, %v4535
    %v4537 = vrot.slane %v4535, 4
    %v4538 = vrot.slane %v4527, 6
    %v4539 = vsel %vm4241, %v4537, %v4538
    %v4540 = vrot.slane %v4538, 4
    %v4541 = vrot.slane %v4516, 6
    %v4542 = vsel %vm4241, %v4540, %v4541
    %v4543 = vrot.slane %v4541, 4
    %v4544 = vrot.slane %v4517, 6
    %v4545 = vrot.slane %v4544, 4
    %v4546 = vrot.slane %v4528, 6
    %v4547 = vsel %vm4241, %v4545, %v4546
    %v4548 = vrot.slane %v4546, 4
    %v4549 = vrot.slane %v4518, 6
    %v4550 = vsel %vm4241, %v4548, %v4549
    %v4551 = vrot.slane %v4549, 4
    %v4552 = vrot.slane %v4529, 6
    %v4553 = vsel %vm4241, %v4551, %v4552
    %v4554 = vrot.slane %v4552, 4
    %v4555 = vrot.slane %v4519, 6
    %v4556 = vsel %vm4241, %v4554, %v4555
    %v4557 = vrot.slane %v4555, 4
    %v4568 = vadd.f32 %v4499, %v4533
    %v4569 = vadd.f32 %v4500, %v4536
    %v4570 = vadd.f32 %v4501, %v4539
    %v4571 = vadd.f32 %v4502, %v4542
    %v4572 = vadd.f32 %v4503, %v4543
    %v4573 = vadd.f32 %v4504, %v4547
    %v4574 = vadd.f32 %v4505, %v4550
    %v4575 = vadd.f32 %v4506, %v4553
    %v4576 = vadd.f32 %v4507, %v4556
    %v4577 = vadd.f32 %v4508, %v4557
    %4578 = vrot.lane.b32.xlu0 %v4150, 120
    %v4579 = vpop.permute.xlu0 %4578
    %4580 = vrot.lane.b32.xlu0 %v4151, 120
    %v4581 = vpop.permute.xlu0 %4580
    %4582 = vrot.lane.b32.xlu0 %v4152, 120
    %v4583 = vpop.permute.xlu0 %4582
    %4584 = vrot.lane.b32.xlu0 %v4153, 120
    %v4585 = vpop.permute.xlu0 %4584
    %4586 = vrot.lane.b32.xlu0 %v4154, 120
    %v4587 = vpop.permute.xlu0 %4586
    %v4593 = vcombine.high %v4579, %v4579
    %v4594 = vcombine.high %v4581, %v4581
    %v4595 = vcombine.high %v4583, %v4583
    %v4596 = vcombine.high %v4585, %v4585
    %v4597 = vcombine.high %v4587, %v4587
    %v4603 = vld [vmem:[%s2 + $0x3] sm:$0x1]
    %v4604 = vlaneseq
    %v4605 = vshrl.u32 %v4604, 7
    %v4606 = vsub.s32 0, %v4605
    %v4607 = vrot.slane %v4603, %v4606
    %v4609 = vcombine.high %v4607, %v4607
    %v4611 = vmul.f32 %v4579, %v4607
    %v4612 = vmul.f32 %v4593, %v4609
    %v4613 = vmul.f32 %v4581, %v4607
    %v4614 = vmul.f32 %v4594, %v4609
    %v4615 = vmul.f32 %v4583, %v4607
    %v4616 = vmul.f32 %v4595, %v4607
    %v4617 = vmul.f32 %v4585, %v4609
    %v4618 = vmul.f32 %v4596, %v4607
    %v4619 = vmul.f32 %v4587, %v4609
    %v4620 = vmul.f32 %v4597, %v4607
    %v4621 = vld [vmem:[%s7 + $0x2] sm:$0x1]
    %v4622 = vlaneseq
    %v4623 = vshrl.u32 %v4622, 7
    %v4624 = vsub.s32 0, %v4623
    %v4625 = vrot.slane %v4621, %v4624
    %v4627 = vcombine.high %v4625, %v4625
    %v4628 = vrot.slane %v4625, 7
    %v4629 = vrot.slane %v4628, 4
    %v4630 = vrot.slane %v4627, 7
    %v4631 = vsel %vm4212, %v4629, %v4630
    %v4632 = vrot.slane %v4630, 4
    %v4633 = vsel %vm4212, %v4632, %v4628
    %v4638 = vmul.f32 %v4611, %v4628
    %v4639 = vmul.f32 %v4612, %v4631
    %v4640 = vmul.f32 %v4613, %v4633
    %v4641 = vmul.f32 %v4614, %v4631
    %v4642 = vmul.f32 %v4615, %v4632
    %v4643 = vmul.f32 %v4616, %v4628
    %v4644 = vmul.f32 %v4617, %v4631
    %v4645 = vmul.f32 %v4618, %v4633
    %v4646 = vmul.f32 %v4619, %v4631
    %v4647 = vmul.f32 %v4620, %v4632
    %v4648 = vadd.f32 %v4568, %v4638
    %v4649 = vadd.f32 %v4569, %v4639
    %v4650 = vadd.f32 %v4570, %v4640
    %v4651 = vadd.f32 %v4571, %v4641
    %v4652 = vadd.f32 %v4572, %v4642
    %v4653 = vadd.f32 %v4573, %v4643
    %v4654 = vadd.f32 %v4574, %v4644
    %v4655 = vadd.f32 %v4575, %v4645
    %v4656 = vadd.f32 %v4576, %v4646
    %v4657 = vadd.f32 %v4577, %v4647
    %v4658 = vld [vmem:[%s7 + $0x5] sm:$0x1]
    %v4659 = vlaneseq
    %v4660 = vshrl.u32 %v4659, 7
    %v4661 = vsub.s32 0, %v4660
    %v4662 = vrot.slane %v4658, %v4661
    %v4664 = vcombine.high %v4662, %v4662
    %v4665 = vrot.slane %v4662, 6
    %v4666 = vrot.slane %v4665, 4
    %v4667 = vrot.slane %v4664, 6
    %v4668 = vsel %vm4241, %v4666, %v4667
    %v4669 = vrot.slane %v4667, 4
    %v4670 = vsel %vm4241, %v4669, %v4665
    %v4675 = vmul.f32 %v4611, %v4665
    %v4676 = vmul.f32 %v4612, %v4668
    %v4677 = vmul.f32 %v4613, %v4670
    %v4678 = vmul.f32 %v4614, %v4668
    %v4679 = vmul.f32 %v4615, %v4669
    %v4680 = vmul.f32 %v4616, %v4665
    %v4681 = vmul.f32 %v4617, %v4668
    %v4682 = vmul.f32 %v4618, %v4670
    %v4683 = vmul.f32 %v4619, %v4668
    %v4684 = vmul.f32 %v4620, %v4669
    %v4695 = vrot.slane %v4675, 5
    %v4696 = vrot.slane %v4695, 4
    %v4697 = vrot.slane %v4676, 5
    %v4698 = vsel %vm4273, %v4696, %v4697
    %v4699 = vrot.slane %v4697, 4
    %v4700 = vrot.slane %v4677, 5
    %v4701 = vsel %vm4273, %v4699, %v4700
    %v4702 = vrot.slane %v4700, 4
    %v4703 = vrot.slane %v4678, 5
    %v4704 = vsel %vm4273, %v4702, %v4703
    %v4705 = vrot.slane %v4703, 4
    %v4706 = vrot.slane %v4679, 5
    %v4707 = vsel %vm4273, %v4705, %v4706
    %v4708 = vrot.slane %v4706, 4
    %v4709 = vrot.slane %v4680, 5
    %v4710 = vrot.slane %v4709, 4
    %v4711 = vrot.slane %v4681, 5
    %v4712 = vsel %vm4273, %v4710, %v4711
    %v4713 = vrot.slane %v4711, 4
    %v4714 = vrot.slane %v4682, 5
    %v4715 = vsel %vm4273, %v4713, %v4714
    %v4716 = vrot.slane %v4714, 4
    %v4717 = vrot.slane %v4683, 5
    %v4718 = vsel %vm4273, %v4716, %v4717
    %v4719 = vrot.slane %v4717, 4
    %v4720 = vrot.slane %v4684, 5
    %v4721 = vsel %vm4273, %v4719, %v4720
    %v4722 = vrot.slane %v4720, 4
    %v4733 = vadd.f32 %v4648, %v4698
    %v4734 = vadd.f32 %v4649, %v4701
    %v4735 = vadd.f32 %v4650, %v4704
    %v4736 = vadd.f32 %v4651, %v4707
    %v4737 = vadd.f32 %v4652, %v4708
    %v4738 = vadd.f32 %v4653, %v4712
    %v4739 = vadd.f32 %v4654, %v4715
    %v4740 = vadd.f32 %v4655, %v4718
    %v4741 = vadd.f32 %v4656, %v4721
    %v4742 = vadd.f32 %v4657, %v4722
    %v4743 = vld [vmem:[%s7 + $0x8] sm:$0x1]
    %v4744 = vlaneseq
    %v4745 = vshrl.u32 %v4744, 7
    %v4746 = vsub.s32 0, %v4745
    %v4747 = vrot.slane %v4743, %v4746
    %v4749 = vcombine.high %v4747, %v4747
    %v4750 = vrot.slane %v4747, 5
    %v4751 = vrot.slane %v4750, 4
    %v4752 = vrot.slane %v4749, 5
    %v4753 = vsel %vm4273, %v4751, %v4752
    %v4754 = vrot.slane %v4752, 4
    %v4755 = vsel %vm4273, %v4754, %v4750
    %v4760 = vmul.f32 %v4611, %v4750
    %v4761 = vmul.f32 %v4612, %v4753
    %v4762 = vmul.f32 %v4613, %v4755
    %v4763 = vmul.f32 %v4614, %v4753
    %v4764 = vmul.f32 %v4615, %v4754
    %v4765 = vmul.f32 %v4616, %v4750
    %v4766 = vmul.f32 %v4617, %v4753
    %v4767 = vmul.f32 %v4618, %v4755
    %v4768 = vmul.f32 %v4619, %v4753
    %v4769 = vmul.f32 %v4620, %v4754
    %v4780 = vrot.slane %v4760, 6
    %v4781 = vrot.slane %v4780, 4
    %v4782 = vrot.slane %v4761, 6
    %v4783 = vsel %vm4241, %v4781, %v4782
    %v4784 = vrot.slane %v4782, 4
    %v4785 = vrot.slane %v4762, 6
    %v4786 = vsel %vm4241, %v4784, %v4785
    %v4787 = vrot.slane %v4785, 4
    %v4788 = vrot.slane %v4763, 6
    %v4789 = vsel %vm4241, %v4787, %v4788
    %v4790 = vrot.slane %v4788, 4
    %v4791 = vrot.slane %v4764, 6
    %v4792 = vsel %vm4241, %v4790, %v4791
    %v4793 = vrot.slane %v4791, 4
    %v4794 = vrot.slane %v4765, 6
    %v4795 = vrot.slane %v4794, 4
    %v4796 = vrot.slane %v4766, 6
    %v4797 = vsel %vm4241, %v4795, %v4796
    %v4798 = vrot.slane %v4796, 4
    %v4799 = vrot.slane %v4767, 6
    %v4800 = vsel %vm4241, %v4798, %v4799
    %v4801 = vrot.slane %v4799, 4
    %v4802 = vrot.slane %v4768, 6
    %v4803 = vsel %vm4241, %v4801, %v4802
    %v4804 = vrot.slane %v4802, 4
    %v4805 = vrot.slane %v4769, 6
    %v4806 = vsel %vm4241, %v4804, %v4805
    %v4807 = vrot.slane %v4805, 4
    %v4818 = vadd.f32 %v4733, %v4783
    %v4819 = vadd.f32 %v4734, %v4786
    %v4820 = vadd.f32 %v4735, %v4789
    %v4821 = vadd.f32 %v4736, %v4792
    %v4822 = vadd.f32 %v4737, %v4793
    %v4823 = vadd.f32 %v4738, %v4797
    %v4824 = vadd.f32 %v4739, %v4800
    %v4825 = vadd.f32 %v4740, %v4803
    %v4826 = vadd.f32 %v4741, %v4806
    %v4827 = vadd.f32 %v4742, %v4807
    %4828 = vst [vmem:[#allocation3 + $0x2] sm:$0xff] %v4126
    %4829 = vst [vmem:[#allocation3 + $0xa] sm:$0xff] %v4127
    %4830 = vst [vmem:[#allocation3 + $0x1a] sm:$0xff] %v4128
    %4831 = vst [vmem:[#allocation3 + $0x22] sm:$0xff] %v4129
    %v4832 = vld [vmem:[#allocation3] sm:$0xff]
    %v4833 = vld [vmem:[#allocation3 + $0x8] sm:$0xff]
    %v4834 = vld [vmem:[#allocation3 + $0x10] sm:$0xf]
    %v4835 = vld [vmem:[#allocation3 + $0x18] sm:$0xff]
    %v4836 = vld [vmem:[#allocation3 + $0x20] sm:$0xff]
    %v4837 = vld [vmem:[#allocation3 + $0x28] sm:$0xf]
    %v4844 = vcombine.high %v4832, %v4832
    %v4845 = vcombine.high %v4833, %v4833
    %v4846 = vcombine.high %v4835, %v4835
    %v4847 = vcombine.high %v4836, %v4836
    %v4848 = vcombine.low %v4832, %v4844
    %v4849 = vcombine.low %v4833, %v4845
    %v4850 = vcombine.low %v4834, %v4835
    %v4851 = vcombine.low %v4846, %v4836
    %v4852 = vcombine.low %v4847, %v4837
    %4858 = vrot.lane.b32.xlu0 %v4848, 16
    %v4859 = vpop.permute.xlu0 %4858
    %4860 = vrot.lane.b32.xlu0 %v4849, 16
    %v4861 = vpop.permute.xlu0 %4860
    %4862 = vrot.lane.b32.xlu0 %v4850, 16
    %v4863 = vpop.permute.xlu0 %4862
    %4864 = vrot.lane.b32.xlu0 %v4851, 16
    %v4865 = vpop.permute.xlu0 %4864
    %4866 = vrot.lane.b32.xlu0 %v4852, 16
    %v4867 = vpop.permute.xlu0 %4866
    %v4873 = vcombine.high %v4859, %v4859
    %v4874 = vcombine.high %v4861, %v4861
    %v4875 = vcombine.high %v4863, %v4863
    %v4876 = vcombine.high %v4865, %v4865
    %v4877 = vcombine.high %v4867, %v4867
    %v4883 = vld [vmem:[%s2 + $0x1] sm:$0x1]
    %v4884 = vlaneseq
    %v4885 = vshrl.u32 %v4884, 7
    %v4886 = vsub.s32 0, %v4885
    %v4887 = vrot.slane %v4883, %v4886
    %v4889 = vcombine.high %v4887, %v4887
    %v4891 = vmul.f32 %v4859, %v4887
    %v4892 = vmul.f32 %v4873, %v4889
    %v4893 = vmul.f32 %v4861, %v4887
    %v4894 = vmul.f32 %v4874, %v4889
    %v4895 = vmul.f32 %v4863, %v4887
    %v4896 = vmul.f32 %v4875, %v4887
    %v4897 = vmul.f32 %v4865, %v4889
    %v4898 = vmul.f32 %v4876, %v4887
    %v4899 = vmul.f32 %v4867, %v4889
    %v4900 = vmul.f32 %v4877, %v4887
    %v4901 = vld [vmem:[%s9] sm:$0x1]
    %v4902 = vlaneseq
    %v4903 = vshrl.u32 %v4902, 7
    %v4904 = vsub.s32 0, %v4903
    %v4905 = vrot.slane %v4901, %v4904
    %v4907 = vcombine.high %v4905, %v4905
    %v4909 = vmul.f32 %v4891, %v4905
    %v4910 = vmul.f32 %v4892, %v4907
    %v4911 = vmul.f32 %v4893, %v4905
    %v4912 = vmul.f32 %v4894, %v4907
    %v4913 = vmul.f32 %v4896, %v4905
    %v4914 = vmul.f32 %v4897, %v4907
    %v4915 = vmul.f32 %v4898, %v4905
    %v4916 = vmul.f32 %v4899, %v4907
    %v4917 = vld [vmem:[%s9 + $0x5] sm:$0x1]
    %v4918 = vlaneseq
    %v4919 = vshrl.u32 %v4918, 7
    %v4920 = vsub.s32 0, %v4919
    %v4921 = vrot.slane %v4917, %v4920
    %v4923 = vcombine.high %v4921, %v4921
    %v4924 = vrot.slane %v4921, 7
    %v4925 = vrot.slane %v4924, 4
    %v4926 = vrot.slane %v4923, 7
    %v4927 = vsel %vm4212, %v4925, %v4926
    %v4928 = vrot.slane %v4926, 4
    %v4929 = vsel %vm4212, %v4928, %v4924
    %v4934 = vmul.f32 %v4891, %v4924
    %v4935 = vmul.f32 %v4892, %v4927
    %v4936 = vmul.f32 %v4893, %v4929
    %v4937 = vmul.f32 %v4894, %v4927
    %v4938 = vmul.f32 %v4895, %v4928
    %v4939 = vmul.f32 %v4896, %v4924
    %v4940 = vmul.f32 %v4897, %v4927
    %v4941 = vmul.f32 %v4898, %v4929
    %v4942 = vmul.f32 %v4899, %v4927
    %v4943 = vmul.f32 %v4900, %v4928
    %v4954 = vrot.slane %v4934, 5
    %v4955 = vrot.slane %v4954, 4
    %v4956 = vrot.slane %v4935, 5
    %v4957 = vsel %vm4273, %v4955, %v4956
    %v4958 = vrot.slane %v4956, 4
    %v4959 = vrot.slane %v4936, 5
    %v4960 = vsel %vm4273, %v4958, %v4959
    %v4961 = vrot.slane %v4959, 4
    %v4962 = vrot.slane %v4937, 5
    %v4963 = vsel %vm4273, %v4961, %v4962
    %v4964 = vrot.slane %v4962, 4
    %v4965 = vrot.slane %v4938, 5
    %v4966 = vsel %vm4273, %v4964, %v4965
    %v4967 = vrot.slane %v4939, 5
    %v4968 = vrot.slane %v4967, 4
    %v4969 = vrot.slane %v4940, 5
    %v4970 = vsel %vm4273, %v4968, %v4969
    %v4971 = vrot.slane %v4969, 4
    %v4972 = vrot.slane %v4941, 5
    %v4973 = vsel %vm4273, %v4971, %v4972
    %v4974 = vrot.slane %v4972, 4
    %v4975 = vrot.slane %v4942, 5
    %v4976 = vsel %vm4273, %v4974, %v4975
    %v4977 = vrot.slane %v4975, 4
    %v4978 = vrot.slane %v4943, 5
    %v4979 = vsel %vm4273, %v4977, %v4978
    %v4988 = vadd.f32 %v4909, %v4957
    %v4989 = vadd.f32 %v4910, %v4960
    %v4990 = vadd.f32 %v4911, %v4963
    %v4991 = vadd.f32 %v4912, %v4966
    %v4992 = vadd.f32 %v4913, %v4970
    %v4993 = vadd.f32 %v4914, %v4973
    %v4994 = vadd.f32 %v4915, %v4976
    %v4995 = vadd.f32 %v4916, %v4979
    %v4996 = vld [vmem:[%s9 + $0xa] sm:$0x1]
    %v4997 = vlaneseq
    %v4998 = vshrl.u32 %v4997, 7
    %v4999 = vsub.s32 0, %v4998
    %v5000 = vrot.slane %v4996, %v4999
    %v5002 = vcombine.high %v5000, %v5000
    %v5003 = vrot.slane %v5000, 6
    %v5004 = vrot.slane %v5003, 4
    %v5005 = vrot.slane %v5002, 6
    %v5006 = vsel %vm4241, %v5004, %v5005
    %v5007 = vrot.slane %v5005, 4
    %v5008 = vsel %vm4241, %v5007, %v5003
    %v5013 = vmul.f32 %v4891, %v5003
    %v5014 = vmul.f32 %v4892, %v5006
    %v5015 = vmul.f32 %v4893, %v5008
    %v5016 = vmul.f32 %v4894, %v5006
    %v5017 = vmul.f32 %v4895, %v5007
    %v5018 = vmul.f32 %v4896, %v5003
    %v5019 = vmul.f32 %v4897, %v5006
    %v5020 = vmul.f32 %v4898, %v5008
    %v5021 = vmul.f32 %v4899, %v5006
    %v5022 = vmul.f32 %v4900, %v5007
    %v5033 = vrot.slane %v5013, 6
    %v5034 = vrot.slane %v5033, 4
    %v5035 = vrot.slane %v5014, 6
    %v5036 = vsel %vm4241, %v5034, %v5035
    %v5037 = vrot.slane %v5035, 4
    %v5038 = vrot.slane %v5015, 6
    %v5039 = vsel %vm4241, %v5037, %v5038
    %v5040 = vrot.slane %v5038, 4
    %v5041 = vrot.slane %v5016, 6
    %v5042 = vsel %vm4241, %v5040, %v5041
    %v5043 = vrot.slane %v5041, 4
    %v5044 = vrot.slane %v5017, 6
    %v5045 = vsel %vm4241, %v5043, %v5044
    %v5046 = vrot.slane %v5018, 6
    %v5047 = vrot.slane %v5046, 4
    %v5048 = vrot.slane %v5019, 6
    %v5049 = vsel %vm4241, %v5047, %v5048
    %v5050 = vrot.slane %v5048, 4
    %v5051 = vrot.slane %v5020, 6
    %v5052 = vsel %vm4241, %v5050, %v5051
    %v5053 = vrot.slane %v5051, 4
    %v5054 = vrot.slane %v5021, 6
    %v5055 = vsel %vm4241, %v5053, %v5054
    %v5056 = vrot.slane %v5054, 4
    %v5057 = vrot.slane %v5022, 6
    %v5058 = vsel %vm4241, %v5056, %v5057
    %v5067 = vadd.f32 %v4988, %v5036
    %v5068 = vadd.f32 %v4989, %v5039
    %v5069 = vadd.f32 %v4990, %v5042
    %v5070 = vadd.f32 %v4991, %v5045
    %v5071 = vadd.f32 %v4992, %v5049
    %v5072 = vadd.f32 %v4993, %v5052
    %v5073 = vadd.f32 %v4994, %v5055
    %v5074 = vadd.f32 %v4995, %v5058
    %v5075 = vld [vmem:[%s9 + $0xf] sm:$0x1]
    %v5076 = vlaneseq
    %v5077 = vshrl.u32 %v5076, 7
    %v5078 = vsub.s32 0, %v5077
    %v5079 = vrot.slane %v5075, %v5078
    %v5081 = vcombine.high %v5079, %v5079
    %v5082 = vrot.slane %v5079, 5
    %v5083 = vrot.slane %v5082, 4
    %v5084 = vrot.slane %v5081, 5
    %v5085 = vsel %vm4273, %v5083, %v5084
    %v5086 = vrot.slane %v5084, 4
    %v5087 = vsel %vm4273, %v5086, %v5082
    %v5092 = vmul.f32 %v4891, %v5082
    %v5093 = vmul.f32 %v4892, %v5085
    %v5094 = vmul.f32 %v4893, %v5087
    %v5095 = vmul.f32 %v4894, %v5085
    %v5096 = vmul.f32 %v4895, %v5086
    %v5097 = vmul.f32 %v4896, %v5082
    %v5098 = vmul.f32 %v4897, %v5085
    %v5099 = vmul.f32 %v4898, %v5087
    %v5100 = vmul.f32 %v4899, %v5085
    %v5101 = vmul.f32 %v4900, %v5086
    %v5112 = vrot.slane %v5092, 7
    %v5113 = vrot.slane %v5112, 4
    %v5114 = vrot.slane %v5093, 7
    %v5115 = vsel %vm4212, %v5113, %v5114
    %v5116 = vrot.slane %v5114, 4
    %v5117 = vrot.slane %v5094, 7
    %v5118 = vsel %vm4212, %v5116, %v5117
    %v5119 = vrot.slane %v5117, 4
    %v5120 = vrot.slane %v5095, 7
    %v5121 = vsel %vm4212, %v5119, %v5120
    %v5122 = vrot.slane %v5120, 4
    %v5123 = vrot.slane %v5096, 7
    %v5124 = vsel %vm4212, %v5122, %v5123
    %v5125 = vrot.slane %v5097, 7
    %v5126 = vrot.slane %v5125, 4
    %v5127 = vrot.slane %v5098, 7
    %v5128 = vsel %vm4212, %v5126, %v5127
    %v5129 = vrot.slane %v5127, 4
    %v5130 = vrot.slane %v5099, 7
    %v5131 = vsel %vm4212, %v5129, %v5130
    %v5132 = vrot.slane %v5130, 4
    %v5133 = vrot.slane %v5100, 7
    %v5134 = vsel %vm4212, %v5132, %v5133
    %v5135 = vrot.slane %v5133, 4
    %v5136 = vrot.slane %v5101, 7
    %v5137 = vsel %vm4212, %v5135, %v5136
    %v5146 = vadd.f32 %v5067, %v5115
    %v5147 = vadd.f32 %v5068, %v5118
    %v5148 = vadd.f32 %v5069, %v5121
    %v5149 = vadd.f32 %v5070, %v5124
    %v5150 = vadd.f32 %v5071, %v5128
    %v5151 = vadd.f32 %v5072, %v5131
    %v5152 = vadd.f32 %v5073, %v5134
    %v5153 = vadd.f32 %v5074, %v5137
    %v5154 = vld [vmem:[%s9 + $0x14] sm:$0x1]
    %v5155 = vlaneseq
    %v5156 = vshrl.u32 %v5155, 7
    %v5157 = vsub.s32 0, %v5156
    %v5158 = vrot.slane %v5154, %v5157
    %v5160 = vcombine.high %v5158, %v5158
    %v5162 = vmul.f32 %v4892, %v5158
    %v5163 = vmul.f32 %v4893, %v5160
    %v5164 = vmul.f32 %v4894, %v5158
    %v5165 = vmul.f32 %v4895, %v5160
    %v5166 = vmul.f32 %v4897, %v5158
    %v5167 = vmul.f32 %v4898, %v5160
    %v5168 = vmul.f32 %v4899, %v5158
    %v5169 = vmul.f32 %v4900, %v5160
    %v5170 = vadd.f32 %v5146, %v5162
    %v5171 = vadd.f32 %v5147, %v5163
    %v5172 = vadd.f32 %v5148, %v5164
    %v5173 = vadd.f32 %v5149, %v5165
    %v5174 = vadd.f32 %v5150, %v5166
    %v5175 = vadd.f32 %v5151, %v5167
    %v5176 = vadd.f32 %v5152, %v5168
    %v5177 = vadd.f32 %v5153, %v5169
    %5178 = vrot.lane.b32.xlu0 %v4848, 8
    %v5179 = vpop.permute.xlu0 %5178
    %5180 = vrot.lane.b32.xlu0 %v4849, 8
    %v5181 = vpop.permute.xlu0 %5180
    %5182 = vrot.lane.b32.xlu0 %v4850, 8
    %v5183 = vpop.permute.xlu0 %5182
    %5184 = vrot.lane.b32.xlu0 %v4851, 8
    %v5185 = vpop.permute.xlu0 %5184
    %5186 = vrot.lane.b32.xlu0 %v4852, 8
    %v5187 = vpop.permute.xlu0 %5186
    %v5193 = vcombine.high %v5179, %v5179
    %v5194 = vcombine.high %v5181, %v5181
    %v5195 = vcombine.high %v5183, %v5183
    %v5196 = vcombine.high %v5185, %v5185
    %v5197 = vcombine.high %v5187, %v5187
    %v5203 = vld [vmem:[%s2 + $0x2] sm:$0x1]
    %v5204 = vlaneseq
    %v5205 = vshrl.u32 %v5204, 7
    %v5206 = vsub.s32 0, %v5205
    %v5207 = vrot.slane %v5203, %v5206
    %v5209 = vcombine.high %v5207, %v5207
    %v5211 = vmul.f32 %v5179, %v5207
    %v5212 = vmul.f32 %v5193, %v5209
    %v5213 = vmul.f32 %v5181, %v5207
    %v5214 = vmul.f32 %v5194, %v5209
    %v5215 = vmul.f32 %v5183, %v5207
    %v5216 = vmul.f32 %v5195, %v5207
    %v5217 = vmul.f32 %v5185, %v5209
    %v5218 = vmul.f32 %v5196, %v5207
    %v5219 = vmul.f32 %v5187, %v5209
    %v5220 = vmul.f32 %v5197, %v5207
    %v5221 = vld [vmem:[%s9 + $0x1] sm:$0x1]
    %v5222 = vlaneseq
    %v5223 = vshrl.u32 %v5222, 7
    %v5224 = vsub.s32 0, %v5223
    %v5225 = vrot.slane %v5221, %v5224
    %v5227 = vcombine.high %v5225, %v5225
    %v5229 = vmul.f32 %v5211, %v5225
    %v5230 = vmul.f32 %v5212, %v5227
    %v5231 = vmul.f32 %v5213, %v5225
    %v5232 = vmul.f32 %v5214, %v5227
    %v5233 = vmul.f32 %v5216, %v5225
    %v5234 = vmul.f32 %v5217, %v5227
    %v5235 = vmul.f32 %v5218, %v5225
    %v5236 = vmul.f32 %v5219, %v5227
    %v5237 = vadd.f32 %v5170, %v5229
    %v5238 = vadd.f32 %v5171, %v5230
    %v5239 = vadd.f32 %v5172, %v5231
    %v5240 = vadd.f32 %v5173, %v5232
    %v5241 = vadd.f32 %v5174, %v5233
    %v5242 = vadd.f32 %v5175, %v5234
    %v5243 = vadd.f32 %v5176, %v5235
    %v5244 = vadd.f32 %v5177, %v5236
    %v5245 = vld [vmem:[%s9 + $0x6] sm:$0x1]
    %v5246 = vlaneseq
    %v5247 = vshrl.u32 %v5246, 7
    %v5248 = vsub.s32 0, %v5247
    %v5249 = vrot.slane %v5245, %v5248
    %v5251 = vcombine.high %v5249, %v5249
    %v5252 = vrot.slane %v5249, 7
    %v5253 = vrot.slane %v5252, 4
    %v5254 = vrot.slane %v5251, 7
    %v5255 = vsel %vm4212, %v5253, %v5254
    %v5256 = vrot.slane %v5254, 4
    %v5257 = vsel %vm4212, %v5256, %v5252
    %v5262 = vmul.f32 %v5211, %v5252
    %v5263 = vmul.f32 %v5212, %v5255
    %v5264 = vmul.f32 %v5213, %v5257
    %v5265 = vmul.f32 %v5214, %v5255
    %v5266 = vmul.f32 %v5215, %v5256
    %v5267 = vmul.f32 %v5216, %v5252
    %v5268 = vmul.f32 %v5217, %v5255
    %v5269 = vmul.f32 %v5218, %v5257
    %v5270 = vmul.f32 %v5219, %v5255
    %v5271 = vmul.f32 %v5220, %v5256
    %v5282 = vrot.slane %v5262, 5
    %v5283 = vrot.slane %v5282, 4
    %v5284 = vrot.slane %v5263, 5
    %v5285 = vsel %vm4273, %v5283, %v5284
    %v5286 = vrot.slane %v5284, 4
    %v5287 = vrot.slane %v5264, 5
    %v5288 = vsel %vm4273, %v5286, %v5287
    %v5289 = vrot.slane %v5287, 4
    %v5290 = vrot.slane %v5265, 5
    %v5291 = vsel %vm4273, %v5289, %v5290
    %v5292 = vrot.slane %v5290, 4
    %v5293 = vrot.slane %v5266, 5
    %v5294 = vsel %vm4273, %v5292, %v5293
    %v5295 = vrot.slane %v5267, 5
    %v5296 = vrot.slane %v5295, 4
    %v5297 = vrot.slane %v5268, 5
    %v5298 = vsel %vm4273, %v5296, %v5297
    %v5299 = vrot.slane %v5297, 4
    %v5300 = vrot.slane %v5269, 5
    %v5301 = vsel %vm4273, %v5299, %v5300
    %v5302 = vrot.slane %v5300, 4
    %v5303 = vrot.slane %v5270, 5
    %v5304 = vsel %vm4273, %v5302, %v5303
    %v5305 = vrot.slane %v5303, 4
    %v5306 = vrot.slane %v5271, 5
    %v5307 = vsel %vm4273, %v5305, %v5306
    %v5316 = vadd.f32 %v5237, %v5285
    %v5317 = vadd.f32 %v5238, %v5288
    %v5318 = vadd.f32 %v5239, %v5291
    %v5319 = vadd.f32 %v5240, %v5294
    %v5320 = vadd.f32 %v5241, %v5298
    %v5321 = vadd.f32 %v5242, %v5301
    %v5322 = vadd.f32 %v5243, %v5304
    %v5323 = vadd.f32 %v5244, %v5307
    %v5324 = vld [vmem:[%s9 + $0xb] sm:$0x1]
    %v5325 = vlaneseq
    %v5326 = vshrl.u32 %v5325, 7
    %v5327 = vsub.s32 0, %v5326
    %v5328 = vrot.slane %v5324, %v5327
    %v5330 = vcombine.high %v5328, %v5328
    %v5331 = vrot.slane %v5328, 6
    %v5332 = vrot.slane %v5331, 4
    %v5333 = vrot.slane %v5330, 6
    %v5334 = vsel %vm4241, %v5332, %v5333
    %v5335 = vrot.slane %v5333, 4
    %v5336 = vsel %vm4241, %v5335, %v5331
    %v5341 = vmul.f32 %v5211, %v5331
    %v5342 = vmul.f32 %v5212, %v5334
    %v5343 = vmul.f32 %v5213, %v5336
    %v5344 = vmul.f32 %v5214, %v5334
    %v5345 = vmul.f32 %v5215, %v5335
    %v5346 = vmul.f32 %v5216, %v5331
    %v5347 = vmul.f32 %v5217, %v5334
    %v5348 = vmul.f32 %v5218, %v5336
    %v5349 = vmul.f32 %v5219, %v5334
    %v5350 = vmul.f32 %v5220, %v5335
    %v5361 = vrot.slane %v5341, 6
    %v5362 = vrot.slane %v5361, 4
    %v5363 = vrot.slane %v5342, 6
    %v5364 = vsel %vm4241, %v5362, %v5363
    %v5365 = vrot.slane %v5363, 4
    %v5366 = vrot.slane %v5343, 6
    %v5367 = vsel %vm4241, %v5365, %v5366
    %v5368 = vrot.slane %v5366, 4
    %v5369 = vrot.slane %v5344, 6
    %v5370 = vsel %vm4241, %v5368, %v5369
    %v5371 = vrot.slane %v5369, 4
    %v5372 = vrot.slane %v5345, 6
    %v5373 = vsel %vm4241, %v5371, %v5372
    %v5374 = vrot.slane %v5346, 6
    %v5375 = vrot.slane %v5374, 4
    %v5376 = vrot.slane %v5347, 6
    %v5377 = vsel %vm4241, %v5375, %v5376
    %v5378 = vrot.slane %v5376, 4
    %v5379 = vrot.slane %v5348, 6
    %v5380 = vsel %vm4241, %v5378, %v5379
    %v5381 = vrot.slane %v5379, 4
    %v5382 = vrot.slane %v5349, 6
    %v5383 = vsel %vm4241, %v5381, %v5382
    %v5384 = vrot.slane %v5382, 4
    %v5385 = vrot.slane %v5350, 6
    %v5386 = vsel %vm4241, %v5384, %v5385
    %v5395 = vadd.f32 %v5316, %v5364
    %v5396 = vadd.f32 %v5317, %v5367
    %v5397 = vadd.f32 %v5318, %v5370
    %v5398 = vadd.f32 %v5319, %v5373
    %v5399 = vadd.f32 %v5320, %v5377
    %v5400 = vadd.f32 %v5321, %v5380
    %v5401 = vadd.f32 %v5322, %v5383
    %v5402 = vadd.f32 %v5323, %v5386
    %v5403 = vld [vmem:[%s9 + $0x10] sm:$0x1]
    %v5404 = vlaneseq
    %v5405 = vshrl.u32 %v5404, 7
    %v5406 = vsub.s32 0, %v5405
    %v5407 = vrot.slane %v5403, %v5406
    %v5409 = vcombine.high %v5407, %v5407
    %v5410 = vrot.slane %v5407, 5
    %v5411 = vrot.slane %v5410, 4
    %v5412 = vrot.slane %v5409, 5
    %v5413 = vsel %vm4273, %v5411, %v5412
    %v5414 = vrot.slane %v5412, 4
    %v5415 = vsel %vm4273, %v5414, %v5410
    %v5420 = vmul.f32 %v5211, %v5410
    %v5421 = vmul.f32 %v5212, %v5413
    %v5422 = vmul.f32 %v5213, %v5415
    %v5423 = vmul.f32 %v5214, %v5413
    %v5424 = vmul.f32 %v5215, %v5414
    %v5425 = vmul.f32 %v5216, %v5410
    %v5426 = vmul.f32 %v5217, %v5413
    %v5427 = vmul.f32 %v5218, %v5415
    %v5428 = vmul.f32 %v5219, %v5413
    %v5429 = vmul.f32 %v5220, %v5414
    %v5440 = vrot.slane %v5420, 7
    %v5441 = vrot.slane %v5440, 4
    %v5442 = vrot.slane %v5421, 7
    %v5443 = vsel %vm4212, %v5441, %v5442
    %v5444 = vrot.slane %v5442, 4
    %v5445 = vrot.slane %v5422, 7
    %v5446 = vsel %vm4212, %v5444, %v5445
    %v5447 = vrot.slane %v5445, 4
    %v5448 = vrot.slane %v5423, 7
    %v5449 = vsel %vm4212, %v5447, %v5448
    %v5450 = vrot.slane %v5448, 4
    %v5451 = vrot.slane %v5424, 7
    %v5452 = vsel %vm4212, %v5450, %v5451
    %v5453 = vrot.slane %v5425, 7
    %v5454 = vrot.slane %v5453, 4
    %v5455 = vrot.slane %v5426, 7
    %v5456 = vsel %vm4212, %v5454, %v5455
    %v5457 = vrot.slane %v5455, 4
    %v5458 = vrot.slane %v5427, 7
    %v5459 = vsel %vm4212, %v5457, %v5458
    %v5460 = vrot.slane %v5458, 4
    %v5461 = vrot.slane %v5428, 7
    %v5462 = vsel %vm4212, %v5460, %v5461
    %v5463 = vrot.slane %v5461, 4
    %v5464 = vrot.slane %v5429, 7
    %v5465 = vsel %vm4212, %v5463, %v5464
    %v5474 = vadd.f32 %v5395, %v5443
    %v5475 = vadd.f32 %v5396, %v5446
    %v5476 = vadd.f32 %v5397, %v5449
    %v5477 = vadd.f32 %v5398, %v5452
    %v5478 = vadd.f32 %v5399, %v5456
    %v5479 = vadd.f32 %v5400, %v5459
    %v5480 = vadd.f32 %v5401, %v5462
    %v5481 = vadd.f32 %v5402, %v5465
    %v5482 = vld [vmem:[%s9 + $0x15] sm:$0x1]
    %v5483 = vlaneseq
    %v5484 = vshrl.u32 %v5483, 7
    %v5485 = vsub.s32 0, %v5484
    %v5486 = vrot.slane %v5482, %v5485
    %v5488 = vcombine.high %v5486, %v5486
    %v5490 = vmul.f32 %v5212, %v5486
    %v5491 = vmul.f32 %v5213, %v5488
    %v5492 = vmul.f32 %v5214, %v5486
    %v5493 = vmul.f32 %v5215, %v5488
    %v5494 = vmul.f32 %v5217, %v5486
    %v5495 = vmul.f32 %v5218, %v5488
    %v5496 = vmul.f32 %v5219, %v5486
    %v5497 = vmul.f32 %v5220, %v5488
    %v5498 = vadd.f32 %v5474, %v5490
    %v5499 = vadd.f32 %v5475, %v5491
    %v5500 = vadd.f32 %v5476, %v5492
    %v5501 = vadd.f32 %v5477, %v5493
    %v5502 = vadd.f32 %v5478, %v5494
    %v5503 = vadd.f32 %v5479, %v5495
    %v5504 = vadd.f32 %v5480, %v5496
    %v5505 = vadd.f32 %v5481, %v5497
    %v5506 = vld [vmem:[%s9 + $0x2] sm:$0x1]
    %v5507 = vlaneseq
    %v5508 = vshrl.u32 %v5507, 7
    %v5509 = vsub.s32 0, %v5508
    %v5510 = vrot.slane %v5506, %v5509
    %v5511 = vmul.f32 %v4832, %v5510
    %v5512 = vmul.f32 %v4833, %v5510
    %v5513 = vmul.f32 %v4835, %v5510
    %v5514 = vmul.f32 %v4836, %v5510
    %v5519 = vcombine.high %v5511, %v5511
    %v5520 = vcombine.high %v5512, %v5512
    %v5521 = vcombine.high %v5513, %v5513
    %v5522 = vcombine.high %v5514, %v5514
    %v5527 = vadd.f32 %v5498, %v5511
    %v5528 = vadd.f32 %v5499, %v5519
    %v5529 = vadd.f32 %v5500, %v5512
    %v5530 = vadd.f32 %v5501, %v5520
    %v5531 = vadd.f32 %v5502, %v5513
    %v5532 = vadd.f32 %v5503, %v5521
    %v5533 = vadd.f32 %v5504, %v5514
    %v5534 = vadd.f32 %v5505, %v5522
    %v5535 = vld [vmem:[%s9 + $0x7] sm:$0x1]
    %v5536 = vlaneseq
    %v5537 = vshrl.u32 %v5536, 7
    %v5538 = vsub.s32 0, %v5537
    %v5539 = vrot.slane %v5535, %v5538
    %v5540 = vmul.f32 %v4832, %v5539
    %v5541 = vmul.f32 %v4833, %v5539
    %v5542 = vmul.f32 %v4834, %v5539
    %v5543 = vmul.f32 %v4835, %v5539
    %v5544 = vmul.f32 %v4836, %v5539
    %v5545 = vmul.f32 %v4837, %v5539
    %v5552 = vcombine.high %v5540, %v5540
    %v5553 = vcombine.high %v5541, %v5541
    %v5554 = vcombine.high %v5543, %v5543
    %v5555 = vcombine.high %v5544, %v5544
    %v5556 = vrot.slane %v5540, 5
    %v5557 = vrot.slane %v5556, 4
    %v5558 = vrot.slane %v5552, 5
    %v5559 = vsel %vm4273, %v5557, %v5558
    %v5560 = vrot.slane %v5558, 4
    %v5561 = vrot.slane %v5541, 5
    %v5562 = vsel %vm4273, %v5560, %v5561
    %v5563 = vrot.slane %v5561, 4
    %v5564 = vrot.slane %v5553, 5
    %v5565 = vsel %vm4273, %v5563, %v5564
    %v5566 = vrot.slane %v5564, 4
    %v5567 = vrot.slane %v5542, 5
    %v5568 = vsel %vm4273, %v5566, %v5567
    %v5569 = vrot.slane %v5543, 5
    %v5570 = vrot.slane %v5569, 4
    %v5571 = vrot.slane %v5554, 5
    %v5572 = vsel %vm4273, %v5570, %v5571
    %v5573 = vrot.slane %v5571, 4
    %v5574 = vrot.slane %v5544, 5
    %v5575 = vsel %vm4273, %v5573, %v5574
    %v5576 = vrot.slane %v5574, 4
    %v5577 = vrot.slane %v5555, 5
    %v5578 = vsel %vm4273, %v5576, %v5577
    %v5579 = vrot.slane %v5577, 4
    %v5580 = vrot.slane %v5545, 5
    %v5581 = vsel %vm4273, %v5579, %v5580
    %v5590 = vadd.f32 %v5527, %v5559
    %v5591 = vadd.f32 %v5528, %v5562
    %v5592 = vadd.f32 %v5529, %v5565
    %v5593 = vadd.f32 %v5530, %v5568
    %v5594 = vadd.f32 %v5531, %v5572
    %v5595 = vadd.f32 %v5532, %v5575
    %v5596 = vadd.f32 %v5533, %v5578
    %v5597 = vadd.f32 %v5534, %v5581
    %v5598 = vld [vmem:[%s9 + $0xc] sm:$0x1]
    %v5599 = vlaneseq
    %v5600 = vshrl.u32 %v5599, 7
    %v5601 = vsub.s32 0, %v5600
    %v5602 = vrot.slane %v5598, %v5601
    %v5603 = vmul.f32 %v4832, %v5602
    %v5604 = vmul.f32 %v4833, %v5602
    %v5605 = vmul.f32 %v4834, %v5602
    %v5606 = vmul.f32 %v4835, %v5602
    %v5607 = vmul.f32 %v4836, %v5602
    %v5608 = vmul.f32 %v4837, %v5602
    %v5615 = vcombine.high %v5603, %v5603
    %v5616 = vcombine.high %v5604, %v5604
    %v5617 = vcombine.high %v5606, %v5606
    %v5618 = vcombine.high %v5607, %v5607
    %v5619 = vrot.slane %v5603, 6
    %v5620 = vrot.slane %v5619, 4
    %v5621 = vrot.slane %v5615, 6
    %v5622 = vsel %vm4241, %v5620, %v5621
    %v5623 = vrot.slane %v5621, 4
    %v5624 = vrot.slane %v5604, 6
    %v5625 = vsel %vm4241, %v5623, %v5624
    %v5626 = vrot.slane %v5624, 4
    %v5627 = vrot.slane %v5616, 6
    %v5628 = vsel %vm4241, %v5626, %v5627
    %v5629 = vrot.slane %v5627, 4
    %v5630 = vrot.slane %v5605, 6
    %v5631 = vsel %vm4241, %v5629, %v5630
    %v5632 = vrot.slane %v5606, 6
    %v5633 = vrot.slane %v5632, 4
    %v5634 = vrot.slane %v5617, 6
    %v5635 = vsel %vm4241, %v5633, %v5634
    %v5636 = vrot.slane %v5634, 4
    %v5637 = vrot.slane %v5607, 6
    %v5638 = vsel %vm4241, %v5636, %v5637
    %v5639 = vrot.slane %v5637, 4
    %v5640 = vrot.slane %v5618, 6
    %v5641 = vsel %vm4241, %v5639, %v5640
    %v5642 = vrot.slane %v5640, 4
    %v5643 = vrot.slane %v5608, 6
    %v5644 = vsel %vm4241, %v5642, %v5643
    %v5653 = vadd.f32 %v5590, %v5622
    %v5654 = vadd.f32 %v5591, %v5625
    %v5655 = vadd.f32 %v5592, %v5628
    %v5656 = vadd.f32 %v5593, %v5631
    %v5657 = vadd.f32 %v5594, %v5635
    %v5658 = vadd.f32 %v5595, %v5638
    %v5659 = vadd.f32 %v5596, %v5641
    %v5660 = vadd.f32 %v5597, %v5644
    %v5661 = vld [vmem:[%s9 + $0x11] sm:$0x1]
    %v5662 = vlaneseq
    %v5663 = vshrl.u32 %v5662, 7
    %v5664 = vsub.s32 0, %v5663
    %v5665 = vrot.slane %v5661, %v5664
    %v5666 = vmul.f32 %v4832, %v5665
    %v5667 = vmul.f32 %v4833, %v5665
    %v5668 = vmul.f32 %v4834, %v5665
    %v5669 = vmul.f32 %v4835, %v5665
    %v5670 = vmul.f32 %v4836, %v5665
    %v5671 = vmul.f32 %v4837, %v5665
    %v5678 = vcombine.high %v5666, %v5666
    %v5679 = vcombine.high %v5667, %v5667
    %v5680 = vcombine.high %v5669, %v5669
    %v5681 = vcombine.high %v5670, %v5670
    %v5682 = vrot.slane %v5666, 7
    %v5683 = vrot.slane %v5682, 4
    %v5684 = vrot.slane %v5678, 7
    %v5685 = vsel %vm4212, %v5683, %v5684
    %v5686 = vrot.slane %v5684, 4
    %v5687 = vrot.slane %v5667, 7
    %v5688 = vsel %vm4212, %v5686, %v5687
    %v5689 = vrot.slane %v5687, 4
    %v5690 = vrot.slane %v5679, 7
    %v5691 = vsel %vm4212, %v5689, %v5690
    %v5692 = vrot.slane %v5690, 4
    %v5693 = vrot.slane %v5668, 7
    %v5694 = vsel %vm4212, %v5692, %v5693
    %v5695 = vrot.slane %v5669, 7
    %v5696 = vrot.slane %v5695, 4
    %v5697 = vrot.slane %v5680, 7
    %v5698 = vsel %vm4212, %v5696, %v5697
    %v5699 = vrot.slane %v5697, 4
    %v5700 = vrot.slane %v5670, 7
    %v5701 = vsel %vm4212, %v5699, %v5700
    %v5702 = vrot.slane %v5700, 4
    %v5703 = vrot.slane %v5681, 7
    %v5704 = vsel %vm4212, %v5702, %v5703
    %v5705 = vrot.slane %v5703, 4
    %v5706 = vrot.slane %v5671, 7
    %v5707 = vsel %vm4212, %v5705, %v5706
    %v5716 = vadd.f32 %v5653, %v5685
    %v5717 = vadd.f32 %v5654, %v5688
    %v5718 = vadd.f32 %v5655, %v5691
    %v5719 = vadd.f32 %v5656, %v5694
    %v5720 = vadd.f32 %v5657, %v5698
    %v5721 = vadd.f32 %v5658, %v5701
    %v5722 = vadd.f32 %v5659, %v5704
    %v5723 = vadd.f32 %v5660, %v5707
    %v5724 = vld [vmem:[%s9 + $0x16] sm:$0x1]
    %v5725 = vlaneseq
    %v5726 = vshrl.u32 %v5725, 7
    %v5727 = vsub.s32 0, %v5726
    %v5728 = vrot.slane %v5724, %v5727
    %v5729 = vmul.f32 %v4832, %v5728
    %v5730 = vmul.f32 %v4833, %v5728
    %v5731 = vmul.f32 %v4834, %v5728
    %v5732 = vmul.f32 %v4835, %v5728
    %v5733 = vmul.f32 %v4836, %v5728
    %v5734 = vmul.f32 %v4837, %v5728
    %v5739 = vcombine.high %v5729, %v5729
    %v5740 = vcombine.high %v5730, %v5730
    %v5741 = vcombine.high %v5732, %v5732
    %v5742 = vcombine.high %v5733, %v5733
    %v5747 = vadd.f32 %v5716, %v5739
    %v5748 = vadd.f32 %v5717, %v5730
    %v5749 = vadd.f32 %v5718, %v5740
    %v5750 = vadd.f32 %v5719, %v5731
    %v5751 = vadd.f32 %v5720, %v5741
    %v5752 = vadd.f32 %v5721, %v5733
    %v5753 = vadd.f32 %v5722, %v5742
    %v5754 = vadd.f32 %v5723, %v5734
    %5755 = vrot.lane.b32.xlu0 %v4848, 120
    %v5756 = vpop.permute.xlu0 %5755
    %5757 = vrot.lane.b32.xlu0 %v4849, 120
    %v5758 = vpop.permute.xlu0 %5757
    %5759 = vrot.lane.b32.xlu0 %v4850, 120
    %v5760 = vpop.permute.xlu0 %5759
    %5761 = vrot.lane.b32.xlu0 %v4851, 120
    %v5762 = vpop.permute.xlu0 %5761
    %5763 = vrot.lane.b32.xlu0 %v4852, 120
    %v5764 = vpop.permute.xlu0 %5763
    %v5770 = vcombine.high %v5756, %v5756
    %v5771 = vcombine.high %v5758, %v5758
    %v5772 = vcombine.high %v5760, %v5760
    %v5773 = vcombine.high %v5762, %v5762
    %v5774 = vcombine.high %v5764, %v5764
    %v5780 = vld [vmem:[%s2 + $0x3] sm:$0x1]
    %v5781 = vlaneseq
    %v5782 = vshrl.u32 %v5781, 7
    %v5783 = vsub.s32 0, %v5782
    %v5784 = vrot.slane %v5780, %v5783
    %v5786 = vcombine.high %v5784, %v5784
    %v5788 = vmul.f32 %v5756, %v5784
    %v5789 = vmul.f32 %v5770, %v5786
    %v5790 = vmul.f32 %v5758, %v5784
    %v5791 = vmul.f32 %v5771, %v5786
    %v5792 = vmul.f32 %v5760, %v5784
    %v5793 = vmul.f32 %v5772, %v5784
    %v5794 = vmul.f32 %v5762, %v5786
    %v5795 = vmul.f32 %v5773, %v5784
    %v5796 = vmul.f32 %v5764, %v5786
    %v5797 = vmul.f32 %v5774, %v5784
    %v5798 = vld [vmem:[%s9 + $0x3] sm:$0x1]
    %v5799 = vlaneseq
    %v5800 = vshrl.u32 %v5799, 7
    %v5801 = vsub.s32 0, %v5800
    %v5802 = vrot.slane %v5798, %v5801
    %v5804 = vcombine.high %v5802, %v5802
    %v5806 = vmul.f32 %v5788, %v5802
    %v5807 = vmul.f32 %v5789, %v5804
    %v5808 = vmul.f32 %v5790, %v5802
    %v5809 = vmul.f32 %v5791, %v5804
    %v5810 = vmul.f32 %v5793, %v5802
    %v5811 = vmul.f32 %v5794, %v5804
    %v5812 = vmul.f32 %v5795, %v5802
    %v5813 = vmul.f32 %v5796, %v5804
    %v5814 = vadd.f32 %v5747, %v5806
    %v5815 = vadd.f32 %v5748, %v5807
    %v5816 = vadd.f32 %v5749, %v5808
    %v5817 = vadd.f32 %v5750, %v5809
    %v5818 = vadd.f32 %v5751, %v5810
    %v5819 = vadd.f32 %v5752, %v5811
    %v5820 = vadd.f32 %v5753, %v5812
    %v5821 = vadd.f32 %v5754, %v5813
    %v5822 = vld [vmem:[%s9 + $0x8] sm:$0x1]
    %v5823 = vlaneseq
    %v5824 = vshrl.u32 %v5823, 7
    %v5825 = vsub.s32 0, %v5824
    %v5826 = vrot.slane %v5822, %v5825
    %v5828 = vcombine.high %v5826, %v5826
    %v5829 = vrot.slane %v5826, 7
    %v5830 = vrot.slane %v5829, 4
    %v5831 = vrot.slane %v5828, 7
    %v5832 = vsel %vm4212, %v5830, %v5831
    %v5833 = vrot.slane %v5831, 4
    %v5834 = vsel %vm4212, %v5833, %v5829
    %v5839 = vmul.f32 %v5788, %v5829
    %v5840 = vmul.f32 %v5789, %v5832
    %v5841 = vmul.f32 %v5790, %v5834
    %v5842 = vmul.f32 %v5791, %v5832
    %v5843 = vmul.f32 %v5792, %v5833
    %v5844 = vmul.f32 %v5793, %v5829
    %v5845 = vmul.f32 %v5794, %v5832
    %v5846 = vmul.f32 %v5795, %v5834
    %v5847 = vmul.f32 %v5796, %v5832
    %v5848 = vmul.f32 %v5797, %v5833
    %v5859 = vrot.slane %v5839, 5
    %v5860 = vrot.slane %v5859, 4
    %v5861 = vrot.slane %v5840, 5
    %v5862 = vsel %vm4273, %v5860, %v5861
    %v5863 = vrot.slane %v5861, 4
    %v5864 = vrot.slane %v5841, 5
    %v5865 = vsel %vm4273, %v5863, %v5864
    %v5866 = vrot.slane %v5864, 4
    %v5867 = vrot.slane %v5842, 5
    %v5868 = vsel %vm4273, %v5866, %v5867
    %v5869 = vrot.slane %v5867, 4
    %v5870 = vrot.slane %v5843, 5
    %v5871 = vsel %vm4273, %v5869, %v5870
    %v5872 = vrot.slane %v5844, 5
    %v5873 = vrot.slane %v5872, 4
    %v5874 = vrot.slane %v5845, 5
    %v5875 = vsel %vm4273, %v5873, %v5874
    %v5876 = vrot.slane %v5874, 4
    %v5877 = vrot.slane %v5846, 5
    %v5878 = vsel %vm4273, %v5876, %v5877
    %v5879 = vrot.slane %v5877, 4
    %v5880 = vrot.slane %v5847, 5
    %v5881 = vsel %vm4273, %v5879, %v5880
    %v5882 = vrot.slane %v5880, 4
    %v5883 = vrot.slane %v5848, 5
    %v5884 = vsel %vm4273, %v5882, %v5883
    %v5893 = vadd.f32 %v5814, %v5862
    %v5894 = vadd.f32 %v5815, %v5865
    %v5895 = vadd.f32 %v5816, %v5868
    %v5896 = vadd.f32 %v5817, %v5871
    %v5897 = vadd.f32 %v5818, %v5875
    %v5898 = vadd.f32 %v5819, %v5878
    %v5899 = vadd.f32 %v5820, %v5881
    %v5900 = vadd.f32 %v5821, %v5884
    %v5901 = vld [vmem:[%s9 + $0xd] sm:$0x1]
    %v5902 = vlaneseq
    %v5903 = vshrl.u32 %v5902, 7
    %v5904 = vsub.s32 0, %v5903
    %v5905 = vrot.slane %v5901, %v5904
    %v5907 = vcombine.high %v5905, %v5905
    %v5908 = vrot.slane %v5905, 6
    %v5909 = vrot.slane %v5908, 4
    %v5910 = vrot.slane %v5907, 6
    %v5911 = vsel %vm4241, %v5909, %v5910
    %v5912 = vrot.slane %v5910, 4
    %v5913 = vsel %vm4241, %v5912, %v5908
    %v5918 = vmul.f32 %v5788, %v5908
    %v5919 = vmul.f32 %v5789, %v5911
    %v5920 = vmul.f32 %v5790, %v5913
    %v5921 = vmul.f32 %v5791, %v5911
    %v5922 = vmul.f32 %v5792, %v5912
    %v5923 = vmul.f32 %v5793, %v5908
    %v5924 = vmul.f32 %v5794, %v5911
    %v5925 = vmul.f32 %v5795, %v5913
    %v5926 = vmul.f32 %v5796, %v5911
    %v5927 = vmul.f32 %v5797, %v5912
    %v5938 = vrot.slane %v5918, 6
    %v5939 = vrot.slane %v5938, 4
    %v5940 = vrot.slane %v5919, 6
    %v5941 = vsel %vm4241, %v5939, %v5940
    %v5942 = vrot.slane %v5940, 4
    %v5943 = vrot.slane %v5920, 6
    %v5944 = vsel %vm4241, %v5942, %v5943
    %v5945 = vrot.slane %v5943, 4
    %v5946 = vrot.slane %v5921, 6
    %v5947 = vsel %vm4241, %v5945, %v5946
    %v5948 = vrot.slane %v5946, 4
    %v5949 = vrot.slane %v5922, 6
    %v5950 = vsel %vm4241, %v5948, %v5949
    %v5951 = vrot.slane %v5923, 6
    %v5952 = vrot.slane %v5951, 4
    %v5953 = vrot.slane %v5924, 6
    %v5954 = vsel %vm4241, %v5952, %v5953
    %v5955 = vrot.slane %v5953, 4
    %v5956 = vrot.slane %v5925, 6
    %v5957 = vsel %vm4241, %v5955, %v5956
    %v5958 = vrot.slane %v5956, 4
    %v5959 = vrot.slane %v5926, 6
    %v5960 = vsel %vm4241, %v5958, %v5959
    %v5961 = vrot.slane %v5959, 4
    %v5962 = vrot.slane %v5927, 6
    %v5963 = vsel %vm4241, %v5961, %v5962
    %v5972 = vadd.f32 %v5893, %v5941
    %v5973 = vadd.f32 %v5894, %v5944
    %v5974 = vadd.f32 %v5895, %v5947
    %v5975 = vadd.f32 %v5896, %v5950
    %v5976 = vadd.f32 %v5897, %v5954
    %v5977 = vadd.f32 %v5898, %v5957
    %v5978 = vadd.f32 %v5899, %v5960
    %v5979 = vadd.f32 %v5900, %v5963
    %v5980 = vld [vmem:[%s9 + $0x12] sm:$0x1]
    %v5981 = vlaneseq
    %v5982 = vshrl.u32 %v5981, 7
    %v5983 = vsub.s32 0, %v5982
    %v5984 = vrot.slane %v5980, %v5983
    %v5986 = vcombine.high %v5984, %v5984
    %v5987 = vrot.slane %v5984, 5
    %v5988 = vrot.slane %v5987, 4
    %v5989 = vrot.slane %v5986, 5
    %v5990 = vsel %vm4273, %v5988, %v5989
    %v5991 = vrot.slane %v5989, 4
    %v5992 = vsel %vm4273, %v5991, %v5987
    %v5997 = vmul.f32 %v5788, %v5987
    %v5998 = vmul.f32 %v5789, %v5990
    %v5999 = vmul.f32 %v5790, %v5992
    %v6000 = vmul.f32 %v5791, %v5990
    %v6001 = vmul.f32 %v5792, %v5991
    %v6002 = vmul.f32 %v5793, %v5987
    %v6003 = vmul.f32 %v5794, %v5990
    %v6004 = vmul.f32 %v5795, %v5992
    %v6005 = vmul.f32 %v5796, %v5990
    %v6006 = vmul.f32 %v5797, %v5991
    %v6017 = vrot.slane %v5997, 7
    %v6018 = vrot.slane %v6017, 4
    %v6019 = vrot.slane %v5998, 7
    %v6020 = vsel %vm4212, %v6018, %v6019
    %v6021 = vrot.slane %v6019, 4
    %v6022 = vrot.slane %v5999, 7
    %v6023 = vsel %vm4212, %v6021, %v6022
    %v6024 = vrot.slane %v6022, 4
    %v6025 = vrot.slane %v6000, 7
    %v6026 = vsel %vm4212, %v6024, %v6025
    %v6027 = vrot.slane %v6025, 4
    %v6028 = vrot.slane %v6001, 7
    %v6029 = vsel %vm4212, %v6027, %v6028
    %v6030 = vrot.slane %v6002, 7
    %v6031 = vrot.slane %v6030, 4
    %v6032 = vrot.slane %v6003, 7
    %v6033 = vsel %vm4212, %v6031, %v6032
    %v6034 = vrot.slane %v6032, 4
    %v6035 = vrot.slane %v6004, 7
    %v6036 = vsel %vm4212, %v6034, %v6035
    %v6037 = vrot.slane %v6035, 4
    %v6038 = vrot.slane %v6005, 7
    %v6039 = vsel %vm4212, %v6037, %v6038
    %v6040 = vrot.slane %v6038, 4
    %v6041 = vrot.slane %v6006, 7
    %v6042 = vsel %vm4212, %v6040, %v6041
    %v6051 = vadd.f32 %v5972, %v6020
    %v6052 = vadd.f32 %v5973, %v6023
    %v6053 = vadd.f32 %v5974, %v6026
    %v6054 = vadd.f32 %v5975, %v6029
    %v6055 = vadd.f32 %v5976, %v6033
    %v6056 = vadd.f32 %v5977, %v6036
    %v6057 = vadd.f32 %v5978, %v6039
    %v6058 = vadd.f32 %v5979, %v6042
    %v6059 = vld [vmem:[%s9 + $0x17] sm:$0x1]
    %v6060 = vlaneseq
    %v6061 = vshrl.u32 %v6060, 7
    %v6062 = vsub.s32 0, %v6061
    %v6063 = vrot.slane %v6059, %v6062
    %v6065 = vcombine.high %v6063, %v6063
    %v6067 = vmul.f32 %v5789, %v6063
    %v6068 = vmul.f32 %v5790, %v6065
    %v6069 = vmul.f32 %v5791, %v6063
    %v6070 = vmul.f32 %v5792, %v6065
    %v6071 = vmul.f32 %v5794, %v6063
    %v6072 = vmul.f32 %v5795, %v6065
    %v6073 = vmul.f32 %v5796, %v6063
    %v6074 = vmul.f32 %v5797, %v6065
    %v6075 = vadd.f32 %v6051, %v6067
    %v6076 = vadd.f32 %v6052, %v6068
    %v6077 = vadd.f32 %v6053, %v6069
    %v6078 = vadd.f32 %v6054, %v6070
    %v6079 = vadd.f32 %v6055, %v6071
    %v6080 = vadd.f32 %v6056, %v6072
    %v6081 = vadd.f32 %v6057, %v6073
    %v6082 = vadd.f32 %v6058, %v6074
    %6083 = vrot.lane.b32.xlu0 %v4848, 112
    %v6084 = vpop.permute.xlu0 %6083
    %6085 = vrot.lane.b32.xlu0 %v4849, 112
    %v6086 = vpop.permute.xlu0 %6085
    %6087 = vrot.lane.b32.xlu0 %v4850, 112
    %v6088 = vpop.permute.xlu0 %6087
    %6089 = vrot.lane.b32.xlu0 %v4851, 112
    %v6090 = vpop.permute.xlu0 %6089
    %6091 = vrot.lane.b32.xlu0 %v4852, 112
    %v6092 = vpop.permute.xlu0 %6091
    %v6098 = vcombine.high %v6084, %v6084
    %v6099 = vcombine.high %v6086, %v6086
    %v6100 = vcombine.high %v6088, %v6088
    %v6101 = vcombine.high %v6090, %v6090
    %v6102 = vcombine.high %v6092, %v6092
    %v6108 = vld [vmem:[%s2 + $0x4] sm:$0x1]
    %v6109 = vlaneseq
    %v6110 = vshrl.u32 %v6109, 7
    %v6111 = vsub.s32 0, %v6110
    %v6112 = vrot.slane %v6108, %v6111
    %v6114 = vcombine.high %v6112, %v6112
    %v6116 = vmul.f32 %v6084, %v6112
    %v6117 = vmul.f32 %v6098, %v6114
    %v6118 = vmul.f32 %v6086, %v6112
    %v6119 = vmul.f32 %v6099, %v6114
    %v6120 = vmul.f32 %v6088, %v6112
    %v6121 = vmul.f32 %v6100, %v6112
    %v6122 = vmul.f32 %v6090, %v6114
    %v6123 = vmul.f32 %v6101, %v6112
    %v6124 = vmul.f32 %v6092, %v6114
    %v6125 = vmul.f32 %v6102, %v6112
    %v6126 = vld [vmem:[%s9 + $0x4] sm:$0x1]
    %v6127 = vlaneseq
    %v6128 = vshrl.u32 %v6127, 7
    %v6129 = vsub.s32 0, %v6128
    %v6130 = vrot.slane %v6126, %v6129
    %v6132 = vcombine.high %v6130, %v6130
    %v6134 = vmul.f32 %v6116, %v6130
    %v6135 = vmul.f32 %v6117, %v6132
    %v6136 = vmul.f32 %v6118, %v6130
    %v6137 = vmul.f32 %v6119, %v6132
    %v6138 = vmul.f32 %v6121, %v6130
    %v6139 = vmul.f32 %v6122, %v6132
    %v6140 = vmul.f32 %v6123, %v6130
    %v6141 = vmul.f32 %v6124, %v6132
    %v6142 = vadd.f32 %v6075, %v6134
    %v6143 = vadd.f32 %v6076, %v6135
    %v6144 = vadd.f32 %v6077, %v6136
    %v6145 = vadd.f32 %v6078, %v6137
    %v6146 = vadd.f32 %v6079, %v6138
    %v6147 = vadd.f32 %v6080, %v6139
    %v6148 = vadd.f32 %v6081, %v6140
    %v6149 = vadd.f32 %v6082, %v6141
    %v6150 = vld [vmem:[%s9 + $0x9] sm:$0x1]
    %v6151 = vlaneseq
    %v6152 = vshrl.u32 %v6151, 7
    %v6153 = vsub.s32 0, %v6152
    %v6154 = vrot.slane %v6150, %v6153
    %v6156 = vcombine.high %v6154, %v6154
    %v6157 = vrot.slane %v6154, 7
    %v6158 = vrot.slane %v6157, 4
    %v6159 = vrot.slane %v6156, 7
    %v6160 = vsel %vm4212, %v6158, %v6159
    %v6161 = vrot.slane %v6159, 4
    %v6162 = vsel %vm4212, %v6161, %v6157
    %v6167 = vmul.f32 %v6116, %v6157
    %v6168 = vmul.f32 %v6117, %v6160
    %v6169 = vmul.f32 %v6118, %v6162
    %v6170 = vmul.f32 %v6119, %v6160
    %v6171 = vmul.f32 %v6120, %v6161
    %v6172 = vmul.f32 %v6121, %v6157
    %v6173 = vmul.f32 %v6122, %v6160
    %v6174 = vmul.f32 %v6123, %v6162
    %v6175 = vmul.f32 %v6124, %v6160
    %v6176 = vmul.f32 %v6125, %v6161
    %v6187 = vrot.slane %v6167, 5
    %v6188 = vrot.slane %v6187, 4
    %v6189 = vrot.slane %v6168, 5
    %v6190 = vsel %vm4273, %v6188, %v6189
    %v6191 = vrot.slane %v6189, 4
    %v6192 = vrot.slane %v6169, 5
    %v6193 = vsel %vm4273, %v6191, %v6192
    %v6194 = vrot.slane %v6192, 4
    %v6195 = vrot.slane %v6170, 5
    %v6196 = vsel %vm4273, %v6194, %v6195
    %v6197 = vrot.slane %v6195, 4
    %v6198 = vrot.slane %v6171, 5
    %v6199 = vsel %vm4273, %v6197, %v6198
    %v6200 = vrot.slane %v6172, 5
    %v6201 = vrot.slane %v6200, 4
    %v6202 = vrot.slane %v6173, 5
    %v6203 = vsel %vm4273, %v6201, %v6202
    %v6204 = vrot.slane %v6202, 4
    %v6205 = vrot.slane %v6174, 5
    %v6206 = vsel %vm4273, %v6204, %v6205
    %v6207 = vrot.slane %v6205, 4
    %v6208 = vrot.slane %v6175, 5
    %v6209 = vsel %vm4273, %v6207, %v6208
    %v6210 = vrot.slane %v6208, 4
    %v6211 = vrot.slane %v6176, 5
    %v6212 = vsel %vm4273, %v6210, %v6211
    %v6221 = vadd.f32 %v6142, %v6190
    %v6222 = vadd.f32 %v6143, %v6193
    %v6223 = vadd.f32 %v6144, %v6196
    %v6224 = vadd.f32 %v6145, %v6199
    %v6225 = vadd.f32 %v6146, %v6203
    %v6226 = vadd.f32 %v6147, %v6206
    %v6227 = vadd.f32 %v6148, %v6209
    %v6228 = vadd.f32 %v6149, %v6212
    %v6229 = vld [vmem:[%s9 + $0xe] sm:$0x1]
    %v6230 = vlaneseq
    %v6231 = vshrl.u32 %v6230, 7
    %v6232 = vsub.s32 0, %v6231
    %v6233 = vrot.slane %v6229, %v6232
    %v6235 = vcombine.high %v6233, %v6233
    %v6236 = vrot.slane %v6233, 6
    %v6237 = vrot.slane %v6236, 4
    %v6238 = vrot.slane %v6235, 6
    %v6239 = vsel %vm4241, %v6237, %v6238
    %v6240 = vrot.slane %v6238, 4
    %v6241 = vsel %vm4241, %v6240, %v6236
    %v6246 = vmul.f32 %v6116, %v6236
    %v6247 = vmul.f32 %v6117, %v6239
    %v6248 = vmul.f32 %v6118, %v6241
    %v6249 = vmul.f32 %v6119, %v6239
    %v6250 = vmul.f32 %v6120, %v6240
    %v6251 = vmul.f32 %v6121, %v6236
    %v6252 = vmul.f32 %v6122, %v6239
    %v6253 = vmul.f32 %v6123, %v6241
    %v6254 = vmul.f32 %v6124, %v6239
    %v6255 = vmul.f32 %v6125, %v6240
    %v6266 = vrot.slane %v6246, 6
    %v6267 = vrot.slane %v6266, 4
    %v6268 = vrot.slane %v6247, 6
    %v6269 = vsel %vm4241, %v6267, %v6268
    %v6270 = vrot.slane %v6268, 4
    %v6271 = vrot.slane %v6248, 6
    %v6272 = vsel %vm4241, %v6270, %v6271
    %v6273 = vrot.slane %v6271, 4
    %v6274 = vrot.slane %v6249, 6
    %v6275 = vsel %vm4241, %v6273, %v6274
    %v6276 = vrot.slane %v6274, 4
    %v6277 = vrot.slane %v6250, 6
    %v6278 = vsel %vm4241, %v6276, %v6277
    %v6279 = vrot.slane %v6251, 6
    %v6280 = vrot.slane %v6279, 4
    %v6281 = vrot.slane %v6252, 6
    %v6282 = vsel %vm4241, %v6280, %v6281
    %v6283 = vrot.slane %v6281, 4
    %v6284 = vrot.slane %v6253, 6
    %v6285 = vsel %vm4241, %v6283, %v6284
    %v6286 = vrot.slane %v6284, 4
    %v6287 = vrot.slane %v6254, 6
    %v6288 = vsel %vm4241, %v6286, %v6287
    %v6289 = vrot.slane %v6287, 4
    %v6290 = vrot.slane %v6255, 6
    %v6291 = vsel %vm4241, %v6289, %v6290
    %v6300 = vadd.f32 %v6221, %v6269
    %v6301 = vadd.f32 %v6222, %v6272
    %v6302 = vadd.f32 %v6223, %v6275
    %v6303 = vadd.f32 %v6224, %v6278
    %v6304 = vadd.f32 %v6225, %v6282
    %v6305 = vadd.f32 %v6226, %v6285
    %v6306 = vadd.f32 %v6227, %v6288
    %v6307 = vadd.f32 %v6228, %v6291
    %v6308 = vld [vmem:[%s9 + $0x13] sm:$0x1]
    %v6309 = vlaneseq
    %v6310 = vshrl.u32 %v6309, 7
    %v6311 = vsub.s32 0, %v6310
    %v6312 = vrot.slane %v6308, %v6311
    %v6314 = vcombine.high %v6312, %v6312
    %v6315 = vrot.slane %v6312, 5
    %v6316 = vrot.slane %v6315, 4
    %v6317 = vrot.slane %v6314, 5
    %v6318 = vsel %vm4273, %v6316, %v6317
    %v6319 = vrot.slane %v6317, 4
    %v6320 = vsel %vm4273, %v6319, %v6315
    %v6325 = vmul.f32 %v6116, %v6315
    %v6326 = vmul.f32 %v6117, %v6318
    %v6327 = vmul.f32 %v6118, %v6320
    %v6328 = vmul.f32 %v6119, %v6318
    %v6329 = vmul.f32 %v6120, %v6319
    %v6330 = vmul.f32 %v6121, %v6315
    %v6331 = vmul.f32 %v6122, %v6318
    %v6332 = vmul.f32 %v6123, %v6320
    %v6333 = vmul.f32 %v6124, %v6318
    %v6334 = vmul.f32 %v6125, %v6319
    %v6345 = vrot.slane %v6325, 7
    %v6346 = vrot.slane %v6345, 4
    %v6347 = vrot.slane %v6326, 7
    %v6348 = vsel %vm4212, %v6346, %v6347
    %v6349 = vrot.slane %v6347, 4
    %v6350 = vrot.slane %v6327, 7
    %v6351 = vsel %vm4212, %v6349, %v6350
    %v6352 = vrot.slane %v6350, 4
    %v6353 = vrot.slane %v6328, 7
    %v6354 = vsel %vm4212, %v6352, %v6353
    %v6355 = vrot.slane %v6353, 4
    %v6356 = vrot.slane %v6329, 7
    %v6357 = vsel %vm4212, %v6355, %v6356
    %v6358 = vrot.slane %v6330, 7
    %v6359 = vrot.slane %v6358, 4
    %v6360 = vrot.slane %v6331, 7
    %v6361 = vsel %vm4212, %v6359, %v6360
    %v6362 = vrot.slane %v6360, 4
    %v6363 = vrot.slane %v6332, 7
    %v6364 = vsel %vm4212, %v6362, %v6363
    %v6365 = vrot.slane %v6363, 4
    %v6366 = vrot.slane %v6333, 7
    %v6367 = vsel %vm4212, %v6365, %v6366
    %v6368 = vrot.slane %v6366, 4
    %v6369 = vrot.slane %v6334, 7
    %v6370 = vsel %vm4212, %v6368, %v6369
    %v6379 = vadd.f32 %v6300, %v6348
    %v6380 = vadd.f32 %v6301, %v6351
    %v6381 = vadd.f32 %v6302, %v6354
    %v6382 = vadd.f32 %v6303, %v6357
    %v6383 = vadd.f32 %v6304, %v6361
    %v6384 = vadd.f32 %v6305, %v6364
    %v6385 = vadd.f32 %v6306, %v6367
    %v6386 = vadd.f32 %v6307, %v6370
    %v6387 = vld [vmem:[%s9 + $0x18] sm:$0x1]
    %v6388 = vlaneseq
    %v6389 = vshrl.u32 %v6388, 7
    %v6390 = vsub.s32 0, %v6389
    %v6391 = vrot.slane %v6387, %v6390
    %v6393 = vcombine.high %v6391, %v6391
    %v6395 = vmul.f32 %v6117, %v6391
    %v6396 = vmul.f32 %v6118, %v6393
    %v6397 = vmul.f32 %v6119, %v6391
    %v6398 = vmul.f32 %v6120, %v6393
    %v6399 = vmul.f32 %v6122, %v6391
    %v6400 = vmul.f32 %v6123, %v6393
    %v6401 = vmul.f32 %v6124, %v6391
    %v6402 = vmul.f32 %v6125, %v6393
    %v6403 = vadd.f32 %v6379, %v6395
    %v6404 = vadd.f32 %v6380, %v6396
    %v6405 = vadd.f32 %v6381, %v6397
    %v6406 = vadd.f32 %v6382, %v6398
    %v6407 = vadd.f32 %v6383, %v6399
    %v6408 = vadd.f32 %v6384, %v6400
    %v6409 = vadd.f32 %v6385, %v6401
    %v6410 = vadd.f32 %v6386, %v6402
    %v6421 = vrot.slane %v4818, 5
    %v6422 = vrot.slane %v6421, 4
    %v6423 = vrot.slane %v4819, 5
    %v6424 = vsel %vm4273, %v6422, %v6423
    %v6425 = vrot.slane %v6423, 4
    %v6426 = vrot.slane %v4820, 5
    %v6427 = vsel %vm4273, %v6425, %v6426
    %v6428 = vrot.slane %v6426, 4
    %v6429 = vrot.slane %v4821, 5
    %v6430 = vsel %vm4273, %v6428, %v6429
    %v6431 = vrot.slane %v6429, 4
    %v6432 = vrot.slane %v4822, 5
    %v6433 = vsel %vm4273, %v6431, %v6432
    %v6434 = vrot.slane %v4823, 5
    %v6435 = vrot.slane %v6434, 4
    %v6436 = vrot.slane %v4824, 5
    %v6437 = vsel %vm4273, %v6435, %v6436
    %v6438 = vrot.slane %v6436, 4
    %v6439 = vrot.slane %v4825, 5
    %v6440 = vsel %vm4273, %v6438, %v6439
    %v6441 = vrot.slane %v6439, 4
    %v6442 = vrot.slane %v4826, 5
    %v6443 = vsel %vm4273, %v6441, %v6442
    %v6444 = vrot.slane %v6442, 4
    %v6445 = vrot.slane %v4827, 5
    %v6446 = vsel %vm4273, %v6444, %v6445
    %v6447 = vcombine.low %v6424, %v6427
    %v6448 = vcombine.low %v6430, %v6433
    %v6449 = vcombine.low %v6437, %v6440
    %v6450 = vcombine.low %v6443, %v6446
    %6455 = vst [vmem:[#allocation4] sm:$0xff] %v6447
    %6456 = vst [vmem:[#allocation4 + $0x10] sm:$0xff] %v6448
    %6457 = vst [vmem:[#allocation4 + $0x20] sm:$0xff] %v6449
    %6458 = vst [vmem:[#allocation4 + $0x30] sm:$0xff] %v6450
    %v6467 = vcombine.low %v6403, %v6404
    %v6468 = vcombine.low %v6405, %v6406
    %v6469 = vcombine.low %v6407, %v6408
    %v6470 = vcombine.low %v6409, %v6410
    %6475 = vst [vmem:[#allocation4 + $0x8] sm:$0xff] %v6467
    %6476 = vst [vmem:[#allocation4 + $0x18] sm:$0xff] %v6468
    %6477 = vst [vmem:[#allocation4 + $0x28] sm:$0xff] %v6469
    %6478 = vst [vmem:[#allocation4 + $0x38] sm:$0xff] %v6470
    %v6479 = vld [vmem:[#allocation4] sm:$0xff]
    %v6480 = vld [vmem:[#allocation4 + $0x8] sm:$0xff]
    %v6481 = vld [vmem:[#allocation4 + $0x10] sm:$0xff]
    %v6482 = vld [vmem:[#allocation4 + $0x18] sm:$0xff]
    %v6483 = vld [vmem:[#allocation4 + $0x20] sm:$0xff]
    %v6484 = vld [vmem:[#allocation4 + $0x28] sm:$0xff]
    %v6485 = vld [vmem:[#allocation4 + $0x30] sm:$0xff]
    %v6486 = vld [vmem:[#allocation4 + $0x38] sm:$0xff]
    %v6487 = vld [vmem:[%s13] sm:$0xff]
    %v6488 = vld [vmem:[%s13 + $0x8] sm:$0xff]
    %v6489 = vld [vmem:[%s13 + $0x10] sm:$0xff]
    %v6490 = vld [vmem:[%s13 + $0x18] sm:$0xff]
    %v6491 = vld [vmem:[%s13 + $0x20] sm:$0xff]
    %v6492 = vld [vmem:[%s13 + $0x28] sm:$0xff]
    %v6493 = vld [vmem:[%s13 + $0x30] sm:$0xff]
    %v6494 = vld [vmem:[%s13 + $0x38] sm:$0xff]
    %v6495 = vld [vmem:[%s13 + $0x40] sm:$0xff]
    %v6496 = vld [vmem:[%s13 + $0x48] sm:$0xff]
    %v6497 = vld [vmem:[%s13 + $0x50] sm:$0xff]
    %v6498 = vld [vmem:[%s13 + $0x58] sm:$0xff]
    %v6499 = vld [vmem:[%s13 + $0x60] sm:$0xff]
    %v6500 = vld [vmem:[%s13 + $0x68] sm:$0xff]
    %v6501 = vld [vmem:[%s13 + $0x70] sm:$0xff]
    %v6502 = vld [vmem:[%s13 + $0x78] sm:$0xff]
    %v6503 = vld [vmem:[%s13 + $0x80] sm:$0xff]
    %v6504 = vld [vmem:[%s13 + $0x88] sm:$0xff]
    %v6505 = vld [vmem:[%s13 + $0x90] sm:$0xff]
    %v6506 = vld [vmem:[%s13 + $0x98] sm:$0xff]
    %v6507 = vld [vmem:[%s13 + $0xa0] sm:$0xff]
    %v6508 = vld [vmem:[%s13 + $0xa8] sm:$0xff]
    %v6509 = vld [vmem:[%s13 + $0xb0] sm:$0xff]
    %v6510 = vld [vmem:[%s13 + $0xb8] sm:$0xff]
    %v6511 = vld [vmem:[%s13 + $0xc0] sm:$0xff]
    %v6512 = vld [vmem:[%s13 + $0xc8] sm:$0xff]
    %v6513 = vld [vmem:[%s13 + $0xd0] sm:$0xff]
    %v6514 = vld [vmem:[%s13 + $0xd8] sm:$0xff]
    %v6515 = vld [vmem:[%s13 + $0xe0] sm:$0xff]
    %v6516 = vld [vmem:[%s13 + $0xe8] sm:$0xff]
    %v6517 = vld [vmem:[%s13 + $0xf0] sm:$0xff]
    %v6518 = vld [vmem:[%s13 + $0xf8] sm:$0xff]
    %v6519 = vld [vmem:[%s13 + $0x100] sm:$0xff]
    %v6520 = vld [vmem:[%s13 + $0x108] sm:$0xff]
    %v6521 = vld [vmem:[%s13 + $0x110] sm:$0xff]
    %v6522 = vld [vmem:[%s13 + $0x118] sm:$0xff]
    %v6523 = vld [vmem:[%s13 + $0x120] sm:$0xff]
    %v6524 = vld [vmem:[%s13 + $0x128] sm:$0xff]
    %v6525 = vld [vmem:[%s13 + $0x130] sm:$0xff]
    %v6526 = vld [vmem:[%s13 + $0x138] sm:$0xff]
    %v6527 = vld [vmem:[%s13 + $0x140] sm:$0xff]
    %v6528 = vld [vmem:[%s13 + $0x148] sm:$0xff]
    %v6529 = vld [vmem:[%s13 + $0x150] sm:$0xff]
    %v6530 = vld [vmem:[%s13 + $0x158] sm:$0xff]
    %v6531 = vld [vmem:[%s13 + $0x160] sm:$0xff]
    %v6532 = vld [vmem:[%s13 + $0x168] sm:$0xff]
    %v6533 = vld [vmem:[%s13 + $0x170] sm:$0xff]
    %v6534 = vld [vmem:[%s13 + $0x178] sm:$0xff]
    %v6535 = vld [vmem:[%s13 + $0x180] sm:$0xff]
    %v6536 = vld [vmem:[%s13 + $0x188] sm:$0xff]
    %v6537 = vld [vmem:[%s13 + $0x190] sm:$0xff]
    %v6538 = vld [vmem:[%s13 + $0x198] sm:$0xff]
    %v6539 = vld [vmem:[%s13 + $0x1a0] sm:$0xff]
    %v6540 = vld [vmem:[%s13 + $0x1a8] sm:$0xff]
    %v6541 = vld [vmem:[%s13 + $0x1b0] sm:$0xff]
    %v6542 = vld [vmem:[%s13 + $0x1b8] sm:$0xff]
    %v6543 = vld [vmem:[%s13 + $0x1c0] sm:$0xff]
    %v6544 = vld [vmem:[%s13 + $0x1c8] sm:$0xff]
    %v6545 = vld [vmem:[%s13 + $0x1d0] sm:$0xff]
    %v6546 = vld [vmem:[%s13 + $0x1d8] sm:$0xff]
    %v6547 = vld [vmem:[%s13 + $0x1e0] sm:$0xff]
    %v6548 = vld [vmem:[%s13 + $0x1e8] sm:$0xff]
    %v6549 = vld [vmem:[%s13 + $0x1f0] sm:$0xff]
    %v6550 = vld [vmem:[%s13 + $0x1f8] sm:$0xff]
    %6551 = vmatprep.subr.mxu0 %v6518
    %6552 = vmatpush1.msra.mxu0 %v6517
    %6553 = vmatprep.subr.mxu0 %v6516
    %6554 = vmatpush1.msra.mxu0 %v6515
    %6555 = vmatprep.subr.mxu0 %v6514
    %6556 = vmatpush1.msra.mxu0 %v6513
    %6557 = vmatprep.subr.mxu0 %v6512
    %6558 = vmatpush1.msra.mxu0 %v6511
    %6559 = vmatprep.subr.mxu0 %v6510
    %6560 = vmatpush1.msra.mxu0 %v6509
    %6561 = vmatprep.subr.mxu0 %v6508
    %6562 = vmatpush1.msra.mxu0 %v6507
    %6563 = vmatprep.subr.mxu0 %v6506
    %6564 = vmatpush1.msra.mxu0 %v6505
    %6565 = vmatprep.subr.mxu0 %v6504
    %6566 = vmatpush1.msra.mxu0 %v6503
    %6567 = vmatprep.subr.mxu0 %v6502
    %6568 = vmatpush1.msra.mxu0 %v6501
    %6569 = vmatprep.subr.mxu0 %v6500
    %6570 = vmatpush1.msra.mxu0 %v6499
    %6571 = vmatprep.subr.mxu0 %v6498
    %6572 = vmatpush1.msra.mxu0 %v6497
    %6573 = vmatprep.subr.mxu0 %v6496
    %6574 = vmatpush1.msra.mxu0 %v6495
    %6575 = vmatprep.subr.mxu0 %v6494
    %6576 = vmatpush1.msra.mxu0 %v6493
    %6577 = vmatprep.subr.mxu0 %v6492
    %6578 = vmatpush1.msra.mxu0 %v6491
    %6579 = vmatprep.subr.mxu0 %v6490
    %6580 = vmatpush1.msra.mxu0 %v6489
    %6581 = vmatprep.subr.mxu0 %v6488
    %6582 = vmatpush1.msra.mxu0 %v6487
    %6583 = vmatprep.subr.mxu0 %v6550
    %6584 = vmatpush2.msra.mxu0 %v6549
    %6585 = vmatprep.subr.mxu0 %v6548
    %6586 = vmatpush2.msra.mxu0 %v6547
    %6587 = vmatprep.subr.mxu0 %v6546
    %6588 = vmatpush2.msra.mxu0 %v6545
    %6589 = vmatprep.subr.mxu0 %v6544
    %6590 = vmatpush2.msra.mxu0 %v6543
    %6591 = vmatprep.subr.mxu0 %v6542
    %6592 = vmatpush2.msra.mxu0 %v6541
    %6593 = vmatprep.subr.mxu0 %v6540
    %6594 = vmatpush2.msra.mxu0 %v6539
    %6595 = vmatprep.subr.mxu0 %v6538
    %6596 = vmatpush2.msra.mxu0 %v6537
    %6597 = vmatprep.subr.mxu0 %v6536
    %6598 = vmatpush2.msra.mxu0 %v6535
    %6599 = vmatprep.subr.mxu0 %v6534
    %6600 = vmatpush2.msra.mxu0 %v6533
    %6601 = vmatprep.subr.mxu0 %v6532
    %6602 = vmatpush2.msra.mxu0 %v6531
    %6603 = vmatprep.subr.mxu0 %v6530
    %6604 = vmatpush2.msra.mxu0 %v6529
    %6605 = vmatprep.subr.mxu0 %v6528
    %6606 = vmatpush2.msra.mxu0 %v6527
    %6607 = vmatprep.subr.mxu0 %v6526
    %6608 = vmatpush2.msra.mxu0 %v6525
    %6609 = vmatprep.subr.mxu0 %v6524
    %6610 = vmatpush2.msra.mxu0 %v6523
    %6611 = vmatprep.subr.mxu0 %v6522
    %6612 = vmatpush2.msra.mxu0 %v6521
    %6613 = vmatprep.subr.mxu0 %v6520
    %6614 = vmatpush2.msra.mxu0 %v6519
    %6615 = vmatprep.mubr.f32.mxu0 %v6480
    %6616 = vmatmul.mubr.f32.gmra.mxu0 %v6479
    %v6617 = vpop.f32.mrf.mxu0
    %v6618 = vadd.f32 0.0, %v6617
    %v6619 = vpop.f32.mrf.mxu0
    %v6620 = vadd.f32 0.0, %v6619
    %6621 = vmatprep.mubr.f32.mxu0 %v6482
    %6622 = vmatmul.mubr.f32.gmra.mxu0 %v6481
    %v6623 = vpop.f32.mrf.mxu0
    %v6624 = vadd.f32 0.0, %v6623
    %v6625 = vpop.f32.mrf.mxu0
    %v6626 = vadd.f32 0.0, %v6625
    %6627 = vmatprep.mubr.f32.mxu0 %v6484
    %6628 = vmatmul.mubr.f32.gmra.mxu0 %v6483
    %v6629 = vpop.f32.mrf.mxu0
    %v6630 = vadd.f32 0.0, %v6629
    %v6631 = vpop.f32.mrf.mxu0
    %v6632 = vadd.f32 0.0, %v6631
    %6633 = vmatprep.mubr.f32.mxu0 %v6486
    %6634 = vmatmul.mubr.f32.gmra.mxu0 %v6485
    %v6635 = vpop.f32.mrf.mxu0
    %v6636 = vadd.f32 0.0, %v6635
    %v6637 = vpop.f32.mrf.mxu0
    %v6638 = vadd.f32 0.0, %v6637
    %6639 = vdwg.mxu0
    %s6640 = sld [smem:[#allocation5 + $0x4]]
    %v6641 = vadd.f32 %v6618, %v6624
    %v6642 = vadd.f32 %v6641, %v6630
    %v6643 = vadd.f32 %v6642, %v6636
    %v6644 = vrot.slane %v6643, 4
    %v6645 = vadd.f32 %v6643, %v6644
    %v6646 = vrot.slane %v6645, 2
    %v6647 = vadd.f32 %v6645, %v6646
    %v6648 = vrot.slane %v6647, 1
    %v6649 = vadd.f32 %v6647, %v6648
    %v6650 = vld [vmem:[%s5] sm:$0xff]
    %v6651 = vld [vmem:[%s5 + $0x8] sm:$0xff]
    %v6652 = vld [vmem:[%s5 + $0x10] sm:$0xff]
    %v6653 = vld [vmem:[%s5 + $0x18] sm:$0xff]
    %v6654 = vld [vmem:[%s5 + $0x20] sm:$0xff]
    %v6655 = vld [vmem:[%s5 + $0x28] sm:$0xff]
    %v6656 = vld [vmem:[%s5 + $0x30] sm:$0xff]
    %v6657 = vld [vmem:[%s5 + $0x38] sm:$0xff]
    %v6658 = vld [vmem:[%s5 + $0x40] sm:$0xff]
    %v6659 = vld [vmem:[%s5 + $0x48] sm:$0xff]
    %v6660 = vld [vmem:[%s5 + $0x50] sm:$0xff]
    %v6661 = vld [vmem:[%s5 + $0x58] sm:$0xff]
    %v6662 = vld [vmem:[%s5 + $0x60] sm:$0xff]
    %v6663 = vld [vmem:[%s5 + $0x68] sm:$0xff]
    %v6664 = vld [vmem:[%s5 + $0x70] sm:$0xff]
    %v6665 = vld [vmem:[%s5 + $0x78] sm:$0xff]
    %6666 = vmatprep.subr.mxu0 0.0
    %6667 = vmatpush1.msra.mxu0 %v6665
    %6668 = vmatprep.subr.mxu0 0.0
    %6669 = vmatpush1.msra.mxu0 %v6664
    %6670 = vmatprep.subr.mxu0 0.0
    %6671 = vmatpush1.msra.mxu0 %v6663
    %6672 = vmatprep.subr.mxu0 0.0
    %6673 = vmatpush1.msra.mxu0 %v6662
    %6674 = vmatprep.subr.mxu0 0.0
    %6675 = vmatpush1.msra.mxu0 %v6661
    %6676 = vmatprep.subr.mxu0 0.0
    %6677 = vmatpush1.msra.mxu0 %v6660
    %6678 = vmatprep.subr.mxu0 0.0
    %6679 = vmatpush1.msra.mxu0 %v6659
    %6680 = vmatprep.subr.mxu0 0.0
    %6681 = vmatpush1.msra.mxu0 %v6658
    %6682 = vmatprep.subr.mxu0 0.0
    %6683 = vmatpush1.msra.mxu0 %v6657
    %6684 = vmatprep.subr.mxu0 0.0
    %6685 = vmatpush1.msra.mxu0 %v6656
    %6686 = vmatprep.subr.mxu0 0.0
    %6687 = vmatpush1.msra.mxu0 %v6655
    %6688 = vmatprep.subr.mxu0 0.0
    %6689 = vmatpush1.msra.mxu0 %v6654
    %6690 = vmatprep.subr.mxu0 0.0
    %6691 = vmatpush1.msra.mxu0 %v6653
    %6692 = vmatprep.subr.mxu0 0.0
    %6693 = vmatpush1.msra.mxu0 %v6652
    %6694 = vmatprep.subr.mxu0 0.0
    %6695 = vmatpush1.msra.mxu0 %v6651
    %6696 = vmatprep.subr.mxu0 0.0
    %6697 = vmatpush1.msra.mxu0 %v6650
    %6698 = vmatprep.subr.mxu0 0.0
    %6699 = vmatpush2.msra.mxu0 0.0
    %6700 = vmatprep.subr.mxu0 0.0
    %6701 = vmatpush2.msra.mxu0 0.0
    %6702 = vmatprep.subr.mxu0 0.0
    %6703 = vmatpush2.msra.mxu0 0.0
    %6704 = vmatprep.subr.mxu0 0.0
    %6705 = vmatpush2.msra.mxu0 0.0
    %6706 = vmatprep.subr.mxu0 0.0
    %6707 = vmatpush2.msra.mxu0 0.0
    %6708 = vmatprep.subr.mxu0 0.0
    %6709 = vmatpush2.msra.mxu0 0.0
    %6710 = vmatprep.subr.mxu0 0.0
    %6711 = vmatpush2.msra.mxu0 0.0
    %6712 = vmatprep.subr.mxu0 0.0
    %6713 = vmatpush2.msra.mxu0 0.0
    %6714 = vmatprep.subr.mxu0 0.0
    %6715 = vmatpush2.msra.mxu0 0.0
    %6716 = vmatprep.subr.mxu0 0.0
    %6717 = vmatpush2.msra.mxu0 0.0
    %6718 = vmatprep.subr.mxu0 0.0
    %6719 = vmatpush2.msra.mxu0 0.0
    %6720 = vmatprep.subr.mxu0 0.0
    %6721 = vmatpush2.msra.mxu0 0.0
    %6722 = vmatprep.subr.mxu0 0.0
    %6723 = vmatpush2.msra.mxu0 0.0
    %6724 = vmatprep.subr.mxu0 0.0
    %6725 = vmatpush2.msra.mxu0 0.0
    %6726 = vmatprep.subr.mxu0 0.0
    %6727 = vmatpush2.msra.mxu0 0.0
    %6728 = vmatprep.subr.mxu0 0.0
    %6729 = vmatpush2.msra.mxu0 0.0
    %6730 = vmatprep.mubr.f32.mxu0 0.0
    %6731 = vmatmul.mubr.f32.gmra.mxu0 %v6649
    %v6732 = vpop.f32.mrf.mxu0
    %v6733 = vadd.f32 0.0, %v6732
    %v6734 = vpop.f32.mrf.mxu0
    %6735 = vdwg.mxu0
    %v6736 = vlaneseq
    %v6737 = vshrl.u32 %v6736, 7
    %v6738 = vsub.s32 0, %v6737
    %v6739 = vrot.slane %v6733, %v6738
    %v6740 = vsub.f32 %v6618, %v6739
    %v6741 = vsub.f32 %v6624, %v6739
    %v6742 = vsub.f32 %v6630, %v6739
    %v6743 = vsub.f32 %v6636, %v6739
    %v6744 = vmul.f32 %v6740, %v6740
    %v6745 = vmul.f32 %v6741, %v6741
    %v6746 = vmul.f32 %v6742, %v6742
    %v6747 = vmul.f32 %v6743, %v6743
    %v6748 = vadd.f32 %v6744, %v6745
    %v6749 = vadd.f32 %v6748, %v6746
    %v6750 = vadd.f32 %v6749, %v6747
    %v6751 = vrot.slane %v6750, 4
    %v6752 = vadd.f32 %v6750, %v6751
    %v6753 = vrot.slane %v6752, 2
    %v6754 = vadd.f32 %v6752, %v6753
    %v6755 = vrot.slane %v6754, 1
    %v6756 = vadd.f32 %v6754, %v6755
    %6757 = vmatprep.subr.mxu0 0.0
    %6758 = vmatpush1.msra.mxu0 %v6665
    %6759 = vmatprep.subr.mxu0 0.0
    %6760 = vmatpush1.msra.mxu0 %v6664
    %6761 = vmatprep.subr.mxu0 0.0
    %6762 = vmatpush1.msra.mxu0 %v6663
    %6763 = vmatprep.subr.mxu0 0.0
    %6764 = vmatpush1.msra.mxu0 %v6662
    %6765 = vmatprep.subr.mxu0 0.0
    %6766 = vmatpush1.msra.mxu0 %v6661
    %6767 = vmatprep.subr.mxu0 0.0
    %6768 = vmatpush1.msra.mxu0 %v6660
    %6769 = vmatprep.subr.mxu0 0.0
    %6770 = vmatpush1.msra.mxu0 %v6659
    %6771 = vmatprep.subr.mxu0 0.0
    %6772 = vmatpush1.msra.mxu0 %v6658
    %6773 = vmatprep.subr.mxu0 0.0
    %6774 = vmatpush1.msra.mxu0 %v6657
    %6775 = vmatprep.subr.mxu0 0.0
    %6776 = vmatpush1.msra.mxu0 %v6656
    %6777 = vmatprep.subr.mxu0 0.0
    %6778 = vmatpush1.msra.mxu0 %v6655
    %6779 = vmatprep.subr.mxu0 0.0
    %6780 = vmatpush1.msra.mxu0 %v6654
    %6781 = vmatprep.subr.mxu0 0.0
    %6782 = vmatpush1.msra.mxu0 %v6653
    %6783 = vmatprep.subr.mxu0 0.0
    %6784 = vmatpush1.msra.mxu0 %v6652
    %6785 = vmatprep.subr.mxu0 0.0
    %6786 = vmatpush1.msra.mxu0 %v6651
    %6787 = vmatprep.subr.mxu0 0.0
    %6788 = vmatpush1.msra.mxu0 %v6650
    %6789 = vmatprep.subr.mxu0 0.0
    %6790 = vmatpush2.msra.mxu0 0.0
    %6791 = vmatprep.subr.mxu0 0.0
    %6792 = vmatpush2.msra.mxu0 0.0
    %6793 = vmatprep.subr.mxu0 0.0
    %6794 = vmatpush2.msra.mxu0 0.0
    %6795 = vmatprep.subr.mxu0 0.0
    %6796 = vmatpush2.msra.mxu0 0.0
    %6797 = vmatprep.subr.mxu0 0.0
    %6798 = vmatpush2.msra.mxu0 0.0
    %6799 = vmatprep.subr.mxu0 0.0
    %6800 = vmatpush2.msra.mxu0 0.0
    %6801 = vmatprep.subr.mxu0 0.0
    %6802 = vmatpush2.msra.mxu0 0.0
    %6803 = vmatprep.subr.mxu0 0.0
    %6804 = vmatpush2.msra.mxu0 0.0
    %6805 = vmatprep.subr.mxu0 0.0
    %6806 = vmatpush2.msra.mxu0 0.0
    %6807 = vmatprep.subr.mxu0 0.0
    %6808 = vmatpush2.msra.mxu0 0.0
    %6809 = vmatprep.subr.mxu0 0.0
    %6810 = vmatpush2.msra.mxu0 0.0
    %6811 = vmatprep.subr.mxu0 0.0
    %6812 = vmatpush2.msra.mxu0 0.0
    %6813 = vmatprep.subr.mxu0 0.0
    %6814 = vmatpush2.msra.mxu0 0.0
    %6815 = vmatprep.subr.mxu0 0.0
    %6816 = vmatpush2.msra.mxu0 0.0
    %6817 = vmatprep.subr.mxu0 0.0
    %6818 = vmatpush2.msra.mxu0 0.0
    %6819 = vmatprep.subr.mxu0 0.0
    %6820 = vmatpush2.msra.mxu0 0.0
    %6821 = vmatprep.mubr.f32.mxu0 0.0
    %6822 = vmatmul.mubr.f32.gmra.mxu0 %v6756
    %v6823 = vpop.f32.mrf.mxu0
    %v6824 = vadd.f32 1e-05, %v6823
    %v6825 = vpop.f32.mrf.mxu0
    %6826 = vdwg.mxu0
    %v6827 = vrsqrt.pop %v6824
    %v6828 = vlaneseq
    %v6829 = vshrl.u32 %v6828, 7
    %v6830 = vsub.s32 0, %v6829
    %v6831 = vrot.slane %v6827, %v6830
    %v6832 = vmul.f32 %v6740, %v6831
    %v6833 = vmul.f32 %v6741, %v6831
    %v6834 = vmul.f32 %v6742, %v6831
    %v6835 = vmul.f32 %v6743, %v6831
    %v6836 = vstv %s6640
    %v6837 = vmul.f32 %v6836, %v6832
    %v6838 = vmul.f32 %v6836, %v6833
    %v6839 = vmul.f32 %v6836, %v6834
    %v6840 = vmul.f32 %v6836, %v6835
    %v6841 = vadd.f32 %v3535, %v6837
    %v6842 = vadd.f32 %v3536, %v6838
    %v6843 = vadd.f32 %v3537, %v6839
    %v6844 = vadd.f32 %v3538, %v6840
    %s6845 = sld [smem:[#allocation5 + $0x5]]
    %v6846 = vadd.f32 %v6620, %v6626
    %v6847 = vadd.f32 %v6846, %v6632
    %v6848 = vadd.f32 %v6847, %v6638
    %v6849 = vrot.slane %v6848, 4
    %v6850 = vadd.f32 %v6848, %v6849
    %v6851 = vrot.slane %v6850, 2
    %v6852 = vadd.f32 %v6850, %v6851
    %v6853 = vrot.slane %v6852, 1
    %v6854 = vadd.f32 %v6852, %v6853
    %6855 = vmatprep.subr.mxu0 0.0
    %6856 = vmatpush1.msra.mxu0 %v6665
    %6857 = vmatprep.subr.mxu0 0.0
    %6858 = vmatpush1.msra.mxu0 %v6664
    %6859 = vmatprep.subr.mxu0 0.0
    %6860 = vmatpush1.msra.mxu0 %v6663
    %6861 = vmatprep.subr.mxu0 0.0
    %6862 = vmatpush1.msra.mxu0 %v6662
    %6863 = vmatprep.subr.mxu0 0.0
    %6864 = vmatpush1.msra.mxu0 %v6661
    %6865 = vmatprep.subr.mxu0 0.0
    %6866 = vmatpush1.msra.mxu0 %v6660
    %6867 = vmatprep.subr.mxu0 0.0
    %6868 = vmatpush1.msra.mxu0 %v6659
    %6869 = vmatprep.subr.mxu0 0.0
    %6870 = vmatpush1.msra.mxu0 %v6658
    %6871 = vmatprep.subr.mxu0 0.0
    %6872 = vmatpush1.msra.mxu0 %v6657
    %6873 = vmatprep.subr.mxu0 0.0
    %6874 = vmatpush1.msra.mxu0 %v6656
    %6875 = vmatprep.subr.mxu0 0.0
    %6876 = vmatpush1.msra.mxu0 %v6655
    %6877 = vmatprep.subr.mxu0 0.0
    %6878 = vmatpush1.msra.mxu0 %v6654
    %6879 = vmatprep.subr.mxu0 0.0
    %6880 = vmatpush1.msra.mxu0 %v6653
    %6881 = vmatprep.subr.mxu0 0.0
    %6882 = vmatpush1.msra.mxu0 %v6652
    %6883 = vmatprep.subr.mxu0 0.0
    %6884 = vmatpush1.msra.mxu0 %v6651
    %6885 = vmatprep.subr.mxu0 0.0
    %6886 = vmatpush1.msra.mxu0 %v6650
    %6887 = vmatprep.subr.mxu0 0.0
    %6888 = vmatpush2.msra.mxu0 0.0
    %6889 = vmatprep.subr.mxu0 0.0
    %6890 = vmatpush2.msra.mxu0 0.0
    %6891 = vmatprep.subr.mxu0 0.0
    %6892 = vmatpush2.msra.mxu0 0.0
    %6893 = vmatprep.subr.mxu0 0.0
    %6894 = vmatpush2.msra.mxu0 0.0
    %6895 = vmatprep.subr.mxu0 0.0
    %6896 = vmatpush2.msra.mxu0 0.0
    %6897 = vmatprep.subr.mxu0 0.0
    %6898 = vmatpush2.msra.mxu0 0.0
    %6899 = vmatprep.subr.mxu0 0.0
    %6900 = vmatpush2.msra.mxu0 0.0
    %6901 = vmatprep.subr.mxu0 0.0
    %6902 = vmatpush2.msra.mxu0 0.0
    %6903 = vmatprep.subr.mxu0 0.0
    %6904 = vmatpush2.msra.mxu0 0.0
    %6905 = vmatprep.subr.mxu0 0.0
    %6906 = vmatpush2.msra.mxu0 0.0
    %6907 = vmatprep.subr.mxu0 0.0
    %6908 = vmatpush2.msra.mxu0 0.0
    %6909 = vmatprep.subr.mxu0 0.0
    %6910 = vmatpush2.msra.mxu0 0.0
    %6911 = vmatprep.subr.mxu0 0.0
    %6912 = vmatpush2.msra.mxu0 0.0
    %6913 = vmatprep.subr.mxu0 0.0
    %6914 = vmatpush2.msra.mxu0 0.0
    %6915 = vmatprep.subr.mxu0 0.0
    %6916 = vmatpush2.msra.mxu0 0.0
    %6917 = vmatprep.subr.mxu0 0.0
    %6918 = vmatpush2.msra.mxu0 0.0
    %6919 = vmatprep.mubr.f32.mxu0 0.0
    %6920 = vmatmul.mubr.f32.gmra.mxu0 %v6854
    %v6921 = vpop.f32.mrf.mxu0
    %v6922 = vadd.f32 0.0, %v6921
    %v6923 = vpop.f32.mrf.mxu0
    %6924 = vdwg.mxu0
    %v6925 = vlaneseq
    %v6926 = vshrl.u32 %v6925, 7
    %v6927 = vsub.s32 0, %v6926
    %v6928 = vrot.slane %v6922, %v6927
    %v6929 = vsub.f32 %v6620, %v6928
    %v6930 = vsub.f32 %v6626, %v6928
    %v6931 = vsub.f32 %v6632, %v6928
    %v6932 = vsub.f32 %v6638, %v6928
    %v6933 = vmul.f32 %v6929, %v6929
    %v6934 = vmul.f32 %v6930, %v6930
    %v6935 = vmul.f32 %v6931, %v6931
    %v6936 = vmul.f32 %v6932, %v6932
    %v6937 = vadd.f32 %v6933, %v6934
    %v6938 = vadd.f32 %v6937, %v6935
    %v6939 = vadd.f32 %v6938, %v6936
    %v6940 = vrot.slane %v6939, 4
    %v6941 = vadd.f32 %v6939, %v6940
    %v6942 = vrot.slane %v6941, 2
    %v6943 = vadd.f32 %v6941, %v6942
    %v6944 = vrot.slane %v6943, 1
    %v6945 = vadd.f32 %v6943, %v6944
    %6946 = vmatprep.subr.mxu0 0.0
    %6947 = vmatpush1.msra.mxu0 %v6665
    %6948 = vmatprep.subr.mxu0 0.0
    %6949 = vmatpush1.msra.mxu0 %v6664
    %6950 = vmatprep.subr.mxu0 0.0
    %6951 = vmatpush1.msra.mxu0 %v6663
    %6952 = vmatprep.subr.mxu0 0.0
    %6953 = vmatpush1.msra.mxu0 %v6662
    %6954 = vmatprep.subr.mxu0 0.0
    %6955 = vmatpush1.msra.mxu0 %v6661
    %6956 = vmatprep.subr.mxu0 0.0
    %6957 = vmatpush1.msra.mxu0 %v6660
    %6958 = vmatprep.subr.mxu0 0.0
    %6959 = vmatpush1.msra.mxu0 %v6659
    %6960 = vmatprep.subr.mxu0 0.0
    %6961 = vmatpush1.msra.mxu0 %v6658
    %6962 = vmatprep.subr.mxu0 0.0
    %6963 = vmatpush1.msra.mxu0 %v6657
    %6964 = vmatprep.subr.mxu0 0.0
    %6965 = vmatpush1.msra.mxu0 %v6656
    %6966 = vmatprep.subr.mxu0 0.0
    %6967 = vmatpush1.msra.mxu0 %v6655
    %6968 = vmatprep.subr.mxu0 0.0
    %6969 = vmatpush1.msra.mxu0 %v6654
    %6970 = vmatprep.subr.mxu0 0.0
    %6971 = vmatpush1.msra.mxu0 %v6653
    %6972 = vmatprep.subr.mxu0 0.0
    %6973 = vmatpush1.msra.mxu0 %v6652
    %6974 = vmatprep.subr.mxu0 0.0
    %6975 = vmatpush1.msra.mxu0 %v6651
    %6976 = vmatprep.subr.mxu0 0.0
    %6977 = vmatpush1.msra.mxu0 %v6650
    %6978 = vmatprep.subr.mxu0 0.0
    %6979 = vmatpush2.msra.mxu0 0.0
    %6980 = vmatprep.subr.mxu0 0.0
    %6981 = vmatpush2.msra.mxu0 0.0
    %6982 = vmatprep.subr.mxu0 0.0
    %6983 = vmatpush2.msra.mxu0 0.0
    %6984 = vmatprep.subr.mxu0 0.0
    %6985 = vmatpush2.msra.mxu0 0.0
    %6986 = vmatprep.subr.mxu0 0.0
    %6987 = vmatpush2.msra.mxu0 0.0
    %6988 = vmatprep.subr.mxu0 0.0
    %6989 = vmatpush2.msra.mxu0 0.0
    %6990 = vmatprep.subr.mxu0 0.0
    %6991 = vmatpush2.msra.mxu0 0.0
    %6992 = vmatprep.subr.mxu0 0.0
    %6993 = vmatpush2.msra.mxu0 0.0
    %6994 = vmatprep.subr.mxu0 0.0
    %6995 = vmatpush2.msra.mxu0 0.0
    %6996 = vmatprep.subr.mxu0 0.0
    %6997 = vmatpush2.msra.mxu0 0.0
    %6998 = vmatprep.subr.mxu0 0.0
    %6999 = vmatpush2.msra.mxu0 0.0
    %7000 = vmatprep.subr.mxu0 0.0
    %7001 = vmatpush2.msra.mxu0 0.0
    %7002 = vmatprep.subr.mxu0 0.0
    %7003 = vmatpush2.msra.mxu0 0.0
    %7004 = vmatprep.subr.mxu0 0.0
    %7005 = vmatpush2.msra.mxu0 0.0
    %7006 = vmatprep.subr.mxu0 0.0
    %7007 = vmatpush2.msra.mxu0 0.0
    %7008 = vmatprep.subr.mxu0 0.0
    %7009 = vmatpush2.msra.mxu0 0.0
    %7010 = vmatprep.mubr.f32.mxu0 0.0
    %7011 = vmatmul.mubr.f32.gmra.mxu0 %v6945
    %v7012 = vpop.f32.mrf.mxu0
    %v7013 = vadd.f32 1e-05, %v7012
    %v7014 = vpop.f32.mrf.mxu0
    %7015 = vdwg.mxu0
    %v7016 = vrsqrt.pop %v7013
    %v7017 = vlaneseq
    %v7018 = vshrl.u32 %v7017, 7
    %v7019 = vsub.s32 0, %v7018
    %v7020 = vrot.slane %v7016, %v7019
    %v7021 = vmul.f32 %v6929, %v7020
    %v7022 = vmul.f32 %v6930, %v7020
    %v7023 = vmul.f32 %v6931, %v7020
    %v7024 = vmul.f32 %v6932, %v7020
    %v7025 = vstv %s6845
    %v7026 = vmul.f32 %v7025, %v7021
    %v7027 = vmul.f32 %v7025, %v7022
    %v7028 = vmul.f32 %v7025, %v7023
    %v7029 = vmul.f32 %v7025, %v7024
    %v7030 = vadd.f32 %v6841, %v7026
    %v7031 = vadd.f32 %v6842, %v7027
    %v7032 = vadd.f32 %v6843, %v7028
    %v7033 = vadd.f32 %v6844, %v7029
    %7034 = vst [vmem:[%s15] sm:$0xff] %v7030
    %7035 = vst [vmem:[%s15 + $0x8] sm:$0xff] %v7031
    %7036 = vst [vmem:[%s15 + $0x10] sm:$0xff] %v7032
    %7037 = vst [vmem:[%s15 + $0x18] sm:$0xff] %v7033
    // Predicated region
    $region66: #{mixed_op_forward.1} parent=1 // pred_check
      _
    $region67: #{mixed_op_forward.1} parent=1 // pred_check_branch
      %7039 = sbr.rel (0) target = $region69
    $region68: #{mixed_op_forward.1} parent=1 // pred_region
      _
    $region69: #{mixed_op_forward.1} parent=1 // pred_fallthru
      _
    // Predicated region
    $region70: #{mixed_op_forward.1} parent=1 // pred_check
      _
    $region71: #{mixed_op_forward.1} parent=1 // pred_check_branch
      %7041 = sbr.rel (0) target = $region73
    $region72: #{mixed_op_forward.1} parent=1 // pred_region
      _
    $region73: #{mixed_op_forward.1} parent=1 // pred_fallthru
      _
    %7042 = vsyncpa [#allocation6], 1

</llo_original>
